<compile_context>
chip_gen: v6e
topology: v6e:2x2x1
jax: 0.10.0
libtpu: 0.0.40
codegen_flags: <defaults>
</compile_context>

<pallas_src>
import functools

import jax
import jax.numpy as jnp
from jax.experimental import pallas as pl
from jax.experimental.pallas import tpu as pltpu


# --------------------------- generation-aware knobs -------------------------- #

def _tpu_vmem_bytes():
    try:
        return int(pltpu.get_tpu_info().vmem_capacity_bytes)
    except Exception:
        # Unknown / interpret environment: assume the smallest (v7x-like) VMEM.
        return 64 * 1024 * 1024


_VMEM_BYTES = _tpu_vmem_bytes()
# v5e/v6e (128 MiB VMEM): bigger row tiles amortize weight re-streaming and the
# ~0.35 us per-grid-step overhead; v7x (64 MiB) stays conservative.
_TM_TARGET = 512 if _VMEM_BYTES >= (100 << 20) else 256
_VMEM_LIMIT = (64 << 20) if _VMEM_BYTES >= (100 << 20) else None


def _cparams(*semantics):
    return pltpu.CompilerParams(dimension_semantics=semantics,
                                vmem_limit_bytes=_VMEM_LIMIT)


def _pick_tile(dim, target, granule):
    """Largest tile <= target dividing dim (prefers 256-multiples on lane dims)."""
    if dim <= target:
        return dim
    prefs = (256, granule) if granule == 128 else (granule,)
    for g in prefs:
        t = (target // g) * g
        while t >= g:
            if dim % t == 0:
                return t
            t -= g
    # TODO(synk): pad non-divisible dims (e.g. GPT-2 vocab 50257 -> 50304) instead
    #             of this whole-dim fallback, which can blow scoped VMEM.
    return dim


# ------------------------------ Pallas kernels ------------------------------ #

def _ln_qkv_kernel(x_ref, g_ref, b_ref, w_ref, bias_ref, qkv_ref, xn_ref):
    """Fused LayerNorm + per-head QKV projection, head-major output.

    grid = (B, heads); LN(x) is computed once per batch element (h == 0) into a
    bf16 VMEM scratch and reused for every head.  Output block is (3, S, hd):
    q/k/v of the current head, written directly in head-major layout.
    """
    @pl.when(pl.program_id(1) == 0)
    def _():
        x = x_ref[...]                                   # (S, D) f32
        mu = jnp.mean(x, axis=-1, keepdims=True)
        var = jnp.mean((x - mu) ** 2, axis=-1, keepdims=True)
        xn = (x - mu) * jax.lax.rsqrt(var + 1e-5) * g_ref[...] + b_ref[...]
        xn_ref[...] = xn.astype(xn_ref.dtype)            # bf16 scratch

    xn = xn_ref[...]                                      # (S, D) bf16
    for t in range(3):                                    # q, k, v of this head
        y = jnp.dot(xn, w_ref[t],
                    preferred_element_type=jnp.float32) + bias_ref[t]
        qkv_ref[t] = y.astype(qkv_ref.dtype)


def ln_qkv_headmajor(x3d, gamma, beta, attn_w, attn_b):
    b, s, d = x3d.shape
    heads, _, _, hd = attn_w.shape
    return pl.pallas_call(
        _ln_qkv_kernel,
        out_shape=jax.ShapeDtypeStruct((heads * 3, b, s, hd), jnp.bfloat16),
        grid=(b, heads),
        in_specs=[
            pl.BlockSpec((None, s, d), lambda i, h: (i, 0, 0)),
            pl.BlockSpec((1, d), lambda i, h: (0, 0)),
            pl.BlockSpec((1, d), lambda i, h: (0, 0)),
            pl.BlockSpec((None, 3, d, hd), lambda i, h: (h, 0, 0, 0)),
            pl.BlockSpec((None, 3, 1, hd), lambda i, h: (h, 0, 0, 0)),
        ],
        out_specs=pl.BlockSpec((3, None, s, hd), lambda i, h: (h, i, 0, 0)),
        scratch_shapes=[pltpu.VMEM((s, d), jnp.bfloat16)],
        compiler_params=_cparams("parallel", "arbitrary"),
    )(x3d, gamma.reshape(1, d), beta.reshape(1, d), attn_w, attn_b)


def _attn_proj_kernel(qkv_ref, res_ref, pw_ref, pb_ref, o_ref, acc_ref, *, scale):
    """Causal attention for one (batch, head) + per-head out-proj accumulation.

    grid = (B, heads) with heads as the reduction ("arbitrary") axis: each head
    adds its contribution attn_h @ proj_w[h] into the f32 accumulator; the last
    head adds bias + residual and stores the (S, D) output.
    """
    h = pl.program_id(1)

    @pl.when(h == 0)
    def _():
        acc_ref[...] = jnp.zeros_like(acc_ref)

    # Scale folded into q: S*hd multiplies instead of S*S.
    q = (qkv_ref[0].astype(jnp.float32) * scale).astype(jnp.bfloat16)  # (S, hd)
    k = qkv_ref[1]                                                      # (S, hd)
    v = qkv_ref[2]                                                      # (S, hd)

    # TODO(synk): KV-tiled online-softmax (flash) loop for long sequences.
    s = jax.lax.dot_general(q, k, (((1,), (1,)), ((), ())),
                            preferred_element_type=jnp.float32)         # (S, S)
    seq = s.shape[0]
    row = jax.lax.broadcasted_iota(jnp.int32, (seq, seq), 0)
    col = jax.lax.broadcasted_iota(jnp.int32, (seq, seq), 1)
    s = jnp.where(col <= row, s, -1e30)                  # f32-safe mask value
    s = s - jnp.max(s, axis=-1, keepdims=True)
    p = jnp.exp(s)
    p = p * pl.reciprocal(jnp.sum(p, axis=-1, keepdims=True), approx=True)

    ctx = jnp.dot(p.astype(jnp.bfloat16), v,
                  preferred_element_type=jnp.float32)                    # (S, hd)
    acc_ref[...] += jnp.dot(ctx.astype(jnp.bfloat16), pw_ref[...],
                            preferred_element_type=jnp.float32)          # (S, D)

    @pl.when(h == pl.num_programs(1) - 1)
    def _():
        o_ref[...] = (acc_ref[...] + pb_ref[...] + res_ref[...]).astype(o_ref.dtype)


def attention_proj_residual(qkv, residual, proj_w, proj_b):
    heads, hd, d = proj_w.shape
    _, b, s, _ = qkv.shape
    scale = 1.0 / (hd ** 0.5)
    return pl.pallas_call(
        functools.partial(_attn_proj_kernel, scale=scale),
        out_shape=jax.ShapeDtypeStruct((b, s, d), jnp.float32),
        grid=(b, heads),
        in_specs=[
            pl.BlockSpec((3, None, s, hd), lambda i, h: (h, i, 0, 0)),
            pl.BlockSpec((None, s, d), lambda i, h: (i, 0, 0)),
            pl.BlockSpec((None, hd, d), lambda i, h: (h, 0, 0)),
            pl.BlockSpec((1, d), lambda i, h: (0, 0)),
        ],
        out_specs=pl.BlockSpec((None, s, d), lambda i, h: (i, 0, 0)),
        scratch_shapes=[pltpu.VMEM((s, d), jnp.float32)],
        compiler_params=_cparams("parallel", "arbitrary"),
    )(qkv, residual, proj_w, proj_b.reshape(1, d))


def _ln_matmul_kernel(x_ref, g_ref, b_ref, w_ref, bias_ref, o_ref, xn_ref,
                      *, activation):
    """Fused LayerNorm(x) @ W + bias (+ gelu_new); LN computed once per row tile."""
    @pl.when(pl.program_id(1) == 0)
    def _():
        x = x_ref[...]
        mu = jnp.mean(x, axis=-1, keepdims=True)
        var = jnp.mean((x - mu) ** 2, axis=-1, keepdims=True)
        xn = (x - mu) * jax.lax.rsqrt(var + 1e-5) * g_ref[...] + b_ref[...]
        xn_ref[...] = xn.astype(xn_ref.dtype)            # bf16 scratch

    y = jnp.dot(xn_ref[...], w_ref[...],
                preferred_element_type=jnp.float32) + bias_ref[...]
    if activation == "gelu":
        # GPT-2 "gelu_new" (tanh approximation), in f32.
        y = 0.5 * y * (1.0 + jnp.tanh(
            jnp.sqrt(2.0 / jnp.pi) * (y + 0.044715 * (y ** 3))))
    o_ref[...] = y.astype(o_ref.dtype)


def ln_matmul_gelu(x2d, gamma, beta, w, bias, *, tn_target=512):
    m, d = x2d.shape
    n = w.shape[1]
    tm = _pick_tile(m, _TM_TARGET, 8)
    tn = _pick_tile(n, tn_target, 128)
    return pl.pallas_call(
        functools.partial(_ln_matmul_kernel, activation="gelu"),
        out_shape=jax.ShapeDtypeStruct((m, n), jnp.bfloat16),
        grid=(m // tm, n // tn),
        in_specs=[
            pl.BlockSpec((tm, d), lambda i, j: (i, 0)),
            pl.BlockSpec((1, d), lambda i, j: (0, 0)),
            pl.BlockSpec((1, d), lambda i, j: (0, 0)),
            pl.BlockSpec((d, tn), lambda i, j: (0, j)),
            pl.BlockSpec((1, tn), lambda i, j: (0, j)),
        ],
        out_specs=pl.BlockSpec((tm, tn), lambda i, j: (i, j)),
        scratch_shapes=[pltpu.VMEM((tm, d), jnp.bfloat16)],
        compiler_params=_cparams("parallel", "arbitrary"),
    )(x2d, gamma.reshape(1, d), beta.reshape(1, d), w, bias.reshape(1, n))


def _matmul_bias_res_kernel(x_ref, w_ref, bias_ref, res_ref, o_ref, acc_ref):
    """K-tiled bf16 x @ W with f32 accumulator; finalize adds bias + residual."""
    k = pl.program_id(2)

    @pl.when(k == 0)
    def _():
        acc_ref[...] = jnp.zeros_like(acc_ref)

    acc_ref[...] += jnp.dot(x_ref[...], w_ref[...],
                            preferred_element_type=jnp.float32)

    @pl.when(k == pl.num_programs(2) - 1)
    def _():
        o_ref[...] = (acc_ref[...] + bias_ref[...] + res_ref[...]).astype(o_ref.dtype)


def matmul_bias_residual(x2d, w, bias, res2d, *, tn_target=512, tk_target=512):
    m, kdim = x2d.shape
    n = w.shape[1]
    tm = _pick_tile(m, _TM_TARGET, 8)
    tn = _pick_tile(n, tn_target, 128)
    tk = _pick_tile(kdim, tk_target, 128)
    return pl.pallas_call(
        _matmul_bias_res_kernel,
        out_shape=jax.ShapeDtypeStruct((m, n), jnp.float32),
        grid=(m // tm, n // tn, kdim // tk),
        in_specs=[
            pl.BlockSpec((tm, tk), lambda i, j, k: (i, k)),
            pl.BlockSpec((tk, tn), lambda i, j, k: (k, j)),
            pl.BlockSpec((1, tn), lambda i, j, k: (0, j)),
            pl.BlockSpec((tm, tn), lambda i, j, k: (i, j)),
        ],
        out_specs=pl.BlockSpec((tm, tn), lambda i, j, k: (i, j)),
        scratch_shapes=[pltpu.VMEM((tm, tn), jnp.float32)],
        compiler_params=_cparams("parallel", "parallel", "arbitrary"),
    )(x2d, w, bias.reshape(1, n), res2d)


def _lnf_lm_head_kernel(x_ref, g_ref, b_ref, wt_ref, hid_ref, logits_ref, xn_ref):
    """Fused final LayerNorm + tied LM head.

    hidden_states tile emitted once per row tile (j == 0); logits for every
    vocab tile reuse the LN result from VMEM scratch.
    """
    @pl.when(pl.program_id(1) == 0)
    def _():
        x = x_ref[...]
        mu = jnp.mean(x, axis=-1, keepdims=True)
        var = jnp.mean((x - mu) ** 2, axis=-1, keepdims=True)
        hf = (x - mu) * jax.lax.rsqrt(var + 1e-5) * g_ref[...] + b_ref[...]
        hid_ref[...] = hf.astype(hid_ref.dtype)
        xn_ref[...] = hf.astype(xn_ref.dtype)

    logits_ref[...] = jnp.dot(xn_ref[...], wt_ref[...],
                              preferred_element_type=jnp.float32
                              ).astype(logits_ref.dtype)


def lnf_lm_head(x2d, gamma, beta, wte_t, *, tv_target=512):
    m, d = x2d.shape
    v = wte_t.shape[1]
    tm = _pick_tile(m, _TM_TARGET, 8)
    tv = _pick_tile(v, tv_target, 128)
    hidden, logits = pl.pallas_call(
        _lnf_lm_head_kernel,
        out_shape=(jax.ShapeDtypeStruct((m, d), jnp.float32),
                   jax.ShapeDtypeStruct((m, v), jnp.float32)),
        grid=(m // tm, v // tv),
        in_specs=[
            pl.BlockSpec((tm, d), lambda i, j: (i, 0)),
            pl.BlockSpec((1, d), lambda i, j: (0, 0)),
            pl.BlockSpec((1, d), lambda i, j: (0, 0)),
            pl.BlockSpec((d, tv), lambda i, j: (0, j)),
        ],
        out_specs=[pl.BlockSpec((tm, d), lambda i, j: (i, 0)),
                   pl.BlockSpec((tm, tv), lambda i, j: (i, j))],
        scratch_shapes=[pltpu.VMEM((tm, d), jnp.bfloat16)],
        compiler_params=_cparams("parallel", "arbitrary"),
    )(x2d, gamma.reshape(1, d), beta.reshape(1, d), wte_t)
    return hidden, logits


# ------------------------------ Model (glue) -------------------------------- #

def init_params(key, *, vocab, max_pos, d, heads, layers, ffn):
    hd = d // heads
    keys = jax.random.split(key, 2 + layers)
    bf16 = jnp.bfloat16
    p = {
        "wte": 0.02 * jax.random.normal(keys[0], (vocab, d), jnp.float32),
        "wpe": 0.02 * jax.random.normal(keys[1], (max_pos, d), jnp.float32),
        "lnf_g": jnp.ones((d,), jnp.float32),
        "lnf_b": jnp.zeros((d,), jnp.float32),
        "blocks": [],
    }
    for li in range(layers):
        bk = jax.random.split(keys[2 + li], 4)
        p["blocks"].append({
            "ln1_g": jnp.ones((d,), jnp.float32),
            "ln1_b": jnp.zeros((d,), jnp.float32),
            # GPT-2 c_attn weight stored head-major (H, 3, D, hd) in bf16
            # (equivalent to the usual (D, 3D) [q|k|v] column layout).
            "attn_w": (0.02 * jax.random.normal(bk[0], (heads, 3, d, hd),
                                                jnp.float32)).astype(bf16),
            "attn_b": jnp.zeros((heads, 3, 1, hd), jnp.float32),
            # Out-projection stored (H, hd, D) so each head contracts directly.
            "proj_w": (0.02 * jax.random.normal(bk[1], (heads, hd, d),
                                                jnp.float32)).astype(bf16),
            "proj_b": jnp.zeros((d,), jnp.float32),
            "ln2_g": jnp.ones((d,), jnp.float32),
            "ln2_b": jnp.zeros((d,), jnp.float32),
            "fc_w": (0.02 * jax.random.normal(bk[2], (d, ffn),
                                              jnp.float32)).astype(bf16),
            "fc_b": jnp.zeros((ffn,), jnp.float32),
            "fc2_w": (0.02 * jax.random.normal(bk[3], (ffn, d),
                                               jnp.float32)).astype(bf16),
            "fc2_b": jnp.zeros((d,), jnp.float32),
        })
    return p


def policy_network_forward(params, input_ids):
    """Returns (logits [B,S,V], hidden_states[-1] [B,S,D]) like the PyTorch module."""
    b, s = input_ids.shape
    vocab, d = params["wte"].shape

    # Embedding lookup (plain JAX gather glue).  Residual stream stays f32.
    h = params["wte"][input_ids] + params["wpe"][:s][None, :, :]          # (B,S,D)
    h2 = h.reshape(b * s, d)

    for blk in params["blocks"]:
        # --- attention sub-block (pre-LN), 2 fused kernels ---
        qkv = ln_qkv_headmajor(h2.reshape(b, s, d), blk["ln1_g"], blk["ln1_b"],
                               blk["attn_w"], blk["attn_b"])      # (3H, B, S, hd)
        h2 = attention_proj_residual(qkv, h2.reshape(b, s, d),
                                     blk["proj_w"], blk["proj_b"]
                                     ).reshape(b * s, d)          # (M, D) f32

        # --- MLP sub-block (pre-LN), 2 fused kernels ---
        mlp = ln_matmul_gelu(h2, blk["ln2_g"], blk["ln2_b"],
                             blk["fc_w"], blk["fc_b"])            # (M, FFN) bf16
        h2 = matmul_bias_residual(mlp, blk["fc2_w"], blk["fc2_b"], h2)

    # Weight-tied LM head with fused final LayerNorm.
    # TODO(synk): at real vocab sizes keep the NT contraction (or cache this
    #             transposed bf16 copy) instead of transposing per forward.
    wte_t = params["wte"].T.astype(jnp.bfloat16)                  # (D, V) bf16
    hf, logits = lnf_lm_head(h2, params["lnf_g"], params["lnf_b"], wte_t)
    return logits.reshape(b, s, vocab), hf.reshape(b, s, d)


# -------------------------- pure-JAX reference ------------------------------ #

def _reference_forward(params, input_ids):
    b, s = input_ids.shape
    _, d = params["wte"].shape
    heads = params["blocks"][0]["proj_w"].shape[0]
    hd = d // heads
    hp = jax.lax.Precision.HIGHEST
    f32 = jnp.float32

    def ln(x, g, bb):
        mu = jnp.mean(x, axis=-1, keepdims=True)
        var = jnp.mean((x - mu) ** 2, axis=-1, keepdims=True)
        return (x - mu) * jax.lax.rsqrt(var + 1e-5) * g + bb

    h = params["wte"][input_ids] + params["wpe"][:s][None, :, :]
    for blk in params["blocks"]:
        attn_w = blk["attn_w"].astype(f32).transpose(2, 1, 0, 3).reshape(d, 3 * d)
        attn_b = blk["attn_b"].astype(f32).transpose(1, 0, 2, 3).reshape(3 * d)
        proj_w = blk["proj_w"].astype(f32).reshape(d, d)
        fc_w, fc2_w = blk["fc_w"].astype(f32), blk["fc2_w"].astype(f32)

        x = ln(h, blk["ln1_g"], blk["ln1_b"])
        qkv = jnp.dot(x, attn_w, precision=hp) + attn_b
        q, k, v = jnp.split(qkv, 3, axis=-1)
        q = q.reshape(b, s, heads, hd).transpose(0, 2, 1, 3)
        k = k.reshape(b, s, heads, hd).transpose(0, 2, 1, 3)
        v = v.reshape(b, s, heads, hd).transpose(0, 2, 1, 3)
        sc = jnp.einsum("bhqd,bhkd->bhqk", q, k, precision=hp) / (hd ** 0.5)
        sc = jnp.where(jnp.tril(jnp.ones((s, s), bool)), sc, -1e30)
        p = jax.nn.softmax(sc, axis=-1)
        a = jnp.einsum("bhqk,bhkd->bhqd", p, v, precision=hp)
        a = a.transpose(0, 2, 1, 3).reshape(b, s, d)
        h = h + jnp.dot(a, proj_w, precision=hp) + blk["proj_b"]
        x = ln(h, blk["ln2_g"], blk["ln2_b"])
        m1 = jnp.dot(x, fc_w, precision=hp) + blk["fc_b"]
        m1 = 0.5 * m1 * (1.0 + jnp.tanh(
            jnp.sqrt(2.0 / jnp.pi) * (m1 + 0.044715 * m1 ** 3)))
        h = h + jnp.dot(m1, fc2_w, precision=hp) + blk["fc2_b"]
    hf = ln(h, params["lnf_g"], params["lnf_b"])
    logits = jnp.dot(hf, params["wte"].T, precision=hp)
    return logits, hf


# ---------------------------------- main ------------------------------------ #

if __name__ == "__main__":
    # Small GPT-2-like config; all dims are multiples of 128 so every block
    # (incl. per-head hd) is lane-dense.
    VOCAB, MAX_POS, D, HEADS, LAYERS, FFN = 512, 128, 256, 2, 2, 1024
    B, S = 2, 64

    key = jax.random.PRNGKey(0)
    pkey, ikey = jax.random.split(key)
    params = init_params(pkey, vocab=VOCAB, max_pos=MAX_POS, d=D,
                         heads=HEADS, layers=LAYERS, ffn=FFN)
    input_ids = jax.random.randint(ikey, (B, S), 0, VOCAB, dtype=jnp.int32)

    fwd = jax.jit(policy_network_forward)
    logits, hidden_states = fwd(params, input_ids)
    jax.block_until_ready((logits, hidden_states))

    assert logits.shape == (B, S, VOCAB)
    assert hidden_states.shape == (B, S, D)

    # Correctness check against a pure-JAX f32 reference; tolerance accounts for
    # bf16 MXU operands (f32 accumulation) and the approx softmax reciprocal.
    ref_logits, ref_hidden = _reference_forward(params, input_ids)
    assert jnp.allclose(logits, ref_logits, atol=3e-2, rtol=3e-2)
    assert jnp.allclose(hidden_states, ref_hidden, atol=3e-2, rtol=3e-2)

    print("KERNEL_OK")
</pallas_src>

<mosaic_0001>
module attributes {stable_mosaic.version = 11 : i64} {
  func.func @_attn_proj_kernel(%arg0: i32, %arg1: i32, %arg2: memref<3x1x64x128xbf16, #tpu.memory_space<vmem>>, %arg3: memref<1x64x256xf32, #tpu.memory_space<vmem>>, %arg4: memref<1x128x256xbf16, #tpu.memory_space<vmem>>, %arg5: memref<1x256xf32, #tpu.memory_space<vmem>>, %arg6: memref<1x64x256xf32, #tpu.memory_space<vmem>>, %arg7: memref<64x256xf32, #tpu.memory_space<vmem>>) attributes {dimension_semantics = [#tpu.dimension_semantics<parallel>, #tpu.dimension_semantics<arbitrary>], iteration_bounds = array<i64: 2, 2>, scalar_prefetch = 0 : i64, scratch_operands = 1 : i64, tpu.core_type = #tpu.core_type<tc>, window_params = [{transform_indices = @transform_0, window_bounds = array<i64: 3, 1, 64, 128>}, {transform_indices = @transform_1, window_bounds = array<i64: 1, 64, 256>}, {transform_indices = @transform_2, window_bounds = array<i64: 1, 128, 256>}, {pipeline_mode = #tpu.pipeline_mode<synchronous>, transform_indices = @transform_3, window_bounds = array<i64: 1, 256>}, {transform_indices = @transform_4, window_bounds = array<i64: 1, 64, 256>}]} {
    %c0_i32 = arith.constant 0 : i32
    %0 = arith.cmpi eq, %arg1, %c0_i32 : i32
    %1 = arith.extui %0 : i1 to i32
    %c0_i32_0 = arith.constant 0 : i32
    %2 = arith.cmpi ne, %1, %c0_i32_0 : i32
    scf.if %2 {
      %cst_24 = arith.constant 0.000000e+00 : f32
      %41 = vector.broadcast %cst_24 : f32 to vector<64x256xf32>
      %c0_25 = arith.constant 0 : index
      %c0_26 = arith.constant 0 : index
      %42 = vector.load %arg7[%c0_25, %c0_26] : memref<64x256xf32, #tpu.memory_space<vmem>>, vector<64x256xf32>
      tpu.vector_store %arg7[%c0_25, %c0_26], %41 {strides = array<i32>} : memref<64x256xf32, #tpu.memory_space<vmem>>, vector<64x256xf32>,
    } else {
    }
    %c0 = arith.constant 0 : index
    %c0_1 = arith.constant 0 : index
    %c0_2 = arith.constant 0 : index
    %c0_3 = arith.constant 0 : index
    %3 = vector.load %arg2[%c0, %c0_1, %c0_2, %c0_3] : memref<3x1x64x128xbf16, #tpu.memory_space<vmem>>, vector<1x1x64x128xbf16>
    %4 = vector.shape_cast %3 : vector<1x1x64x128xbf16> to vector<64x128xbf16>
    %5 = arith.extf %4 : vector<64x128xbf16> to vector<64x128xf32>
    %cst = arith.constant 0.0883883461 : f32
    %6 = vector.broadcast %cst : f32 to vector<64x128xf32>
    %7 = arith.mulf %5, %6 : vector<64x128xf32>
    %8 = arith.truncf %7 : vector<64x128xf32> to vector<64x128xbf16>
    %c1 = arith.constant 1 : index
    %c0_4 = arith.constant 0 : index
    %c0_5 = arith.constant 0 : index
    %c0_6 = arith.constant 0 : index
    %9 = vector.load %arg2[%c1, %c0_4, %c0_5, %c0_6] : memref<3x1x64x128xbf16, #tpu.memory_space<vmem>>, vector<1x1x64x128xbf16>
    %10 = vector.shape_cast %9 : vector<1x1x64x128xbf16> to vector<64x128xbf16>
    %c2 = arith.constant 2 : index
    %c0_7 = arith.constant 0 : index
    %c0_8 = arith.constant 0 : index
    %c0_9 = arith.constant 0 : index
    %11 = vector.load %arg2[%c2, %c0_7, %c0_8, %c0_9] : memref<3x1x64x128xbf16, #tpu.memory_space<vmem>>, vector<1x1x64x128xbf16>
    %12 = vector.shape_cast %11 : vector<1x1x64x128xbf16> to vector<64x128xbf16>
    %cst_10 = arith.constant dense<0.000000e+00> : vector<64x64xf32>
    %13 = tpu.matmul %8, %10, %cst_10 {dimension_numbers = #tpu.dot_dimension_numbers<[1], [1], [0], [0], [0, 0, 1, 0], [], []>} : vector<64x128xbf16>, vector<64x128xbf16>, vector<64x64xf32> -> vector<64x64xf32>
    %14 = tpu.iota {dimensions = array<i32: 0>} : vector<64x64xi32>
    %15 = tpu.iota {dimensions = array<i32: 1>} : vector<64x64xi32>
    %16 = arith.cmpi sle, %15, %14 : vector<64x64xi32>
    %cst_11 = arith.constant -1.000000e+30 : f32
    %17 = vector.broadcast %cst_11 : f32 to vector<64x64xf32>
    %18 = arith.select %16, %13, %17 : vector<64x64xi1>, vector<64x64xf32>
    %cst_12 = arith.constant dense<0xFF800000> : vector<64xf32>
    %19 = vector.multi_reduction <maximumf>, %18, %cst_12 [1] : vector<64x64xf32> to vector<64xf32>
    %20 = vector.shape_cast %19 : vector<64xf32> to vector<64x1xf32>
    %21 = vector.broadcast %20 : vector<64x1xf32> to vector<64x64xf32>
    %22 = arith.subf %18, %21 : vector<64x64xf32>
    %23 = math.exp %22 : vector<64x64xf32>
    %cst_13 = arith.constant dense<0.000000e+00> : vector<64xf32>
    %24 = vector.multi_reduction <add>, %23, %cst_13 [1] : vector<64x64xf32> to vector<64xf32>
    %25 = vector.shape_cast %24 : vector<64xf32> to vector<64x1xf32>
    %26 = tpu.reciprocal %25 {approx = true} : vector<64x1xf32> -> vector<64x1xf32>
    %27 = vector.broadcast %26 : vector<64x1xf32> to vector<64x64xf32>
    %28 = arith.mulf %23, %27 : vector<64x64xf32>
    %29 = arith.truncf %28 : vector<64x64xf32> to vector<64x64xbf16>
    %cst_14 = arith.constant dense<0.000000e+00> : vector<64x128xf32>
    %30 = tpu.matmul %29, %12, %cst_14 {dimension_numbers = #tpu.dot_dimension_numbers<[1], [0], [0], [1], [0, 0, 1, 1], [], []>} : vector<64x64xbf16>, vector<64x128xbf16>, vector<64x128xf32> -> vector<64x128xf32>
    %c0_15 = arith.constant 0 : index
    %c0_16 = arith.constant 0 : index
    %31 = vector.load %arg7[%c0_15, %c0_16] : memref<64x256xf32, #tpu.memory_space<vmem>>, vector<64x256xf32>
    %32 = arith.truncf %30 : vector<64x128xf32> to vector<64x128xbf16>
    %c0_17 = arith.constant 0 : index
    %c0_18 = arith.constant 0 : index
    %c0_19 = arith.constant 0 : index
    %33 = vector.load %arg4[%c0_17, %c0_18, %c0_19] : memref<1x128x256xbf16, #tpu.memory_space<vmem>>, vector<1x128x256xbf16>
    %34 = vector.shape_cast %33 : vector<1x128x256xbf16> to vector<128x256xbf16>
    %cst_20 = arith.constant dense<0.000000e+00> : vector<64x256xf32>
    %35 = tpu.matmul %32, %34, %cst_20 {dimension_numbers = #tpu.dot_dimension_numbers<[1], [0], [0], [1], [0, 0, 1, 1], [], []>} : vector<64x128xbf16>, vector<128x256xbf16>, vector<64x256xf32> -> vector<64x256xf32>
    %36 = arith.addf %31, %35 : vector<64x256xf32>
    %c0_21 = arith.constant 0 : index
    %c0_22 = arith.constant 0 : index
    %37 = vector.load %arg7[%c0_21, %c0_22] : memref<64x256xf32, #tpu.memory_space<vmem>>, vector<64x256xf32>
    tpu.vector_store %arg7[%c0_21, %c0_22], %36 {strides = array<i32>} : memref<64x256xf32, #tpu.memory_space<vmem>>, vector<64x256xf32>,
    %c1_i32 = arith.constant 1 : i32
    %38 = arith.cmpi eq, %arg1, %c1_i32 : i32
    %39 = arith.extui %38 : i1 to i32
    %c0_i32_23 = arith.constant 0 : i32
    %40 = arith.cmpi ne, %39, %c0_i32_23 : i32
    scf.if %40 {
      %c0_24 = arith.constant 0 : index
      %c0_25 = arith.constant 0 : index
      %41 = vector.load %arg7[%c0_24, %c0_25] : memref<64x256xf32, #tpu.memory_space<vmem>>, vector<64x256xf32>
      %c0_26 = arith.constant 0 : index
      %c0_27 = arith.constant 0 : index
      %42 = vector.load %arg5[%c0_26, %c0_27] : memref<1x256xf32, #tpu.memory_space<vmem>>, vector<1x256xf32>
      %43 = vector.broadcast %42 : vector<1x256xf32> to vector<64x256xf32>
      %44 = arith.addf %41, %43 : vector<64x256xf32>
      %c0_28 = arith.constant 0 : index
      %c0_29 = arith.constant 0 : index
      %c0_30 = arith.constant 0 : index
      %45 = vector.load %arg3[%c0_28, %c0_29, %c0_30] : memref<1x64x256xf32, #tpu.memory_space<vmem>>, vector<1x64x256xf32>
      %46 = vector.shape_cast %45 : vector<1x64x256xf32> to vector<64x256xf32>
      %47 = arith.addf %44, %46 : vector<64x256xf32>
      %c0_31 = arith.constant 0 : index
      %c0_32 = arith.constant 0 : index
      %c0_33 = arith.constant 0 : index
      %48 = vector.load %arg6[%c0_31, %c0_32, %c0_33] : memref<1x64x256xf32, #tpu.memory_space<vmem>>, vector<1x64x256xf32>
      %49 = vector.shape_cast %48 : vector<1x64x256xf32> to vector<64x256xf32>
      %50 = vector.shape_cast %47 : vector<64x256xf32> to vector<1x64x256xf32>
      tpu.vector_store %arg6[%c0_31, %c0_32, %c0_33], %50 {strides = array<i32>} : memref<1x64x256xf32, #tpu.memory_space<vmem>>, vector<1x64x256xf32>,
    } else {
    }
    return
  }
  func.func @transform_0(%arg0: i32, %arg1: i32) -> (i32, i32, i32, i32) {
    %c0_i32 = arith.constant 0 : i32
    %c0_i32_0 = arith.constant 0 : i32
    %c0_i32_1 = arith.constant 0 : i32
    return %arg1, %arg0, %c0_i32, %c0_i32_0 : i32, i32, i32, i32
  }
  func.func @transform_1(%arg0: i32, %arg1: i32) -> (i32, i32, i32) {
    %c0_i32 = arith.constant 0 : i32
    %c0_i32_0 = arith.constant 0 : i32
    %c0_i32_1 = arith.constant 0 : i32
    return %arg0, %c0_i32, %c0_i32_0 : i32, i32, i32
  }
  func.func @transform_2(%arg0: i32, %arg1: i32) -> (i32, i32, i32) {
    %c0_i32 = arith.constant 0 : i32
    %c0_i32_0 = arith.constant 0 : i32
    %c0_i32_1 = arith.constant 0 : i32
    return %arg1, %c0_i32, %c0_i32_0 : i32, i32, i32
  }
  func.func @transform_3(%arg0: i32, %arg1: i32) -> (i32, i32) {
    %c0_i32 = arith.constant 0 : i32
    %c0_i32_0 = arith.constant 0 : i32
    %c0_i32_1 = arith.constant 0 : i32
    return %c0_i32, %c0_i32_0 : i32, i32
  }
  func.func @transform_4(%arg0: i32, %arg1: i32) -> (i32, i32, i32) {
    %c0_i32 = arith.constant 0 : i32
    %c0_i32_0 = arith.constant 0 : i32
    %c0_i32_1 = arith.constant 0 : i32
    return %arg0, %c0_i32, %c0_i32_0 : i32, i32, i32
  }
}

module attributes {stable_mosaic.version = 11 : i64} {
  func.func @_ln_qkv_kernel(%arg0: i32, %arg1: i32, %arg2: memref<1x64x256xf32, #tpu.memory_space<vmem>>, %arg3: memref<1x256xf32, #tpu.memory_space<vmem>>, %arg4: memref<1x256xf32, #tpu.memory_space<vmem>>, %arg5: memref<1x3x256x128xbf16, #tpu.memory_space<vmem>>, %arg6: memref<1x3x1x128xf32, #tpu.memory_space<vmem>>, %arg7: memref<3x1x64x128xbf16, #tpu.memory_space<vmem>>, %arg8: memref<64x256xbf16, #tpu.memory_space<vmem>>) attributes {dimension_semantics = [#tpu.dimension_semantics<parallel>, #tpu.dimension_semantics<arbitrary>], iteration_bounds = array<i64: 2, 2>, scalar_prefetch = 0 : i64, scratch_operands = 1 : i64, tpu.core_type = #tpu.core_type<tc>, window_params = [{transform_indices = @transform_0, window_bounds = array<i64: 1, 64, 256>}, {pipeline_mode = #tpu.pipeline_mode<synchronous>, transform_indices = @transform_1, window_bounds = array<i64: 1, 256>}, {pipeline_mode = #tpu.pipeline_mode<synchronous>, transform_indices = @transform_2, window_bounds = array<i64: 1, 256>}, {transform_indices = @transform_3, window_bounds = array<i64: 1, 3, 256, 128>}, {transform_indices = @transform_4, window_bounds = array<i64: 1, 3, 1, 128>}, {transform_indices = @transform_5, window_bounds = array<i64: 3, 1, 64, 128>}]} {
    %c0_i32 = arith.constant 0 : i32
    %0 = arith.cmpi eq, %arg1, %c0_i32 : i32
    %1 = arith.extui %0 : i1 to i32
    %c0_i32_0 = arith.constant 0 : i32
    %2 = arith.cmpi ne, %1, %c0_i32_0 : i32
    scf.if %2 {
      %c0_38 = arith.constant 0 : index
      %c0_39 = arith.constant 0 : index
      %c0_40 = arith.constant 0 : index
      %37 = vector.load %arg2[%c0_38, %c0_39, %c0_40] : memref<1x64x256xf32, #tpu.memory_space<vmem>>, vector<1x64x256xf32>
      %38 = vector.shape_cast %37 : vector<1x64x256xf32> to vector<64x256xf32>
      %cst_41 = arith.constant dense<0.000000e+00> : vector<64xf32>
      %39 = vector.multi_reduction <add>, %38, %cst_41 [1] : vector<64x256xf32> to vector<64xf32>
      %40 = vector.shape_cast %39 : vector<64xf32> to vector<64x1xf32>
      %cst_42 = arith.constant 2.560000e+02 : f32
      %41 = vector.broadcast %cst_42 : f32 to vector<64x1xf32>
      %42 = arith.divf %40, %41 : vector<64x1xf32>
      %43 = vector.broadcast %42 : vector<64x1xf32> to vector<64x256xf32>
      %44 = arith.subf %38, %43 : vector<64x256xf32>
      %45 = arith.mulf %44, %44 : vector<64x256xf32>
      %cst_43 = arith.constant dense<0.000000e+00> : vector<64xf32>
      %46 = vector.multi_reduction <add>, %45, %cst_43 [1] : vector<64x256xf32> to vector<64xf32>
      %47 = vector.shape_cast %46 : vector<64xf32> to vector<64x1xf32>
      %cst_44 = arith.constant 2.560000e+02 : f32
      %48 = vector.broadcast %cst_44 : f32 to vector<64x1xf32>
      %49 = arith.divf %47, %48 : vector<64x1xf32>
      %50 = vector.broadcast %42 : vector<64x1xf32> to vector<64x256xf32>
      %51 = arith.subf %38, %50 : vector<64x256xf32>
      %cst_45 = arith.constant 9.99999974E-6 : f32
      %52 = vector.broadcast %cst_45 : f32 to vector<64x1xf32>
      %53 = arith.addf %49, %52 : vector<64x1xf32>
      %54 = math.rsqrt %53 : vector<64x1xf32>
      %55 = vector.broadcast %54 : vector<64x1xf32> to vector<64x256xf32>
      %56 = arith.mulf %51, %55 : vector<64x256xf32>
      %c0_46 = arith.constant 0 : index
      %c0_47 = arith.constant 0 : index
      %57 = vector.load %arg3[%c0_46, %c0_47] : memref<1x256xf32, #tpu.memory_space<vmem>>, vector<1x256xf32>
      %58 = vector.broadcast %57 : vector<1x256xf32> to vector<64x256xf32>
      %59 = arith.mulf %56, %58 : vector<64x256xf32>
      %c0_48 = arith.constant 0 : index
      %c0_49 = arith.constant 0 : index
      %60 = vector.load %arg4[%c0_48, %c0_49] : memref<1x256xf32, #tpu.memory_space<vmem>>, vector<1x256xf32>
      %61 = vector.broadcast %60 : vector<1x256xf32> to vector<64x256xf32>
      %62 = arith.addf %59, %61 : vector<64x256xf32>
      %63 = arith.truncf %62 : vector<64x256xf32> to vector<64x256xbf16>
      %c0_50 = arith.constant 0 : index
      %c0_51 = arith.constant 0 : index
      %64 = vector.load %arg8[%c0_50, %c0_51] : memref<64x256xbf16, #tpu.memory_space<vmem>>, vector<64x256xbf16>
      tpu.vector_store %arg8[%c0_50, %c0_51], %63 {strides = array<i32>} : memref<64x256xbf16, #tpu.memory_space<vmem>>, vector<64x256xbf16>,
    } else {
    }
    %c0 = arith.constant 0 : index
    %c0_1 = arith.constant 0 : index
    %3 = vector.load %arg8[%c0, %c0_1] : memref<64x256xbf16, #tpu.memory_space<vmem>>, vector<64x256xbf16>
    %c0_2 = arith.constant 0 : index
    %c0_3 = arith.constant 0 : index
    %c0_4 = arith.constant 0 : index
    %c0_5 = arith.constant 0 : index
    %4 = vector.load %arg5[%c0_2, %c0_3, %c0_4, %c0_5] : memref<1x3x256x128xbf16, #tpu.memory_space<vmem>>, vector<1x1x256x128xbf16>
    %5 = vector.shape_cast %4 : vector<1x1x256x128xbf16> to vector<256x128xbf16>
    %cst = arith.constant dense<0.000000e+00> : vector<64x128xf32>
    %6 = tpu.matmul %3, %5, %cst {dimension_numbers = #tpu.dot_dimension_numbers<[1], [0], [0], [1], [0, 0, 1, 1], [], []>} : vector<64x256xbf16>, vector<256x128xbf16>, vector<64x128xf32> -> vector<64x128xf32>
    %c0_6 = arith.constant 0 : index
    %c0_7 = arith.constant 0 : index
    %c0_8 = arith.constant 0 : index
    %c0_9 = arith.constant 0 : index
    %7 = vector.load %arg6[%c0_6, %c0_7, %c0_8, %c0_9] : memref<1x3x1x128xf32, #tpu.memory_space<vmem>>, vector<1x1x1x128xf32>
    %8 = vector.shape_cast %7 : vector<1x1x1x128xf32> to vector<1x128xf32>
    %9 = vector.broadcast %8 : vector<1x128xf32> to vector<64x128xf32>
    %10 = arith.addf %6, %9 : vector<64x128xf32>
    %11 = arith.truncf %10 : vector<64x128xf32> to vector<64x128xbf16>
    %c0_10 = arith.constant 0 : index
    %c0_11 = arith.constant 0 : index
    %c0_12 = arith.constant 0 : index
    %c0_13 = arith.constant 0 : index
    %12 = vector.load %arg7[%c0_10, %c0_11, %c0_12, %c0_13] : memref<3x1x64x128xbf16, #tpu.memory_space<vmem>>, vector<1x1x64x128xbf16>
    %13 = vector.shape_cast %12 : vector<1x1x64x128xbf16> to vector<64x128xbf16>
    %14 = vector.shape_cast %11 : vector<64x128xbf16> to vector<1x1x64x128xbf16>
    tpu.vector_store %arg7[%c0_10, %c0_11, %c0_12, %c0_13], %14 {strides = array<i32>} : memref<3x1x64x128xbf16, #tpu.memory_space<vmem>>, vector<1x1x64x128xbf16>,
    %c0_14 = arith.constant 0 : index
    %c1 = arith.constant 1 : index
    %c0_15 = arith.constant 0 : index
    %c0_16 = arith.constant 0 : index
    %15 = vector.load %arg5[%c0_14, %c1, %c0_15, %c0_16] : memref<1x3x256x128xbf16, #tpu.memory_space<vmem>>, vector<1x1x256x128xbf16>
    %16 = vector.shape_cast %15 : vector<1x1x256x128xbf16> to vector<256x128xbf16>
    %cst_17 = arith.constant dense<0.000000e+00> : vector<64x128xf32>
    %17 = tpu.matmul %3, %16, %cst_17 {dimension_numbers = #tpu.dot_dimension_numbers<[1], [0], [0], [1], [0, 0, 1, 1], [], []>} : vector<64x256xbf16>, vector<256x128xbf16>, vector<64x128xf32> -> vector<64x128xf32>
    %c0_18 = arith.constant 0 : index
    %c1_19 = arith.constant 1 : index
    %c0_20 = arith.constant 0 : index
    %c0_21 = arith.constant 0 : index
    %18 = vector.load %arg6[%c0_18, %c1_19, %c0_20, %c0_21] : memref<1x3x1x128xf32, #tpu.memory_space<vmem>>, vector<1x1x1x128xf32>
    %19 = vector.shape_cast %18 : vector<1x1x1x128xf32> to vector<1x128xf32>
    %20 = vector.broadcast %19 : vector<1x128xf32> to vector<64x128xf32>
    %21 = arith.addf %17, %20 : vector<64x128xf32>
    %22 = arith.truncf %21 : vector<64x128xf32> to vector<64x128xbf16>
    %c1_22 = arith.constant 1 : index
    %c0_23 = arith.constant 0 : index
    %c0_24 = arith.constant 0 : index
    %c0_25 = arith.constant 0 : index
    %23 = vector.load %arg7[%c1_22, %c0_23, %c0_24, %c0_25] : memref<3x1x64x128xbf16, #tpu.memory_space<vmem>>, vector<1x1x64x128xbf16>
    %24 = vector.shape_cast %23 : vector<1x1x64x128xbf16> to vector<64x128xbf16>
    %25 = vector.shape_cast %22 : vector<64x128xbf16> to vector<1x1x64x128xbf16>
    tpu.vector_store %arg7[%c1_22, %c0_23, %c0_24, %c0_25], %25 {strides = array<i32>} : memref<3x1x64x128xbf16, #tpu.memory_space<vmem>>, vector<1x1x64x128xbf16>,
    %c0_26 = arith.constant 0 : index
    %c2 = arith.constant 2 : index
    %c0_27 = arith.constant 0 : index
    %c0_28 = arith.constant 0 : index
    %26 = vector.load %arg5[%c0_26, %c2, %c0_27, %c0_28] : memref<1x3x256x128xbf16, #tpu.memory_space<vmem>>, vector<1x1x256x128xbf16>
    %27 = vector.shape_cast %26 : vector<1x1x256x128xbf16> to vector<256x128xbf16>
    %cst_29 = arith.constant dense<0.000000e+00> : vector<64x128xf32>
    %28 = tpu.matmul %3, %27, %cst_29 {dimension_numbers = #tpu.dot_dimension_numbers<[1], [0], [0], [1], [0, 0, 1, 1], [], []>} : vector<64x256xbf16>, vector<256x128xbf16>, vector<64x128xf32> -> vector<64x128xf32>
    %c0_30 = arith.constant 0 : index
    %c2_31 = arith.constant 2 : index
    %c0_32 = arith.constant 0 : index
    %c0_33 = arith.constant 0 : index
    %29 = vector.load %arg6[%c0_30, %c2_31, %c0_32, %c0_33] : memref<1x3x1x128xf32, #tpu.memory_space<vmem>>, vector<1x1x1x128xf32>
    %30 = vector.shape_cast %29 : vector<1x1x1x128xf32> to vector<1x128xf32>
    %31 = vector.broadcast %30 : vector<1x128xf32> to vector<64x128xf32>
    %32 = arith.addf %28, %31 : vector<64x128xf32>
    %33 = arith.truncf %32 : vector<64x128xf32> to vector<64x128xbf16>
    %c2_34 = arith.constant 2 : index
    %c0_35 = arith.constant 0 : index
    %c0_36 = arith.constant 0 : index
    %c0_37 = arith.constant 0 : index
    %34 = vector.load %arg7[%c2_34, %c0_35, %c0_36, %c0_37] : memref<3x1x64x128xbf16, #tpu.memory_space<vmem>>, vector<1x1x64x128xbf16>
    %35 = vector.shape_cast %34 : vector<1x1x64x128xbf16> to vector<64x128xbf16>
    %36 = vector.shape_cast %33 : vector<64x128xbf16> to vector<1x1x64x128xbf16>
    tpu.vector_store %arg7[%c2_34, %c0_35, %c0_36, %c0_37], %36 {strides = array<i32>} : memref<3x1x64x128xbf16, #tpu.memory_space<vmem>>, vector<1x1x64x128xbf16>,
    return
  }
  func.func @transform_0(%arg0: i32, %arg1: i32) -> (i32, i32, i32) {
    %c0_i32 = arith.constant 0 : i32
    %c0_i32_0 = arith.constant 0 : i32
    %c0_i32_1 = arith.constant 0 : i32
    return %arg0, %c0_i32, %c0_i32_0 : i32, i32, i32
  }
  func.func @transform_1(%arg0: i32, %arg1: i32) -> (i32, i32) {
    %c0_i32 = arith.constant 0 : i32
    %c0_i32_0 = arith.constant 0 : i32
    %c0_i32_1 = arith.constant 0 : i32
    return %c0_i32, %c0_i32_0 : i32, i32
  }
  func.func @transform_2(%arg0: i32, %arg1: i32) -> (i32, i32) {
    %c0_i32 = arith.constant 0 : i32
    %c0_i32_0 = arith.constant 0 : i32
    %c0_i32_1 = arith.constant 0 : i32
    return %c0_i32, %c0_i32_0 : i32, i32
  }
  func.func @transform_3(%arg0: i32, %arg1: i32) -> (i32, i32, i32, i32) {
    %c0_i32 = arith.constant 0 : i32
    %c0_i32_0 = arith.constant 0 : i32
    %c0_i32_1 = arith.constant 0 : i32
    %c0_i32_2 = arith.constant 0 : i32
    return %arg1, %c0_i32, %c0_i32_0, %c0_i32_1 : i32, i32, i32, i32
  }
  func.func @transform_4(%arg0: i32, %arg1: i32) -> (i32, i32, i32, i32) {
    %c0_i32 = arith.constant 0 : i32
    %c0_i32_0 = arith.constant 0 : i32
    %c0_i32_1 = arith.constant 0 : i32
    %c0_i32_2 = arith.constant 0 : i32
    return %arg1, %c0_i32, %c0_i32_0, %c0_i32_1 : i32, i32, i32, i32
  }
  func.func @transform_5(%arg0: i32, %arg1: i32) -> (i32, i32, i32, i32) {
    %c0_i32 = arith.constant 0 : i32
    %c0_i32_0 = arith.constant 0 : i32
    %c0_i32_1 = arith.constant 0 : i32
    return %arg1, %arg0, %c0_i32, %c0_i32_0 : i32, i32, i32, i32
  }
}

module attributes {stable_mosaic.version = 11 : i64} {
  func.func @_ln_matmul_kernel(%arg0: i32, %arg1: i32, %arg2: memref<128x256xf32, #tpu.memory_space<vmem>>, %arg3: memref<1x256xf32, #tpu.memory_space<vmem>>, %arg4: memref<1x256xf32, #tpu.memory_space<vmem>>, %arg5: memref<256x512xbf16, #tpu.memory_space<vmem>>, %arg6: memref<1x512xf32, #tpu.memory_space<vmem>>, %arg7: memref<128x512xbf16, #tpu.memory_space<vmem>>, %arg8: memref<128x256xbf16, #tpu.memory_space<vmem>>) attributes {dimension_semantics = [#tpu.dimension_semantics<parallel>, #tpu.dimension_semantics<arbitrary>], iteration_bounds = array<i64: 1, 2>, scalar_prefetch = 0 : i64, scratch_operands = 1 : i64, tpu.core_type = #tpu.core_type<tc>, window_params = [{transform_indices = @transform_0, window_bounds = array<i64: 128, 256>}, {pipeline_mode = #tpu.pipeline_mode<synchronous>, transform_indices = @transform_1, window_bounds = array<i64: 1, 256>}, {pipeline_mode = #tpu.pipeline_mode<synchronous>, transform_indices = @transform_2, window_bounds = array<i64: 1, 256>}, {transform_indices = @transform_3, window_bounds = array<i64: 256, 512>}, {transform_indices = @transform_4, window_bounds = array<i64: 1, 512>}, {transform_indices = @transform_5, window_bounds = array<i64: 128, 512>}]} {
    %c0_i32 = arith.constant 0 : i32
    %0 = arith.cmpi eq, %arg1, %c0_i32 : i32
    %1 = arith.extui %0 : i1 to i32
    %c0_i32_0 = arith.constant 0 : i32
    %2 = arith.cmpi ne, %1, %c0_i32_0 : i32
    scf.if %2 {
      %c0_12 = arith.constant 0 : index
      %c0_13 = arith.constant 0 : index
      %25 = vector.load %arg2[%c0_12, %c0_13] : memref<128x256xf32, #tpu.memory_space<vmem>>, vector<128x256xf32>
      %cst_14 = arith.constant dense<0.000000e+00> : vector<128xf32>
      %26 = vector.multi_reduction <add>, %25, %cst_14 [1] : vector<128x256xf32> to vector<128xf32>
      %27 = vector.shape_cast %26 : vector<128xf32> to vector<128x1xf32>
      %cst_15 = arith.constant 2.560000e+02 : f32
      %28 = vector.broadcast %cst_15 : f32 to vector<128x1xf32>
      %29 = arith.divf %27, %28 : vector<128x1xf32>
      %30 = vector.broadcast %29 : vector<128x1xf32> to vector<128x256xf32>
      %31 = arith.subf %25, %30 : vector<128x256xf32>
      %32 = arith.mulf %31, %31 : vector<128x256xf32>
      %cst_16 = arith.constant dense<0.000000e+00> : vector<128xf32>
      %33 = vector.multi_reduction <add>, %32, %cst_16 [1] : vector<128x256xf32> to vector<128xf32>
      %34 = vector.shape_cast %33 : vector<128xf32> to vector<128x1xf32>
      %cst_17 = arith.constant 2.560000e+02 : f32
      %35 = vector.broadcast %cst_17 : f32 to vector<128x1xf32>
      %36 = arith.divf %34, %35 : vector<128x1xf32>
      %37 = vector.broadcast %29 : vector<128x1xf32> to vector<128x256xf32>
      %38 = arith.subf %25, %37 : vector<128x256xf32>
      %cst_18 = arith.constant 9.99999974E-6 : f32
      %39 = vector.broadcast %cst_18 : f32 to vector<128x1xf32>
      %40 = arith.addf %36, %39 : vector<128x1xf32>
      %41 = math.rsqrt %40 : vector<128x1xf32>
      %42 = vector.broadcast %41 : vector<128x1xf32> to vector<128x256xf32>
      %43 = arith.mulf %38, %42 : vector<128x256xf32>
      %c0_19 = arith.constant 0 : index
      %c0_20 = arith.constant 0 : index
      %44 = vector.load %arg3[%c0_19, %c0_20] : memref<1x256xf32, #tpu.memory_space<vmem>>, vector<1x256xf32>
      %45 = vector.broadcast %44 : vector<1x256xf32> to vector<128x256xf32>
      %46 = arith.mulf %43, %45 : vector<128x256xf32>
      %c0_21 = arith.constant 0 : index
      %c0_22 = arith.constant 0 : index
      %47 = vector.load %arg4[%c0_21, %c0_22] : memref<1x256xf32, #tpu.memory_space<vmem>>, vector<1x256xf32>
      %48 = vector.broadcast %47 : vector<1x256xf32> to vector<128x256xf32>
      %49 = arith.addf %46, %48 : vector<128x256xf32>
      %50 = arith.truncf %49 : vector<128x256xf32> to vector<128x256xbf16>
      %c0_23 = arith.constant 0 : index
      %c0_24 = arith.constant 0 : index
      %51 = vector.load %arg8[%c0_23, %c0_24] : memref<128x256xbf16, #tpu.memory_space<vmem>>, vector<128x256xbf16>
      tpu.vector_store %arg8[%c0_23, %c0_24], %50 {strides = array<i32>} : memref<128x256xbf16, #tpu.memory_space<vmem>>, vector<128x256xbf16>,
    } else {
    }
    %c0 = arith.constant 0 : index
    %c0_1 = arith.constant 0 : index
    %3 = vector.load %arg8[%c0, %c0_1] : memref<128x256xbf16, #tpu.memory_space<vmem>>, vector<128x256xbf16>
    %c0_2 = arith.constant 0 : index
    %c0_3 = arith.constant 0 : index
    %4 = vector.load %arg5[%c0_2, %c0_3] : memref<256x512xbf16, #tpu.memory_space<vmem>>, vector<256x512xbf16>
    %cst = arith.constant dense<0.000000e+00> : vector<128x512xf32>
    %5 = tpu.matmul %3, %4, %cst {dimension_numbers = #tpu.dot_dimension_numbers<[1], [0], [0], [1], [0, 0, 1, 1], [], []>} : vector<128x256xbf16>, vector<256x512xbf16>, vector<128x512xf32> -> vector<128x512xf32>
    %c0_4 = arith.constant 0 : index
    %c0_5 = arith.constant 0 : index
    %6 = vector.load %arg6[%c0_4, %c0_5] : memref<1x512xf32, #tpu.memory_space<vmem>>, vector<1x512xf32>
    %7 = vector.broadcast %6 : vector<1x512xf32> to vector<128x512xf32>
    %8 = arith.addf %5, %7 : vector<128x512xf32>
    %cst_6 = arith.constant 5.000000e-01 : f32
    %9 = vector.broadcast %cst_6 : f32 to vector<128x512xf32>
    %10 = arith.mulf %9, %8 : vector<128x512xf32>
    %cst_7 = arith.constant 0.636619746 : f32
    %11 = math.sqrt %cst_7 : f32
    %12 = arith.mulf %8, %8 : vector<128x512xf32>
    %13 = arith.mulf %8, %12 : vector<128x512xf32>
    %cst_8 = arith.constant 4.471500e-02 : f32
    %14 = vector.broadcast %cst_8 : f32 to vector<128x512xf32>
    %15 = arith.mulf %14, %13 : vector<128x512xf32>
    %16 = arith.addf %8, %15 : vector<128x512xf32>
    %17 = vector.broadcast %11 : f32 to vector<128x512xf32>
    %18 = arith.mulf %17, %16 : vector<128x512xf32>
    %19 = math.tanh %18 : vector<128x512xf32>
    %cst_9 = arith.constant 1.000000e+00 : f32
    %20 = vector.broadcast %cst_9 : f32 to vector<128x512xf32>
    %21 = arith.addf %20, %19 : vector<128x512xf32>
    %22 = arith.mulf %10, %21 : vector<128x512xf32>
    %23 = arith.truncf %22 : vector<128x512xf32> to vector<128x512xbf16>
    %c0_10 = arith.constant 0 : index
    %c0_11 = arith.constant 0 : index
    %24 = vector.load %arg7[%c0_10, %c0_11] : memref<128x512xbf16, #tpu.memory_space<vmem>>, vector<128x512xbf16>
    tpu.vector_store %arg7[%c0_10, %c0_11], %23 {strides = array<i32>} : memref<128x512xbf16, #tpu.memory_space<vmem>>, vector<128x512xbf16>,
    return
  }
  func.func @transform_0(%arg0: i32, %arg1: i32) -> (i32, i32) {
    %c0_i32 = arith.constant 0 : i32
    %c0_i32_0 = arith.constant 0 : i32
    return %arg0, %c0_i32 : i32, i32
  }
  func.func @transform_1(%arg0: i32, %arg1: i32) -> (i32, i32) {
    %c0_i32 = arith.constant 0 : i32
    %c0_i32_0 = arith.constant 0 : i32
    %c0_i32_1 = arith.constant 0 : i32
    return %c0_i32, %c0_i32_0 : i32, i32
  }
  func.func @transform_2(%arg0: i32, %arg1: i32) -> (i32, i32) {
    %c0_i32 = arith.constant 0 : i32
    %c0_i32_0 = arith.constant 0 : i32
    %c0_i32_1 = arith.constant 0 : i32
    return %c0_i32, %c0_i32_0 : i32, i32
  }
  func.func @transform_3(%arg0: i32, %arg1: i32) -> (i32, i32) {
    %c0_i32 = arith.constant 0 : i32
    %c0_i32_0 = arith.constant 0 : i32
    return %c0_i32, %arg1 : i32, i32
  }
  func.func @transform_4(%arg0: i32, %arg1: i32) -> (i32, i32) {
    %c0_i32 = arith.constant 0 : i32
    %c0_i32_0 = arith.constant 0 : i32
    return %c0_i32, %arg1 : i32, i32
  }
  func.func @transform_5(%arg0: i32, %arg1: i32) -> (i32, i32) {
    %c0_i32 = arith.constant 0 : i32
    return %arg0, %arg1 : i32, i32
  }
}

module attributes {stable_mosaic.version = 11 : i64} {
  func.func @_matmul_bias_res_kernel(%arg0: i32, %arg1: i32, %arg2: i32, %arg3: memref<128x512xbf16, #tpu.memory_space<vmem>>, %arg4: memref<512x256xbf16, #tpu.memory_space<vmem>>, %arg5: memref<1x256xf32, #tpu.memory_space<vmem>>, %arg6: memref<128x256xf32, #tpu.memory_space<vmem>>, %arg7: memref<128x256xf32, #tpu.memory_space<vmem>>, %arg8: memref<128x256xf32, #tpu.memory_space<vmem>>) attributes {dimension_semantics = [#tpu.dimension_semantics<parallel>, #tpu.dimension_semantics<parallel>, #tpu.dimension_semantics<arbitrary>], iteration_bounds = array<i64: 1, 1, 2>, scalar_prefetch = 0 : i64, scratch_operands = 1 : i64, tpu.core_type = #tpu.core_type<tc>, window_params = [{transform_indices = @transform_0, window_bounds = array<i64: 128, 512>}, {transform_indices = @transform_1, window_bounds = array<i64: 512, 256>}, {transform_indices = @transform_2, window_bounds = array<i64: 1, 256>}, {transform_indices = @transform_3, window_bounds = array<i64: 128, 256>}, {transform_indices = @transform_4, window_bounds = array<i64: 128, 256>}]} {
    %c0_i32 = arith.constant 0 : i32
    %0 = arith.cmpi eq, %arg2, %c0_i32 : i32
    %1 = arith.extui %0 : i1 to i32
    %c0_i32_0 = arith.constant 0 : i32
    %2 = arith.cmpi ne, %1, %c0_i32_0 : i32
    scf.if %2 {
      %cst_9 = arith.constant 0.000000e+00 : f32
      %12 = vector.broadcast %cst_9 : f32 to vector<128x256xf32>
      %c0_10 = arith.constant 0 : index
      %c0_11 = arith.constant 0 : index
      %13 = vector.load %arg8[%c0_10, %c0_11] : memref<128x256xf32, #tpu.memory_space<vmem>>, vector<128x256xf32>
      tpu.vector_store %arg8[%c0_10, %c0_11], %12 {strides = array<i32>} : memref<128x256xf32, #tpu.memory_space<vmem>>, vector<128x256xf32>,
    } else {
    }
    %c0 = arith.constant 0 : index
    %c0_1 = arith.constant 0 : index
    %3 = vector.load %arg8[%c0, %c0_1] : memref<128x256xf32, #tpu.memory_space<vmem>>, vector<128x256xf32>
    %c0_2 = arith.constant 0 : index
    %c0_3 = arith.constant 0 : index
    %4 = vector.load %arg3[%c0_2, %c0_3] : memref<128x512xbf16, #tpu.memory_space<vmem>>, vector<128x512xbf16>
    %c0_4 = arith.constant 0 : index
    %c0_5 = arith.constant 0 : index
    %5 = vector.load %arg4[%c0_4, %c0_5] : memref<512x256xbf16, #tpu.memory_space<vmem>>, vector<512x256xbf16>
    %cst = arith.constant dense<0.000000e+00> : vector<128x256xf32>
    %6 = tpu.matmul %4, %5, %cst {dimension_numbers = #tpu.dot_dimension_numbers<[1], [0], [0], [1], [0, 0, 1, 1], [], []>} : vector<128x512xbf16>, vector<512x256xbf16>, vector<128x256xf32> -> vector<128x256xf32>
    %7 = arith.addf %3, %6 : vector<128x256xf32>
    %c0_6 = arith.constant 0 : index
    %c0_7 = arith.constant 0 : index
    %8 = vector.load %arg8[%c0_6, %c0_7] : memref<128x256xf32, #tpu.memory_space<vmem>>, vector<128x256xf32>
    tpu.vector_store %arg8[%c0_6, %c0_7], %7 {strides = array<i32>} : memref<128x256xf32, #tpu.memory_space<vmem>>, vector<128x256xf32>,
    %c1_i32 = arith.constant 1 : i32
    %9 = arith.cmpi eq, %arg2, %c1_i32 : i32
    %10 = arith.extui %9 : i1 to i32
    %c0_i32_8 = arith.constant 0 : i32
    %11 = arith.cmpi ne, %10, %c0_i32_8 : i32
    scf.if %11 {
      %c0_9 = arith.constant 0 : index
      %c0_10 = arith.constant 0 : index
      %12 = vector.load %arg8[%c0_9, %c0_10] : memref<128x256xf32, #tpu.memory_space<vmem>>, vector<128x256xf32>
      %c0_11 = arith.constant 0 : index
      %c0_12 = arith.constant 0 : index
      %13 = vector.load %arg5[%c0_11, %c0_12] : memref<1x256xf32, #tpu.memory_space<vmem>>, vector<1x256xf32>
      %14 = vector.broadcast %13 : vector<1x256xf32> to vector<128x256xf32>
      %15 = arith.addf %12, %14 : vector<128x256xf32>
      %c0_13 = arith.constant 0 : index
      %c0_14 = arith.constant 0 : index
      %16 = vector.load %arg6[%c0_13, %c0_14] : memref<128x256xf32, #tpu.memory_space<vmem>>, vector<128x256xf32>
      %17 = arith.addf %15, %16 : vector<128x256xf32>
      %c0_15 = arith.constant 0 : index
      %c0_16 = arith.constant 0 : index
      %18 = vector.load %arg7[%c0_15, %c0_16] : memref<128x256xf32, #tpu.memory_space<vmem>>, vector<128x256xf32>
      tpu.vector_store %arg7[%c0_15, %c0_16], %17 {strides = array<i32>} : memref<128x256xf32, #tpu.memory_space<vmem>>, vector<128x256xf32>,
    } else {
    }
    return
  }
  func.func @transform_0(%arg0: i32, %arg1: i32, %arg2: i32) -> (i32, i32) {
    %c0_i32 = arith.constant 0 : i32
    return %arg0, %arg2 : i32, i32
  }
  func.func @transform_1(%arg0: i32, %arg1: i32, %arg2: i32) -> (i32, i32) {
    %c0_i32 = arith.constant 0 : i32
    return %arg2, %arg1 : i32, i32
  }
  func.func @transform_2(%arg0: i32, %arg1: i32, %arg2: i32) -> (i32, i32) {
    %c0_i32 = arith.constant 0 : i32
    %c0_i32_0 = arith.constant 0 : i32
    return %c0_i32, %arg1 : i32, i32
  }
  func.func @transform_3(%arg0: i32, %arg1: i32, %arg2: i32) -> (i32, i32) {
    %c0_i32 = arith.constant 0 : i32
    return %arg0, %arg1 : i32, i32
  }
  func.func @transform_4(%arg0: i32, %arg1: i32, %arg2: i32) -> (i32, i32) {
    %c0_i32 = arith.constant 0 : i32
    return %arg0, %arg1 : i32, i32
  }
}

module attributes {stable_mosaic.version = 11 : i64} {
  func.func @_lnf_lm_head_kernel(%arg0: i32, %arg1: i32, %arg2: memref<128x256xf32, #tpu.memory_space<vmem>>, %arg3: memref<1x256xf32, #tpu.memory_space<vmem>>, %arg4: memref<1x256xf32, #tpu.memory_space<vmem>>, %arg5: memref<256x512xbf16, #tpu.memory_space<vmem>>, %arg6: memref<128x256xf32, #tpu.memory_space<vmem>>, %arg7: memref<128x512xf32, #tpu.memory_space<vmem>>, %arg8: memref<128x256xbf16, #tpu.memory_space<vmem>>) attributes {dimension_semantics = [#tpu.dimension_semantics<parallel>, #tpu.dimension_semantics<arbitrary>], iteration_bounds = array<i64: 1, 1>, scalar_prefetch = 0 : i64, scratch_operands = 1 : i64, tpu.core_type = #tpu.core_type<tc>, window_params = [{transform_indices = @transform_0, window_bounds = array<i64: 128, 256>}, {pipeline_mode = #tpu.pipeline_mode<synchronous>, transform_indices = @transform_1, window_bounds = array<i64: 1, 256>}, {pipeline_mode = #tpu.pipeline_mode<synchronous>, transform_indices = @transform_2, window_bounds = array<i64: 1, 256>}, {transform_indices = @transform_3, window_bounds = array<i64: 256, 512>}, {transform_indices = @transform_4, window_bounds = array<i64: 128, 256>}, {transform_indices = @transform_5, window_bounds = array<i64: 128, 512>}]} {
    %c0_i32 = arith.constant 0 : i32
    %0 = arith.cmpi eq, %arg1, %c0_i32 : i32
    %1 = arith.extui %0 : i1 to i32
    %c0_i32_0 = arith.constant 0 : i32
    %2 = arith.cmpi ne, %1, %c0_i32_0 : i32
    scf.if %2 {
      %c0_6 = arith.constant 0 : index
      %c0_7 = arith.constant 0 : index
      %7 = vector.load %arg2[%c0_6, %c0_7] : memref<128x256xf32, #tpu.memory_space<vmem>>, vector<128x256xf32>
      %cst_8 = arith.constant dense<0.000000e+00> : vector<128xf32>
      %8 = vector.multi_reduction <add>, %7, %cst_8 [1] : vector<128x256xf32> to vector<128xf32>
      %9 = vector.shape_cast %8 : vector<128xf32> to vector<128x1xf32>
      %cst_9 = arith.constant 2.560000e+02 : f32
      %10 = vector.broadcast %cst_9 : f32 to vector<128x1xf32>
      %11 = arith.divf %9, %10 : vector<128x1xf32>
      %12 = vector.broadcast %11 : vector<128x1xf32> to vector<128x256xf32>
      %13 = arith.subf %7, %12 : vector<128x256xf32>
      %14 = arith.mulf %13, %13 : vector<128x256xf32>
      %cst_10 = arith.constant dense<0.000000e+00> : vector<128xf32>
      %15 = vector.multi_reduction <add>, %14, %cst_10 [1] : vector<128x256xf32> to vector<128xf32>
      %16 = vector.shape_cast %15 : vector<128xf32> to vector<128x1xf32>
      %cst_11 = arith.constant 2.560000e+02 : f32
      %17 = vector.broadcast %cst_11 : f32 to vector<128x1xf32>
      %18 = arith.divf %16, %17 : vector<128x1xf32>
      %19 = vector.broadcast %11 : vector<128x1xf32> to vector<128x256xf32>
      %20 = arith.subf %7, %19 : vector<128x256xf32>
      %cst_12 = arith.constant 9.99999974E-6 : f32
      %21 = vector.broadcast %cst_12 : f32 to vector<128x1xf32>
      %22 = arith.addf %18, %21 : vector<128x1xf32>
      %23 = math.rsqrt %22 : vector<128x1xf32>
      %24 = vector.broadcast %23 : vector<128x1xf32> to vector<128x256xf32>
      %25 = arith.mulf %20, %24 : vector<128x256xf32>
      %c0_13 = arith.constant 0 : index
      %c0_14 = arith.constant 0 : index
      %26 = vector.load %arg3[%c0_13, %c0_14] : memref<1x256xf32, #tpu.memory_space<vmem>>, vector<1x256xf32>
      %27 = vector.broadcast %26 : vector<1x256xf32> to vector<128x256xf32>
      %28 = arith.mulf %25, %27 : vector<128x256xf32>
      %c0_15 = arith.constant 0 : index
      %c0_16 = arith.constant 0 : index
      %29 = vector.load %arg4[%c0_15, %c0_16] : memref<1x256xf32, #tpu.memory_space<vmem>>, vector<1x256xf32>
      %30 = vector.broadcast %29 : vector<1x256xf32> to vector<128x256xf32>
      %31 = arith.addf %28, %30 : vector<128x256xf32>
      %c0_17 = arith.constant 0 : index
      %c0_18 = arith.constant 0 : index
      %32 = vector.load %arg6[%c0_17, %c0_18] : memref<128x256xf32, #tpu.memory_space<vmem>>, vector<128x256xf32>
      tpu.vector_store %arg6[%c0_17, %c0_18], %31 {strides = array<i32>} : memref<128x256xf32, #tpu.memory_space<vmem>>, vector<128x256xf32>,
      %33 = arith.truncf %31 : vector<128x256xf32> to vector<128x256xbf16>
      %c0_19 = arith.constant 0 : index
      %c0_20 = arith.constant 0 : index
      %34 = vector.load %arg8[%c0_19, %c0_20] : memref<128x256xbf16, #tpu.memory_space<vmem>>, vector<128x256xbf16>
      tpu.vector_store %arg8[%c0_19, %c0_20], %33 {strides = array<i32>} : memref<128x256xbf16, #tpu.memory_space<vmem>>, vector<128x256xbf16>,
    } else {
    }
    %c0 = arith.constant 0 : index
    %c0_1 = arith.constant 0 : index
    %3 = vector.load %arg8[%c0, %c0_1] : memref<128x256xbf16, #tpu.memory_space<vmem>>, vector<128x256xbf16>
    %c0_2 = arith.constant 0 : index
    %c0_3 = arith.constant 0 : index
    %4 = vector.load %arg5[%c0_2, %c0_3] : memref<256x512xbf16, #tpu.memory_space<vmem>>, vector<256x512xbf16>
    %cst = arith.constant dense<0.000000e+00> : vector<128x512xf32>
    %5 = tpu.matmul %3, %4, %cst {dimension_numbers = #tpu.dot_dimension_numbers<[1], [0], [0], [1], [0, 0, 1, 1], [], []>} : vector<128x256xbf16>, vector<256x512xbf16>, vector<128x512xf32> -> vector<128x512xf32>
    %c0_4 = arith.constant 0 : index
    %c0_5 = arith.constant 0 : index
    %6 = vector.load %arg7[%c0_4, %c0_5] : memref<128x512xf32, #tpu.memory_space<vmem>>, vector<128x512xf32>
    tpu.vector_store %arg7[%c0_4, %c0_5], %5 {strides = array<i32>} : memref<128x512xf32, #tpu.memory_space<vmem>>, vector<128x512xf32>,
    return
  }
  func.func @transform_0(%arg0: i32, %arg1: i32) -> (i32, i32) {
    %c0_i32 = arith.constant 0 : i32
    %c0_i32_0 = arith.constant 0 : i32
    return %arg0, %c0_i32 : i32, i32
  }
  func.func @transform_1(%arg0: i32, %arg1: i32) -> (i32, i32) {
    %c0_i32 = arith.constant 0 : i32
    %c0_i32_0 = arith.constant 0 : i32
    %c0_i32_1 = arith.constant 0 : i32
    return %c0_i32, %c0_i32_0 : i32, i32
  }
  func.func @transform_2(%arg0: i32, %arg1: i32) -> (i32, i32) {
    %c0_i32 = arith.constant 0 : i32
    %c0_i32_0 = arith.constant 0 : i32
    %c0_i32_1 = arith.constant 0 : i32
    return %c0_i32, %c0_i32_0 : i32, i32
  }
  func.func @transform_3(%arg0: i32, %arg1: i32) -> (i32, i32) {
    %c0_i32 = arith.constant 0 : i32
    %c0_i32_0 = arith.constant 0 : i32
    return %c0_i32, %arg1 : i32, i32
  }
  func.func @transform_4(%arg0: i32, %arg1: i32) -> (i32, i32) {
    %c0_i32 = arith.constant 0 : i32
    %c0_i32_0 = arith.constant 0 : i32
    return %arg0, %c0_i32 : i32, i32
  }
  func.func @transform_5(%arg0: i32, %arg1: i32) -> (i32, i32) {
    %c0_i32 = arith.constant 0 : i32
    return %arg0, %arg1 : i32, i32
  }
}

</mosaic_0001>

<llo_original>
// kernel: policy_network_forward.10
$region0: #{policy_network_forward.10}
  #allocation0 [shape = 'u32[]', space=smem, size = 0x4, offset = 0x4, fixed_abs, tag = 'smem constant byte address 0x4 - core index']
  #allocation1 [shape = 'u32[144,128]{1,0:T(1,128)}', space=vmem, size = 0x12000, scoped, tag = 'internal scratch']
  #allocation2 [shape = 'f32[64,256]{1,0:T(8,128)}', space=vmem, size = 0x10000, scoped, tag = 'scratch operand']
  %s0 = inlined_call_operand.vmem [shape: bf16[6,2,64,128], index: 0, kind: input, shape index: {}]
  %s1 = inlined_call_operand.vmem [shape: f32[2,64,256], index: 1, kind: input, shape index: {}]
  %s2 = inlined_call_operand.vmem [shape: bf16[2,128,256], index: 2, kind: input, shape index: {}]
  %s3 = inlined_call_operand.vmem [shape: f32[1,256], index: 3, kind: input, shape index: {}]
  %s4 = inlined_call_operand.vmem [shape: f32[2,64,256], index: 4, kind: output, shape index: {}]
  %s5 = sld [smem:[#allocation0]]
  $region98: #{policy_network_forward.10} parent=0
    _
  %s7 = ssub.s32 1, %s5
  %s8 = scalar_select 0, %s7, %s5
  $region1: #{policy_network_forward.10} parent=0
    #allocation3 [shape = 'u8[98304]{0}', space=vmem, size = 0x18000, scoped, tag = 'input window, operand 0']
    loop: start=0, step=1, limit=6
    $region2: #{policy_network_forward.10} parent=1 // loop_pre_header
      _
    $region3: #{policy_network_forward.10} parent=1 // loop_header
      %s10 = sphi 0, %s14
      %p11 = scmp.ge.s32.totalorder %s10, 6
      %s17 = sphi 0, %s29
      %s18 = sphi 0, %s25
      %s19 = sphi 0, %s17
      %s20 = sphi 0, %s18
      %s21 = sphi 0, %s19
      %s22 = sphi 0, %s20
      %s34 = sphi 0, %s36
      %s37 = sphi 0, %s34
      %s38 = sphi 0, %s37
      %s54 = sphi 0, %s38
      %s60 = sphi 0, %s62
      %s63 = sphi 0, %s60
      %s64 = sphi 0, %s63
      %s80 = sphi 0, %s64
      %s86 = sphi 0, %s88
      %s89 = sphi 0, %s86
      %s90 = sphi 0, %s89
      %s106 = sphi 0, %s90
      %s110 = sphi 0, %s110
      %s112 = sphi 0, %s110
      %s113 = sphi 0, %s112
      %s127 = sphi 0, %s113
      %s133 = sphi 0, %s135
      %s136 = sphi 0, %s133
      %s137 = sphi 0, %s136
      %s153 = sphi 0, %s137
    $region4: #{policy_network_forward.10} parent=1 // loop_header_branch
      %13 = sbr.rel (%p11) target = $region8
    $region5: #{policy_network_forward.10} parent=1 // loop_body
      %s15 = ssub.s32 %s10, 1
      %s16 = ssub.s32 %s10, 2
      %s23 = sadd.s32 1, %s18
      %p24 = scmp.ge.s32.totalorder %s23, 2
      %s25 = scalar_select %p24, 0, %s23
      %s26 = sadd.s32 1, %s17
      %s27 = scalar_select %p24, %s26, %s17
      %p28 = scmp.ge.s32.totalorder %s27, 2
      %s29 = scalar_select %p28, 0, %s27
      %s30 = ssub.s32 %s18, %s25
      %s31 = ssub.s32 %s17, %s29
      %s32 = sor.u32 %s30, %s31
      %p33 = scmp.eq.s32.totalorder %s32, 0
      %s35 = sadd.s32 %s34, 1
      %s36 = scalar_select %p33, %s34, %s35
      %p39 = pneg %p33
      %p40 = scmp.eq.s32.totalorder %s10, 3
      %p41 = por %p39, %p40
      %p42 = scmp.ne.s32.totalorder %s34, %s37
      %p43 = scmp.eq.s32.totalorder %s10, 0
      %p44 = por %p42, %p43
      %p45 = scmp.ne.s32.totalorder %s34, %s37
      %p46 = scmp.eq.s32.totalorder %s15, 3
      %p47 = por %p45, %p46
      %p48 = scmp.ne.s32.totalorder %s37, %s38
      %p49 = scmp.eq.s32.totalorder %s15, 0
      %p50 = por %p48, %p49
      %p51 = scmp.ne.s32.totalorder %s37, %s38
      %p52 = scmp.eq.s32.totalorder %s16, 3
      %p53 = por %p51, %p52
      %p55 = scmp.ne.s32.totalorder %s38, %s54
      %p56 = scmp.eq.s32.totalorder %s16, 0
      %p57 = por %p55, %p56
      %s58 = ssub.s32 %s17, %s29
      %p59 = scmp.eq.s32.totalorder %s58, 0
      %s61 = sadd.s32 %s60, 1
      %s62 = scalar_select %p59, %s60, %s61
      %p65 = pneg %p59
      %p66 = scmp.eq.s32.totalorder %s10, 3
      %p67 = por %p65, %p66
      %p68 = scmp.ne.s32.totalorder %s60, %s63
      %p69 = scmp.eq.s32.totalorder %s10, 0
      %p70 = por %p68, %p69
      %p71 = scmp.ne.s32.totalorder %s60, %s63
      %p72 = scmp.eq.s32.totalorder %s15, 3
      %p73 = por %p71, %p72
      %p74 = scmp.ne.s32.totalorder %s63, %s64
      %p75 = scmp.eq.s32.totalorder %s15, 0
      %p76 = por %p74, %p75
      %p77 = scmp.ne.s32.totalorder %s63, %s64
      %p78 = scmp.eq.s32.totalorder %s16, 3
      %p79 = por %p77, %p78
      %p81 = scmp.ne.s32.totalorder %s64, %s80
      %p82 = scmp.eq.s32.totalorder %s16, 0
      %p83 = por %p81, %p82
      %s84 = ssub.s32 %s18, %s25
      %p85 = scmp.eq.s32.totalorder %s84, 0
      %s87 = sadd.s32 %s86, 1
      %s88 = scalar_select %p85, %s86, %s87
      %p91 = pneg %p85
      %p92 = scmp.eq.s32.totalorder %s10, 3
      %p93 = por %p91, %p92
      %p94 = scmp.ne.s32.totalorder %s86, %s89
      %p95 = scmp.eq.s32.totalorder %s10, 0
      %p96 = por %p94, %p95
      %p97 = scmp.ne.s32.totalorder %s86, %s89
      %p98 = scmp.eq.s32.totalorder %s15, 3
      %p99 = por %p97, %p98
      %p100 = scmp.ne.s32.totalorder %s89, %s90
      %p101 = scmp.eq.s32.totalorder %s15, 0
      %p102 = por %p100, %p101
      %p103 = scmp.ne.s32.totalorder %s89, %s90
      %p104 = scmp.eq.s32.totalorder %s16, 3
      %p105 = por %p103, %p104
      %p107 = scmp.ne.s32.totalorder %s90, %s106
      %p108 = scmp.eq.s32.totalorder %s16, 0
      %p109 = por %p107, %p108
      %s111 = sadd.s32 %s110, 1
      %p114 = scmp.eq.s32.totalorder %s10, 3
      %p115 = scmp.ne.s32.totalorder %s110, %s112
      %p116 = scmp.eq.s32.totalorder %s10, 0
      %p117 = por %p115, %p116
      %p118 = scmp.ne.s32.totalorder %s110, %s112
      %p119 = scmp.eq.s32.totalorder %s15, 3
      %p120 = por %p118, %p119
      %p121 = scmp.ne.s32.totalorder %s112, %s113
      %p122 = scmp.eq.s32.totalorder %s15, 0
      %p123 = por %p121, %p122
      %p124 = scmp.ne.s32.totalorder %s112, %s113
      %p125 = scmp.eq.s32.totalorder %s16, 3
      %p126 = por %p124, %p125
      %p128 = scmp.ne.s32.totalorder %s113, %s127
      %p129 = scmp.eq.s32.totalorder %s16, 0
      %p130 = por %p128, %p129
      %s131 = ssub.s32 %s17, %s29
      %p132 = scmp.eq.s32.totalorder %s131, 0
      %s134 = sadd.s32 %s133, 1
      %s135 = scalar_select %p132, %s133, %s134
      %p138 = pneg %p132
      %p139 = scmp.eq.s32.totalorder %s10, 3
      %p140 = por %p138, %p139
      %p141 = scmp.ne.s32.totalorder %s133, %s136
      %p142 = scmp.eq.s32.totalorder %s10, 0
      %p143 = por %p141, %p142
      %p144 = scmp.ne.s32.totalorder %s133, %s136
      %p145 = scmp.eq.s32.totalorder %s15, 3
      %p146 = por %p144, %p145
      %p147 = scmp.ne.s32.totalorder %s136, %s137
      %p148 = scmp.eq.s32.totalorder %s15, 0
      %p149 = por %p147, %p148
      %p150 = scmp.ne.s32.totalorder %s136, %s137
      %p151 = scmp.eq.s32.totalorder %s16, 3
      %p152 = por %p150, %p151
      %p154 = scmp.ne.s32.totalorder %s137, %s153
      %p155 = scmp.eq.s32.totalorder %s16, 0
      %p156 = por %p154, %p155
      %p157 = scmp.le.s32.totalorder 1, %s10
      %p158 = scmp.lt.s32.totalorder %s10, 5
      %p159 = pnand %p157, %p158
      %p160 = pneg %p159
      // Predicated region
      $region9: #{policy_network_forward.10} parent=5 // pred_check
        _
      $region10: #{policy_network_forward.10} parent=5 // pred_check_branch
        %162 = sbr.rel (%p159) target = $region12
      $region11: #{policy_network_forward.10} parent=5 // pred_region
        %s163 = ssub.s32 %s10, 1
        // Predicated region
        $region13: #{policy_network_forward.10} parent=11 // pred_check
          %p164 = pneg %p123
        $region14: #{policy_network_forward.10} parent=11 // pred_check_branch
          %166 = sbr.rel (%p164) target = $region16
        $region15: #{policy_network_forward.10} parent=11 // pred_region
          _
        $region16: #{policy_network_forward.10} parent=11 // pred_fallthru
          _
      $region12: #{policy_network_forward.10} parent=5 // pred_fallthru
        _
      %p167 = scmp.lt.s32.totalorder %s10, 4
      // Predicated region
      $region17: #{policy_network_forward.10} parent=5 // pred_check
        %p168 = pneg %p167
      $region18: #{policy_network_forward.10} parent=5 // pred_check_branch
        %170 = sbr.rel (%p168) target = $region20
      $region19: #{policy_network_forward.10} parent=5 // pred_region
        // Predicated region
        $region21: #{policy_network_forward.10} parent=19 // pred_check
          %p171 = pneg %p44
        $region22: #{policy_network_forward.10} parent=19 // pred_check_branch
          %173 = sbr.rel (%p171) target = $region24
        $region23: #{policy_network_forward.10} parent=19 // pred_region
          %s174 = sand.u32 %s34, 1
          %s175 = sand.u32 %s34, 1
          %s176 = smul.addr %s175, 96
          %s177 = scalar_lea.vmem [#allocation3], %s176
          %s178 = smul.u32 3, %s18
          %s179 = smul.addr %s17, 8
          %s180 = smul.addr %s178, 16
          %s181 = sadd.s32 %s179, %s180
          %s182 = smul.addr %s181, 4
          %s183 = scalar_lea.vmem %s0, %s182
          // Predicated region
          $region25: #{policy_network_forward.10} parent=23 // pred_check
            _
          $region26: #{policy_network_forward.10} parent=23 // pred_check_branch
            %185 = sbr.rel (0) target = $region28
          $region27: #{policy_network_forward.10} parent=23 // pred_region
            // Predicated region
            $region29: #{policy_network_forward.10} parent=27 // pred_check
              _
            $region30: #{policy_network_forward.10} parent=27 // pred_check_branch
              %187 = sbr.rel target = $region32
            $region31: #{policy_network_forward.10} parent=27 // pred_region
              // Predicated region
              $region44: #{policy_network_forward.10} parent=31 // pred_check
                _
              $region45: #{policy_network_forward.10} parent=31 // pred_check_branch
                %249 = sbr.rel (0) target = $region47
              $region46: #{policy_network_forward.10} parent=31 // pred_region
                loop: start=0, step=1, limit=1
                $region48: #{policy_network_forward.10} parent=46 // loop_pre_header
                  _
                $region49: #{policy_network_forward.10} parent=46 // loop_header
                  %s251 = sphi 0, %s255
                  %p252 = scmp.ge.s32.totalorder %s251, 1
                  %s256 = sphi %s183, %s183
                  %s257 = sphi %s177, %s177
                $region50: #{policy_network_forward.10} parent=46 // loop_header_branch
                  %254 = sbr.rel (%p252) target = $region54
                $region51: #{policy_network_forward.10} parent=46 // loop_body
                  _
                $region52: #{policy_network_forward.10} parent=46 // loop_footer
                  %s255 = sadd.s32 1, %s251
                $region53: #{policy_network_forward.10} parent=46 // loop_footer_branch
                  %250 = sbr.rel target = $region49
                $region54: #{policy_network_forward.10} parent=46 // loop_exit
                  _
                %s259 = ssub.s32 16, 1
                loop: start=0, step=1, limit=1
                $region55: #{policy_network_forward.10} parent=46 // loop_pre_header
                  _
                $region56: #{policy_network_forward.10} parent=46 // loop_header
                  %s261 = sphi 0, %s265
                  %p262 = scmp.ge.s32.totalorder %s261, 1
                  %s266 = sphi %s183, %s183
                  %s267 = sphi %s177, %s177
                $region57: #{policy_network_forward.10} parent=46 // loop_header_branch
                  %264 = sbr.rel (%p262) target = $region61
                $region58: #{policy_network_forward.10} parent=46 // loop_body
                  %v268 = vld [vmem:[%s266] sm:%s259]
                  %269 = vst [vmem:[%s267] sm:%s259] %v268
                  %v270 = vld [vmem:[%s266 + $0x4] sm:%s259]
                  %271 = vst [vmem:[%s267 + $0x4] sm:%s259] %v270
                  %v272 = vld [vmem:[%s266 + $0x8] sm:%s259]
                  %273 = vst [vmem:[%s267 + $0x8] sm:%s259] %v272
                  %v274 = vld [vmem:[%s266 + $0xc] sm:%s259]
                  %275 = vst [vmem:[%s267 + $0xc] sm:%s259] %v274
                  %v276 = vld [vmem:[%s266 + $0x10] sm:%s259]
                  %277 = vst [vmem:[%s267 + $0x10] sm:%s259] %v276
                  %v278 = vld [vmem:[%s266 + $0x14] sm:%s259]
                  %279 = vst [vmem:[%s267 + $0x14] sm:%s259] %v278
                  %v280 = vld [vmem:[%s266 + $0x18] sm:%s259]
                  %281 = vst [vmem:[%s267 + $0x18] sm:%s259] %v280
                  %v282 = vld [vmem:[%s266 + $0x1c] sm:%s259]
                  %283 = vst [vmem:[%s267 + $0x1c] sm:%s259] %v282
                  %v284 = vld [vmem:[%s266 + $0x40] sm:%s259]
                  %285 = vst [vmem:[%s267 + $0x20] sm:%s259] %v284
                  %v286 = vld [vmem:[%s266 + $0x44] sm:%s259]
                  %287 = vst [vmem:[%s267 + $0x24] sm:%s259] %v286
                  %v288 = vld [vmem:[%s266 + $0x48] sm:%s259]
                  %289 = vst [vmem:[%s267 + $0x28] sm:%s259] %v288
                  %v290 = vld [vmem:[%s266 + $0x4c] sm:%s259]
                  %291 = vst [vmem:[%s267 + $0x2c] sm:%s259] %v290
                  %v292 = vld [vmem:[%s266 + $0x50] sm:%s259]
                  %293 = vst [vmem:[%s267 + $0x30] sm:%s259] %v292
                  %v294 = vld [vmem:[%s266 + $0x54] sm:%s259]
                  %295 = vst [vmem:[%s267 + $0x34] sm:%s259] %v294
                  %v296 = vld [vmem:[%s266 + $0x58] sm:%s259]
                  %297 = vst [vmem:[%s267 + $0x38] sm:%s259] %v296
                  %v298 = vld [vmem:[%s266 + $0x5c] sm:%s259]
                  %299 = vst [vmem:[%s267 + $0x3c] sm:%s259] %v298
                  %v300 = vld [vmem:[%s266 + $0x80] sm:%s259]
                  %301 = vst [vmem:[%s267 + $0x40] sm:%s259] %v300
                  %v302 = vld [vmem:[%s266 + $0x84] sm:%s259]
                  %303 = vst [vmem:[%s267 + $0x44] sm:%s259] %v302
                  %v304 = vld [vmem:[%s266 + $0x88] sm:%s259]
                  %305 = vst [vmem:[%s267 + $0x48] sm:%s259] %v304
                  %v306 = vld [vmem:[%s266 + $0x8c] sm:%s259]
                  %307 = vst [vmem:[%s267 + $0x4c] sm:%s259] %v306
                  %v308 = vld [vmem:[%s266 + $0x90] sm:%s259]
                  %309 = vst [vmem:[%s267 + $0x50] sm:%s259] %v308
                  %v310 = vld [vmem:[%s266 + $0x94] sm:%s259]
                  %311 = vst [vmem:[%s267 + $0x54] sm:%s259] %v310
                  %v312 = vld [vmem:[%s266 + $0x98] sm:%s259]
                  %313 = vst [vmem:[%s267 + $0x58] sm:%s259] %v312
                  %v314 = vld [vmem:[%s266 + $0x9c] sm:%s259]
                  %315 = vst [vmem:[%s267 + $0x5c] sm:%s259] %v314
                $region59: #{policy_network_forward.10} parent=46 // loop_footer
                  %s265 = sadd.s32 1, %s261
                $region60: #{policy_network_forward.10} parent=46 // loop_footer_branch
                  %260 = sbr.rel target = $region56
                $region61: #{policy_network_forward.10} parent=46 // loop_exit
                  _
              $region47: #{policy_network_forward.10} parent=31 // pred_fallthru
                _
            $region32: #{policy_network_forward.10} parent=27 // pred_fallthru
              _
            // Predicated region
            $region33: #{policy_network_forward.10} parent=27 // pred_check
              _
            $region34: #{policy_network_forward.10} parent=27 // pred_check_branch
              %189 = sbr.rel (0) target = $region36
            $region35: #{policy_network_forward.10} parent=27 // pred_region
              %s191 = ssub.s32 16, 1
              loop: start=0, step=1, limit=1
              $region37: #{policy_network_forward.10} parent=35 // loop_pre_header
                _
              $region38: #{policy_network_forward.10} parent=35 // loop_header
                %s193 = sphi 0, %s197
                %p194 = scmp.ge.s32.totalorder %s193, 1
                %s198 = sphi %s183, %s183
                %s199 = sphi %s177, %s177
              $region39: #{policy_network_forward.10} parent=35 // loop_header_branch
                %196 = sbr.rel (%p194) target = $region43
              $region40: #{policy_network_forward.10} parent=35 // loop_body
                %v200 = vld [vmem:[%s198] sm:%s191]
                %201 = vst [vmem:[%s199] sm:%s191] %v200
                %v202 = vld [vmem:[%s198 + $0x4] sm:%s191]
                %203 = vst [vmem:[%s199 + $0x4] sm:%s191] %v202
                %v204 = vld [vmem:[%s198 + $0x8] sm:%s191]
                %205 = vst [vmem:[%s199 + $0x8] sm:%s191] %v204
                %v206 = vld [vmem:[%s198 + $0xc] sm:%s191]
                %207 = vst [vmem:[%s199 + $0xc] sm:%s191] %v206
                %v208 = vld [vmem:[%s198 + $0x10] sm:%s191]
                %209 = vst [vmem:[%s199 + $0x10] sm:%s191] %v208
                %v210 = vld [vmem:[%s198 + $0x14] sm:%s191]
                %211 = vst [vmem:[%s199 + $0x14] sm:%s191] %v210
                %v212 = vld [vmem:[%s198 + $0x18] sm:%s191]
                %213 = vst [vmem:[%s199 + $0x18] sm:%s191] %v212
                %v214 = vld [vmem:[%s198 + $0x1c] sm:%s191]
                %215 = vst [vmem:[%s199 + $0x1c] sm:%s191] %v214
                %v216 = vld [vmem:[%s198 + $0x40] sm:%s191]
                %217 = vst [vmem:[%s199 + $0x20] sm:%s191] %v216
                %v218 = vld [vmem:[%s198 + $0x44] sm:%s191]
                %219 = vst [vmem:[%s199 + $0x24] sm:%s191] %v218
                %v220 = vld [vmem:[%s198 + $0x48] sm:%s191]
                %221 = vst [vmem:[%s199 + $0x28] sm:%s191] %v220
                %v222 = vld [vmem:[%s198 + $0x4c] sm:%s191]
                %223 = vst [vmem:[%s199 + $0x2c] sm:%s191] %v222
                %v224 = vld [vmem:[%s198 + $0x50] sm:%s191]
                %225 = vst [vmem:[%s199 + $0x30] sm:%s191] %v224
                %v226 = vld [vmem:[%s198 + $0x54] sm:%s191]
                %227 = vst [vmem:[%s199 + $0x34] sm:%s191] %v226
                %v228 = vld [vmem:[%s198 + $0x58] sm:%s191]
                %229 = vst [vmem:[%s199 + $0x38] sm:%s191] %v228
                %v230 = vld [vmem:[%s198 + $0x5c] sm:%s191]
                %231 = vst [vmem:[%s199 + $0x3c] sm:%s191] %v230
                %v232 = vld [vmem:[%s198 + $0x80] sm:%s191]
                %233 = vst [vmem:[%s199 + $0x40] sm:%s191] %v232
                %v234 = vld [vmem:[%s198 + $0x84] sm:%s191]
                %235 = vst [vmem:[%s199 + $0x44] sm:%s191] %v234
                %v236 = vld [vmem:[%s198 + $0x88] sm:%s191]
                %237 = vst [vmem:[%s199 + $0x48] sm:%s191] %v236
                %v238 = vld [vmem:[%s198 + $0x8c] sm:%s191]
                %239 = vst [vmem:[%s199 + $0x4c] sm:%s191] %v238
                %v240 = vld [vmem:[%s198 + $0x90] sm:%s191]
                %241 = vst [vmem:[%s199 + $0x50] sm:%s191] %v240
                %v242 = vld [vmem:[%s198 + $0x94] sm:%s191]
                %243 = vst [vmem:[%s199 + $0x54] sm:%s191] %v242
                %v244 = vld [vmem:[%s198 + $0x98] sm:%s191]
                %245 = vst [vmem:[%s199 + $0x58] sm:%s191] %v244
                %v246 = vld [vmem:[%s198 + $0x9c] sm:%s191]
                %247 = vst [vmem:[%s199 + $0x5c] sm:%s191] %v246
              $region41: #{policy_network_forward.10} parent=35 // loop_footer
                %s197 = sadd.s32 1, %s193
              $region42: #{policy_network_forward.10} parent=35 // loop_footer_branch
                %192 = sbr.rel target = $region38
              $region43: #{policy_network_forward.10} parent=35 // loop_exit
                _
            $region36: #{policy_network_forward.10} parent=27 // pred_fallthru
              _
          $region28: #{policy_network_forward.10} parent=23 // pred_fallthru
            _
          %316 = vnop
        $region24: #{policy_network_forward.10} parent=19 // pred_fallthru
          _
        // Predicated region
        $region62: #{policy_network_forward.10} parent=19 // pred_check
          %p317 = pneg %p70
        $region63: #{policy_network_forward.10} parent=19 // pred_check_branch
          %319 = sbr.rel (%p317) target = $region65
        $region64: #{policy_network_forward.10} parent=19 // pred_region
          %p320 = scmp.lt.s32.totalorder %s17, 1
          %s321 = scalar_select %p320, %s17, 1
          %s322 = smul.addr %s321, 16
          %s323 = smul.addr %s322, 8
          %s324 = scalar_lea.vmem %s1, %s323
        $region65: #{policy_network_forward.10} parent=19 // pred_fallthru
          _
        // Predicated region
        $region66: #{policy_network_forward.10} parent=19 // pred_check
          %p325 = pneg %p96
        $region67: #{policy_network_forward.10} parent=19 // pred_check_branch
          %327 = sbr.rel (%p325) target = $region69
        $region68: #{policy_network_forward.10} parent=19 // pred_region
          %p328 = scmp.lt.s32.totalorder %s18, 1
          %s329 = scalar_select %p328, %s18, 1
          %s330 = smul.addr %s329, 32
          %s331 = smul.addr %s330, 4
          %s332 = scalar_lea.vmem %s2, %s331
        $region69: #{policy_network_forward.10} parent=19 // pred_fallthru
          _
      $region20: #{policy_network_forward.10} parent=5 // pred_fallthru
        _
      %p333 = scmp.le.s32.totalorder 1, %s10
      %p334 = scmp.lt.s32.totalorder %s10, 5
      %p335 = pnand %p333, %p334
      %p336 = pneg %p335
      // Predicated region
      $region70: #{policy_network_forward.10} parent=5 // pred_check
        _
      $region71: #{policy_network_forward.10} parent=5 // pred_check_branch
        %338 = sbr.rel (%p335) target = $region73
      $region72: #{policy_network_forward.10} parent=5 // pred_region
        %s339 = ssub.s32 %s10, 1
        %s340 = sand.u32 %s37, 1
        %s341 = sand.u32 %s37, 1
        %s342 = smul.addr %s341, 96
        %s343 = scalar_lea.vmem [#allocation3], %s342
        // Predicated region
        $region74: #{policy_network_forward.10} parent=72 // pred_check
          %p344 = pneg %p50
        $region75: #{policy_network_forward.10} parent=72 // pred_check_branch
          %346 = sbr.rel (%p344) target = $region77
        $region76: #{policy_network_forward.10} parent=72 // pred_region
          _
        $region77: #{policy_network_forward.10} parent=72 // pred_fallthru
          _
        %s347 = sand.u32 %s37, 1
        %s348 = sand.u32 %s37, 1
        %s349 = smul.addr %s348, 96
        %s350 = scalar_lea.vmem [#allocation3], %s349
        %p351 = pneg %p50
        %p352 = pneg %p47
        %p353 = scmp.lt.s32.totalorder %s19, 1
        %s354 = scalar_select %p353, %s19, 1
        %s355 = smul.addr %s354, 16
        %s356 = smul.addr %s355, 8
        %s357 = scalar_lea.vmem %s1, %s356
        %p358 = pneg %p76
        %p359 = pneg %p73
        %p360 = scmp.lt.s32.totalorder %s20, 1
        %s361 = scalar_select %p360, %s20, 1
        %s362 = smul.addr %s361, 32
        %s363 = smul.addr %s362, 4
        %s364 = scalar_lea.vmem %s2, %s363
        %p365 = pneg %p102
        %p366 = pneg %p99
        %p367 = pneg %p123
        %p368 = pneg %p120
        %p369 = pneg %p149
        %p370 = pneg %p146
        %p371 = scmp.lt.s32.totalorder %s19, 1
        %s372 = scalar_select %p371, %s19, 1
        %s373 = smul.addr %s372, 16
        %s374 = smul.addr %s373, 8
        %s375 = scalar_lea.vmem %s4, %s374
        %s376 = smul.u32 3, %s20
        %p377 = scmp.lt.s32.totalorder %s19, 1
        %s378 = scalar_select %p377, %s19, 1
        %s379 = smul.addr %s378, 16
        %s380 = smul.addr %s379, 8
        %s381 = scalar_lea.vmem %s1, %s380
        %p382 = scmp.lt.s32.totalorder %s20, 1
        %s383 = scalar_select %p382, %s20, 1
        %s384 = smul.addr %s383, 32
        %s385 = smul.addr %s384, 4
        %s386 = scalar_lea.vmem %s2, %s385
        %p387 = scmp.lt.s32.totalorder %s19, 1
        %s388 = scalar_select %p387, %s19, 1
        %s389 = smul.addr %s388, 16
        %s390 = smul.addr %s389, 8
        %s391 = scalar_lea.vmem %s4, %s390
        %p393 = scmp.eq.s32.totalorder %s20, 0
        // Predicated region
        $region78: #{policy_network_forward.10} parent=72 // pred_check
          %p394 = pneg %p393
        $region79: #{policy_network_forward.10} parent=72 // pred_check_branch
          %396 = sbr.rel (%p394) target = $region81
        $region80: #{policy_network_forward.10} parent=72 // pred_region
          %397 = vst [vmem:[#allocation2] sm:$0xff] 0.0
          %398 = vst [vmem:[#allocation2 + $0x8] sm:$0xff] 0.0
          %399 = vst [vmem:[#allocation2 + $0x10] sm:$0xff] 0.0
          %400 = vst [vmem:[#allocation2 + $0x18] sm:$0xff] 0.0
          %401 = vst [vmem:[#allocation2 + $0x20] sm:$0xff] 0.0
          %402 = vst [vmem:[#allocation2 + $0x28] sm:$0xff] 0.0
          %403 = vst [vmem:[#allocation2 + $0x30] sm:$0xff] 0.0
          %404 = vst [vmem:[#allocation2 + $0x38] sm:$0xff] 0.0
          %405 = vst [vmem:[#allocation2 + $0x40] sm:$0xff] 0.0
          %406 = vst [vmem:[#allocation2 + $0x48] sm:$0xff] 0.0
          %407 = vst [vmem:[#allocation2 + $0x50] sm:$0xff] 0.0
          %408 = vst [vmem:[#allocation2 + $0x58] sm:$0xff] 0.0
          %409 = vst [vmem:[#allocation2 + $0x60] sm:$0xff] 0.0
          %410 = vst [vmem:[#allocation2 + $0x68] sm:$0xff] 0.0
          %411 = vst [vmem:[#allocation2 + $0x70] sm:$0xff] 0.0
          %412 = vst [vmem:[#allocation2 + $0x78] sm:$0xff] 0.0
        $region81: #{policy_network_forward.10} parent=72 // pred_fallthru
          _
        %v413 = vld [vmem:[%s343] sm:$0xf]
        %v414 = vld [vmem:[%s343 + $0x4] sm:$0xf]
        %v415 = vld [vmem:[%s343 + $0x8] sm:$0xf]
        %v416 = vld [vmem:[%s343 + $0xc] sm:$0xf]
        %v417 = vld [vmem:[%s343 + $0x10] sm:$0xf]
        %v418 = vld [vmem:[%s343 + $0x14] sm:$0xf]
        %v419 = vld [vmem:[%s343 + $0x18] sm:$0xf]
        %v420 = vld [vmem:[%s343 + $0x1c] sm:$0xf]
        %v421 = vunpack.c.l.bf16 %v413
        %v422 = vunpack.c.l.bf16 %v414
        %v423 = vunpack.c.l.bf16 %v415
        %v424 = vunpack.c.l.bf16 %v416
        %v425 = vunpack.c.l.bf16 %v417
        %v426 = vunpack.c.l.bf16 %v418
        %v427 = vunpack.c.l.bf16 %v419
        %v428 = vunpack.c.l.bf16 %v420
        %v429 = vmul.f32 %v421, 0.088388346
        %v430 = vmul.f32 %v422, 0.088388346
        %v431 = vmul.f32 %v423, 0.088388346
        %v432 = vmul.f32 %v424, 0.088388346
        %v433 = vmul.f32 %v425, 0.088388346
        %v434 = vmul.f32 %v426, 0.088388346
        %v435 = vmul.f32 %v427, 0.088388346
        %v436 = vmul.f32 %v428, 0.088388346
        %v437 = vpack.c.bf16 %v430, %v429
        %v438 = vpack.c.bf16 %v432, %v431
        %v439 = vpack.c.bf16 %v434, %v433
        %v440 = vpack.c.bf16 %v436, %v435
        %s441 = scalar_lea.vmem %s343, 32 [#allocation3]
        %v442 = vld [vmem:[%s441] sm:$0xf]
        %v443 = vld [vmem:[%s441 + $0x4] sm:$0xf]
        %v444 = vld [vmem:[%s441 + $0x8] sm:$0xf]
        %v445 = vld [vmem:[%s441 + $0xc] sm:$0xf]
        %v446 = vld [vmem:[%s441 + $0x10] sm:$0xf]
        %v447 = vld [vmem:[%s441 + $0x14] sm:$0xf]
        %v448 = vld [vmem:[%s441 + $0x18] sm:$0xf]
        %v449 = vld [vmem:[%s441 + $0x1c] sm:$0xf]
        %s450 = scalar_lea.vmem %s343, 64 [#allocation3]
        %v451 = vld [vmem:[%s450] sm:$0xf]
        %v452 = vld [vmem:[%s450 + $0x4] sm:$0xf]
        %v453 = vld [vmem:[%s450 + $0x8] sm:$0xf]
        %v454 = vld [vmem:[%s450 + $0xc] sm:$0xf]
        %v455 = vld [vmem:[%s450 + $0x10] sm:$0xf]
        %v456 = vld [vmem:[%s450 + $0x14] sm:$0xf]
        %v457 = vld [vmem:[%s450 + $0x18] sm:$0xf]
        %v458 = vld [vmem:[%s450 + $0x1c] sm:$0xf]
        %v467 = vunpack.c.l.b16 %v442
        %v468 = vunpack.c.l.b16 %v443
        %v469 = vunpack.c.l.b16 %v444
        %v470 = vunpack.c.l.b16 %v445
        %v471 = vunpack.c.l.b16 %v446
        %v472 = vunpack.c.l.b16 %v447
        %v473 = vunpack.c.l.b16 %v448
        %v474 = vunpack.c.l.b16 %v449
        %v475 = vpack.c.b16 %v468, %v467
        %v476 = vpack.c.b16 %v470, %v469
        %v477 = vpack.c.b16 %v472, %v471
        %v478 = vpack.c.b16 %v474, %v473
        %483 = vmatprep.subr.bf16.mxu0 0
        %484 = vmatpush1.bf16.xpose.msra.mxu0 0
        %485 = vmatprep.subr.bf16.mxu0 0
        %486 = vmatpush1.bf16.xpose.msra.mxu0 0
        %487 = vmatprep.subr.bf16.mxu0 0
        %488 = vmatpush1.bf16.xpose.msra.mxu0 0
        %489 = vmatprep.subr.bf16.mxu0 0
        %490 = vmatpush1.bf16.xpose.msra.mxu0 0
        %491 = vmatprep.subr.bf16.mxu0 0
        %492 = vmatpush1.bf16.xpose.msra.mxu0 %v478
        %493 = vmatprep.subr.bf16.mxu0 0
        %494 = vmatpush1.bf16.xpose.msra.mxu0 %v477
        %495 = vmatprep.subr.bf16.mxu0 0
        %496 = vmatpush1.bf16.xpose.msra.mxu0 %v476
        %497 = vmatprep.subr.bf16.mxu0 0
        %498 = vmatpush1.bf16.xpose.msra.mxu0 %v475
        %499 = vmatprep.subr.bf16.mxu0 0
        %500 = vmatpush2.bf16.xpose.msra.mxu0 0
        %501 = vmatprep.subr.bf16.mxu0 0
        %502 = vmatpush2.bf16.xpose.msra.mxu0 0
        %503 = vmatprep.subr.bf16.mxu0 0
        %504 = vmatpush2.bf16.xpose.msra.mxu0 0
        %505 = vmatprep.subr.bf16.mxu0 0
        %506 = vmatpush2.bf16.xpose.msra.mxu0 0
        %507 = vmatprep.subr.bf16.mxu0 0
        %508 = vmatpush2.bf16.xpose.msra.mxu0 0
        %509 = vmatprep.subr.bf16.mxu0 0
        %510 = vmatpush2.bf16.xpose.msra.mxu0 0
        %511 = vmatprep.subr.bf16.mxu0 0
        %512 = vmatpush2.bf16.xpose.msra.mxu0 0
        %513 = vmatprep.subr.bf16.mxu0 0
        %514 = vmatpush2.bf16.xpose.msra.mxu0 0
        %515 = vmatprep.mubr.bf16.mxu0 0
        %516 = vmatmul.mubr.bf16.gmra.mxu0 %v437
        %v517 = vpop.f32.mrf.mxu0
        %v518 = vadd.f32 0.0, %v517
        %v519 = vpop.f32.mrf.mxu0
        %v520 = vpop.f32.mrf.mxu0
        %v521 = vadd.f32 0.0, %v520
        %v522 = vpop.f32.mrf.mxu0
        %523 = vmatprep.mubr.bf16.mxu0 0
        %524 = vmatmul.mubr.bf16.gmra.mxu0 %v438
        %v525 = vpop.f32.mrf.mxu0
        %v526 = vadd.f32 0.0, %v525
        %v527 = vpop.f32.mrf.mxu0
        %v528 = vpop.f32.mrf.mxu0
        %v529 = vadd.f32 0.0, %v528
        %v530 = vpop.f32.mrf.mxu0
        %531 = vmatprep.mubr.bf16.mxu0 0
        %532 = vmatmul.mubr.bf16.gmra.mxu0 %v439
        %v533 = vpop.f32.mrf.mxu0
        %v534 = vadd.f32 0.0, %v533
        %v535 = vpop.f32.mrf.mxu0
        %v536 = vpop.f32.mrf.mxu0
        %v537 = vadd.f32 0.0, %v536
        %v538 = vpop.f32.mrf.mxu0
        %539 = vmatprep.mubr.bf16.mxu0 0
        %540 = vmatmul.mubr.bf16.gmra.mxu0 %v440
        %v541 = vpop.f32.mrf.mxu0
        %v542 = vadd.f32 0.0, %v541
        %v543 = vpop.f32.mrf.mxu0
        %v544 = vpop.f32.mrf.mxu0
        %v545 = vadd.f32 0.0, %v544
        %v546 = vpop.f32.mrf.mxu0
        %547 = vdwg.mxu0
        %v548 = vlaneseq
        %v549 = vshrl.u32 %v548, 7
        %v550 = vadd.s32 %v549, 8
        %v551 = vadd.s32 %v549, 16
        %v552 = vadd.s32 %v549, 24
        %v553 = vadd.s32 %v549, 32
        %v554 = vadd.s32 %v549, 40
        %v555 = vadd.s32 %v549, 48
        %v556 = vadd.s32 %v549, 56
        %v557 = vlaneseq
        %v558 = vand.u32 %v557, 127
        %vm559 = vcmp.le.s32.totalorder %v558, %v549
        %vm560 = vcmp.le.s32.totalorder %v558, %v550
        %vm561 = vcmp.le.s32.totalorder %v558, %v551
        %vm562 = vcmp.le.s32.totalorder %v558, %v552
        %vm563 = vcmp.le.s32.totalorder %v558, %v553
        %vm564 = vcmp.le.s32.totalorder %v558, %v554
        %vm565 = vcmp.le.s32.totalorder %v558, %v555
        %vm566 = vcmp.le.s32.totalorder %v558, %v556
        %v567 = vsel %vm559, %v518, -1e+30
        %v568 = vsel %vm560, %v521, -1e+30
        %v569 = vsel %vm561, %v526, -1e+30
        %v570 = vsel %vm562, %v529, -1e+30
        %v571 = vsel %vm563, %v534, -1e+30
        %v572 = vsel %vm564, %v537, -1e+30
        %v573 = vsel %vm565, %v542, -1e+30
        %v574 = vsel %vm566, %v545, -1e+30
        %vm575 = vcmask 523264
        %v576 = vsel %vm575, %v567, -inf
        %577 = vmax.xlane.f32.xlu0 %v576
        %v578 = vpop.xlane.xlu0 %577
        %v579 = vsel %vm575, %v568, -inf
        %580 = vmax.xlane.f32.xlu0 %v579
        %v581 = vpop.xlane.xlu0 %580
        %v582 = vsel %vm575, %v569, -inf
        %583 = vmax.xlane.f32.xlu0 %v582
        %v584 = vpop.xlane.xlu0 %583
        %v585 = vsel %vm575, %v570, -inf
        %586 = vmax.xlane.f32.xlu0 %v585
        %v587 = vpop.xlane.xlu0 %586
        %v588 = vsel %vm575, %v571, -inf
        %589 = vmax.xlane.f32.xlu0 %v588
        %v590 = vpop.xlane.xlu0 %589
        %v591 = vsel %vm575, %v572, -inf
        %592 = vmax.xlane.f32.xlu0 %v591
        %v593 = vpop.xlane.xlu0 %592
        %v594 = vsel %vm575, %v573, -inf
        %595 = vmax.xlane.f32.xlu0 %v594
        %v596 = vpop.xlane.xlu0 %595
        %v597 = vsel %vm575, %v574, -inf
        %598 = vmax.xlane.f32.xlu0 %v597
        %v599 = vpop.xlane.xlu0 %598
        %v600 = vsub.f32 %v567, %v578
        %v601 = vsub.f32 %v568, %v581
        %v602 = vsub.f32 %v569, %v584
        %v603 = vsub.f32 %v570, %v587
        %v604 = vsub.f32 %v571, %v590
        %v605 = vsub.f32 %v572, %v593
        %v606 = vsub.f32 %v573, %v596
        %v607 = vsub.f32 %v574, %v599
        %v608 = vmul.f32 %v600, 1.442695
        %v609 = vpow.pop %v608
        %v610 = vmul.f32 %v601, 1.442695
        %v611 = vpow.pop %v610
        %v612 = vmul.f32 %v602, 1.442695
        %v613 = vpow.pop %v612
        %v614 = vmul.f32 %v603, 1.442695
        %v615 = vpow.pop %v614
        %v616 = vmul.f32 %v604, 1.442695
        %v617 = vpow.pop %v616
        %v618 = vmul.f32 %v605, 1.442695
        %v619 = vpow.pop %v618
        %v620 = vmul.f32 %v606, 1.442695
        %v621 = vpow.pop %v620
        %v622 = vmul.f32 %v607, 1.442695
        %v623 = vpow.pop %v622
        %v624 = vsel %vm575, %v609, 0.0
        %625 = vadd.xlane.f32.xlu0 %v624
        %v626 = vpop.xlane.xlu0 %625
        %v627 = vsel %vm575, %v611, 0.0
        %628 = vadd.xlane.f32.xlu0 %v627
        %v629 = vpop.xlane.xlu0 %628
        %v630 = vsel %vm575, %v613, 0.0
        %631 = vadd.xlane.f32.xlu0 %v630
        %v632 = vpop.xlane.xlu0 %631
        %v633 = vsel %vm575, %v615, 0.0
        %634 = vadd.xlane.f32.xlu0 %v633
        %v635 = vpop.xlane.xlu0 %634
        %v636 = vsel %vm575, %v617, 0.0
        %637 = vadd.xlane.f32.xlu0 %v636
        %v638 = vpop.xlane.xlu0 %637
        %v639 = vsel %vm575, %v619, 0.0
        %640 = vadd.xlane.f32.xlu0 %v639
        %v641 = vpop.xlane.xlu0 %640
        %v642 = vsel %vm575, %v621, 0.0
        %643 = vadd.xlane.f32.xlu0 %v642
        %v644 = vpop.xlane.xlu0 %643
        %v645 = vsel %vm575, %v623, 0.0
        %646 = vadd.xlane.f32.xlu0 %v645
        %v647 = vpop.xlane.xlu0 %646
        %v648 = vrcp.pop %v626
        %v649 = vrcp.pop %v629
        %v650 = vrcp.pop %v632
        %v651 = vrcp.pop %v635
        %v652 = vrcp.pop %v638
        %v653 = vrcp.pop %v641
        %v654 = vrcp.pop %v644
        %v655 = vrcp.pop %v647
        %v656 = vmul.f32 %v609, %v648
        %v657 = vmul.f32 %v611, %v649
        %v658 = vmul.f32 %v613, %v650
        %v659 = vmul.f32 %v615, %v651
        %v660 = vmul.f32 %v617, %v652
        %v661 = vmul.f32 %v619, %v653
        %v662 = vmul.f32 %v621, %v654
        %v663 = vmul.f32 %v623, %v655
        %v664 = vpack.c.bf16 %v657, %v656
        %v665 = vpack.c.bf16 %v659, %v658
        %v666 = vpack.c.bf16 %v661, %v660
        %v667 = vpack.c.bf16 %v663, %v662
        %v676 = vunpack.c.l.b16 %v451
        %v677 = vunpack.c.l.b16 %v452
        %v678 = vunpack.c.l.b16 %v453
        %v679 = vunpack.c.l.b16 %v454
        %v680 = vunpack.c.l.b16 %v455
        %v681 = vunpack.c.l.b16 %v456
        %v682 = vunpack.c.l.b16 %v457
        %v683 = vunpack.c.l.b16 %v458
        %v684 = vpack.c.b16 %v677, %v676
        %v685 = vpack.c.b16 %v679, %v678
        %v686 = vpack.c.b16 %v681, %v680
        %v687 = vpack.c.b16 %v683, %v682
        %v693 = vsel %vm575, %v664, 0
        %v696 = vsel %vm575, %v665, 0
        %v699 = vsel %vm575, %v666, 0
        %v702 = vsel %vm575, %v667, 0
        %704 = vmatprep.subr.bf16.mxu0 0
        %705 = vmatpush1.bf16.msra.mxu0 0
        %706 = vmatprep.subr.bf16.mxu0 0
        %707 = vmatpush1.bf16.msra.mxu0 0
        %708 = vmatprep.subr.bf16.mxu0 0
        %709 = vmatpush1.bf16.msra.mxu0 0
        %710 = vmatprep.subr.bf16.mxu0 0
        %711 = vmatpush1.bf16.msra.mxu0 0
        %712 = vmatprep.subr.bf16.mxu0 0
        %713 = vmatpush1.bf16.msra.mxu0 %v687
        %714 = vmatprep.subr.bf16.mxu0 0
        %715 = vmatpush1.bf16.msra.mxu0 %v686
        %716 = vmatprep.subr.bf16.mxu0 0
        %717 = vmatpush1.bf16.msra.mxu0 %v685
        %718 = vmatprep.subr.bf16.mxu0 0
        %719 = vmatpush1.bf16.msra.mxu0 %v684
        %720 = vmatprep.subr.bf16.mxu0 0
        %721 = vmatpush2.bf16.msra.mxu0 0
        %722 = vmatprep.subr.bf16.mxu0 0
        %723 = vmatpush2.bf16.msra.mxu0 0
        %724 = vmatprep.subr.bf16.mxu0 0
        %725 = vmatpush2.bf16.msra.mxu0 0
        %726 = vmatprep.subr.bf16.mxu0 0
        %727 = vmatpush2.bf16.msra.mxu0 0
        %728 = vmatprep.subr.bf16.mxu0 0
        %729 = vmatpush2.bf16.msra.mxu0 0
        %730 = vmatprep.subr.bf16.mxu0 0
        %731 = vmatpush2.bf16.msra.mxu0 0
        %732 = vmatprep.subr.bf16.mxu0 0
        %733 = vmatpush2.bf16.msra.mxu0 0
        %734 = vmatprep.subr.bf16.mxu0 0
        %735 = vmatpush2.bf16.msra.mxu0 0
        %736 = vmatprep.mubr.bf16.mxu0 0
        %737 = vmatmul.mubr.bf16.gmra.mxu0 %v693
        %v738 = vpop.f32.mrf.mxu0
        %v739 = vadd.f32 0.0, %v738
        %v740 = vpop.f32.mrf.mxu0
        %v741 = vpop.f32.mrf.mxu0
        %v742 = vadd.f32 0.0, %v741
        %v743 = vpop.f32.mrf.mxu0
        %744 = vmatprep.mubr.bf16.mxu0 0
        %745 = vmatmul.mubr.bf16.gmra.mxu0 %v696
        %v746 = vpop.f32.mrf.mxu0
        %v747 = vadd.f32 0.0, %v746
        %v748 = vpop.f32.mrf.mxu0
        %v749 = vpop.f32.mrf.mxu0
        %v750 = vadd.f32 0.0, %v749
        %v751 = vpop.f32.mrf.mxu0
        %752 = vmatprep.mubr.bf16.mxu0 0
        %753 = vmatmul.mubr.bf16.gmra.mxu0 %v699
        %v754 = vpop.f32.mrf.mxu0
        %v755 = vadd.f32 0.0, %v754
        %v756 = vpop.f32.mrf.mxu0
        %v757 = vpop.f32.mrf.mxu0
        %v758 = vadd.f32 0.0, %v757
        %v759 = vpop.f32.mrf.mxu0
        %760 = vmatprep.mubr.bf16.mxu0 0
        %761 = vmatmul.mubr.bf16.gmra.mxu0 %v702
        %v762 = vpop.f32.mrf.mxu0
        %v763 = vadd.f32 0.0, %v762
        %v764 = vpop.f32.mrf.mxu0
        %v765 = vpop.f32.mrf.mxu0
        %v766 = vadd.f32 0.0, %v765
        %v767 = vpop.f32.mrf.mxu0
        %768 = vdwg.mxu0
        %v769 = vld [vmem:[#allocation2] sm:$0xff]
        %v770 = vld [vmem:[#allocation2 + $0x8] sm:$0xff]
        %v771 = vld [vmem:[#allocation2 + $0x10] sm:$0xff]
        %v772 = vld [vmem:[#allocation2 + $0x18] sm:$0xff]
        %v773 = vld [vmem:[#allocation2 + $0x20] sm:$0xff]
        %v774 = vld [vmem:[#allocation2 + $0x28] sm:$0xff]
        %v775 = vld [vmem:[#allocation2 + $0x30] sm:$0xff]
        %v776 = vld [vmem:[#allocation2 + $0x38] sm:$0xff]
        %v777 = vld [vmem:[#allocation2 + $0x40] sm:$0xff]
        %v778 = vld [vmem:[#allocation2 + $0x48] sm:$0xff]
        %v779 = vld [vmem:[#allocation2 + $0x50] sm:$0xff]
        %v780 = vld [vmem:[#allocation2 + $0x58] sm:$0xff]
        %v781 = vld [vmem:[#allocation2 + $0x60] sm:$0xff]
        %v782 = vld [vmem:[#allocation2 + $0x68] sm:$0xff]
        %v783 = vld [vmem:[#allocation2 + $0x70] sm:$0xff]
        %v784 = vld [vmem:[#allocation2 + $0x78] sm:$0xff]
        %v785 = vpack.c.bf16 %v742, %v739
        %v786 = vpack.c.bf16 %v750, %v747
        %v787 = vpack.c.bf16 %v758, %v755
        %v788 = vpack.c.bf16 %v766, %v763
        %v789 = vld [vmem:[%s386] sm:$0xff]
        %v790 = vld [vmem:[%s386 + $0x8] sm:$0xff]
        %v791 = vld [vmem:[%s386 + $0x10] sm:$0xff]
        %v792 = vld [vmem:[%s386 + $0x18] sm:$0xff]
        %v793 = vld [vmem:[%s386 + $0x20] sm:$0xff]
        %v794 = vld [vmem:[%s386 + $0x28] sm:$0xff]
        %v795 = vld [vmem:[%s386 + $0x30] sm:$0xff]
        %v796 = vld [vmem:[%s386 + $0x38] sm:$0xff]
        %v797 = vld [vmem:[%s386 + $0x40] sm:$0xff]
        %v798 = vld [vmem:[%s386 + $0x48] sm:$0xff]
        %v799 = vld [vmem:[%s386 + $0x50] sm:$0xff]
        %v800 = vld [vmem:[%s386 + $0x58] sm:$0xff]
        %v801 = vld [vmem:[%s386 + $0x60] sm:$0xff]
        %v802 = vld [vmem:[%s386 + $0x68] sm:$0xff]
        %v803 = vld [vmem:[%s386 + $0x70] sm:$0xff]
        %v804 = vld [vmem:[%s386 + $0x78] sm:$0xff]
        %v821 = vunpack.c.l.b16 %v789
        %v822 = vunpack.c.h.b16 %v789
        %v823 = vunpack.c.l.b16 %v790
        %v824 = vunpack.c.h.b16 %v790
        %v825 = vunpack.c.l.b16 %v791
        %v826 = vunpack.c.h.b16 %v791
        %v827 = vunpack.c.l.b16 %v792
        %v828 = vunpack.c.h.b16 %v792
        %v829 = vunpack.c.l.b16 %v793
        %v830 = vunpack.c.h.b16 %v793
        %v831 = vunpack.c.l.b16 %v794
        %v832 = vunpack.c.h.b16 %v794
        %v833 = vunpack.c.l.b16 %v795
        %v834 = vunpack.c.h.b16 %v795
        %v835 = vunpack.c.l.b16 %v796
        %v836 = vunpack.c.h.b16 %v796
        %v837 = vunpack.c.l.b16 %v797
        %v838 = vunpack.c.h.b16 %v797
        %v839 = vunpack.c.l.b16 %v798
        %v840 = vunpack.c.h.b16 %v798
        %v841 = vunpack.c.l.b16 %v799
        %v842 = vunpack.c.h.b16 %v799
        %v843 = vunpack.c.l.b16 %v800
        %v844 = vunpack.c.h.b16 %v800
        %v845 = vunpack.c.l.b16 %v801
        %v846 = vunpack.c.h.b16 %v801
        %v847 = vunpack.c.l.b16 %v802
        %v848 = vunpack.c.h.b16 %v802
        %v849 = vunpack.c.l.b16 %v803
        %v850 = vunpack.c.h.b16 %v803
        %v851 = vunpack.c.l.b16 %v804
        %v852 = vunpack.c.h.b16 %v804
        %v853 = vpack.c.b16 %v823, %v821
        %v854 = vpack.c.b16 %v824, %v822
        %v855 = vpack.c.b16 %v827, %v825
        %v856 = vpack.c.b16 %v828, %v826
        %v857 = vpack.c.b16 %v831, %v829
        %v858 = vpack.c.b16 %v832, %v830
        %v859 = vpack.c.b16 %v835, %v833
        %v860 = vpack.c.b16 %v836, %v834
        %v861 = vpack.c.b16 %v839, %v837
        %v862 = vpack.c.b16 %v840, %v838
        %v863 = vpack.c.b16 %v843, %v841
        %v864 = vpack.c.b16 %v844, %v842
        %v865 = vpack.c.b16 %v847, %v845
        %v866 = vpack.c.b16 %v848, %v846
        %v867 = vpack.c.b16 %v851, %v849
        %v868 = vpack.c.b16 %v852, %v850
        %885 = vmatprep.subr.bf16.mxu0 %v868
        %886 = vmatpush1.bf16.msra.mxu0 %v867
        %887 = vmatprep.subr.bf16.mxu0 %v866
        %888 = vmatpush1.bf16.msra.mxu0 %v865
        %889 = vmatprep.subr.bf16.mxu0 %v864
        %890 = vmatpush1.bf16.msra.mxu0 %v863
        %891 = vmatprep.subr.bf16.mxu0 %v862
        %892 = vmatpush1.bf16.msra.mxu0 %v861
        %893 = vmatprep.subr.bf16.mxu0 %v860
        %894 = vmatpush1.bf16.msra.mxu0 %v859
        %895 = vmatprep.subr.bf16.mxu0 %v858
        %896 = vmatpush1.bf16.msra.mxu0 %v857
        %897 = vmatprep.subr.bf16.mxu0 %v856
        %898 = vmatpush1.bf16.msra.mxu0 %v855
        %899 = vmatprep.subr.bf16.mxu0 %v854
        %900 = vmatpush1.bf16.msra.mxu0 %v853
        %901 = vmatprep.subr.bf16.mxu0 0
        %902 = vmatpush2.bf16.msra.mxu0 0
        %903 = vmatprep.subr.bf16.mxu0 0
        %904 = vmatpush2.bf16.msra.mxu0 0
        %905 = vmatprep.subr.bf16.mxu0 0
        %906 = vmatpush2.bf16.msra.mxu0 0
        %907 = vmatprep.subr.bf16.mxu0 0
        %908 = vmatpush2.bf16.msra.mxu0 0
        %909 = vmatprep.subr.bf16.mxu0 0
        %910 = vmatpush2.bf16.msra.mxu0 0
        %911 = vmatprep.subr.bf16.mxu0 0
        %912 = vmatpush2.bf16.msra.mxu0 0
        %913 = vmatprep.subr.bf16.mxu0 0
        %914 = vmatpush2.bf16.msra.mxu0 0
        %915 = vmatprep.subr.bf16.mxu0 0
        %916 = vmatpush2.bf16.msra.mxu0 0
        %917 = vmatprep.mubr.bf16.mxu0 0
        %918 = vmatmul.mubr.bf16.gmra.mxu0 %v785
        %v919 = vpop.f32.mrf.mxu0
        %v920 = vadd.f32 0.0, %v919
        %v921 = vpop.f32.mrf.mxu0
        %v922 = vadd.f32 0.0, %v921
        %v923 = vpop.f32.mrf.mxu0
        %v924 = vadd.f32 0.0, %v923
        %v925 = vpop.f32.mrf.mxu0
        %v926 = vadd.f32 0.0, %v925
        %927 = vmatprep.mubr.bf16.mxu0 0
        %928 = vmatmul.mubr.bf16.gmra.mxu0 %v786
        %v929 = vpop.f32.mrf.mxu0
        %v930 = vadd.f32 0.0, %v929
        %v931 = vpop.f32.mrf.mxu0
        %v932 = vadd.f32 0.0, %v931
        %v933 = vpop.f32.mrf.mxu0
        %v934 = vadd.f32 0.0, %v933
        %v935 = vpop.f32.mrf.mxu0
        %v936 = vadd.f32 0.0, %v935
        %937 = vmatprep.mubr.bf16.mxu0 0
        %938 = vmatmul.mubr.bf16.gmra.mxu0 %v787
        %v939 = vpop.f32.mrf.mxu0
        %v940 = vadd.f32 0.0, %v939
        %v941 = vpop.f32.mrf.mxu0
        %v942 = vadd.f32 0.0, %v941
        %v943 = vpop.f32.mrf.mxu0
        %v944 = vadd.f32 0.0, %v943
        %v945 = vpop.f32.mrf.mxu0
        %v946 = vadd.f32 0.0, %v945
        %947 = vmatprep.mubr.bf16.mxu0 0
        %948 = vmatmul.mubr.bf16.gmra.mxu0 %v788
        %v949 = vpop.f32.mrf.mxu0
        %v950 = vadd.f32 0.0, %v949
        %v951 = vpop.f32.mrf.mxu0
        %v952 = vadd.f32 0.0, %v951
        %v953 = vpop.f32.mrf.mxu0
        %v954 = vadd.f32 0.0, %v953
        %v955 = vpop.f32.mrf.mxu0
        %v956 = vadd.f32 0.0, %v955
        %957 = vdwg.mxu0
        %v958 = vadd.f32 %v769, %v920
        %v959 = vadd.f32 %v770, %v922
        %v960 = vadd.f32 %v771, %v924
        %v961 = vadd.f32 %v772, %v926
        %v962 = vadd.f32 %v773, %v930
        %v963 = vadd.f32 %v774, %v932
        %v964 = vadd.f32 %v775, %v934
        %v965 = vadd.f32 %v776, %v936
        %v966 = vadd.f32 %v777, %v940
        %v967 = vadd.f32 %v778, %v942
        %v968 = vadd.f32 %v779, %v944
        %v969 = vadd.f32 %v780, %v946
        %v970 = vadd.f32 %v781, %v950
        %v971 = vadd.f32 %v782, %v952
        %v972 = vadd.f32 %v783, %v954
        %v973 = vadd.f32 %v784, %v956
        %974 = vst [vmem:[#allocation2] sm:$0xff] %v958
        %975 = vst [vmem:[#allocation2 + $0x8] sm:$0xff] %v959
        %976 = vst [vmem:[#allocation2 + $0x10] sm:$0xff] %v960
        %977 = vst [vmem:[#allocation2 + $0x18] sm:$0xff] %v961
        %978 = vst [vmem:[#allocation2 + $0x20] sm:$0xff] %v962
        %979 = vst [vmem:[#allocation2 + $0x28] sm:$0xff] %v963
        %980 = vst [vmem:[#allocation2 + $0x30] sm:$0xff] %v964
        %981 = vst [vmem:[#allocation2 + $0x38] sm:$0xff] %v965
        %982 = vst [vmem:[#allocation2 + $0x40] sm:$0xff] %v966
        %983 = vst [vmem:[#allocation2 + $0x48] sm:$0xff] %v967
        %984 = vst [vmem:[#allocation2 + $0x50] sm:$0xff] %v968
        %985 = vst [vmem:[#allocation2 + $0x58] sm:$0xff] %v969
        %986 = vst [vmem:[#allocation2 + $0x60] sm:$0xff] %v970
        %987 = vst [vmem:[#allocation2 + $0x68] sm:$0xff] %v971
        %988 = vst [vmem:[#allocation2 + $0x70] sm:$0xff] %v972
        %989 = vst [vmem:[#allocation2 + $0x78] sm:$0xff] %v973
        %p990 = scmp.eq.s32.totalorder %s20, 1
        // Predicated region
        $region82: #{policy_network_forward.10} parent=72 // pred_check
          %p991 = pneg %p990
        $region83: #{policy_network_forward.10} parent=72 // pred_check_branch
          %993 = sbr.rel (%p991) target = $region85
        $region84: #{policy_network_forward.10} parent=72 // pred_region
          %v994 = vld [vmem:[#allocation2] sm:$0xff]
          %v995 = vld [vmem:[#allocation2 + $0x8] sm:$0xff]
          %v996 = vld [vmem:[#allocation2 + $0x10] sm:$0xff]
          %v997 = vld [vmem:[#allocation2 + $0x18] sm:$0xff]
          %v998 = vld [vmem:[#allocation2 + $0x20] sm:$0xff]
          %v999 = vld [vmem:[#allocation2 + $0x28] sm:$0xff]
          %v1000 = vld [vmem:[#allocation2 + $0x30] sm:$0xff]
          %v1001 = vld [vmem:[#allocation2 + $0x38] sm:$0xff]
          %v1002 = vld [vmem:[#allocation2 + $0x40] sm:$0xff]
          %v1003 = vld [vmem:[#allocation2 + $0x48] sm:$0xff]
          %v1004 = vld [vmem:[#allocation2 + $0x50] sm:$0xff]
          %v1005 = vld [vmem:[#allocation2 + $0x58] sm:$0xff]
          %v1006 = vld [vmem:[#allocation2 + $0x60] sm:$0xff]
          %v1007 = vld [vmem:[#allocation2 + $0x68] sm:$0xff]
          %v1008 = vld [vmem:[#allocation2 + $0x70] sm:$0xff]
          %v1009 = vld [vmem:[#allocation2 + $0x78] sm:$0xff]
          %v1010 = vld [vmem:[%s3] sm:$0x3]
          %v1012 = vlaneseq
          %v1013 = vshrl.u32 %v1012, 7
          %v1014 = vsub.s32 0, %v1013
          %v1015 = vrot.slane %v1010, %v1014
          %v1016 = vlaneseq
          %v1017 = vshrl.u32 %v1016, 7
          %v1018 = vsub.s32 1, %v1017
          %v1019 = vrot.slane %v1010, %v1018
          %v1022 = vadd.f32 %v994, %v1015
          %v1023 = vadd.f32 %v995, %v1019
          %v1024 = vadd.f32 %v996, %v1015
          %v1025 = vadd.f32 %v997, %v1019
          %v1026 = vadd.f32 %v998, %v1015
          %v1027 = vadd.f32 %v999, %v1019
          %v1028 = vadd.f32 %v1000, %v1015
          %v1029 = vadd.f32 %v1001, %v1019
          %v1030 = vadd.f32 %v1002, %v1015
          %v1031 = vadd.f32 %v1003, %v1019
          %v1032 = vadd.f32 %v1004, %v1015
          %v1033 = vadd.f32 %v1005, %v1019
          %v1034 = vadd.f32 %v1006, %v1015
          %v1035 = vadd.f32 %v1007, %v1019
          %v1036 = vadd.f32 %v1008, %v1015
          %v1037 = vadd.f32 %v1009, %v1019
          %v1038 = vld [vmem:[%s381] sm:$0xff]
          %v1039 = vld [vmem:[%s381 + $0x8] sm:$0xff]
          %v1040 = vld [vmem:[%s381 + $0x10] sm:$0xff]
          %v1041 = vld [vmem:[%s381 + $0x18] sm:$0xff]
          %v1042 = vld [vmem:[%s381 + $0x20] sm:$0xff]
          %v1043 = vld [vmem:[%s381 + $0x28] sm:$0xff]
          %v1044 = vld [vmem:[%s381 + $0x30] sm:$0xff]
          %v1045 = vld [vmem:[%s381 + $0x38] sm:$0xff]
          %v1046 = vld [vmem:[%s381 + $0x40] sm:$0xff]
          %v1047 = vld [vmem:[%s381 + $0x48] sm:$0xff]
          %v1048 = vld [vmem:[%s381 + $0x50] sm:$0xff]
          %v1049 = vld [vmem:[%s381 + $0x58] sm:$0xff]
          %v1050 = vld [vmem:[%s381 + $0x60] sm:$0xff]
          %v1051 = vld [vmem:[%s381 + $0x68] sm:$0xff]
          %v1052 = vld [vmem:[%s381 + $0x70] sm:$0xff]
          %v1053 = vld [vmem:[%s381 + $0x78] sm:$0xff]
          %v1054 = vadd.f32 %v1022, %v1038
          %v1055 = vadd.f32 %v1023, %v1039
          %v1056 = vadd.f32 %v1024, %v1040
          %v1057 = vadd.f32 %v1025, %v1041
          %v1058 = vadd.f32 %v1026, %v1042
          %v1059 = vadd.f32 %v1027, %v1043
          %v1060 = vadd.f32 %v1028, %v1044
          %v1061 = vadd.f32 %v1029, %v1045
          %v1062 = vadd.f32 %v1030, %v1046
          %v1063 = vadd.f32 %v1031, %v1047
          %v1064 = vadd.f32 %v1032, %v1048
          %v1065 = vadd.f32 %v1033, %v1049
          %v1066 = vadd.f32 %v1034, %v1050
          %v1067 = vadd.f32 %v1035, %v1051
          %v1068 = vadd.f32 %v1036, %v1052
          %v1069 = vadd.f32 %v1037, %v1053
          %1070 = vst [vmem:[%s391] sm:$0xff] %v1054
          %1071 = vst [vmem:[%s391 + $0x8] sm:$0xff] %v1055
          %1072 = vst [vmem:[%s391 + $0x10] sm:$0xff] %v1056
          %1073 = vst [vmem:[%s391 + $0x18] sm:$0xff] %v1057
          %1074 = vst [vmem:[%s391 + $0x20] sm:$0xff] %v1058
          %1075 = vst [vmem:[%s391 + $0x28] sm:$0xff] %v1059
          %1076 = vst [vmem:[%s391 + $0x30] sm:$0xff] %v1060
          %1077 = vst [vmem:[%s391 + $0x38] sm:$0xff] %v1061
          %1078 = vst [vmem:[%s391 + $0x40] sm:$0xff] %v1062
          %1079 = vst [vmem:[%s391 + $0x48] sm:$0xff] %v1063
          %1080 = vst [vmem:[%s391 + $0x50] sm:$0xff] %v1064
          %1081 = vst [vmem:[%s391 + $0x58] sm:$0xff] %v1065
          %1082 = vst [vmem:[%s391 + $0x60] sm:$0xff] %v1066
          %1083 = vst [vmem:[%s391 + $0x68] sm:$0xff] %v1067
          %1084 = vst [vmem:[%s391 + $0x70] sm:$0xff] %v1068
          %1085 = vst [vmem:[%s391 + $0x78] sm:$0xff] %v1069
        $region85: #{policy_network_forward.10} parent=72 // pred_fallthru
          _
        %p1086 = scmp.lt.s32.totalorder %s19, 1
        %s1087 = scalar_select %p1086, %s19, 1
        %s1088 = smul.addr %s1087, 16
        %s1089 = smul.addr %s1088, 8
        %s1090 = scalar_lea.vmem %s4, %s1089
        // Predicated region
        $region86: #{policy_network_forward.10} parent=72 // pred_check
          %p1091 = pneg %p146
        $region87: #{policy_network_forward.10} parent=72 // pred_check_branch
          %1093 = sbr.rel (%p1091) target = $region89
        $region88: #{policy_network_forward.10} parent=72 // pred_region
          _
        $region89: #{policy_network_forward.10} parent=72 // pred_fallthru
          _
      $region73: #{policy_network_forward.10} parent=5 // pred_fallthru
        _
      %p1094 = scmp.le.s32.totalorder 2, %s10
      // Predicated region
      $region90: #{policy_network_forward.10} parent=5 // pred_check
        %p1095 = pneg %p1094
      $region91: #{policy_network_forward.10} parent=5 // pred_check_branch
        %1097 = sbr.rel (%p1095) target = $region93
      $region92: #{policy_network_forward.10} parent=5 // pred_region
        %s1098 = ssub.s32 %s10, 2
        // Predicated region
        $region94: #{policy_network_forward.10} parent=92 // pred_check
          %p1099 = pneg %p152
        $region95: #{policy_network_forward.10} parent=92 // pred_check_branch
          %1101 = sbr.rel (%p1099) target = $region97
        $region96: #{policy_network_forward.10} parent=92 // pred_region
          %p1102 = scmp.lt.s32.totalorder %s21, 1
          %s1103 = scalar_select %p1102, %s21, 1
          %s1104 = smul.addr %s1103, 16
          %s1105 = smul.addr %s1104, 8
          %s1106 = scalar_lea.vmem %s4, %s1105
        $region97: #{policy_network_forward.10} parent=92 // pred_fallthru
          _
      $region93: #{policy_network_forward.10} parent=5 // pred_fallthru
        _
    $region6: #{policy_network_forward.10} parent=1 // loop_footer
      %s14 = sadd.s32 1, %s10
    $region7: #{policy_network_forward.10} parent=1 // loop_footer_branch
      %9 = sbr.rel target = $region3
    $region8: #{policy_network_forward.10} parent=1 // loop_exit
      _

// kernel: policy_network_forward.9
$region0: #{policy_network_forward.9}
  #allocation0 [shape = 'u32[]', space=smem, size = 0x4, offset = 0x4, fixed_abs, tag = 'smem constant byte address 0x4 - core index']
  #allocation1 [shape = 'u32[144,128]{1,0:T(1,128)}', space=vmem, size = 0x12000, scoped, tag = 'internal scratch']
  #allocation2 [shape = 'bf16[64,256]{1,0:T(8,128)(2,1)}', space=vmem, size = 0x8000, scoped, tag = 'scratch operand']
  %s0 = inlined_call_operand.vmem [shape: f32[2,64,256], index: 0, kind: input, shape index: {}]
  %s1 = inlined_call_operand.vmem [shape: f32[1,256], index: 1, kind: input, shape index: {}]
  %s2 = inlined_call_operand.vmem [shape: f32[1,256], index: 2, kind: input, shape index: {}]
  %s3 = inlined_call_operand.vmem [shape: bf16[2,3,256,128], index: 3, kind: input, shape index: {}]
  %s4 = inlined_call_operand.vmem [shape: f32[2,3,1,128], index: 4, kind: input, shape index: {}]
  %s5 = inlined_call_operand.vmem [shape: bf16[6,2,64,128], index: 5, kind: output, shape index: {}]
  %s6 = sld [smem:[#allocation0]]
  $region94: #{policy_network_forward.9} parent=0
    _
  %s8 = ssub.s32 1, %s6
  %s9 = scalar_select 0, %s8, %s6
  $region1: #{policy_network_forward.9} parent=0
    #allocation3 [shape = 'u8[98304]{0}', space=vmem, size = 0x18000, scoped, tag = 'output window, operand 0']
    loop: start=0, step=1, limit=6
    $region2: #{policy_network_forward.9} parent=1 // loop_pre_header
      _
    $region3: #{policy_network_forward.9} parent=1 // loop_header
      %s11 = sphi 0, %s15
      %p12 = scmp.ge.s32.totalorder %s11, 6
      %s18 = sphi 0, %s30
      %s19 = sphi 0, %s26
      %s20 = sphi 0, %s18
      %s21 = sphi 0, %s19
      %s22 = sphi 0, %s20
      %s23 = sphi 0, %s21
      %s33 = sphi 0, %s35
      %s36 = sphi 0, %s33
      %s37 = sphi 0, %s36
      %s53 = sphi 0, %s37
      %s57 = sphi 0, %s57
      %s59 = sphi 0, %s57
      %s60 = sphi 0, %s59
      %s74 = sphi 0, %s60
      %s78 = sphi 0, %s78
      %s80 = sphi 0, %s78
      %s81 = sphi 0, %s80
      %s95 = sphi 0, %s81
      %s101 = sphi 0, %s103
      %s104 = sphi 0, %s101
      %s105 = sphi 0, %s104
      %s121 = sphi 0, %s105
      %s127 = sphi 0, %s129
      %s130 = sphi 0, %s127
      %s131 = sphi 0, %s130
      %s147 = sphi 0, %s131
      %s155 = sphi 0, %s157
      %s158 = sphi 0, %s155
      %s159 = sphi 0, %s158
      %s175 = sphi 0, %s159
    $region4: #{policy_network_forward.9} parent=1 // loop_header_branch
      %14 = sbr.rel (%p12) target = $region8
    $region5: #{policy_network_forward.9} parent=1 // loop_body
      %s16 = ssub.s32 %s11, 1
      %s17 = ssub.s32 %s11, 2
      %s24 = sadd.s32 1, %s19
      %p25 = scmp.ge.s32.totalorder %s24, 2
      %s26 = scalar_select %p25, 0, %s24
      %s27 = sadd.s32 1, %s18
      %s28 = scalar_select %p25, %s27, %s18
      %p29 = scmp.ge.s32.totalorder %s28, 2
      %s30 = scalar_select %p29, 0, %s28
      %s31 = ssub.s32 %s18, %s30
      %p32 = scmp.eq.s32.totalorder %s31, 0
      %s34 = sadd.s32 %s33, 1
      %s35 = scalar_select %p32, %s33, %s34
      %p38 = pneg %p32
      %p39 = scmp.eq.s32.totalorder %s11, 3
      %p40 = por %p38, %p39
      %p41 = scmp.ne.s32.totalorder %s33, %s36
      %p42 = scmp.eq.s32.totalorder %s11, 0
      %p43 = por %p41, %p42
      %p44 = scmp.ne.s32.totalorder %s33, %s36
      %p45 = scmp.eq.s32.totalorder %s16, 3
      %p46 = por %p44, %p45
      %p47 = scmp.ne.s32.totalorder %s36, %s37
      %p48 = scmp.eq.s32.totalorder %s16, 0
      %p49 = por %p47, %p48
      %p50 = scmp.ne.s32.totalorder %s36, %s37
      %p51 = scmp.eq.s32.totalorder %s17, 3
      %p52 = por %p50, %p51
      %p54 = scmp.ne.s32.totalorder %s37, %s53
      %p55 = scmp.eq.s32.totalorder %s17, 0
      %p56 = por %p54, %p55
      %s58 = sadd.s32 %s57, 1
      %p61 = scmp.eq.s32.totalorder %s11, 3
      %p62 = scmp.ne.s32.totalorder %s57, %s59
      %p63 = scmp.eq.s32.totalorder %s11, 0
      %p64 = por %p62, %p63
      %p65 = scmp.ne.s32.totalorder %s57, %s59
      %p66 = scmp.eq.s32.totalorder %s16, 3
      %p67 = por %p65, %p66
      %p68 = scmp.ne.s32.totalorder %s59, %s60
      %p69 = scmp.eq.s32.totalorder %s16, 0
      %p70 = por %p68, %p69
      %p71 = scmp.ne.s32.totalorder %s59, %s60
      %p72 = scmp.eq.s32.totalorder %s17, 3
      %p73 = por %p71, %p72
      %p75 = scmp.ne.s32.totalorder %s60, %s74
      %p76 = scmp.eq.s32.totalorder %s17, 0
      %p77 = por %p75, %p76
      %s79 = sadd.s32 %s78, 1
      %p82 = scmp.eq.s32.totalorder %s11, 3
      %p83 = scmp.ne.s32.totalorder %s78, %s80
      %p84 = scmp.eq.s32.totalorder %s11, 0
      %p85 = por %p83, %p84
      %p86 = scmp.ne.s32.totalorder %s78, %s80
      %p87 = scmp.eq.s32.totalorder %s16, 3
      %p88 = por %p86, %p87
      %p89 = scmp.ne.s32.totalorder %s80, %s81
      %p90 = scmp.eq.s32.totalorder %s16, 0
      %p91 = por %p89, %p90
      %p92 = scmp.ne.s32.totalorder %s80, %s81
      %p93 = scmp.eq.s32.totalorder %s17, 3
      %p94 = por %p92, %p93
      %p96 = scmp.ne.s32.totalorder %s81, %s95
      %p97 = scmp.eq.s32.totalorder %s17, 0
      %p98 = por %p96, %p97
      %s99 = ssub.s32 %s19, %s26
      %p100 = scmp.eq.s32.totalorder %s99, 0
      %s102 = sadd.s32 %s101, 1
      %s103 = scalar_select %p100, %s101, %s102
      %p106 = pneg %p100
      %p107 = scmp.eq.s32.totalorder %s11, 3
      %p108 = por %p106, %p107
      %p109 = scmp.ne.s32.totalorder %s101, %s104
      %p110 = scmp.eq.s32.totalorder %s11, 0
      %p111 = por %p109, %p110
      %p112 = scmp.ne.s32.totalorder %s101, %s104
      %p113 = scmp.eq.s32.totalorder %s16, 3
      %p114 = por %p112, %p113
      %p115 = scmp.ne.s32.totalorder %s104, %s105
      %p116 = scmp.eq.s32.totalorder %s16, 0
      %p117 = por %p115, %p116
      %p118 = scmp.ne.s32.totalorder %s104, %s105
      %p119 = scmp.eq.s32.totalorder %s17, 3
      %p120 = por %p118, %p119
      %p122 = scmp.ne.s32.totalorder %s105, %s121
      %p123 = scmp.eq.s32.totalorder %s17, 0
      %p124 = por %p122, %p123
      %s125 = ssub.s32 %s19, %s26
      %p126 = scmp.eq.s32.totalorder %s125, 0
      %s128 = sadd.s32 %s127, 1
      %s129 = scalar_select %p126, %s127, %s128
      %p132 = pneg %p126
      %p133 = scmp.eq.s32.totalorder %s11, 3
      %p134 = por %p132, %p133
      %p135 = scmp.ne.s32.totalorder %s127, %s130
      %p136 = scmp.eq.s32.totalorder %s11, 0
      %p137 = por %p135, %p136
      %p138 = scmp.ne.s32.totalorder %s127, %s130
      %p139 = scmp.eq.s32.totalorder %s16, 3
      %p140 = por %p138, %p139
      %p141 = scmp.ne.s32.totalorder %s130, %s131
      %p142 = scmp.eq.s32.totalorder %s16, 0
      %p143 = por %p141, %p142
      %p144 = scmp.ne.s32.totalorder %s130, %s131
      %p145 = scmp.eq.s32.totalorder %s17, 3
      %p146 = por %p144, %p145
      %p148 = scmp.ne.s32.totalorder %s131, %s147
      %p149 = scmp.eq.s32.totalorder %s17, 0
      %p150 = por %p148, %p149
      %s151 = ssub.s32 %s19, %s26
      %s152 = ssub.s32 %s18, %s30
      %s153 = sor.u32 %s151, %s152
      %p154 = scmp.eq.s32.totalorder %s153, 0
      %s156 = sadd.s32 %s155, 1
      %s157 = scalar_select %p154, %s155, %s156
      %p160 = pneg %p154
      %p161 = scmp.eq.s32.totalorder %s11, 3
      %p162 = por %p160, %p161
      %p163 = scmp.ne.s32.totalorder %s155, %s158
      %p164 = scmp.eq.s32.totalorder %s11, 0
      %p165 = por %p163, %p164
      %p166 = scmp.ne.s32.totalorder %s155, %s158
      %p167 = scmp.eq.s32.totalorder %s16, 3
      %p168 = por %p166, %p167
      %p169 = scmp.ne.s32.totalorder %s158, %s159
      %p170 = scmp.eq.s32.totalorder %s16, 0
      %p171 = por %p169, %p170
      %p172 = scmp.ne.s32.totalorder %s158, %s159
      %p173 = scmp.eq.s32.totalorder %s17, 3
      %p174 = por %p172, %p173
      %p176 = scmp.ne.s32.totalorder %s159, %s175
      %p177 = scmp.eq.s32.totalorder %s17, 0
      %p178 = por %p176, %p177
      %p179 = scmp.le.s32.totalorder 1, %s11
      %p180 = scmp.lt.s32.totalorder %s11, 5
      %p181 = pnand %p179, %p180
      %p182 = pneg %p181
      // Predicated region
      $region9: #{policy_network_forward.9} parent=5 // pred_check
        _
      $region10: #{policy_network_forward.9} parent=5 // pred_check_branch
        %184 = sbr.rel (%p181) target = $region12
      $region11: #{policy_network_forward.9} parent=5 // pred_region
        %s185 = ssub.s32 %s11, 1
        // Predicated region
        $region13: #{policy_network_forward.9} parent=11 // pred_check
          %p186 = pneg %p70
        $region14: #{policy_network_forward.9} parent=11 // pred_check_branch
          %188 = sbr.rel (%p186) target = $region16
        $region15: #{policy_network_forward.9} parent=11 // pred_region
          _
        $region16: #{policy_network_forward.9} parent=11 // pred_fallthru
          _
        // Predicated region
        $region17: #{policy_network_forward.9} parent=11 // pred_check
          %p189 = pneg %p91
        $region18: #{policy_network_forward.9} parent=11 // pred_check_branch
          %191 = sbr.rel (%p189) target = $region20
        $region19: #{policy_network_forward.9} parent=11 // pred_region
          _
        $region20: #{policy_network_forward.9} parent=11 // pred_fallthru
          _
      $region12: #{policy_network_forward.9} parent=5 // pred_fallthru
        _
      %p192 = scmp.lt.s32.totalorder %s11, 4
      // Predicated region
      $region21: #{policy_network_forward.9} parent=5 // pred_check
        %p193 = pneg %p192
      $region22: #{policy_network_forward.9} parent=5 // pred_check_branch
        %195 = sbr.rel (%p193) target = $region24
      $region23: #{policy_network_forward.9} parent=5 // pred_region
        // Predicated region
        $region25: #{policy_network_forward.9} parent=23 // pred_check
          %p196 = pneg %p43
        $region26: #{policy_network_forward.9} parent=23 // pred_check_branch
          %198 = sbr.rel (%p196) target = $region28
        $region27: #{policy_network_forward.9} parent=23 // pred_region
          %p199 = scmp.lt.s32.totalorder %s18, 1
          %s200 = scalar_select %p199, %s18, 1
          %s201 = smul.addr %s200, 16
          %s202 = smul.addr %s201, 8
          %s203 = scalar_lea.vmem %s0, %s202
        $region28: #{policy_network_forward.9} parent=23 // pred_fallthru
          _
        // Predicated region
        $region29: #{policy_network_forward.9} parent=23 // pred_check
          %p204 = pneg %p111
        $region30: #{policy_network_forward.9} parent=23 // pred_check_branch
          %206 = sbr.rel (%p204) target = $region32
        $region31: #{policy_network_forward.9} parent=23 // pred_region
          %p207 = scmp.lt.s32.totalorder %s19, 1
          %s208 = scalar_select %p207, %s19, 1
          %s209 = smul.addr %s208, 96
          %s210 = smul.addr %s209, 4
          %s211 = scalar_lea.vmem %s3, %s210
        $region32: #{policy_network_forward.9} parent=23 // pred_fallthru
          _
        // Predicated region
        $region33: #{policy_network_forward.9} parent=23 // pred_check
          %p212 = pneg %p137
        $region34: #{policy_network_forward.9} parent=23 // pred_check_branch
          %214 = sbr.rel (%p212) target = $region36
        $region35: #{policy_network_forward.9} parent=23 // pred_region
          %p215 = scmp.lt.s32.totalorder %s19, 1
          %s216 = scalar_select %p215, %s19, 1
          %s217 = smul.addr %s216, 3
          %s218 = scalar_lea.vmem %s4, %s217
        $region36: #{policy_network_forward.9} parent=23 // pred_fallthru
          _
      $region24: #{policy_network_forward.9} parent=5 // pred_fallthru
        _
      %p219 = scmp.le.s32.totalorder 1, %s11
      %p220 = scmp.lt.s32.totalorder %s11, 5
      %p221 = pnand %p219, %p220
      %p222 = pneg %p221
      // Predicated region
      $region37: #{policy_network_forward.9} parent=5 // pred_check
        _
      $region38: #{policy_network_forward.9} parent=5 // pred_check_branch
        %224 = sbr.rel (%p221) target = $region40
      $region39: #{policy_network_forward.9} parent=5 // pred_region
        %s225 = ssub.s32 %s11, 1
        %p226 = scmp.lt.s32.totalorder %s20, 1
        %s227 = scalar_select %p226, %s20, 1
        %s228 = smul.addr %s227, 16
        %s229 = smul.addr %s228, 8
        %s230 = scalar_lea.vmem %s0, %s229
        %p231 = pneg %p49
        %p232 = pneg %p46
        %p233 = pneg %p70
        %p234 = pneg %p67
        %p235 = pneg %p91
        %p236 = pneg %p88
        %p237 = scmp.lt.s32.totalorder %s21, 1
        %s238 = scalar_select %p237, %s21, 1
        %s239 = smul.addr %s238, 96
        %s240 = smul.addr %s239, 4
        %s241 = scalar_lea.vmem %s3, %s240
        %p242 = pneg %p117
        %p243 = pneg %p114
        %p244 = scmp.lt.s32.totalorder %s21, 1
        %s245 = scalar_select %p244, %s21, 1
        %s246 = smul.addr %s245, 3
        %s247 = scalar_lea.vmem %s4, %s246
        %p248 = pneg %p143
        %p249 = pneg %p140
        %p250 = pneg %p171
        %p251 = pneg %p168
        %s252 = sand.u32 %s158, 1
        %s253 = sand.u32 %s158, 1
        %s254 = smul.addr %s253, 96
        %s255 = scalar_lea.vmem [#allocation3], %s254
        %p256 = scmp.lt.s32.totalorder %s20, 1
        %s257 = scalar_select %p256, %s20, 1
        %s258 = smul.addr %s257, 16
        %s259 = smul.addr %s258, 8
        %s260 = scalar_lea.vmem %s0, %s259
        %p261 = scmp.lt.s32.totalorder %s21, 1
        %s262 = scalar_select %p261, %s21, 1
        %s263 = smul.addr %s262, 96
        %s264 = smul.addr %s263, 4
        %s265 = scalar_lea.vmem %s3, %s264
        %p266 = scmp.lt.s32.totalorder %s21, 1
        %s267 = scalar_select %p266, %s21, 1
        %s268 = smul.addr %s267, 3
        %s269 = scalar_lea.vmem %s4, %s268
        %s270 = smul.u32 3, %s21
        %p272 = scmp.eq.s32.totalorder %s21, 0
        // Predicated region
        $region41: #{policy_network_forward.9} parent=39 // pred_check
          %p273 = pneg %p272
        $region42: #{policy_network_forward.9} parent=39 // pred_check_branch
          %275 = sbr.rel (%p273) target = $region44
        $region43: #{policy_network_forward.9} parent=39 // pred_region
          %v276 = vld [vmem:[%s260] sm:$0xff]
          %v277 = vld [vmem:[%s260 + $0x8] sm:$0xff]
          %v278 = vld [vmem:[%s260 + $0x10] sm:$0xff]
          %v279 = vld [vmem:[%s260 + $0x18] sm:$0xff]
          %v280 = vld [vmem:[%s260 + $0x20] sm:$0xff]
          %v281 = vld [vmem:[%s260 + $0x28] sm:$0xff]
          %v282 = vld [vmem:[%s260 + $0x30] sm:$0xff]
          %v283 = vld [vmem:[%s260 + $0x38] sm:$0xff]
          %v284 = vld [vmem:[%s260 + $0x40] sm:$0xff]
          %v285 = vld [vmem:[%s260 + $0x48] sm:$0xff]
          %v286 = vld [vmem:[%s260 + $0x50] sm:$0xff]
          %v287 = vld [vmem:[%s260 + $0x58] sm:$0xff]
          %v288 = vld [vmem:[%s260 + $0x60] sm:$0xff]
          %v289 = vld [vmem:[%s260 + $0x68] sm:$0xff]
          %v290 = vld [vmem:[%s260 + $0x70] sm:$0xff]
          %v291 = vld [vmem:[%s260 + $0x78] sm:$0xff]
          %v292 = vadd.f32 %v276, %v277
          %293 = vadd.xlane.f32.xlu0 %v292
          %v294 = vpop.xlane.xlu0 %293
          %v295 = vadd.f32 %v278, %v279
          %296 = vadd.xlane.f32.xlu0 %v295
          %v297 = vpop.xlane.xlu0 %296
          %v298 = vadd.f32 %v280, %v281
          %299 = vadd.xlane.f32.xlu0 %v298
          %v300 = vpop.xlane.xlu0 %299
          %v301 = vadd.f32 %v282, %v283
          %302 = vadd.xlane.f32.xlu0 %v301
          %v303 = vpop.xlane.xlu0 %302
          %v304 = vadd.f32 %v284, %v285
          %305 = vadd.xlane.f32.xlu0 %v304
          %v306 = vpop.xlane.xlu0 %305
          %v307 = vadd.f32 %v286, %v287
          %308 = vadd.xlane.f32.xlu0 %v307
          %v309 = vpop.xlane.xlu0 %308
          %v310 = vadd.f32 %v288, %v289
          %311 = vadd.xlane.f32.xlu0 %v310
          %v312 = vpop.xlane.xlu0 %311
          %v313 = vadd.f32 %v290, %v291
          %314 = vadd.xlane.f32.xlu0 %v313
          %v315 = vpop.xlane.xlu0 %314
          %v316 = vrcp.pop 256.0
          %v317 = vmul.f32 %v294, %v316
          %v318 = vmul.f32 %v297, %v316
          %v319 = vmul.f32 %v300, %v316
          %v320 = vmul.f32 %v303, %v316
          %v321 = vmul.f32 %v306, %v316
          %v322 = vmul.f32 %v309, %v316
          %v323 = vmul.f32 %v312, %v316
          %v324 = vmul.f32 %v315, %v316
          %v325 = vsub.f32 %v276, %v317
          %v326 = vsub.f32 %v277, %v317
          %v327 = vsub.f32 %v278, %v318
          %v328 = vsub.f32 %v279, %v318
          %v329 = vsub.f32 %v280, %v319
          %v330 = vsub.f32 %v281, %v319
          %v331 = vsub.f32 %v282, %v320
          %v332 = vsub.f32 %v283, %v320
          %v333 = vsub.f32 %v284, %v321
          %v334 = vsub.f32 %v285, %v321
          %v335 = vsub.f32 %v286, %v322
          %v336 = vsub.f32 %v287, %v322
          %v337 = vsub.f32 %v288, %v323
          %v338 = vsub.f32 %v289, %v323
          %v339 = vsub.f32 %v290, %v324
          %v340 = vsub.f32 %v291, %v324
          %v341 = vmul.f32 %v325, %v325
          %v342 = vmul.f32 %v326, %v326
          %v343 = vmul.f32 %v327, %v327
          %v344 = vmul.f32 %v328, %v328
          %v345 = vmul.f32 %v329, %v329
          %v346 = vmul.f32 %v330, %v330
          %v347 = vmul.f32 %v331, %v331
          %v348 = vmul.f32 %v332, %v332
          %v349 = vmul.f32 %v333, %v333
          %v350 = vmul.f32 %v334, %v334
          %v351 = vmul.f32 %v335, %v335
          %v352 = vmul.f32 %v336, %v336
          %v353 = vmul.f32 %v337, %v337
          %v354 = vmul.f32 %v338, %v338
          %v355 = vmul.f32 %v339, %v339
          %v356 = vmul.f32 %v340, %v340
          %v357 = vadd.f32 %v341, %v342
          %358 = vadd.xlane.f32.xlu0 %v357
          %v359 = vpop.xlane.xlu0 %358
          %v360 = vadd.f32 %v343, %v344
          %361 = vadd.xlane.f32.xlu0 %v360
          %v362 = vpop.xlane.xlu0 %361
          %v363 = vadd.f32 %v345, %v346
          %364 = vadd.xlane.f32.xlu0 %v363
          %v365 = vpop.xlane.xlu0 %364
          %v366 = vadd.f32 %v347, %v348
          %367 = vadd.xlane.f32.xlu0 %v366
          %v368 = vpop.xlane.xlu0 %367
          %v369 = vadd.f32 %v349, %v350
          %370 = vadd.xlane.f32.xlu0 %v369
          %v371 = vpop.xlane.xlu0 %370
          %v372 = vadd.f32 %v351, %v352
          %373 = vadd.xlane.f32.xlu0 %v372
          %v374 = vpop.xlane.xlu0 %373
          %v375 = vadd.f32 %v353, %v354
          %376 = vadd.xlane.f32.xlu0 %v375
          %v377 = vpop.xlane.xlu0 %376
          %v378 = vadd.f32 %v355, %v356
          %379 = vadd.xlane.f32.xlu0 %v378
          %v380 = vpop.xlane.xlu0 %379
          %v381 = vmul.f32 %v359, %v316
          %v382 = vmul.f32 %v362, %v316
          %v383 = vmul.f32 %v365, %v316
          %v384 = vmul.f32 %v368, %v316
          %v385 = vmul.f32 %v371, %v316
          %v386 = vmul.f32 %v374, %v316
          %v387 = vmul.f32 %v377, %v316
          %v388 = vmul.f32 %v380, %v316
          %v389 = vadd.f32 %v381, 1e-05
          %v390 = vadd.f32 %v382, 1e-05
          %v391 = vadd.f32 %v383, 1e-05
          %v392 = vadd.f32 %v384, 1e-05
          %v393 = vadd.f32 %v385, 1e-05
          %v394 = vadd.f32 %v386, 1e-05
          %v395 = vadd.f32 %v387, 1e-05
          %v396 = vadd.f32 %v388, 1e-05
          %v397 = vrsqrt.pop %v389
          %v398 = vrsqrt.pop %v390
          %v399 = vrsqrt.pop %v391
          %v400 = vrsqrt.pop %v392
          %v401 = vrsqrt.pop %v393
          %v402 = vrsqrt.pop %v394
          %v403 = vrsqrt.pop %v395
          %v404 = vrsqrt.pop %v396
          %v405 = vmul.f32 %v325, %v397
          %v406 = vmul.f32 %v326, %v397
          %v407 = vmul.f32 %v327, %v398
          %v408 = vmul.f32 %v328, %v398
          %v409 = vmul.f32 %v329, %v399
          %v410 = vmul.f32 %v330, %v399
          %v411 = vmul.f32 %v331, %v400
          %v412 = vmul.f32 %v332, %v400
          %v413 = vmul.f32 %v333, %v401
          %v414 = vmul.f32 %v334, %v401
          %v415 = vmul.f32 %v335, %v402
          %v416 = vmul.f32 %v336, %v402
          %v417 = vmul.f32 %v337, %v403
          %v418 = vmul.f32 %v338, %v403
          %v419 = vmul.f32 %v339, %v404
          %v420 = vmul.f32 %v340, %v404
          %v421 = vld [vmem:[%s1] sm:$0x3]
          %v423 = vlaneseq
          %v424 = vshrl.u32 %v423, 7
          %v425 = vsub.s32 0, %v424
          %v426 = vrot.slane %v421, %v425
          %v427 = vlaneseq
          %v428 = vshrl.u32 %v427, 7
          %v429 = vsub.s32 1, %v428
          %v430 = vrot.slane %v421, %v429
          %v433 = vmul.f32 %v405, %v426
          %v434 = vmul.f32 %v406, %v430
          %v435 = vmul.f32 %v407, %v426
          %v436 = vmul.f32 %v408, %v430
          %v437 = vmul.f32 %v409, %v426
          %v438 = vmul.f32 %v410, %v430
          %v439 = vmul.f32 %v411, %v426
          %v440 = vmul.f32 %v412, %v430
          %v441 = vmul.f32 %v413, %v426
          %v442 = vmul.f32 %v414, %v430
          %v443 = vmul.f32 %v415, %v426
          %v444 = vmul.f32 %v416, %v430
          %v445 = vmul.f32 %v417, %v426
          %v446 = vmul.f32 %v418, %v430
          %v447 = vmul.f32 %v419, %v426
          %v448 = vmul.f32 %v420, %v430
          %v449 = vld [vmem:[%s2] sm:$0x3]
          %v451 = vlaneseq
          %v452 = vshrl.u32 %v451, 7
          %v453 = vsub.s32 0, %v452
          %v454 = vrot.slane %v449, %v453
          %v455 = vlaneseq
          %v456 = vshrl.u32 %v455, 7
          %v457 = vsub.s32 1, %v456
          %v458 = vrot.slane %v449, %v457
          %v461 = vadd.f32 %v433, %v454
          %v462 = vadd.f32 %v434, %v458
          %v463 = vadd.f32 %v435, %v454
          %v464 = vadd.f32 %v436, %v458
          %v465 = vadd.f32 %v437, %v454
          %v466 = vadd.f32 %v438, %v458
          %v467 = vadd.f32 %v439, %v454
          %v468 = vadd.f32 %v440, %v458
          %v469 = vadd.f32 %v441, %v454
          %v470 = vadd.f32 %v442, %v458
          %v471 = vadd.f32 %v443, %v454
          %v472 = vadd.f32 %v444, %v458
          %v473 = vadd.f32 %v445, %v454
          %v474 = vadd.f32 %v446, %v458
          %v475 = vadd.f32 %v447, %v454
          %v476 = vadd.f32 %v448, %v458
          %v477 = vpack.c.bf16 %v463, %v461
          %v478 = vpack.c.bf16 %v464, %v462
          %v479 = vpack.c.bf16 %v467, %v465
          %v480 = vpack.c.bf16 %v468, %v466
          %v481 = vpack.c.bf16 %v471, %v469
          %v482 = vpack.c.bf16 %v472, %v470
          %v483 = vpack.c.bf16 %v475, %v473
          %v484 = vpack.c.bf16 %v476, %v474
          %v493 = vunpack.c.l.b16 %v477
          %v494 = vunpack.c.l.b16 %v478
          %v495 = vunpack.c.h.b16 %v477
          %v496 = vunpack.c.h.b16 %v478
          %v497 = vunpack.c.l.b16 %v479
          %v498 = vunpack.c.l.b16 %v480
          %v499 = vunpack.c.h.b16 %v479
          %v500 = vunpack.c.h.b16 %v480
          %v501 = vunpack.c.l.b16 %v481
          %v502 = vunpack.c.l.b16 %v482
          %v503 = vunpack.c.h.b16 %v481
          %v504 = vunpack.c.h.b16 %v482
          %v505 = vunpack.c.l.b16 %v483
          %v506 = vunpack.c.l.b16 %v484
          %v507 = vunpack.c.h.b16 %v483
          %v508 = vunpack.c.h.b16 %v484
          %v509 = vpack.c.b16 %v494, %v493
          %v510 = vpack.c.b16 %v496, %v495
          %v511 = vpack.c.b16 %v498, %v497
          %v512 = vpack.c.b16 %v500, %v499
          %v513 = vpack.c.b16 %v502, %v501
          %v514 = vpack.c.b16 %v504, %v503
          %v515 = vpack.c.b16 %v506, %v505
          %v516 = vpack.c.b16 %v508, %v507
          %525 = vst [vmem:[#allocation2] sm:$0xff] %v509
          %526 = vst [vmem:[#allocation2 + $0x8] sm:$0xff] %v510
          %527 = vst [vmem:[#allocation2 + $0x10] sm:$0xff] %v511
          %528 = vst [vmem:[#allocation2 + $0x18] sm:$0xff] %v512
          %529 = vst [vmem:[#allocation2 + $0x20] sm:$0xff] %v513
          %530 = vst [vmem:[#allocation2 + $0x28] sm:$0xff] %v514
          %531 = vst [vmem:[#allocation2 + $0x30] sm:$0xff] %v515
          %532 = vst [vmem:[#allocation2 + $0x38] sm:$0xff] %v516
        $region44: #{policy_network_forward.9} parent=39 // pred_fallthru
          _
        %v533 = vld [vmem:[#allocation2] sm:$0xff]
        %v534 = vld [vmem:[#allocation2 + $0x8] sm:$0xff]
        %v535 = vld [vmem:[#allocation2 + $0x10] sm:$0xff]
        %v536 = vld [vmem:[#allocation2 + $0x18] sm:$0xff]
        %v537 = vld [vmem:[#allocation2 + $0x20] sm:$0xff]
        %v538 = vld [vmem:[#allocation2 + $0x28] sm:$0xff]
        %v539 = vld [vmem:[#allocation2 + $0x30] sm:$0xff]
        %v540 = vld [vmem:[#allocation2 + $0x38] sm:$0xff]
        %v541 = vld [vmem:[%s265] sm:$0xf]
        %v542 = vld [vmem:[%s265 + $0x4] sm:$0xf]
        %v543 = vld [vmem:[%s265 + $0x8] sm:$0xf]
        %v544 = vld [vmem:[%s265 + $0xc] sm:$0xf]
        %v545 = vld [vmem:[%s265 + $0x10] sm:$0xf]
        %v546 = vld [vmem:[%s265 + $0x14] sm:$0xf]
        %v547 = vld [vmem:[%s265 + $0x18] sm:$0xf]
        %v548 = vld [vmem:[%s265 + $0x1c] sm:$0xf]
        %v549 = vld [vmem:[%s265 + $0x20] sm:$0xf]
        %v550 = vld [vmem:[%s265 + $0x24] sm:$0xf]
        %v551 = vld [vmem:[%s265 + $0x28] sm:$0xf]
        %v552 = vld [vmem:[%s265 + $0x2c] sm:$0xf]
        %v553 = vld [vmem:[%s265 + $0x30] sm:$0xf]
        %v554 = vld [vmem:[%s265 + $0x34] sm:$0xf]
        %v555 = vld [vmem:[%s265 + $0x38] sm:$0xf]
        %v556 = vld [vmem:[%s265 + $0x3c] sm:$0xf]
        %v557 = vld [vmem:[%s265 + $0x40] sm:$0xf]
        %v558 = vld [vmem:[%s265 + $0x44] sm:$0xf]
        %v559 = vld [vmem:[%s265 + $0x48] sm:$0xf]
        %v560 = vld [vmem:[%s265 + $0x4c] sm:$0xf]
        %v561 = vld [vmem:[%s265 + $0x50] sm:$0xf]
        %v562 = vld [vmem:[%s265 + $0x54] sm:$0xf]
        %v563 = vld [vmem:[%s265 + $0x58] sm:$0xf]
        %v564 = vld [vmem:[%s265 + $0x5c] sm:$0xf]
        %v565 = vld [vmem:[%s265 + $0x60] sm:$0xf]
        %v566 = vld [vmem:[%s265 + $0x64] sm:$0xf]
        %v567 = vld [vmem:[%s265 + $0x68] sm:$0xf]
        %v568 = vld [vmem:[%s265 + $0x6c] sm:$0xf]
        %v569 = vld [vmem:[%s265 + $0x70] sm:$0xf]
        %v570 = vld [vmem:[%s265 + $0x74] sm:$0xf]
        %v571 = vld [vmem:[%s265 + $0x78] sm:$0xf]
        %v572 = vld [vmem:[%s265 + $0x7c] sm:$0xf]
        %v573 = vld [vmem:[%s269] sm:$0x1]
        %v575 = vlaneseq
        %v576 = vshrl.u32 %v575, 7
        %v577 = vsub.s32 0, %v576
        %v578 = vrot.slane %v573, %v577
        %v588 = vunpack.c.l.b16 %v533
        %v589 = vunpack.c.h.b16 %v533
        %v590 = vunpack.c.l.b16 %v534
        %v591 = vunpack.c.h.b16 %v534
        %v592 = vunpack.c.l.b16 %v535
        %v593 = vunpack.c.h.b16 %v535
        %v594 = vunpack.c.l.b16 %v536
        %v595 = vunpack.c.h.b16 %v536
        %v596 = vunpack.c.l.b16 %v537
        %v597 = vunpack.c.h.b16 %v537
        %v598 = vunpack.c.l.b16 %v538
        %v599 = vunpack.c.h.b16 %v538
        %v600 = vunpack.c.l.b16 %v539
        %v601 = vunpack.c.h.b16 %v539
        %v602 = vunpack.c.l.b16 %v540
        %v603 = vunpack.c.h.b16 %v540
        %v604 = vpack.c.b16 %v590, %v588
        %v605 = vpack.c.b16 %v591, %v589
        %v606 = vpack.c.b16 %v594, %v592
        %v607 = vpack.c.b16 %v595, %v593
        %v608 = vpack.c.b16 %v598, %v596
        %v609 = vpack.c.b16 %v599, %v597
        %v610 = vpack.c.b16 %v602, %v600
        %v611 = vpack.c.b16 %v603, %v601
        %v652 = vunpack.c.l.b16 %v541
        %v653 = vunpack.c.l.b16 %v542
        %v654 = vunpack.c.l.b16 %v543
        %v655 = vunpack.c.l.b16 %v544
        %v656 = vunpack.c.l.b16 %v545
        %v657 = vunpack.c.l.b16 %v546
        %v658 = vunpack.c.l.b16 %v547
        %v659 = vunpack.c.l.b16 %v548
        %v660 = vunpack.c.l.b16 %v549
        %v661 = vunpack.c.l.b16 %v550
        %v662 = vunpack.c.l.b16 %v551
        %v663 = vunpack.c.l.b16 %v552
        %v664 = vunpack.c.l.b16 %v553
        %v665 = vunpack.c.l.b16 %v554
        %v666 = vunpack.c.l.b16 %v555
        %v667 = vunpack.c.l.b16 %v556
        %v668 = vunpack.c.l.b16 %v557
        %v669 = vunpack.c.l.b16 %v558
        %v670 = vunpack.c.l.b16 %v559
        %v671 = vunpack.c.l.b16 %v560
        %v672 = vunpack.c.l.b16 %v561
        %v673 = vunpack.c.l.b16 %v562
        %v674 = vunpack.c.l.b16 %v563
        %v675 = vunpack.c.l.b16 %v564
        %v676 = vunpack.c.l.b16 %v565
        %v677 = vunpack.c.l.b16 %v566
        %v678 = vunpack.c.l.b16 %v567
        %v679 = vunpack.c.l.b16 %v568
        %v680 = vunpack.c.l.b16 %v569
        %v681 = vunpack.c.l.b16 %v570
        %v682 = vunpack.c.l.b16 %v571
        %v683 = vunpack.c.l.b16 %v572
        %v684 = vpack.c.b16 %v653, %v652
        %v685 = vpack.c.b16 %v655, %v654
        %v686 = vpack.c.b16 %v657, %v656
        %v687 = vpack.c.b16 %v659, %v658
        %v688 = vpack.c.b16 %v661, %v660
        %v689 = vpack.c.b16 %v663, %v662
        %v690 = vpack.c.b16 %v665, %v664
        %v691 = vpack.c.b16 %v667, %v666
        %v692 = vpack.c.b16 %v669, %v668
        %v693 = vpack.c.b16 %v671, %v670
        %v694 = vpack.c.b16 %v673, %v672
        %v695 = vpack.c.b16 %v675, %v674
        %v696 = vpack.c.b16 %v677, %v676
        %v697 = vpack.c.b16 %v679, %v678
        %v698 = vpack.c.b16 %v681, %v680
        %v699 = vpack.c.b16 %v683, %v682
        %716 = vmatprep.subr.bf16.mxu0 0
        %717 = vmatpush1.bf16.msra.mxu0 %v691
        %718 = vmatprep.subr.bf16.mxu0 0
        %719 = vmatpush1.bf16.msra.mxu0 %v690
        %720 = vmatprep.subr.bf16.mxu0 0
        %721 = vmatpush1.bf16.msra.mxu0 %v689
        %722 = vmatprep.subr.bf16.mxu0 0
        %723 = vmatpush1.bf16.msra.mxu0 %v688
        %724 = vmatprep.subr.bf16.mxu0 0
        %725 = vmatpush1.bf16.msra.mxu0 %v687
        %726 = vmatprep.subr.bf16.mxu0 0
        %727 = vmatpush1.bf16.msra.mxu0 %v686
        %728 = vmatprep.subr.bf16.mxu0 0
        %729 = vmatpush1.bf16.msra.mxu0 %v685
        %730 = vmatprep.subr.bf16.mxu0 0
        %731 = vmatpush1.bf16.msra.mxu0 %v684
        %732 = vmatprep.subr.bf16.mxu0 0
        %733 = vmatpush2.bf16.msra.mxu0 %v699
        %734 = vmatprep.subr.bf16.mxu0 0
        %735 = vmatpush2.bf16.msra.mxu0 %v698
        %736 = vmatprep.subr.bf16.mxu0 0
        %737 = vmatpush2.bf16.msra.mxu0 %v697
        %738 = vmatprep.subr.bf16.mxu0 0
        %739 = vmatpush2.bf16.msra.mxu0 %v696
        %740 = vmatprep.subr.bf16.mxu0 0
        %741 = vmatpush2.bf16.msra.mxu0 %v695
        %742 = vmatprep.subr.bf16.mxu0 0
        %743 = vmatpush2.bf16.msra.mxu0 %v694
        %744 = vmatprep.subr.bf16.mxu0 0
        %745 = vmatpush2.bf16.msra.mxu0 %v693
        %746 = vmatprep.subr.bf16.mxu0 0
        %747 = vmatpush2.bf16.msra.mxu0 %v692
        %748 = vmatprep.mubr.bf16.mxu0 %v605
        %749 = vmatmul.mubr.bf16.gmra.mxu0 %v604
        %v750 = vpop.f32.mrf.mxu0
        %v751 = vadd.f32 %v578, %v750
        %v752 = vpop.f32.mrf.mxu0
        %v753 = vpop.f32.mrf.mxu0
        %v754 = vadd.f32 %v578, %v753
        %v755 = vpop.f32.mrf.mxu0
        %756 = vmatprep.mubr.bf16.mxu0 %v607
        %757 = vmatmul.mubr.bf16.gmra.mxu0 %v606
        %v758 = vpop.f32.mrf.mxu0
        %v759 = vadd.f32 %v578, %v758
        %v760 = vpop.f32.mrf.mxu0
        %v761 = vpop.f32.mrf.mxu0
        %v762 = vadd.f32 %v578, %v761
        %v763 = vpop.f32.mrf.mxu0
        %764 = vmatprep.mubr.bf16.mxu0 %v609
        %765 = vmatmul.mubr.bf16.gmra.mxu0 %v608
        %v766 = vpop.f32.mrf.mxu0
        %v767 = vadd.f32 %v578, %v766
        %v768 = vpop.f32.mrf.mxu0
        %v769 = vpop.f32.mrf.mxu0
        %v770 = vadd.f32 %v578, %v769
        %v771 = vpop.f32.mrf.mxu0
        %772 = vmatprep.mubr.bf16.mxu0 %v611
        %773 = vmatmul.mubr.bf16.gmra.mxu0 %v610
        %v774 = vpop.f32.mrf.mxu0
        %v775 = vadd.f32 %v578, %v774
        %v776 = vpop.f32.mrf.mxu0
        %v777 = vpop.f32.mrf.mxu0
        %v778 = vadd.f32 %v578, %v777
        %v779 = vpop.f32.mrf.mxu0
        %780 = vdwg.mxu0
        %v781 = vpack.c.bf16 %v754, %v751
        %v782 = vpack.c.bf16 %v762, %v759
        %v783 = vpack.c.bf16 %v770, %v767
        %v784 = vpack.c.bf16 %v778, %v775
        %v789 = vunpack.c.l.b16 %v781
        %v790 = vunpack.c.h.b16 %v781
        %v791 = vunpack.c.l.b16 %v782
        %v792 = vunpack.c.h.b16 %v782
        %v793 = vunpack.c.l.b16 %v783
        %v794 = vunpack.c.h.b16 %v783
        %v795 = vunpack.c.l.b16 %v784
        %v796 = vunpack.c.h.b16 %v784
        %v797 = vpack.c.b16 %v789, %v789
        %v798 = vpack.c.b16 %v790, %v790
        %v799 = vpack.c.b16 %v791, %v791
        %v800 = vpack.c.b16 %v792, %v792
        %v801 = vpack.c.b16 %v793, %v793
        %v802 = vpack.c.b16 %v794, %v794
        %v803 = vpack.c.b16 %v795, %v795
        %v804 = vpack.c.b16 %v796, %v796
        %813 = vst [vmem:[%s255] sm:$0xf] %v797
        %814 = vst [vmem:[%s255 + $0x4] sm:$0xf] %v798
        %815 = vst [vmem:[%s255 + $0x8] sm:$0xf] %v799
        %816 = vst [vmem:[%s255 + $0xc] sm:$0xf] %v800
        %817 = vst [vmem:[%s255 + $0x10] sm:$0xf] %v801
        %818 = vst [vmem:[%s255 + $0x14] sm:$0xf] %v802
        %819 = vst [vmem:[%s255 + $0x18] sm:$0xf] %v803
        %820 = vst [vmem:[%s255 + $0x1c] sm:$0xf] %v804
        %s821 = scalar_lea.vmem %s265, 128
        %v822 = vld [vmem:[%s821] sm:$0xf]
        %v823 = vld [vmem:[%s821 + $0x4] sm:$0xf]
        %v824 = vld [vmem:[%s821 + $0x8] sm:$0xf]
        %v825 = vld [vmem:[%s821 + $0xc] sm:$0xf]
        %v826 = vld [vmem:[%s821 + $0x10] sm:$0xf]
        %v827 = vld [vmem:[%s821 + $0x14] sm:$0xf]
        %v828 = vld [vmem:[%s821 + $0x18] sm:$0xf]
        %v829 = vld [vmem:[%s821 + $0x1c] sm:$0xf]
        %v830 = vld [vmem:[%s821 + $0x20] sm:$0xf]
        %v831 = vld [vmem:[%s821 + $0x24] sm:$0xf]
        %v832 = vld [vmem:[%s821 + $0x28] sm:$0xf]
        %v833 = vld [vmem:[%s821 + $0x2c] sm:$0xf]
        %v834 = vld [vmem:[%s821 + $0x30] sm:$0xf]
        %v835 = vld [vmem:[%s821 + $0x34] sm:$0xf]
        %v836 = vld [vmem:[%s821 + $0x38] sm:$0xf]
        %v837 = vld [vmem:[%s821 + $0x3c] sm:$0xf]
        %v838 = vld [vmem:[%s821 + $0x40] sm:$0xf]
        %v839 = vld [vmem:[%s821 + $0x44] sm:$0xf]
        %v840 = vld [vmem:[%s821 + $0x48] sm:$0xf]
        %v841 = vld [vmem:[%s821 + $0x4c] sm:$0xf]
        %v842 = vld [vmem:[%s821 + $0x50] sm:$0xf]
        %v843 = vld [vmem:[%s821 + $0x54] sm:$0xf]
        %v844 = vld [vmem:[%s821 + $0x58] sm:$0xf]
        %v845 = vld [vmem:[%s821 + $0x5c] sm:$0xf]
        %v846 = vld [vmem:[%s821 + $0x60] sm:$0xf]
        %v847 = vld [vmem:[%s821 + $0x64] sm:$0xf]
        %v848 = vld [vmem:[%s821 + $0x68] sm:$0xf]
        %v849 = vld [vmem:[%s821 + $0x6c] sm:$0xf]
        %v850 = vld [vmem:[%s821 + $0x70] sm:$0xf]
        %v851 = vld [vmem:[%s821 + $0x74] sm:$0xf]
        %v852 = vld [vmem:[%s821 + $0x78] sm:$0xf]
        %v853 = vld [vmem:[%s821 + $0x7c] sm:$0xf]
        %s854 = scalar_lea.vmem %s269, 1
        %v855 = vld [vmem:[%s854] sm:$0x1]
        %v857 = vlaneseq
        %v858 = vshrl.u32 %v857, 7
        %v859 = vsub.s32 0, %v858
        %v860 = vrot.slane %v855, %v859
        %v894 = vunpack.c.l.b16 %v822
        %v895 = vunpack.c.l.b16 %v823
        %v896 = vunpack.c.l.b16 %v824
        %v897 = vunpack.c.l.b16 %v825
        %v898 = vunpack.c.l.b16 %v826
        %v899 = vunpack.c.l.b16 %v827
        %v900 = vunpack.c.l.b16 %v828
        %v901 = vunpack.c.l.b16 %v829
        %v902 = vunpack.c.l.b16 %v830
        %v903 = vunpack.c.l.b16 %v831
        %v904 = vunpack.c.l.b16 %v832
        %v905 = vunpack.c.l.b16 %v833
        %v906 = vunpack.c.l.b16 %v834
        %v907 = vunpack.c.l.b16 %v835
        %v908 = vunpack.c.l.b16 %v836
        %v909 = vunpack.c.l.b16 %v837
        %v910 = vunpack.c.l.b16 %v838
        %v911 = vunpack.c.l.b16 %v839
        %v912 = vunpack.c.l.b16 %v840
        %v913 = vunpack.c.l.b16 %v841
        %v914 = vunpack.c.l.b16 %v842
        %v915 = vunpack.c.l.b16 %v843
        %v916 = vunpack.c.l.b16 %v844
        %v917 = vunpack.c.l.b16 %v845
        %v918 = vunpack.c.l.b16 %v846
        %v919 = vunpack.c.l.b16 %v847
        %v920 = vunpack.c.l.b16 %v848
        %v921 = vunpack.c.l.b16 %v849
        %v922 = vunpack.c.l.b16 %v850
        %v923 = vunpack.c.l.b16 %v851
        %v924 = vunpack.c.l.b16 %v852
        %v925 = vunpack.c.l.b16 %v853
        %v926 = vpack.c.b16 %v895, %v894
        %v927 = vpack.c.b16 %v897, %v896
        %v928 = vpack.c.b16 %v899, %v898
        %v929 = vpack.c.b16 %v901, %v900
        %v930 = vpack.c.b16 %v903, %v902
        %v931 = vpack.c.b16 %v905, %v904
        %v932 = vpack.c.b16 %v907, %v906
        %v933 = vpack.c.b16 %v909, %v908
        %v934 = vpack.c.b16 %v911, %v910
        %v935 = vpack.c.b16 %v913, %v912
        %v936 = vpack.c.b16 %v915, %v914
        %v937 = vpack.c.b16 %v917, %v916
        %v938 = vpack.c.b16 %v919, %v918
        %v939 = vpack.c.b16 %v921, %v920
        %v940 = vpack.c.b16 %v923, %v922
        %v941 = vpack.c.b16 %v925, %v924
        %958 = vmatprep.subr.bf16.mxu0 0
        %959 = vmatpush1.bf16.msra.mxu0 %v933
        %960 = vmatprep.subr.bf16.mxu0 0
        %961 = vmatpush1.bf16.msra.mxu0 %v932
        %962 = vmatprep.subr.bf16.mxu0 0
        %963 = vmatpush1.bf16.msra.mxu0 %v931
        %964 = vmatprep.subr.bf16.mxu0 0
        %965 = vmatpush1.bf16.msra.mxu0 %v930
        %966 = vmatprep.subr.bf16.mxu0 0
        %967 = vmatpush1.bf16.msra.mxu0 %v929
        %968 = vmatprep.subr.bf16.mxu0 0
        %969 = vmatpush1.bf16.msra.mxu0 %v928
        %970 = vmatprep.subr.bf16.mxu0 0
        %971 = vmatpush1.bf16.msra.mxu0 %v927
        %972 = vmatprep.subr.bf16.mxu0 0
        %973 = vmatpush1.bf16.msra.mxu0 %v926
        %974 = vmatprep.subr.bf16.mxu0 0
        %975 = vmatpush2.bf16.msra.mxu0 %v941
        %976 = vmatprep.subr.bf16.mxu0 0
        %977 = vmatpush2.bf16.msra.mxu0 %v940
        %978 = vmatprep.subr.bf16.mxu0 0
        %979 = vmatpush2.bf16.msra.mxu0 %v939
        %980 = vmatprep.subr.bf16.mxu0 0
        %981 = vmatpush2.bf16.msra.mxu0 %v938
        %982 = vmatprep.subr.bf16.mxu0 0
        %983 = vmatpush2.bf16.msra.mxu0 %v937
        %984 = vmatprep.subr.bf16.mxu0 0
        %985 = vmatpush2.bf16.msra.mxu0 %v936
        %986 = vmatprep.subr.bf16.mxu0 0
        %987 = vmatpush2.bf16.msra.mxu0 %v935
        %988 = vmatprep.subr.bf16.mxu0 0
        %989 = vmatpush2.bf16.msra.mxu0 %v934
        %990 = vmatprep.mubr.bf16.mxu0 %v605
        %991 = vmatmul.mubr.bf16.gmra.mxu0 %v604
        %v992 = vpop.f32.mrf.mxu0
        %v993 = vadd.f32 %v860, %v992
        %v994 = vpop.f32.mrf.mxu0
        %v995 = vpop.f32.mrf.mxu0
        %v996 = vadd.f32 %v860, %v995
        %v997 = vpop.f32.mrf.mxu0
        %998 = vmatprep.mubr.bf16.mxu0 %v607
        %999 = vmatmul.mubr.bf16.gmra.mxu0 %v606
        %v1000 = vpop.f32.mrf.mxu0
        %v1001 = vadd.f32 %v860, %v1000
        %v1002 = vpop.f32.mrf.mxu0
        %v1003 = vpop.f32.mrf.mxu0
        %v1004 = vadd.f32 %v860, %v1003
        %v1005 = vpop.f32.mrf.mxu0
        %1006 = vmatprep.mubr.bf16.mxu0 %v609
        %1007 = vmatmul.mubr.bf16.gmra.mxu0 %v608
        %v1008 = vpop.f32.mrf.mxu0
        %v1009 = vadd.f32 %v860, %v1008
        %v1010 = vpop.f32.mrf.mxu0
        %v1011 = vpop.f32.mrf.mxu0
        %v1012 = vadd.f32 %v860, %v1011
        %v1013 = vpop.f32.mrf.mxu0
        %1014 = vmatprep.mubr.bf16.mxu0 %v611
        %1015 = vmatmul.mubr.bf16.gmra.mxu0 %v610
        %v1016 = vpop.f32.mrf.mxu0
        %v1017 = vadd.f32 %v860, %v1016
        %v1018 = vpop.f32.mrf.mxu0
        %v1019 = vpop.f32.mrf.mxu0
        %v1020 = vadd.f32 %v860, %v1019
        %v1021 = vpop.f32.mrf.mxu0
        %1022 = vdwg.mxu0
        %v1023 = vpack.c.bf16 %v996, %v993
        %v1024 = vpack.c.bf16 %v1004, %v1001
        %v1025 = vpack.c.bf16 %v1012, %v1009
        %v1026 = vpack.c.bf16 %v1020, %v1017
        %v1031 = vunpack.c.l.b16 %v1023
        %v1032 = vunpack.c.h.b16 %v1023
        %v1033 = vunpack.c.l.b16 %v1024
        %v1034 = vunpack.c.h.b16 %v1024
        %v1035 = vunpack.c.l.b16 %v1025
        %v1036 = vunpack.c.h.b16 %v1025
        %v1037 = vunpack.c.l.b16 %v1026
        %v1038 = vunpack.c.h.b16 %v1026
        %v1039 = vpack.c.b16 %v1031, %v1031
        %v1040 = vpack.c.b16 %v1032, %v1032
        %v1041 = vpack.c.b16 %v1033, %v1033
        %v1042 = vpack.c.b16 %v1034, %v1034
        %v1043 = vpack.c.b16 %v1035, %v1035
        %v1044 = vpack.c.b16 %v1036, %v1036
        %v1045 = vpack.c.b16 %v1037, %v1037
        %v1046 = vpack.c.b16 %v1038, %v1038
        %s1055 = scalar_lea.vmem %s255, 32 [#allocation3]
        %1056 = vst [vmem:[%s1055] sm:$0xf] %v1039
        %1057 = vst [vmem:[%s1055 + $0x4] sm:$0xf] %v1040
        %1058 = vst [vmem:[%s1055 + $0x8] sm:$0xf] %v1041
        %1059 = vst [vmem:[%s1055 + $0xc] sm:$0xf] %v1042
        %1060 = vst [vmem:[%s1055 + $0x10] sm:$0xf] %v1043
        %1061 = vst [vmem:[%s1055 + $0x14] sm:$0xf] %v1044
        %1062 = vst [vmem:[%s1055 + $0x18] sm:$0xf] %v1045
        %1063 = vst [vmem:[%s1055 + $0x1c] sm:$0xf] %v1046
        %s1064 = scalar_lea.vmem %s265, 256
        %v1065 = vld [vmem:[%s1064] sm:$0xf]
        %v1066 = vld [vmem:[%s1064 + $0x4] sm:$0xf]
        %v1067 = vld [vmem:[%s1064 + $0x8] sm:$0xf]
        %v1068 = vld [vmem:[%s1064 + $0xc] sm:$0xf]
        %v1069 = vld [vmem:[%s1064 + $0x10] sm:$0xf]
        %v1070 = vld [vmem:[%s1064 + $0x14] sm:$0xf]
        %v1071 = vld [vmem:[%s1064 + $0x18] sm:$0xf]
        %v1072 = vld [vmem:[%s1064 + $0x1c] sm:$0xf]
        %v1073 = vld [vmem:[%s1064 + $0x20] sm:$0xf]
        %v1074 = vld [vmem:[%s1064 + $0x24] sm:$0xf]
        %v1075 = vld [vmem:[%s1064 + $0x28] sm:$0xf]
        %v1076 = vld [vmem:[%s1064 + $0x2c] sm:$0xf]
        %v1077 = vld [vmem:[%s1064 + $0x30] sm:$0xf]
        %v1078 = vld [vmem:[%s1064 + $0x34] sm:$0xf]
        %v1079 = vld [vmem:[%s1064 + $0x38] sm:$0xf]
        %v1080 = vld [vmem:[%s1064 + $0x3c] sm:$0xf]
        %v1081 = vld [vmem:[%s1064 + $0x40] sm:$0xf]
        %v1082 = vld [vmem:[%s1064 + $0x44] sm:$0xf]
        %v1083 = vld [vmem:[%s1064 + $0x48] sm:$0xf]
        %v1084 = vld [vmem:[%s1064 + $0x4c] sm:$0xf]
        %v1085 = vld [vmem:[%s1064 + $0x50] sm:$0xf]
        %v1086 = vld [vmem:[%s1064 + $0x54] sm:$0xf]
        %v1087 = vld [vmem:[%s1064 + $0x58] sm:$0xf]
        %v1088 = vld [vmem:[%s1064 + $0x5c] sm:$0xf]
        %v1089 = vld [vmem:[%s1064 + $0x60] sm:$0xf]
        %v1090 = vld [vmem:[%s1064 + $0x64] sm:$0xf]
        %v1091 = vld [vmem:[%s1064 + $0x68] sm:$0xf]
        %v1092 = vld [vmem:[%s1064 + $0x6c] sm:$0xf]
        %v1093 = vld [vmem:[%s1064 + $0x70] sm:$0xf]
        %v1094 = vld [vmem:[%s1064 + $0x74] sm:$0xf]
        %v1095 = vld [vmem:[%s1064 + $0x78] sm:$0xf]
        %v1096 = vld [vmem:[%s1064 + $0x7c] sm:$0xf]
        %s1097 = scalar_lea.vmem %s269, 2
        %v1098 = vld [vmem:[%s1097] sm:$0x1]
        %v1100 = vlaneseq
        %v1101 = vshrl.u32 %v1100, 7
        %v1102 = vsub.s32 0, %v1101
        %v1103 = vrot.slane %v1098, %v1102
        %v1137 = vunpack.c.l.b16 %v1065
        %v1138 = vunpack.c.l.b16 %v1066
        %v1139 = vunpack.c.l.b16 %v1067
        %v1140 = vunpack.c.l.b16 %v1068
        %v1141 = vunpack.c.l.b16 %v1069
        %v1142 = vunpack.c.l.b16 %v1070
        %v1143 = vunpack.c.l.b16 %v1071
        %v1144 = vunpack.c.l.b16 %v1072
        %v1145 = vunpack.c.l.b16 %v1073
        %v1146 = vunpack.c.l.b16 %v1074
        %v1147 = vunpack.c.l.b16 %v1075
        %v1148 = vunpack.c.l.b16 %v1076
        %v1149 = vunpack.c.l.b16 %v1077
        %v1150 = vunpack.c.l.b16 %v1078
        %v1151 = vunpack.c.l.b16 %v1079
        %v1152 = vunpack.c.l.b16 %v1080
        %v1153 = vunpack.c.l.b16 %v1081
        %v1154 = vunpack.c.l.b16 %v1082
        %v1155 = vunpack.c.l.b16 %v1083
        %v1156 = vunpack.c.l.b16 %v1084
        %v1157 = vunpack.c.l.b16 %v1085
        %v1158 = vunpack.c.l.b16 %v1086
        %v1159 = vunpack.c.l.b16 %v1087
        %v1160 = vunpack.c.l.b16 %v1088
        %v1161 = vunpack.c.l.b16 %v1089
        %v1162 = vunpack.c.l.b16 %v1090
        %v1163 = vunpack.c.l.b16 %v1091
        %v1164 = vunpack.c.l.b16 %v1092
        %v1165 = vunpack.c.l.b16 %v1093
        %v1166 = vunpack.c.l.b16 %v1094
        %v1167 = vunpack.c.l.b16 %v1095
        %v1168 = vunpack.c.l.b16 %v1096
        %v1169 = vpack.c.b16 %v1138, %v1137
        %v1170 = vpack.c.b16 %v1140, %v1139
        %v1171 = vpack.c.b16 %v1142, %v1141
        %v1172 = vpack.c.b16 %v1144, %v1143
        %v1173 = vpack.c.b16 %v1146, %v1145
        %v1174 = vpack.c.b16 %v1148, %v1147
        %v1175 = vpack.c.b16 %v1150, %v1149
        %v1176 = vpack.c.b16 %v1152, %v1151
        %v1177 = vpack.c.b16 %v1154, %v1153
        %v1178 = vpack.c.b16 %v1156, %v1155
        %v1179 = vpack.c.b16 %v1158, %v1157
        %v1180 = vpack.c.b16 %v1160, %v1159
        %v1181 = vpack.c.b16 %v1162, %v1161
        %v1182 = vpack.c.b16 %v1164, %v1163
        %v1183 = vpack.c.b16 %v1166, %v1165
        %v1184 = vpack.c.b16 %v1168, %v1167
        %1201 = vmatprep.subr.bf16.mxu0 0
        %1202 = vmatpush1.bf16.msra.mxu0 %v1176
        %1203 = vmatprep.subr.bf16.mxu0 0
        %1204 = vmatpush1.bf16.msra.mxu0 %v1175
        %1205 = vmatprep.subr.bf16.mxu0 0
        %1206 = vmatpush1.bf16.msra.mxu0 %v1174
        %1207 = vmatprep.subr.bf16.mxu0 0
        %1208 = vmatpush1.bf16.msra.mxu0 %v1173
        %1209 = vmatprep.subr.bf16.mxu0 0
        %1210 = vmatpush1.bf16.msra.mxu0 %v1172
        %1211 = vmatprep.subr.bf16.mxu0 0
        %1212 = vmatpush1.bf16.msra.mxu0 %v1171
        %1213 = vmatprep.subr.bf16.mxu0 0
        %1214 = vmatpush1.bf16.msra.mxu0 %v1170
        %1215 = vmatprep.subr.bf16.mxu0 0
        %1216 = vmatpush1.bf16.msra.mxu0 %v1169
        %1217 = vmatprep.subr.bf16.mxu0 0
        %1218 = vmatpush2.bf16.msra.mxu0 %v1184
        %1219 = vmatprep.subr.bf16.mxu0 0
        %1220 = vmatpush2.bf16.msra.mxu0 %v1183
        %1221 = vmatprep.subr.bf16.mxu0 0
        %1222 = vmatpush2.bf16.msra.mxu0 %v1182
        %1223 = vmatprep.subr.bf16.mxu0 0
        %1224 = vmatpush2.bf16.msra.mxu0 %v1181
        %1225 = vmatprep.subr.bf16.mxu0 0
        %1226 = vmatpush2.bf16.msra.mxu0 %v1180
        %1227 = vmatprep.subr.bf16.mxu0 0
        %1228 = vmatpush2.bf16.msra.mxu0 %v1179
        %1229 = vmatprep.subr.bf16.mxu0 0
        %1230 = vmatpush2.bf16.msra.mxu0 %v1178
        %1231 = vmatprep.subr.bf16.mxu0 0
        %1232 = vmatpush2.bf16.msra.mxu0 %v1177
        %1233 = vmatprep.mubr.bf16.mxu0 %v605
        %1234 = vmatmul.mubr.bf16.gmra.mxu0 %v604
        %v1235 = vpop.f32.mrf.mxu0
        %v1236 = vadd.f32 %v1103, %v1235
        %v1237 = vpop.f32.mrf.mxu0
        %v1238 = vpop.f32.mrf.mxu0
        %v1239 = vadd.f32 %v1103, %v1238
        %v1240 = vpop.f32.mrf.mxu0
        %1241 = vmatprep.mubr.bf16.mxu0 %v607
        %1242 = vmatmul.mubr.bf16.gmra.mxu0 %v606
        %v1243 = vpop.f32.mrf.mxu0
        %v1244 = vadd.f32 %v1103, %v1243
        %v1245 = vpop.f32.mrf.mxu0
        %v1246 = vpop.f32.mrf.mxu0
        %v1247 = vadd.f32 %v1103, %v1246
        %v1248 = vpop.f32.mrf.mxu0
        %1249 = vmatprep.mubr.bf16.mxu0 %v609
        %1250 = vmatmul.mubr.bf16.gmra.mxu0 %v608
        %v1251 = vpop.f32.mrf.mxu0
        %v1252 = vadd.f32 %v1103, %v1251
        %v1253 = vpop.f32.mrf.mxu0
        %v1254 = vpop.f32.mrf.mxu0
        %v1255 = vadd.f32 %v1103, %v1254
        %v1256 = vpop.f32.mrf.mxu0
        %1257 = vmatprep.mubr.bf16.mxu0 %v611
        %1258 = vmatmul.mubr.bf16.gmra.mxu0 %v610
        %v1259 = vpop.f32.mrf.mxu0
        %v1260 = vadd.f32 %v1103, %v1259
        %v1261 = vpop.f32.mrf.mxu0
        %v1262 = vpop.f32.mrf.mxu0
        %v1263 = vadd.f32 %v1103, %v1262
        %v1264 = vpop.f32.mrf.mxu0
        %1265 = vdwg.mxu0
        %v1266 = vpack.c.bf16 %v1239, %v1236
        %v1267 = vpack.c.bf16 %v1247, %v1244
        %v1268 = vpack.c.bf16 %v1255, %v1252
        %v1269 = vpack.c.bf16 %v1263, %v1260
        %v1274 = vunpack.c.l.b16 %v1266
        %v1275 = vunpack.c.h.b16 %v1266
        %v1276 = vunpack.c.l.b16 %v1267
        %v1277 = vunpack.c.h.b16 %v1267
        %v1278 = vunpack.c.l.b16 %v1268
        %v1279 = vunpack.c.h.b16 %v1268
        %v1280 = vunpack.c.l.b16 %v1269
        %v1281 = vunpack.c.h.b16 %v1269
        %v1282 = vpack.c.b16 %v1274, %v1274
        %v1283 = vpack.c.b16 %v1275, %v1275
        %v1284 = vpack.c.b16 %v1276, %v1276
        %v1285 = vpack.c.b16 %v1277, %v1277
        %v1286 = vpack.c.b16 %v1278, %v1278
        %v1287 = vpack.c.b16 %v1279, %v1279
        %v1288 = vpack.c.b16 %v1280, %v1280
        %v1289 = vpack.c.b16 %v1281, %v1281
        %s1298 = scalar_lea.vmem %s255, 64 [#allocation3]
        %1299 = vst [vmem:[%s1298] sm:$0xf] %v1282
        %1300 = vst [vmem:[%s1298 + $0x4] sm:$0xf] %v1283
        %1301 = vst [vmem:[%s1298 + $0x8] sm:$0xf] %v1284
        %1302 = vst [vmem:[%s1298 + $0xc] sm:$0xf] %v1285
        %1303 = vst [vmem:[%s1298 + $0x10] sm:$0xf] %v1286
        %1304 = vst [vmem:[%s1298 + $0x14] sm:$0xf] %v1287
        %1305 = vst [vmem:[%s1298 + $0x18] sm:$0xf] %v1288
        %1306 = vst [vmem:[%s1298 + $0x1c] sm:$0xf] %v1289
        %s1307 = sand.u32 %s158, 1
        %s1308 = sand.u32 %s158, 1
        %s1309 = smul.addr %s1308, 96
        %s1310 = scalar_lea.vmem [#allocation3], %s1309
        // Predicated region
        $region45: #{policy_network_forward.9} parent=39 // pred_check
          %p1311 = pneg %p168
        $region46: #{policy_network_forward.9} parent=39 // pred_check_branch
          %1313 = sbr.rel (%p1311) target = $region48
        $region47: #{policy_network_forward.9} parent=39 // pred_region
          %s1314 = smul.u32 3, %s21
          %s1315 = smul.addr %s20, 8
          %s1316 = smul.addr %s1314, 16
          %s1317 = sadd.s32 %s1315, %s1316
          %s1318 = smul.addr %s1317, 4
          %s1319 = scalar_lea.vmem %s5, %s1318
          // Predicated region
          $region49: #{policy_network_forward.9} parent=47 // pred_check
            _
          $region50: #{policy_network_forward.9} parent=47 // pred_check_branch
            %1321 = sbr.rel (0) target = $region52
          $region51: #{policy_network_forward.9} parent=47 // pred_region
            // Predicated region
            $region53: #{policy_network_forward.9} parent=51 // pred_check
              _
            $region54: #{policy_network_forward.9} parent=51 // pred_check_branch
              %1323 = sbr.rel target = $region56
            $region55: #{policy_network_forward.9} parent=51 // pred_region
              // Predicated region
              $region68: #{policy_network_forward.9} parent=55 // pred_check
                _
              $region69: #{policy_network_forward.9} parent=55 // pred_check_branch
                %1385 = sbr.rel (0) target = $region71
              $region70: #{policy_network_forward.9} parent=55 // pred_region
                loop: start=0, step=1, limit=1
                $region72: #{policy_network_forward.9} parent=70 // loop_pre_header
                  _
                $region73: #{policy_network_forward.9} parent=70 // loop_header
                  %s1387 = sphi 0, %s1391
                  %p1388 = scmp.ge.s32.totalorder %s1387, 1
                  %s1392 = sphi %s1310, %s1310
                  %s1393 = sphi %s1319, %s1319
                $region74: #{policy_network_forward.9} parent=70 // loop_header_branch
                  %1390 = sbr.rel (%p1388) target = $region78
                $region75: #{policy_network_forward.9} parent=70 // loop_body
                  _
                $region76: #{policy_network_forward.9} parent=70 // loop_footer
                  %s1391 = sadd.s32 1, %s1387
                $region77: #{policy_network_forward.9} parent=70 // loop_footer_branch
                  %1386 = sbr.rel target = $region73
                $region78: #{policy_network_forward.9} parent=70 // loop_exit
                  _
                %s1395 = ssub.s32 16, 1
                loop: start=0, step=1, limit=1
                $region79: #{policy_network_forward.9} parent=70 // loop_pre_header
                  _
                $region80: #{policy_network_forward.9} parent=70 // loop_header
                  %s1397 = sphi 0, %s1401
                  %p1398 = scmp.ge.s32.totalorder %s1397, 1
                  %s1402 = sphi %s1310, %s1310
                  %s1403 = sphi %s1319, %s1319
                $region81: #{policy_network_forward.9} parent=70 // loop_header_branch
                  %1400 = sbr.rel (%p1398) target = $region85
                $region82: #{policy_network_forward.9} parent=70 // loop_body
                  %v1404 = vld [vmem:[%s1402] sm:%s1395]
                  %1405 = vst [vmem:[%s1403] sm:%s1395] %v1404
                  %v1406 = vld [vmem:[%s1402 + $0x4] sm:%s1395]
                  %1407 = vst [vmem:[%s1403 + $0x4] sm:%s1395] %v1406
                  %v1408 = vld [vmem:[%s1402 + $0x8] sm:%s1395]
                  %1409 = vst [vmem:[%s1403 + $0x8] sm:%s1395] %v1408
                  %v1410 = vld [vmem:[%s1402 + $0xc] sm:%s1395]
                  %1411 = vst [vmem:[%s1403 + $0xc] sm:%s1395] %v1410
                  %v1412 = vld [vmem:[%s1402 + $0x10] sm:%s1395]
                  %1413 = vst [vmem:[%s1403 + $0x10] sm:%s1395] %v1412
                  %v1414 = vld [vmem:[%s1402 + $0x14] sm:%s1395]
                  %1415 = vst [vmem:[%s1403 + $0x14] sm:%s1395] %v1414
                  %v1416 = vld [vmem:[%s1402 + $0x18] sm:%s1395]
                  %1417 = vst [vmem:[%s1403 + $0x18] sm:%s1395] %v1416
                  %v1418 = vld [vmem:[%s1402 + $0x1c] sm:%s1395]
                  %1419 = vst [vmem:[%s1403 + $0x1c] sm:%s1395] %v1418
                  %v1420 = vld [vmem:[%s1402 + $0x20] sm:%s1395]
                  %1421 = vst [vmem:[%s1403 + $0x40] sm:%s1395] %v1420
                  %v1422 = vld [vmem:[%s1402 + $0x24] sm:%s1395]
                  %1423 = vst [vmem:[%s1403 + $0x44] sm:%s1395] %v1422
                  %v1424 = vld [vmem:[%s1402 + $0x28] sm:%s1395]
                  %1425 = vst [vmem:[%s1403 + $0x48] sm:%s1395] %v1424
                  %v1426 = vld [vmem:[%s1402 + $0x2c] sm:%s1395]
                  %1427 = vst [vmem:[%s1403 + $0x4c] sm:%s1395] %v1426
                  %v1428 = vld [vmem:[%s1402 + $0x30] sm:%s1395]
                  %1429 = vst [vmem:[%s1403 + $0x50] sm:%s1395] %v1428
                  %v1430 = vld [vmem:[%s1402 + $0x34] sm:%s1395]
                  %1431 = vst [vmem:[%s1403 + $0x54] sm:%s1395] %v1430
                  %v1432 = vld [vmem:[%s1402 + $0x38] sm:%s1395]
                  %1433 = vst [vmem:[%s1403 + $0x58] sm:%s1395] %v1432
                  %v1434 = vld [vmem:[%s1402 + $0x3c] sm:%s1395]
                  %1435 = vst [vmem:[%s1403 + $0x5c] sm:%s1395] %v1434
                  %v1436 = vld [vmem:[%s1402 + $0x40] sm:%s1395]
                  %1437 = vst [vmem:[%s1403 + $0x80] sm:%s1395] %v1436
                  %v1438 = vld [vmem:[%s1402 + $0x44] sm:%s1395]
                  %1439 = vst [vmem:[%s1403 + $0x84] sm:%s1395] %v1438
                  %v1440 = vld [vmem:[%s1402 + $0x48] sm:%s1395]
                  %1441 = vst [vmem:[%s1403 + $0x88] sm:%s1395] %v1440
                  %v1442 = vld [vmem:[%s1402 + $0x4c] sm:%s1395]
                  %1443 = vst [vmem:[%s1403 + $0x8c] sm:%s1395] %v1442
                  %v1444 = vld [vmem:[%s1402 + $0x50] sm:%s1395]
                  %1445 = vst [vmem:[%s1403 + $0x90] sm:%s1395] %v1444
                  %v1446 = vld [vmem:[%s1402 + $0x54] sm:%s1395]
                  %1447 = vst [vmem:[%s1403 + $0x94] sm:%s1395] %v1446
                  %v1448 = vld [vmem:[%s1402 + $0x58] sm:%s1395]
                  %1449 = vst [vmem:[%s1403 + $0x98] sm:%s1395] %v1448
                  %v1450 = vld [vmem:[%s1402 + $0x5c] sm:%s1395]
                  %1451 = vst [vmem:[%s1403 + $0x9c] sm:%s1395] %v1450
                $region83: #{policy_network_forward.9} parent=70 // loop_footer
                  %s1401 = sadd.s32 1, %s1397
                $region84: #{policy_network_forward.9} parent=70 // loop_footer_branch
                  %1396 = sbr.rel target = $region80
                $region85: #{policy_network_forward.9} parent=70 // loop_exit
                  _
              $region71: #{policy_network_forward.9} parent=55 // pred_fallthru
                _
            $region56: #{policy_network_forward.9} parent=51 // pred_fallthru
              _
            // Predicated region
            $region57: #{policy_network_forward.9} parent=51 // pred_check
              _
            $region58: #{policy_network_forward.9} parent=51 // pred_check_branch
              %1325 = sbr.rel (0) target = $region60
            $region59: #{policy_network_forward.9} parent=51 // pred_region
              %s1327 = ssub.s32 16, 1
              loop: start=0, step=1, limit=1
              $region61: #{policy_network_forward.9} parent=59 // loop_pre_header
                _
              $region62: #{policy_network_forward.9} parent=59 // loop_header
                %s1329 = sphi 0, %s1333
                %p1330 = scmp.ge.s32.totalorder %s1329, 1
                %s1334 = sphi %s1310, %s1310
                %s1335 = sphi %s1319, %s1319
              $region63: #{policy_network_forward.9} parent=59 // loop_header_branch
                %1332 = sbr.rel (%p1330) target = $region67
              $region64: #{policy_network_forward.9} parent=59 // loop_body
                %v1336 = vld [vmem:[%s1334] sm:%s1327]
                %1337 = vst [vmem:[%s1335] sm:%s1327] %v1336
                %v1338 = vld [vmem:[%s1334 + $0x4] sm:%s1327]
                %1339 = vst [vmem:[%s1335 + $0x4] sm:%s1327] %v1338
                %v1340 = vld [vmem:[%s1334 + $0x8] sm:%s1327]
                %1341 = vst [vmem:[%s1335 + $0x8] sm:%s1327] %v1340
                %v1342 = vld [vmem:[%s1334 + $0xc] sm:%s1327]
                %1343 = vst [vmem:[%s1335 + $0xc] sm:%s1327] %v1342
                %v1344 = vld [vmem:[%s1334 + $0x10] sm:%s1327]
                %1345 = vst [vmem:[%s1335 + $0x10] sm:%s1327] %v1344
                %v1346 = vld [vmem:[%s1334 + $0x14] sm:%s1327]
                %1347 = vst [vmem:[%s1335 + $0x14] sm:%s1327] %v1346
                %v1348 = vld [vmem:[%s1334 + $0x18] sm:%s1327]
                %1349 = vst [vmem:[%s1335 + $0x18] sm:%s1327] %v1348
                %v1350 = vld [vmem:[%s1334 + $0x1c] sm:%s1327]
                %1351 = vst [vmem:[%s1335 + $0x1c] sm:%s1327] %v1350
                %v1352 = vld [vmem:[%s1334 + $0x20] sm:%s1327]
                %1353 = vst [vmem:[%s1335 + $0x40] sm:%s1327] %v1352
                %v1354 = vld [vmem:[%s1334 + $0x24] sm:%s1327]
                %1355 = vst [vmem:[%s1335 + $0x44] sm:%s1327] %v1354
                %v1356 = vld [vmem:[%s1334 + $0x28] sm:%s1327]
                %1357 = vst [vmem:[%s1335 + $0x48] sm:%s1327] %v1356
                %v1358 = vld [vmem:[%s1334 + $0x2c] sm:%s1327]
                %1359 = vst [vmem:[%s1335 + $0x4c] sm:%s1327] %v1358
                %v1360 = vld [vmem:[%s1334 + $0x30] sm:%s1327]
                %1361 = vst [vmem:[%s1335 + $0x50] sm:%s1327] %v1360
                %v1362 = vld [vmem:[%s1334 + $0x34] sm:%s1327]
                %1363 = vst [vmem:[%s1335 + $0x54] sm:%s1327] %v1362
                %v1364 = vld [vmem:[%s1334 + $0x38] sm:%s1327]
                %1365 = vst [vmem:[%s1335 + $0x58] sm:%s1327] %v1364
                %v1366 = vld [vmem:[%s1334 + $0x3c] sm:%s1327]
                %1367 = vst [vmem:[%s1335 + $0x5c] sm:%s1327] %v1366
                %v1368 = vld [vmem:[%s1334 + $0x40] sm:%s1327]
                %1369 = vst [vmem:[%s1335 + $0x80] sm:%s1327] %v1368
                %v1370 = vld [vmem:[%s1334 + $0x44] sm:%s1327]
                %1371 = vst [vmem:[%s1335 + $0x84] sm:%s1327] %v1370
                %v1372 = vld [vmem:[%s1334 + $0x48] sm:%s1327]
                %1373 = vst [vmem:[%s1335 + $0x88] sm:%s1327] %v1372
                %v1374 = vld [vmem:[%s1334 + $0x4c] sm:%s1327]
                %1375 = vst [vmem:[%s1335 + $0x8c] sm:%s1327] %v1374
                %v1376 = vld [vmem:[%s1334 + $0x50] sm:%s1327]
                %1377 = vst [vmem:[%s1335 + $0x90] sm:%s1327] %v1376
                %v1378 = vld [vmem:[%s1334 + $0x54] sm:%s1327]
                %1379 = vst [vmem:[%s1335 + $0x94] sm:%s1327] %v1378
                %v1380 = vld [vmem:[%s1334 + $0x58] sm:%s1327]
                %1381 = vst [vmem:[%s1335 + $0x98] sm:%s1327] %v1380
                %v1382 = vld [vmem:[%s1334 + $0x5c] sm:%s1327]
                %1383 = vst [vmem:[%s1335 + $0x9c] sm:%s1327] %v1382
              $region65: #{policy_network_forward.9} parent=59 // loop_footer
                %s1333 = sadd.s32 1, %s1329
              $region66: #{policy_network_forward.9} parent=59 // loop_footer_branch
                %1328 = sbr.rel target = $region62
              $region67: #{policy_network_forward.9} parent=59 // loop_exit
                _
            $region60: #{policy_network_forward.9} parent=51 // pred_fallthru
              _
          $region52: #{policy_network_forward.9} parent=47 // pred_fallthru
            _
          %1452 = vnop
        $region48: #{policy_network_forward.9} parent=39 // pred_fallthru
          _
      $region40: #{policy_network_forward.9} parent=5 // pred_fallthru
        _
      %p1453 = scmp.le.s32.totalorder 2, %s11
      // Predicated region
      $region86: #{policy_network_forward.9} parent=5 // pred_check
        %p1454 = pneg %p1453
      $region87: #{policy_network_forward.9} parent=5 // pred_check_branch
        %1456 = sbr.rel (%p1454) target = $region89
      $region88: #{policy_network_forward.9} parent=5 // pred_region
        %s1457 = ssub.s32 %s11, 2
        // Predicated region
        $region90: #{policy_network_forward.9} parent=88 // pred_check
          %p1458 = pneg %p174
        $region91: #{policy_network_forward.9} parent=88 // pred_check_branch
          %1460 = sbr.rel (%p1458) target = $region93
        $region92: #{policy_network_forward.9} parent=88 // pred_region
          %s1461 = sand.u32 %s159, 1
          %s1462 = sand.u32 %s159, 1
          %s1463 = smul.addr %s1462, 96
          %s1464 = scalar_lea.vmem [#allocation3], %s1463
        $region93: #{policy_network_forward.9} parent=88 // pred_fallthru
          _
      $region89: #{policy_network_forward.9} parent=5 // pred_fallthru
        _
    $region6: #{policy_network_forward.9} parent=1 // loop_footer
      %s15 = sadd.s32 1, %s11
    $region7: #{policy_network_forward.9} parent=1 // loop_footer_branch
      %10 = sbr.rel target = $region3
    $region8: #{policy_network_forward.9} parent=1 // loop_exit
      _

// kernel: policy_network_forward.11
$region0: #{policy_network_forward.11}
  #allocation0 [shape = 'u32[]', space=smem, size = 0x4, offset = 0x4, fixed_abs, tag = 'smem constant byte address 0x4 - core index']
  #allocation1 [shape = 'u32[144,128]{1,0:T(1,128)}', space=vmem, size = 0x12000, scoped, tag = 'internal scratch']
  #allocation2 [shape = 'bf16[128,256]{1,0:T(8,128)(2,1)}', space=vmem, size = 0x10000, scoped, tag = 'scratch operand']
  %s0 = inlined_call_operand.vmem [shape: f32[128,256], index: 0, kind: input, shape index: {}]
  %s1 = inlined_call_operand.vmem [shape: f32[1,256], index: 1, kind: input, shape index: {}]
  %s2 = inlined_call_operand.vmem [shape: f32[1,256], index: 2, kind: input, shape index: {}]
  %s3 = inlined_call_operand.vmem [shape: bf16[256,1024], index: 3, kind: input, shape index: {}]
  %s4 = inlined_call_operand.vmem [shape: f32[1,1024], index: 4, kind: input, shape index: {}]
  %s5 = inlined_call_operand.vmem [shape: bf16[128,1024], index: 5, kind: output, shape index: {}]
  %s6 = sld [smem:[#allocation0]]
  $region99: #{policy_network_forward.11} parent=0
    _
  %s8 = ssub.s32 1, %s6
  %s9 = scalar_select 0, %s8, %s6
  $region1: #{policy_network_forward.11} parent=0
    #allocation3 [shape = 'u8[524288]{0}', space=vmem, size = 0x80000, scoped, tag = 'input window, operand 3']
    #allocation4 [shape = 'u8[262144]{0}', space=vmem, size = 0x40000, scoped, tag = 'output window, operand 0']
    loop: start=0, step=1, limit=4
    $region2: #{policy_network_forward.11} parent=1 // loop_pre_header
      _
    $region3: #{policy_network_forward.11} parent=1 // loop_header
      %s11 = sphi 0, %s15
      %p12 = scmp.ge.s32.totalorder %s11, 4
      %s18 = sphi 0, %s30
      %s19 = sphi 0, %s26
      %s20 = sphi 0, %s18
      %s21 = sphi 0, %s19
      %s22 = sphi 0, %s20
      %s23 = sphi 0, %s21
      %s33 = sphi 0, %s35
      %s36 = sphi 0, %s33
      %s37 = sphi 0, %s36
      %s53 = sphi 0, %s37
      %s57 = sphi 0, %s57
      %s59 = sphi 0, %s57
      %s60 = sphi 0, %s59
      %s74 = sphi 0, %s60
      %s78 = sphi 0, %s78
      %s80 = sphi 0, %s78
      %s81 = sphi 0, %s80
      %s95 = sphi 0, %s81
      %s101 = sphi 0, %s103
      %s104 = sphi 0, %s101
      %s105 = sphi 0, %s104
      %s121 = sphi 0, %s105
      %s127 = sphi 0, %s129
      %s130 = sphi 0, %s127
      %s131 = sphi 0, %s130
      %s147 = sphi 0, %s131
      %s155 = sphi 0, %s157
      %s158 = sphi 0, %s155
      %s159 = sphi 0, %s158
      %s175 = sphi 0, %s159
    $region4: #{policy_network_forward.11} parent=1 // loop_header_branch
      %14 = sbr.rel (%p12) target = $region8
    $region5: #{policy_network_forward.11} parent=1 // loop_body
      %s16 = ssub.s32 %s11, 1
      %s17 = ssub.s32 %s11, 2
      %s24 = sadd.s32 1, %s19
      %p25 = scmp.ge.s32.totalorder %s24, 2
      %s26 = scalar_select %p25, 0, %s24
      %s27 = sadd.s32 1, %s18
      %s28 = scalar_select %p25, %s27, %s18
      %p29 = scmp.ge.s32.totalorder %s28, 1
      %s30 = scalar_select %p29, 0, %s28
      %s31 = ssub.s32 %s18, %s30
      %p32 = scmp.eq.s32.totalorder %s31, 0
      %s34 = sadd.s32 %s33, 1
      %s35 = scalar_select %p32, %s33, %s34
      %p38 = pneg %p32
      %p39 = scmp.eq.s32.totalorder %s11, 1
      %p40 = por %p38, %p39
      %p41 = scmp.ne.s32.totalorder %s33, %s36
      %p42 = scmp.eq.s32.totalorder %s11, 0
      %p43 = por %p41, %p42
      %p44 = scmp.ne.s32.totalorder %s33, %s36
      %p45 = scmp.eq.s32.totalorder %s16, 1
      %p46 = por %p44, %p45
      %p47 = scmp.ne.s32.totalorder %s36, %s37
      %p48 = scmp.eq.s32.totalorder %s16, 0
      %p49 = por %p47, %p48
      %p50 = scmp.ne.s32.totalorder %s36, %s37
      %p51 = scmp.eq.s32.totalorder %s17, 1
      %p52 = por %p50, %p51
      %p54 = scmp.ne.s32.totalorder %s37, %s53
      %p55 = scmp.eq.s32.totalorder %s17, 0
      %p56 = por %p54, %p55
      %s58 = sadd.s32 %s57, 1
      %p61 = scmp.eq.s32.totalorder %s11, 1
      %p62 = scmp.ne.s32.totalorder %s57, %s59
      %p63 = scmp.eq.s32.totalorder %s11, 0
      %p64 = por %p62, %p63
      %p65 = scmp.ne.s32.totalorder %s57, %s59
      %p66 = scmp.eq.s32.totalorder %s16, 1
      %p67 = por %p65, %p66
      %p68 = scmp.ne.s32.totalorder %s59, %s60
      %p69 = scmp.eq.s32.totalorder %s16, 0
      %p70 = por %p68, %p69
      %p71 = scmp.ne.s32.totalorder %s59, %s60
      %p72 = scmp.eq.s32.totalorder %s17, 1
      %p73 = por %p71, %p72
      %p75 = scmp.ne.s32.totalorder %s60, %s74
      %p76 = scmp.eq.s32.totalorder %s17, 0
      %p77 = por %p75, %p76
      %s79 = sadd.s32 %s78, 1
      %p82 = scmp.eq.s32.totalorder %s11, 1
      %p83 = scmp.ne.s32.totalorder %s78, %s80
      %p84 = scmp.eq.s32.totalorder %s11, 0
      %p85 = por %p83, %p84
      %p86 = scmp.ne.s32.totalorder %s78, %s80
      %p87 = scmp.eq.s32.totalorder %s16, 1
      %p88 = por %p86, %p87
      %p89 = scmp.ne.s32.totalorder %s80, %s81
      %p90 = scmp.eq.s32.totalorder %s16, 0
      %p91 = por %p89, %p90
      %p92 = scmp.ne.s32.totalorder %s80, %s81
      %p93 = scmp.eq.s32.totalorder %s17, 1
      %p94 = por %p92, %p93
      %p96 = scmp.ne.s32.totalorder %s81, %s95
      %p97 = scmp.eq.s32.totalorder %s17, 0
      %p98 = por %p96, %p97
      %s99 = ssub.s32 %s19, %s26
      %p100 = scmp.eq.s32.totalorder %s99, 0
      %s102 = sadd.s32 %s101, 1
      %s103 = scalar_select %p100, %s101, %s102
      %p106 = pneg %p100
      %p107 = scmp.eq.s32.totalorder %s11, 1
      %p108 = por %p106, %p107
      %p109 = scmp.ne.s32.totalorder %s101, %s104
      %p110 = scmp.eq.s32.totalorder %s11, 0
      %p111 = por %p109, %p110
      %p112 = scmp.ne.s32.totalorder %s101, %s104
      %p113 = scmp.eq.s32.totalorder %s16, 1
      %p114 = por %p112, %p113
      %p115 = scmp.ne.s32.totalorder %s104, %s105
      %p116 = scmp.eq.s32.totalorder %s16, 0
      %p117 = por %p115, %p116
      %p118 = scmp.ne.s32.totalorder %s104, %s105
      %p119 = scmp.eq.s32.totalorder %s17, 1
      %p120 = por %p118, %p119
      %p122 = scmp.ne.s32.totalorder %s105, %s121
      %p123 = scmp.eq.s32.totalorder %s17, 0
      %p124 = por %p122, %p123
      %s125 = ssub.s32 %s19, %s26
      %p126 = scmp.eq.s32.totalorder %s125, 0
      %s128 = sadd.s32 %s127, 1
      %s129 = scalar_select %p126, %s127, %s128
      %p132 = pneg %p126
      %p133 = scmp.eq.s32.totalorder %s11, 1
      %p134 = por %p132, %p133
      %p135 = scmp.ne.s32.totalorder %s127, %s130
      %p136 = scmp.eq.s32.totalorder %s11, 0
      %p137 = por %p135, %p136
      %p138 = scmp.ne.s32.totalorder %s127, %s130
      %p139 = scmp.eq.s32.totalorder %s16, 1
      %p140 = por %p138, %p139
      %p141 = scmp.ne.s32.totalorder %s130, %s131
      %p142 = scmp.eq.s32.totalorder %s16, 0
      %p143 = por %p141, %p142
      %p144 = scmp.ne.s32.totalorder %s130, %s131
      %p145 = scmp.eq.s32.totalorder %s17, 1
      %p146 = por %p144, %p145
      %p148 = scmp.ne.s32.totalorder %s131, %s147
      %p149 = scmp.eq.s32.totalorder %s17, 0
      %p150 = por %p148, %p149
      %s151 = ssub.s32 %s18, %s30
      %s152 = ssub.s32 %s19, %s26
      %s153 = sor.u32 %s151, %s152
      %p154 = scmp.eq.s32.totalorder %s153, 0
      %s156 = sadd.s32 %s155, 1
      %s157 = scalar_select %p154, %s155, %s156
      %p160 = pneg %p154
      %p161 = scmp.eq.s32.totalorder %s11, 1
      %p162 = por %p160, %p161
      %p163 = scmp.ne.s32.totalorder %s155, %s158
      %p164 = scmp.eq.s32.totalorder %s11, 0
      %p165 = por %p163, %p164
      %p166 = scmp.ne.s32.totalorder %s155, %s158
      %p167 = scmp.eq.s32.totalorder %s16, 1
      %p168 = por %p166, %p167
      %p169 = scmp.ne.s32.totalorder %s158, %s159
      %p170 = scmp.eq.s32.totalorder %s16, 0
      %p171 = por %p169, %p170
      %p172 = scmp.ne.s32.totalorder %s158, %s159
      %p173 = scmp.eq.s32.totalorder %s17, 1
      %p174 = por %p172, %p173
      %p176 = scmp.ne.s32.totalorder %s159, %s175
      %p177 = scmp.eq.s32.totalorder %s17, 0
      %p178 = por %p176, %p177
      %p179 = scmp.le.s32.totalorder 1, %s11
      %p180 = scmp.lt.s32.totalorder %s11, 3
      %p181 = pnand %p179, %p180
      %p182 = pneg %p181
      // Predicated region
      $region9: #{policy_network_forward.11} parent=5 // pred_check
        _
      $region10: #{policy_network_forward.11} parent=5 // pred_check_branch
        %184 = sbr.rel (%p181) target = $region12
      $region11: #{policy_network_forward.11} parent=5 // pred_region
        %s185 = ssub.s32 %s11, 1
        // Predicated region
        $region13: #{policy_network_forward.11} parent=11 // pred_check
          %p186 = pneg %p49
        $region14: #{policy_network_forward.11} parent=11 // pred_check_branch
          %188 = sbr.rel (%p186) target = $region16
        $region15: #{policy_network_forward.11} parent=11 // pred_region
          %s189 = smul.u32 16, %s20
          %p190 = scmp.lt.s32.totalorder %s189, 15
          %s191 = scalar_select %p190, %s189, 15
          %s192 = smul.addr %s191, 2
          %s193 = smul.addr %s192, 8
          %s194 = scalar_lea.vmem %s0, %s193
          %s195 = smul.u32 16, %s20
        $region16: #{policy_network_forward.11} parent=11 // pred_fallthru
          _
        // Predicated region
        $region17: #{policy_network_forward.11} parent=11 // pred_check
          %p196 = pneg %p70
        $region18: #{policy_network_forward.11} parent=11 // pred_check_branch
          %198 = sbr.rel (%p196) target = $region20
        $region19: #{policy_network_forward.11} parent=11 // pred_region
          _
        $region20: #{policy_network_forward.11} parent=11 // pred_fallthru
          _
        // Predicated region
        $region21: #{policy_network_forward.11} parent=11 // pred_check
          %p199 = pneg %p91
        $region22: #{policy_network_forward.11} parent=11 // pred_check_branch
          %201 = sbr.rel (%p199) target = $region24
        $region23: #{policy_network_forward.11} parent=11 // pred_region
          _
        $region24: #{policy_network_forward.11} parent=11 // pred_fallthru
          _
      $region12: #{policy_network_forward.11} parent=5 // pred_fallthru
        _
      %p202 = scmp.lt.s32.totalorder %s11, 2
      // Predicated region
      $region25: #{policy_network_forward.11} parent=5 // pred_check
        %p203 = pneg %p202
      $region26: #{policy_network_forward.11} parent=5 // pred_check_branch
        %205 = sbr.rel (%p203) target = $region28
      $region27: #{policy_network_forward.11} parent=5 // pred_region
        // Predicated region
        $region29: #{policy_network_forward.11} parent=27 // pred_check
          %p206 = pneg %p111
        $region30: #{policy_network_forward.11} parent=27 // pred_check_branch
          %208 = sbr.rel (%p206) target = $region32
        $region31: #{policy_network_forward.11} parent=27 // pred_region
          %s209 = sand.u32 %s101, 1
          %s210 = sand.u32 %s101, 1
          %s211 = smul.addr %s210, 512
          %s212 = scalar_lea.vmem [#allocation3], %s211
          %s213 = smul.u32 4, %s19
          %s214 = smul.addr %s213, 4
          %s215 = scalar_lea.vmem %s3, %s214
          // Predicated region
          $region33: #{policy_network_forward.11} parent=31 // pred_check
            _
          $region34: #{policy_network_forward.11} parent=31 // pred_check_branch
            %217 = sbr.rel (0) target = $region36
          $region35: #{policy_network_forward.11} parent=31 // pred_region
            // Predicated region
            $region37: #{policy_network_forward.11} parent=35 // pred_check
              _
            $region38: #{policy_network_forward.11} parent=35 // pred_check_branch
              %219 = sbr.rel (0) target = $region40
            $region39: #{policy_network_forward.11} parent=35 // pred_region
              loop: start=0, step=1, limit=1
              $region41: #{policy_network_forward.11} parent=39 // loop_pre_header
                _
              $region42: #{policy_network_forward.11} parent=39 // loop_header
                %s221 = sphi 0, %s225
                %p222 = scmp.ge.s32.totalorder %s221, 1
                %s226 = sphi %s215, %s215
                %s227 = sphi %s212, %s212
              $region43: #{policy_network_forward.11} parent=39 // loop_header_branch
                %224 = sbr.rel (%p222) target = $region47
              $region44: #{policy_network_forward.11} parent=39 // loop_body
                %v228 = vld [vmem:[%s226] sm:$0xff]
                %229 = vst [vmem:[%s227] sm:$0xff] %v228
                %v230 = vld [vmem:[%s226 + $0x8] sm:$0xff]
                %231 = vst [vmem:[%s227 + $0x8] sm:$0xff] %v230
                %v232 = vld [vmem:[%s226 + $0x20] sm:$0xff]
                %233 = vst [vmem:[%s227 + $0x10] sm:$0xff] %v232
                %v234 = vld [vmem:[%s226 + $0x28] sm:$0xff]
                %235 = vst [vmem:[%s227 + $0x18] sm:$0xff] %v234
                %v236 = vld [vmem:[%s226 + $0x40] sm:$0xff]
                %237 = vst [vmem:[%s227 + $0x20] sm:$0xff] %v236
                %v238 = vld [vmem:[%s226 + $0x48] sm:$0xff]
                %239 = vst [vmem:[%s227 + $0x28] sm:$0xff] %v238
                %v240 = vld [vmem:[%s226 + $0x60] sm:$0xff]
                %241 = vst [vmem:[%s227 + $0x30] sm:$0xff] %v240
                %v242 = vld [vmem:[%s226 + $0x68] sm:$0xff]
                %243 = vst [vmem:[%s227 + $0x38] sm:$0xff] %v242
                %v244 = vld [vmem:[%s226 + $0x80] sm:$0xff]
                %245 = vst [vmem:[%s227 + $0x40] sm:$0xff] %v244
                %v246 = vld [vmem:[%s226 + $0x88] sm:$0xff]
                %247 = vst [vmem:[%s227 + $0x48] sm:$0xff] %v246
                %v248 = vld [vmem:[%s226 + $0xa0] sm:$0xff]
                %249 = vst [vmem:[%s227 + $0x50] sm:$0xff] %v248
                %v250 = vld [vmem:[%s226 + $0xa8] sm:$0xff]
                %251 = vst [vmem:[%s227 + $0x58] sm:$0xff] %v250
                %v252 = vld [vmem:[%s226 + $0xc0] sm:$0xff]
                %253 = vst [vmem:[%s227 + $0x60] sm:$0xff] %v252
                %v254 = vld [vmem:[%s226 + $0xc8] sm:$0xff]
                %255 = vst [vmem:[%s227 + $0x68] sm:$0xff] %v254
                %v256 = vld [vmem:[%s226 + $0xe0] sm:$0xff]
                %257 = vst [vmem:[%s227 + $0x70] sm:$0xff] %v256
                %v258 = vld [vmem:[%s226 + $0xe8] sm:$0xff]
                %259 = vst [vmem:[%s227 + $0x78] sm:$0xff] %v258
                %v260 = vld [vmem:[%s226 + $0x100] sm:$0xff]
                %261 = vst [vmem:[%s227 + $0x80] sm:$0xff] %v260
                %v262 = vld [vmem:[%s226 + $0x108] sm:$0xff]
                %263 = vst [vmem:[%s227 + $0x88] sm:$0xff] %v262
                %v264 = vld [vmem:[%s226 + $0x120] sm:$0xff]
                %265 = vst [vmem:[%s227 + $0x90] sm:$0xff] %v264
                %v266 = vld [vmem:[%s226 + $0x128] sm:$0xff]
                %267 = vst [vmem:[%s227 + $0x98] sm:$0xff] %v266
                %v268 = vld [vmem:[%s226 + $0x140] sm:$0xff]
                %269 = vst [vmem:[%s227 + $0xa0] sm:$0xff] %v268
                %v270 = vld [vmem:[%s226 + $0x148] sm:$0xff]
                %271 = vst [vmem:[%s227 + $0xa8] sm:$0xff] %v270
                %v272 = vld [vmem:[%s226 + $0x160] sm:$0xff]
                %273 = vst [vmem:[%s227 + $0xb0] sm:$0xff] %v272
                %v274 = vld [vmem:[%s226 + $0x168] sm:$0xff]
                %275 = vst [vmem:[%s227 + $0xb8] sm:$0xff] %v274
                %v276 = vld [vmem:[%s226 + $0x180] sm:$0xff]
                %277 = vst [vmem:[%s227 + $0xc0] sm:$0xff] %v276
                %v278 = vld [vmem:[%s226 + $0x188] sm:$0xff]
                %279 = vst [vmem:[%s227 + $0xc8] sm:$0xff] %v278
                %v280 = vld [vmem:[%s226 + $0x1a0] sm:$0xff]
                %281 = vst [vmem:[%s227 + $0xd0] sm:$0xff] %v280
                %v282 = vld [vmem:[%s226 + $0x1a8] sm:$0xff]
                %283 = vst [vmem:[%s227 + $0xd8] sm:$0xff] %v282
                %v284 = vld [vmem:[%s226 + $0x1c0] sm:$0xff]
                %285 = vst [vmem:[%s227 + $0xe0] sm:$0xff] %v284
                %v286 = vld [vmem:[%s226 + $0x1c8] sm:$0xff]
                %287 = vst [vmem:[%s227 + $0xe8] sm:$0xff] %v286
                %v288 = vld [vmem:[%s226 + $0x1e0] sm:$0xff]
                %289 = vst [vmem:[%s227 + $0xf0] sm:$0xff] %v288
                %v290 = vld [vmem:[%s226 + $0x1e8] sm:$0xff]
                %291 = vst [vmem:[%s227 + $0xf8] sm:$0xff] %v290
                %v292 = vld [vmem:[%s226 + $0x200] sm:$0xff]
                %293 = vst [vmem:[%s227 + $0x100] sm:$0xff] %v292
                %v294 = vld [vmem:[%s226 + $0x208] sm:$0xff]
                %295 = vst [vmem:[%s227 + $0x108] sm:$0xff] %v294
                %v296 = vld [vmem:[%s226 + $0x220] sm:$0xff]
                %297 = vst [vmem:[%s227 + $0x110] sm:$0xff] %v296
                %v298 = vld [vmem:[%s226 + $0x228] sm:$0xff]
                %299 = vst [vmem:[%s227 + $0x118] sm:$0xff] %v298
                %v300 = vld [vmem:[%s226 + $0x240] sm:$0xff]
                %301 = vst [vmem:[%s227 + $0x120] sm:$0xff] %v300
                %v302 = vld [vmem:[%s226 + $0x248] sm:$0xff]
                %303 = vst [vmem:[%s227 + $0x128] sm:$0xff] %v302
                %v304 = vld [vmem:[%s226 + $0x260] sm:$0xff]
                %305 = vst [vmem:[%s227 + $0x130] sm:$0xff] %v304
                %v306 = vld [vmem:[%s226 + $0x268] sm:$0xff]
                %307 = vst [vmem:[%s227 + $0x138] sm:$0xff] %v306
                %v308 = vld [vmem:[%s226 + $0x280] sm:$0xff]
                %309 = vst [vmem:[%s227 + $0x140] sm:$0xff] %v308
                %v310 = vld [vmem:[%s226 + $0x288] sm:$0xff]
                %311 = vst [vmem:[%s227 + $0x148] sm:$0xff] %v310
                %v312 = vld [vmem:[%s226 + $0x2a0] sm:$0xff]
                %313 = vst [vmem:[%s227 + $0x150] sm:$0xff] %v312
                %v314 = vld [vmem:[%s226 + $0x2a8] sm:$0xff]
                %315 = vst [vmem:[%s227 + $0x158] sm:$0xff] %v314
                %v316 = vld [vmem:[%s226 + $0x2c0] sm:$0xff]
                %317 = vst [vmem:[%s227 + $0x160] sm:$0xff] %v316
                %v318 = vld [vmem:[%s226 + $0x2c8] sm:$0xff]
                %319 = vst [vmem:[%s227 + $0x168] sm:$0xff] %v318
                %v320 = vld [vmem:[%s226 + $0x2e0] sm:$0xff]
                %321 = vst [vmem:[%s227 + $0x170] sm:$0xff] %v320
                %v322 = vld [vmem:[%s226 + $0x2e8] sm:$0xff]
                %323 = vst [vmem:[%s227 + $0x178] sm:$0xff] %v322
                %v324 = vld [vmem:[%s226 + $0x300] sm:$0xff]
                %325 = vst [vmem:[%s227 + $0x180] sm:$0xff] %v324
                %v326 = vld [vmem:[%s226 + $0x308] sm:$0xff]
                %327 = vst [vmem:[%s227 + $0x188] sm:$0xff] %v326
                %v328 = vld [vmem:[%s226 + $0x320] sm:$0xff]
                %329 = vst [vmem:[%s227 + $0x190] sm:$0xff] %v328
                %v330 = vld [vmem:[%s226 + $0x328] sm:$0xff]
                %331 = vst [vmem:[%s227 + $0x198] sm:$0xff] %v330
                %v332 = vld [vmem:[%s226 + $0x340] sm:$0xff]
                %333 = vst [vmem:[%s227 + $0x1a0] sm:$0xff] %v332
                %v334 = vld [vmem:[%s226 + $0x348] sm:$0xff]
                %335 = vst [vmem:[%s227 + $0x1a8] sm:$0xff] %v334
                %v336 = vld [vmem:[%s226 + $0x360] sm:$0xff]
                %337 = vst [vmem:[%s227 + $0x1b0] sm:$0xff] %v336
                %v338 = vld [vmem:[%s226 + $0x368] sm:$0xff]
                %339 = vst [vmem:[%s227 + $0x1b8] sm:$0xff] %v338
                %v340 = vld [vmem:[%s226 + $0x380] sm:$0xff]
                %341 = vst [vmem:[%s227 + $0x1c0] sm:$0xff] %v340
                %v342 = vld [vmem:[%s226 + $0x388] sm:$0xff]
                %343 = vst [vmem:[%s227 + $0x1c8] sm:$0xff] %v342
                %v344 = vld [vmem:[%s226 + $0x3a0] sm:$0xff]
                %345 = vst [vmem:[%s227 + $0x1d0] sm:$0xff] %v344
                %v346 = vld [vmem:[%s226 + $0x3a8] sm:$0xff]
                %347 = vst [vmem:[%s227 + $0x1d8] sm:$0xff] %v346
                %v348 = vld [vmem:[%s226 + $0x3c0] sm:$0xff]
                %349 = vst [vmem:[%s227 + $0x1e0] sm:$0xff] %v348
                %v350 = vld [vmem:[%s226 + $0x3c8] sm:$0xff]
                %351 = vst [vmem:[%s227 + $0x1e8] sm:$0xff] %v350
                %v352 = vld [vmem:[%s226 + $0x3e0] sm:$0xff]
                %353 = vst [vmem:[%s227 + $0x1f0] sm:$0xff] %v352
                %v354 = vld [vmem:[%s226 + $0x3e8] sm:$0xff]
                %355 = vst [vmem:[%s227 + $0x1f8] sm:$0xff] %v354
              $region45: #{policy_network_forward.11} parent=39 // loop_footer
                %s225 = sadd.s32 1, %s221
              $region46: #{policy_network_forward.11} parent=39 // loop_footer_branch
                %220 = sbr.rel target = $region42
              $region47: #{policy_network_forward.11} parent=39 // loop_exit
                _
            $region40: #{policy_network_forward.11} parent=35 // pred_fallthru
              _
            // Predicated region
            $region48: #{policy_network_forward.11} parent=35 // pred_check
              _
            $region49: #{policy_network_forward.11} parent=35 // pred_check_branch
              %357 = sbr.rel target = $region51
            $region50: #{policy_network_forward.11} parent=35 // pred_region
              _
            $region51: #{policy_network_forward.11} parent=35 // pred_fallthru
              _
          $region36: #{policy_network_forward.11} parent=31 // pred_fallthru
            _
          %358 = vnop
        $region32: #{policy_network_forward.11} parent=27 // pred_fallthru
          _
        // Predicated region
        $region52: #{policy_network_forward.11} parent=27 // pred_check
          %p359 = pneg %p137
        $region53: #{policy_network_forward.11} parent=27 // pred_check_branch
          %361 = sbr.rel (%p359) target = $region55
        $region54: #{policy_network_forward.11} parent=27 // pred_region
          %s362 = smul.u32 4, %s19
          %p363 = scmp.lt.s32.totalorder %s362, 7
          %s364 = scalar_select %p363, %s362, 7
          %s365 = scalar_lea.vmem %s4, %s364
          %s366 = smul.u32 4, %s19
        $region55: #{policy_network_forward.11} parent=27 // pred_fallthru
          _
      $region28: #{policy_network_forward.11} parent=5 // pred_fallthru
        _
      %p367 = scmp.le.s32.totalorder 1, %s11
      %p368 = scmp.lt.s32.totalorder %s11, 3
      %p369 = pnand %p367, %p368
      %p370 = pneg %p369
      // Predicated region
      $region56: #{policy_network_forward.11} parent=5 // pred_check
        _
      $region57: #{policy_network_forward.11} parent=5 // pred_check_branch
        %372 = sbr.rel (%p369) target = $region59
      $region58: #{policy_network_forward.11} parent=5 // pred_region
        %s373 = ssub.s32 %s11, 1
        %s374 = sand.u32 %s104, 1
        %s375 = sand.u32 %s104, 1
        %s376 = smul.addr %s375, 512
        %s377 = scalar_lea.vmem [#allocation3], %s376
        // Predicated region
        $region60: #{policy_network_forward.11} parent=58 // pred_check
          %p378 = pneg %p117
        $region61: #{policy_network_forward.11} parent=58 // pred_check_branch
          %380 = sbr.rel (%p378) target = $region63
        $region62: #{policy_network_forward.11} parent=58 // pred_region
          _
        $region63: #{policy_network_forward.11} parent=58 // pred_fallthru
          _
        %s381 = smul.u32 16, %s20
        %p382 = scmp.lt.s32.totalorder %s381, 15
        %s383 = scalar_select %p382, %s381, 15
        %s384 = smul.addr %s383, 2
        %s385 = smul.addr %s384, 8
        %s386 = scalar_lea.vmem %s0, %s385
        %p387 = pneg %p49
        %p388 = pneg %p46
        %p389 = pneg %p70
        %p390 = pneg %p67
        %p391 = pneg %p91
        %p392 = pneg %p88
        %s393 = sand.u32 %s104, 1
        %s394 = sand.u32 %s104, 1
        %s395 = smul.addr %s394, 512
        %s396 = scalar_lea.vmem [#allocation3], %s395
        %p397 = pneg %p117
        %p398 = pneg %p114
        %s399 = smul.u32 4, %s21
        %p400 = scmp.lt.s32.totalorder %s399, 7
        %s401 = scalar_select %p400, %s399, 7
        %s402 = scalar_lea.vmem %s4, %s401
        %p403 = pneg %p143
        %p404 = pneg %p140
        %p405 = pneg %p171
        %p406 = pneg %p168
        %s407 = sand.u32 %s158, 1
        %s408 = sand.u32 %s158, 1
        %s409 = smul.addr %s408, 256
        %s410 = scalar_lea.vmem [#allocation4], %s409
        %s411 = smul.u32 16, %s20
        %p412 = scmp.lt.s32.totalorder %s411, 15
        %s413 = scalar_select %p412, %s411, 15
        %s414 = smul.addr %s413, 2
        %s415 = smul.addr %s414, 8
        %s416 = scalar_lea.vmem %s0, %s415
        %s417 = smul.u32 16, %s20
        %s418 = smul.u32 4, %s21
        %s419 = smul.u32 4, %s21
        %p420 = scmp.lt.s32.totalorder %s419, 7
        %s421 = scalar_select %p420, %s419, 7
        %s422 = scalar_lea.vmem %s4, %s421
        %s423 = smul.u32 4, %s21
        %s424 = smul.u32 16, %s20
        %s425 = smul.u32 4, %s21
        %p426 = scmp.eq.s32.totalorder %s21, 0
        // Predicated region
        $region64: #{policy_network_forward.11} parent=58 // pred_check
          %p427 = pneg %p426
        $region65: #{policy_network_forward.11} parent=58 // pred_check_branch
          %429 = sbr.rel (%p427) target = $region67
        $region66: #{policy_network_forward.11} parent=58 // pred_region
          %v430 = vld [vmem:[%s416] sm:$0xff]
          %v431 = vld [vmem:[%s416 + $0x8] sm:$0xff]
          %v432 = vld [vmem:[%s416 + $0x10] sm:$0xff]
          %v433 = vld [vmem:[%s416 + $0x18] sm:$0xff]
          %v434 = vld [vmem:[%s416 + $0x20] sm:$0xff]
          %v435 = vld [vmem:[%s416 + $0x28] sm:$0xff]
          %v436 = vld [vmem:[%s416 + $0x30] sm:$0xff]
          %v437 = vld [vmem:[%s416 + $0x38] sm:$0xff]
          %v438 = vld [vmem:[%s416 + $0x40] sm:$0xff]
          %v439 = vld [vmem:[%s416 + $0x48] sm:$0xff]
          %v440 = vld [vmem:[%s416 + $0x50] sm:$0xff]
          %v441 = vld [vmem:[%s416 + $0x58] sm:$0xff]
          %v442 = vld [vmem:[%s416 + $0x60] sm:$0xff]
          %v443 = vld [vmem:[%s416 + $0x68] sm:$0xff]
          %v444 = vld [vmem:[%s416 + $0x70] sm:$0xff]
          %v445 = vld [vmem:[%s416 + $0x78] sm:$0xff]
          %v446 = vld [vmem:[%s416 + $0x80] sm:$0xff]
          %v447 = vld [vmem:[%s416 + $0x88] sm:$0xff]
          %v448 = vld [vmem:[%s416 + $0x90] sm:$0xff]
          %v449 = vld [vmem:[%s416 + $0x98] sm:$0xff]
          %v450 = vld [vmem:[%s416 + $0xa0] sm:$0xff]
          %v451 = vld [vmem:[%s416 + $0xa8] sm:$0xff]
          %v452 = vld [vmem:[%s416 + $0xb0] sm:$0xff]
          %v453 = vld [vmem:[%s416 + $0xb8] sm:$0xff]
          %v454 = vld [vmem:[%s416 + $0xc0] sm:$0xff]
          %v455 = vld [vmem:[%s416 + $0xc8] sm:$0xff]
          %v456 = vld [vmem:[%s416 + $0xd0] sm:$0xff]
          %v457 = vld [vmem:[%s416 + $0xd8] sm:$0xff]
          %v458 = vld [vmem:[%s416 + $0xe0] sm:$0xff]
          %v459 = vld [vmem:[%s416 + $0xe8] sm:$0xff]
          %v460 = vld [vmem:[%s416 + $0xf0] sm:$0xff]
          %v461 = vld [vmem:[%s416 + $0xf8] sm:$0xff]
          %v462 = vadd.f32 %v430, %v431
          %463 = vadd.xlane.f32.xlu0 %v462
          %v464 = vpop.xlane.xlu0 %463
          %v465 = vadd.f32 %v432, %v433
          %466 = vadd.xlane.f32.xlu0 %v465
          %v467 = vpop.xlane.xlu0 %466
          %v468 = vadd.f32 %v434, %v435
          %469 = vadd.xlane.f32.xlu0 %v468
          %v470 = vpop.xlane.xlu0 %469
          %v471 = vadd.f32 %v436, %v437
          %472 = vadd.xlane.f32.xlu0 %v471
          %v473 = vpop.xlane.xlu0 %472
          %v474 = vadd.f32 %v438, %v439
          %475 = vadd.xlane.f32.xlu0 %v474
          %v476 = vpop.xlane.xlu0 %475
          %v477 = vadd.f32 %v440, %v441
          %478 = vadd.xlane.f32.xlu0 %v477
          %v479 = vpop.xlane.xlu0 %478
          %v480 = vadd.f32 %v442, %v443
          %481 = vadd.xlane.f32.xlu0 %v480
          %v482 = vpop.xlane.xlu0 %481
          %v483 = vadd.f32 %v444, %v445
          %484 = vadd.xlane.f32.xlu0 %v483
          %v485 = vpop.xlane.xlu0 %484
          %v486 = vadd.f32 %v446, %v447
          %487 = vadd.xlane.f32.xlu0 %v486
          %v488 = vpop.xlane.xlu0 %487
          %v489 = vadd.f32 %v448, %v449
          %490 = vadd.xlane.f32.xlu0 %v489
          %v491 = vpop.xlane.xlu0 %490
          %v492 = vadd.f32 %v450, %v451
          %493 = vadd.xlane.f32.xlu0 %v492
          %v494 = vpop.xlane.xlu0 %493
          %v495 = vadd.f32 %v452, %v453
          %496 = vadd.xlane.f32.xlu0 %v495
          %v497 = vpop.xlane.xlu0 %496
          %v498 = vadd.f32 %v454, %v455
          %499 = vadd.xlane.f32.xlu0 %v498
          %v500 = vpop.xlane.xlu0 %499
          %v501 = vadd.f32 %v456, %v457
          %502 = vadd.xlane.f32.xlu0 %v501
          %v503 = vpop.xlane.xlu0 %502
          %v504 = vadd.f32 %v458, %v459
          %505 = vadd.xlane.f32.xlu0 %v504
          %v506 = vpop.xlane.xlu0 %505
          %v507 = vadd.f32 %v460, %v461
          %508 = vadd.xlane.f32.xlu0 %v507
          %v509 = vpop.xlane.xlu0 %508
          %v510 = vrcp.pop 256.0
          %v511 = vmul.f32 %v464, %v510
          %v512 = vmul.f32 %v467, %v510
          %v513 = vmul.f32 %v470, %v510
          %v514 = vmul.f32 %v473, %v510
          %v515 = vmul.f32 %v476, %v510
          %v516 = vmul.f32 %v479, %v510
          %v517 = vmul.f32 %v482, %v510
          %v518 = vmul.f32 %v485, %v510
          %v519 = vmul.f32 %v488, %v510
          %v520 = vmul.f32 %v491, %v510
          %v521 = vmul.f32 %v494, %v510
          %v522 = vmul.f32 %v497, %v510
          %v523 = vmul.f32 %v500, %v510
          %v524 = vmul.f32 %v503, %v510
          %v525 = vmul.f32 %v506, %v510
          %v526 = vmul.f32 %v509, %v510
          %v527 = vsub.f32 %v430, %v511
          %v528 = vsub.f32 %v431, %v511
          %v529 = vsub.f32 %v432, %v512
          %v530 = vsub.f32 %v433, %v512
          %v531 = vsub.f32 %v434, %v513
          %v532 = vsub.f32 %v435, %v513
          %v533 = vsub.f32 %v436, %v514
          %v534 = vsub.f32 %v437, %v514
          %v535 = vsub.f32 %v438, %v515
          %v536 = vsub.f32 %v439, %v515
          %v537 = vsub.f32 %v440, %v516
          %v538 = vsub.f32 %v441, %v516
          %v539 = vsub.f32 %v442, %v517
          %v540 = vsub.f32 %v443, %v517
          %v541 = vsub.f32 %v444, %v518
          %v542 = vsub.f32 %v445, %v518
          %v543 = vsub.f32 %v446, %v519
          %v544 = vsub.f32 %v447, %v519
          %v545 = vsub.f32 %v448, %v520
          %v546 = vsub.f32 %v449, %v520
          %v547 = vsub.f32 %v450, %v521
          %v548 = vsub.f32 %v451, %v521
          %v549 = vsub.f32 %v452, %v522
          %v550 = vsub.f32 %v453, %v522
          %v551 = vsub.f32 %v454, %v523
          %v552 = vsub.f32 %v455, %v523
          %v553 = vsub.f32 %v456, %v524
          %v554 = vsub.f32 %v457, %v524
          %v555 = vsub.f32 %v458, %v525
          %v556 = vsub.f32 %v459, %v525
          %v557 = vsub.f32 %v460, %v526
          %v558 = vsub.f32 %v461, %v526
          %v559 = vmul.f32 %v527, %v527
          %v560 = vmul.f32 %v528, %v528
          %v561 = vmul.f32 %v529, %v529
          %v562 = vmul.f32 %v530, %v530
          %v563 = vmul.f32 %v531, %v531
          %v564 = vmul.f32 %v532, %v532
          %v565 = vmul.f32 %v533, %v533
          %v566 = vmul.f32 %v534, %v534
          %v567 = vmul.f32 %v535, %v535
          %v568 = vmul.f32 %v536, %v536
          %v569 = vmul.f32 %v537, %v537
          %v570 = vmul.f32 %v538, %v538
          %v571 = vmul.f32 %v539, %v539
          %v572 = vmul.f32 %v540, %v540
          %v573 = vmul.f32 %v541, %v541
          %v574 = vmul.f32 %v542, %v542
          %v575 = vmul.f32 %v543, %v543
          %v576 = vmul.f32 %v544, %v544
          %v577 = vmul.f32 %v545, %v545
          %v578 = vmul.f32 %v546, %v546
          %v579 = vmul.f32 %v547, %v547
          %v580 = vmul.f32 %v548, %v548
          %v581 = vmul.f32 %v549, %v549
          %v582 = vmul.f32 %v550, %v550
          %v583 = vmul.f32 %v551, %v551
          %v584 = vmul.f32 %v552, %v552
          %v585 = vmul.f32 %v553, %v553
          %v586 = vmul.f32 %v554, %v554
          %v587 = vmul.f32 %v555, %v555
          %v588 = vmul.f32 %v556, %v556
          %v589 = vmul.f32 %v557, %v557
          %v590 = vmul.f32 %v558, %v558
          %v591 = vadd.f32 %v559, %v560
          %592 = vadd.xlane.f32.xlu0 %v591
          %v593 = vpop.xlane.xlu0 %592
          %v594 = vadd.f32 %v561, %v562
          %595 = vadd.xlane.f32.xlu0 %v594
          %v596 = vpop.xlane.xlu0 %595
          %v597 = vadd.f32 %v563, %v564
          %598 = vadd.xlane.f32.xlu0 %v597
          %v599 = vpop.xlane.xlu0 %598
          %v600 = vadd.f32 %v565, %v566
          %601 = vadd.xlane.f32.xlu0 %v600
          %v602 = vpop.xlane.xlu0 %601
          %v603 = vadd.f32 %v567, %v568
          %604 = vadd.xlane.f32.xlu0 %v603
          %v605 = vpop.xlane.xlu0 %604
          %v606 = vadd.f32 %v569, %v570
          %607 = vadd.xlane.f32.xlu0 %v606
          %v608 = vpop.xlane.xlu0 %607
          %v609 = vadd.f32 %v571, %v572
          %610 = vadd.xlane.f32.xlu0 %v609
          %v611 = vpop.xlane.xlu0 %610
          %v612 = vadd.f32 %v573, %v574
          %613 = vadd.xlane.f32.xlu0 %v612
          %v614 = vpop.xlane.xlu0 %613
          %v615 = vadd.f32 %v575, %v576
          %616 = vadd.xlane.f32.xlu0 %v615
          %v617 = vpop.xlane.xlu0 %616
          %v618 = vadd.f32 %v577, %v578
          %619 = vadd.xlane.f32.xlu0 %v618
          %v620 = vpop.xlane.xlu0 %619
          %v621 = vadd.f32 %v579, %v580
          %622 = vadd.xlane.f32.xlu0 %v621
          %v623 = vpop.xlane.xlu0 %622
          %v624 = vadd.f32 %v581, %v582
          %625 = vadd.xlane.f32.xlu0 %v624
          %v626 = vpop.xlane.xlu0 %625
          %v627 = vadd.f32 %v583, %v584
          %628 = vadd.xlane.f32.xlu0 %v627
          %v629 = vpop.xlane.xlu0 %628
          %v630 = vadd.f32 %v585, %v586
          %631 = vadd.xlane.f32.xlu0 %v630
          %v632 = vpop.xlane.xlu0 %631
          %v633 = vadd.f32 %v587, %v588
          %634 = vadd.xlane.f32.xlu0 %v633
          %v635 = vpop.xlane.xlu0 %634
          %v636 = vadd.f32 %v589, %v590
          %637 = vadd.xlane.f32.xlu0 %v636
          %v638 = vpop.xlane.xlu0 %637
          %v639 = vmul.f32 %v593, %v510
          %v640 = vmul.f32 %v596, %v510
          %v641 = vmul.f32 %v599, %v510
          %v642 = vmul.f32 %v602, %v510
          %v643 = vmul.f32 %v605, %v510
          %v644 = vmul.f32 %v608, %v510
          %v645 = vmul.f32 %v611, %v510
          %v646 = vmul.f32 %v614, %v510
          %v647 = vmul.f32 %v617, %v510
          %v648 = vmul.f32 %v620, %v510
          %v649 = vmul.f32 %v623, %v510
          %v650 = vmul.f32 %v626, %v510
          %v651 = vmul.f32 %v629, %v510
          %v652 = vmul.f32 %v632, %v510
          %v653 = vmul.f32 %v635, %v510
          %v654 = vmul.f32 %v638, %v510
          %v655 = vadd.f32 %v639, 1e-05
          %v656 = vadd.f32 %v640, 1e-05
          %v657 = vadd.f32 %v641, 1e-05
          %v658 = vadd.f32 %v642, 1e-05
          %v659 = vadd.f32 %v643, 1e-05
          %v660 = vadd.f32 %v644, 1e-05
          %v661 = vadd.f32 %v645, 1e-05
          %v662 = vadd.f32 %v646, 1e-05
          %v663 = vadd.f32 %v647, 1e-05
          %v664 = vadd.f32 %v648, 1e-05
          %v665 = vadd.f32 %v649, 1e-05
          %v666 = vadd.f32 %v650, 1e-05
          %v667 = vadd.f32 %v651, 1e-05
          %v668 = vadd.f32 %v652, 1e-05
          %v669 = vadd.f32 %v653, 1e-05
          %v670 = vadd.f32 %v654, 1e-05
          %v671 = vrsqrt.pop %v655
          %v672 = vrsqrt.pop %v656
          %v673 = vrsqrt.pop %v657
          %v674 = vrsqrt.pop %v658
          %v675 = vrsqrt.pop %v659
          %v676 = vrsqrt.pop %v660
          %v677 = vrsqrt.pop %v661
          %v678 = vrsqrt.pop %v662
          %v679 = vrsqrt.pop %v663
          %v680 = vrsqrt.pop %v664
          %v681 = vrsqrt.pop %v665
          %v682 = vrsqrt.pop %v666
          %v683 = vrsqrt.pop %v667
          %v684 = vrsqrt.pop %v668
          %v685 = vrsqrt.pop %v669
          %v686 = vrsqrt.pop %v670
          %v687 = vmul.f32 %v527, %v671
          %v688 = vmul.f32 %v528, %v671
          %v689 = vmul.f32 %v529, %v672
          %v690 = vmul.f32 %v530, %v672
          %v691 = vmul.f32 %v531, %v673
          %v692 = vmul.f32 %v532, %v673
          %v693 = vmul.f32 %v533, %v674
          %v694 = vmul.f32 %v534, %v674
          %v695 = vmul.f32 %v535, %v675
          %v696 = vmul.f32 %v536, %v675
          %v697 = vmul.f32 %v537, %v676
          %v698 = vmul.f32 %v538, %v676
          %v699 = vmul.f32 %v539, %v677
          %v700 = vmul.f32 %v540, %v677
          %v701 = vmul.f32 %v541, %v678
          %v702 = vmul.f32 %v542, %v678
          %v703 = vmul.f32 %v543, %v679
          %v704 = vmul.f32 %v544, %v679
          %v705 = vmul.f32 %v545, %v680
          %v706 = vmul.f32 %v546, %v680
          %v707 = vmul.f32 %v547, %v681
          %v708 = vmul.f32 %v548, %v681
          %v709 = vmul.f32 %v549, %v682
          %v710 = vmul.f32 %v550, %v682
          %v711 = vmul.f32 %v551, %v683
          %v712 = vmul.f32 %v552, %v683
          %v713 = vmul.f32 %v553, %v684
          %v714 = vmul.f32 %v554, %v684
          %v715 = vmul.f32 %v555, %v685
          %v716 = vmul.f32 %v556, %v685
          %v717 = vmul.f32 %v557, %v686
          %v718 = vmul.f32 %v558, %v686
          %v719 = vld [vmem:[%s1] sm:$0x3]
          %v721 = vlaneseq
          %v722 = vshrl.u32 %v721, 7
          %v723 = vsub.s32 0, %v722
          %v724 = vrot.slane %v719, %v723
          %v725 = vlaneseq
          %v726 = vshrl.u32 %v725, 7
          %v727 = vsub.s32 1, %v726
          %v728 = vrot.slane %v719, %v727
          %v731 = vmul.f32 %v687, %v724
          %v732 = vmul.f32 %v688, %v728
          %v733 = vmul.f32 %v689, %v724
          %v734 = vmul.f32 %v690, %v728
          %v735 = vmul.f32 %v691, %v724
          %v736 = vmul.f32 %v692, %v728
          %v737 = vmul.f32 %v693, %v724
          %v738 = vmul.f32 %v694, %v728
          %v739 = vmul.f32 %v695, %v724
          %v740 = vmul.f32 %v696, %v728
          %v741 = vmul.f32 %v697, %v724
          %v742 = vmul.f32 %v698, %v728
          %v743 = vmul.f32 %v699, %v724
          %v744 = vmul.f32 %v700, %v728
          %v745 = vmul.f32 %v701, %v724
          %v746 = vmul.f32 %v702, %v728
          %v747 = vmul.f32 %v703, %v724
          %v748 = vmul.f32 %v704, %v728
          %v749 = vmul.f32 %v705, %v724
          %v750 = vmul.f32 %v706, %v728
          %v751 = vmul.f32 %v707, %v724
          %v752 = vmul.f32 %v708, %v728
          %v753 = vmul.f32 %v709, %v724
          %v754 = vmul.f32 %v710, %v728
          %v755 = vmul.f32 %v711, %v724
          %v756 = vmul.f32 %v712, %v728
          %v757 = vmul.f32 %v713, %v724
          %v758 = vmul.f32 %v714, %v728
          %v759 = vmul.f32 %v715, %v724
          %v760 = vmul.f32 %v716, %v728
          %v761 = vmul.f32 %v717, %v724
          %v762 = vmul.f32 %v718, %v728
          %v763 = vld [vmem:[%s2] sm:$0x3]
          %v765 = vlaneseq
          %v766 = vshrl.u32 %v765, 7
          %v767 = vsub.s32 0, %v766
          %v768 = vrot.slane %v763, %v767
          %v769 = vlaneseq
          %v770 = vshrl.u32 %v769, 7
          %v771 = vsub.s32 1, %v770
          %v772 = vrot.slane %v763, %v771
          %v775 = vadd.f32 %v731, %v768
          %v776 = vadd.f32 %v732, %v772
          %v777 = vadd.f32 %v733, %v768
          %v778 = vadd.f32 %v734, %v772
          %v779 = vadd.f32 %v735, %v768
          %v780 = vadd.f32 %v736, %v772
          %v781 = vadd.f32 %v737, %v768
          %v782 = vadd.f32 %v738, %v772
          %v783 = vadd.f32 %v739, %v768
          %v784 = vadd.f32 %v740, %v772
          %v785 = vadd.f32 %v741, %v768
          %v786 = vadd.f32 %v742, %v772
          %v787 = vadd.f32 %v743, %v768
          %v788 = vadd.f32 %v744, %v772
          %v789 = vadd.f32 %v745, %v768
          %v790 = vadd.f32 %v746, %v772
          %v791 = vadd.f32 %v747, %v768
          %v792 = vadd.f32 %v748, %v772
          %v793 = vadd.f32 %v749, %v768
          %v794 = vadd.f32 %v750, %v772
          %v795 = vadd.f32 %v751, %v768
          %v796 = vadd.f32 %v752, %v772
          %v797 = vadd.f32 %v753, %v768
          %v798 = vadd.f32 %v754, %v772
          %v799 = vadd.f32 %v755, %v768
          %v800 = vadd.f32 %v756, %v772
          %v801 = vadd.f32 %v757, %v768
          %v802 = vadd.f32 %v758, %v772
          %v803 = vadd.f32 %v759, %v768
          %v804 = vadd.f32 %v760, %v772
          %v805 = vadd.f32 %v761, %v768
          %v806 = vadd.f32 %v762, %v772
          %v807 = vpack.c.bf16 %v777, %v775
          %v808 = vpack.c.bf16 %v778, %v776
          %v809 = vpack.c.bf16 %v781, %v779
          %v810 = vpack.c.bf16 %v782, %v780
          %v811 = vpack.c.bf16 %v785, %v783
          %v812 = vpack.c.bf16 %v786, %v784
          %v813 = vpack.c.bf16 %v789, %v787
          %v814 = vpack.c.bf16 %v790, %v788
          %v815 = vpack.c.bf16 %v793, %v791
          %v816 = vpack.c.bf16 %v794, %v792
          %v817 = vpack.c.bf16 %v797, %v795
          %v818 = vpack.c.bf16 %v798, %v796
          %v819 = vpack.c.bf16 %v801, %v799
          %v820 = vpack.c.bf16 %v802, %v800
          %v821 = vpack.c.bf16 %v805, %v803
          %v822 = vpack.c.bf16 %v806, %v804
          %v839 = vunpack.c.l.b16 %v807
          %v840 = vunpack.c.l.b16 %v808
          %v841 = vunpack.c.h.b16 %v807
          %v842 = vunpack.c.h.b16 %v808
          %v843 = vunpack.c.l.b16 %v809
          %v844 = vunpack.c.l.b16 %v810
          %v845 = vunpack.c.h.b16 %v809
          %v846 = vunpack.c.h.b16 %v810
          %v847 = vunpack.c.l.b16 %v811
          %v848 = vunpack.c.l.b16 %v812
          %v849 = vunpack.c.h.b16 %v811
          %v850 = vunpack.c.h.b16 %v812
          %v851 = vunpack.c.l.b16 %v813
          %v852 = vunpack.c.l.b16 %v814
          %v853 = vunpack.c.h.b16 %v813
          %v854 = vunpack.c.h.b16 %v814
          %v855 = vunpack.c.l.b16 %v815
          %v856 = vunpack.c.l.b16 %v816
          %v857 = vunpack.c.h.b16 %v815
          %v858 = vunpack.c.h.b16 %v816
          %v859 = vunpack.c.l.b16 %v817
          %v860 = vunpack.c.l.b16 %v818
          %v861 = vunpack.c.h.b16 %v817
          %v862 = vunpack.c.h.b16 %v818
          %v863 = vunpack.c.l.b16 %v819
          %v864 = vunpack.c.l.b16 %v820
          %v865 = vunpack.c.h.b16 %v819
          %v866 = vunpack.c.h.b16 %v820
          %v867 = vunpack.c.l.b16 %v821
          %v868 = vunpack.c.l.b16 %v822
          %v869 = vunpack.c.h.b16 %v821
          %v870 = vunpack.c.h.b16 %v822
          %v871 = vpack.c.b16 %v840, %v839
          %v872 = vpack.c.b16 %v842, %v841
          %v873 = vpack.c.b16 %v844, %v843
          %v874 = vpack.c.b16 %v846, %v845
          %v875 = vpack.c.b16 %v848, %v847
          %v876 = vpack.c.b16 %v850, %v849
          %v877 = vpack.c.b16 %v852, %v851
          %v878 = vpack.c.b16 %v854, %v853
          %v879 = vpack.c.b16 %v856, %v855
          %v880 = vpack.c.b16 %v858, %v857
          %v881 = vpack.c.b16 %v860, %v859
          %v882 = vpack.c.b16 %v862, %v861
          %v883 = vpack.c.b16 %v864, %v863
          %v884 = vpack.c.b16 %v866, %v865
          %v885 = vpack.c.b16 %v868, %v867
          %v886 = vpack.c.b16 %v870, %v869
          %903 = vst [vmem:[#allocation2] sm:$0xff] %v871
          %904 = vst [vmem:[#allocation2 + $0x8] sm:$0xff] %v872
          %905 = vst [vmem:[#allocation2 + $0x10] sm:$0xff] %v873
          %906 = vst [vmem:[#allocation2 + $0x18] sm:$0xff] %v874
          %907 = vst [vmem:[#allocation2 + $0x20] sm:$0xff] %v875
          %908 = vst [vmem:[#allocation2 + $0x28] sm:$0xff] %v876
          %909 = vst [vmem:[#allocation2 + $0x30] sm:$0xff] %v877
          %910 = vst [vmem:[#allocation2 + $0x38] sm:$0xff] %v878
          %911 = vst [vmem:[#allocation2 + $0x40] sm:$0xff] %v879
          %912 = vst [vmem:[#allocation2 + $0x48] sm:$0xff] %v880
          %913 = vst [vmem:[#allocation2 + $0x50] sm:$0xff] %v881
          %914 = vst [vmem:[#allocation2 + $0x58] sm:$0xff] %v882
          %915 = vst [vmem:[#allocation2 + $0x60] sm:$0xff] %v883
          %916 = vst [vmem:[#allocation2 + $0x68] sm:$0xff] %v884
          %917 = vst [vmem:[#allocation2 + $0x70] sm:$0xff] %v885
          %918 = vst [vmem:[#allocation2 + $0x78] sm:$0xff] %v886
        $region67: #{policy_network_forward.11} parent=58 // pred_fallthru
          _
        %v919 = vld [vmem:[#allocation2] sm:$0xff]
        %v920 = vld [vmem:[#allocation2 + $0x8] sm:$0xff]
        %v921 = vld [vmem:[#allocation2 + $0x10] sm:$0xff]
        %v922 = vld [vmem:[#allocation2 + $0x18] sm:$0xff]
        %v923 = vld [vmem:[#allocation2 + $0x20] sm:$0xff]
        %v924 = vld [vmem:[#allocation2 + $0x28] sm:$0xff]
        %v925 = vld [vmem:[#allocation2 + $0x30] sm:$0xff]
        %v926 = vld [vmem:[#allocation2 + $0x38] sm:$0xff]
        %v927 = vld [vmem:[#allocation2 + $0x40] sm:$0xff]
        %v928 = vld [vmem:[#allocation2 + $0x48] sm:$0xff]
        %v929 = vld [vmem:[#allocation2 + $0x50] sm:$0xff]
        %v930 = vld [vmem:[#allocation2 + $0x58] sm:$0xff]
        %v931 = vld [vmem:[#allocation2 + $0x60] sm:$0xff]
        %v932 = vld [vmem:[#allocation2 + $0x68] sm:$0xff]
        %v933 = vld [vmem:[#allocation2 + $0x70] sm:$0xff]
        %v934 = vld [vmem:[#allocation2 + $0x78] sm:$0xff]
        %v935 = vld [vmem:[%s377] sm:$0xff]
        %v936 = vld [vmem:[%s377 + $0x8] sm:$0xff]
        %v937 = vld [vmem:[%s377 + $0x10] sm:$0xff]
        %v938 = vld [vmem:[%s377 + $0x18] sm:$0xff]
        %v939 = vld [vmem:[%s377 + $0x20] sm:$0xff]
        %v940 = vld [vmem:[%s377 + $0x28] sm:$0xff]
        %v941 = vld [vmem:[%s377 + $0x30] sm:$0xff]
        %v942 = vld [vmem:[%s377 + $0x38] sm:$0xff]
        %v943 = vld [vmem:[%s377 + $0x40] sm:$0xff]
        %v944 = vld [vmem:[%s377 + $0x48] sm:$0xff]
        %v945 = vld [vmem:[%s377 + $0x50] sm:$0xff]
        %v946 = vld [vmem:[%s377 + $0x58] sm:$0xff]
        %v947 = vld [vmem:[%s377 + $0x60] sm:$0xff]
        %v948 = vld [vmem:[%s377 + $0x68] sm:$0xff]
        %v949 = vld [vmem:[%s377 + $0x70] sm:$0xff]
        %v950 = vld [vmem:[%s377 + $0x78] sm:$0xff]
        %v951 = vld [vmem:[%s377 + $0x80] sm:$0xff]
        %v952 = vld [vmem:[%s377 + $0x88] sm:$0xff]
        %v953 = vld [vmem:[%s377 + $0x90] sm:$0xff]
        %v954 = vld [vmem:[%s377 + $0x98] sm:$0xff]
        %v955 = vld [vmem:[%s377 + $0xa0] sm:$0xff]
        %v956 = vld [vmem:[%s377 + $0xa8] sm:$0xff]
        %v957 = vld [vmem:[%s377 + $0xb0] sm:$0xff]
        %v958 = vld [vmem:[%s377 + $0xb8] sm:$0xff]
        %v959 = vld [vmem:[%s377 + $0xc0] sm:$0xff]
        %v960 = vld [vmem:[%s377 + $0xc8] sm:$0xff]
        %v961 = vld [vmem:[%s377 + $0xd0] sm:$0xff]
        %v962 = vld [vmem:[%s377 + $0xd8] sm:$0xff]
        %v963 = vld [vmem:[%s377 + $0xe0] sm:$0xff]
        %v964 = vld [vmem:[%s377 + $0xe8] sm:$0xff]
        %v965 = vld [vmem:[%s377 + $0xf0] sm:$0xff]
        %v966 = vld [vmem:[%s377 + $0xf8] sm:$0xff]
        %v967 = vld [vmem:[%s377 + $0x100] sm:$0xff]
        %v968 = vld [vmem:[%s377 + $0x108] sm:$0xff]
        %v969 = vld [vmem:[%s377 + $0x110] sm:$0xff]
        %v970 = vld [vmem:[%s377 + $0x118] sm:$0xff]
        %v971 = vld [vmem:[%s377 + $0x120] sm:$0xff]
        %v972 = vld [vmem:[%s377 + $0x128] sm:$0xff]
        %v973 = vld [vmem:[%s377 + $0x130] sm:$0xff]
        %v974 = vld [vmem:[%s377 + $0x138] sm:$0xff]
        %v975 = vld [vmem:[%s377 + $0x140] sm:$0xff]
        %v976 = vld [vmem:[%s377 + $0x148] sm:$0xff]
        %v977 = vld [vmem:[%s377 + $0x150] sm:$0xff]
        %v978 = vld [vmem:[%s377 + $0x158] sm:$0xff]
        %v979 = vld [vmem:[%s377 + $0x160] sm:$0xff]
        %v980 = vld [vmem:[%s377 + $0x168] sm:$0xff]
        %v981 = vld [vmem:[%s377 + $0x170] sm:$0xff]
        %v982 = vld [vmem:[%s377 + $0x178] sm:$0xff]
        %v983 = vld [vmem:[%s377 + $0x180] sm:$0xff]
        %v984 = vld [vmem:[%s377 + $0x188] sm:$0xff]
        %v985 = vld [vmem:[%s377 + $0x190] sm:$0xff]
        %v986 = vld [vmem:[%s377 + $0x198] sm:$0xff]
        %v987 = vld [vmem:[%s377 + $0x1a0] sm:$0xff]
        %v988 = vld [vmem:[%s377 + $0x1a8] sm:$0xff]
        %v989 = vld [vmem:[%s377 + $0x1b0] sm:$0xff]
        %v990 = vld [vmem:[%s377 + $0x1b8] sm:$0xff]
        %v991 = vld [vmem:[%s377 + $0x1c0] sm:$0xff]
        %v992 = vld [vmem:[%s377 + $0x1c8] sm:$0xff]
        %v993 = vld [vmem:[%s377 + $0x1d0] sm:$0xff]
        %v994 = vld [vmem:[%s377 + $0x1d8] sm:$0xff]
        %v995 = vld [vmem:[%s377 + $0x1e0] sm:$0xff]
        %v996 = vld [vmem:[%s377 + $0x1e8] sm:$0xff]
        %v997 = vld [vmem:[%s377 + $0x1f0] sm:$0xff]
        %v998 = vld [vmem:[%s377 + $0x1f8] sm:$0xff]
        %v999 = vld [vmem:[%s422] sm:$0xf]
        %v1001 = vlaneseq
        %v1002 = vshrl.u32 %v1001, 7
        %v1003 = vsub.s32 0, %v1002
        %v1004 = vrot.slane %v999, %v1003
        %v1005 = vlaneseq
        %v1006 = vshrl.u32 %v1005, 7
        %v1007 = vsub.s32 1, %v1006
        %v1008 = vrot.slane %v999, %v1007
        %v1009 = vlaneseq
        %v1010 = vshrl.u32 %v1009, 7
        %v1011 = vsub.s32 2, %v1010
        %v1012 = vrot.slane %v999, %v1011
        %v1013 = vlaneseq
        %v1014 = vshrl.u32 %v1013, 7
        %v1015 = vsub.s32 3, %v1014
        %v1016 = vrot.slane %v999, %v1015
        %v1037 = vunpack.c.l.b16 %v919
        %v1038 = vunpack.c.h.b16 %v919
        %v1039 = vunpack.c.l.b16 %v920
        %v1040 = vunpack.c.h.b16 %v920
        %v1041 = vunpack.c.l.b16 %v921
        %v1042 = vunpack.c.h.b16 %v921
        %v1043 = vunpack.c.l.b16 %v922
        %v1044 = vunpack.c.h.b16 %v922
        %v1045 = vunpack.c.l.b16 %v923
        %v1046 = vunpack.c.h.b16 %v923
        %v1047 = vunpack.c.l.b16 %v924
        %v1048 = vunpack.c.h.b16 %v924
        %v1049 = vunpack.c.l.b16 %v925
        %v1050 = vunpack.c.h.b16 %v925
        %v1051 = vunpack.c.l.b16 %v926
        %v1052 = vunpack.c.h.b16 %v926
        %v1053 = vunpack.c.l.b16 %v927
        %v1054 = vunpack.c.h.b16 %v927
        %v1055 = vunpack.c.l.b16 %v928
        %v1056 = vunpack.c.h.b16 %v928
        %v1057 = vunpack.c.l.b16 %v929
        %v1058 = vunpack.c.h.b16 %v929
        %v1059 = vunpack.c.l.b16 %v930
        %v1060 = vunpack.c.h.b16 %v930
        %v1061 = vunpack.c.l.b16 %v931
        %v1062 = vunpack.c.h.b16 %v931
        %v1063 = vunpack.c.l.b16 %v932
        %v1064 = vunpack.c.h.b16 %v932
        %v1065 = vunpack.c.l.b16 %v933
        %v1066 = vunpack.c.h.b16 %v933
        %v1067 = vunpack.c.l.b16 %v934
        %v1068 = vunpack.c.h.b16 %v934
        %v1069 = vpack.c.b16 %v1039, %v1037
        %v1070 = vpack.c.b16 %v1040, %v1038
        %v1071 = vpack.c.b16 %v1043, %v1041
        %v1072 = vpack.c.b16 %v1044, %v1042
        %v1073 = vpack.c.b16 %v1047, %v1045
        %v1074 = vpack.c.b16 %v1048, %v1046
        %v1075 = vpack.c.b16 %v1051, %v1049
        %v1076 = vpack.c.b16 %v1052, %v1050
        %v1077 = vpack.c.b16 %v1055, %v1053
        %v1078 = vpack.c.b16 %v1056, %v1054
        %v1079 = vpack.c.b16 %v1059, %v1057
        %v1080 = vpack.c.b16 %v1060, %v1058
        %v1081 = vpack.c.b16 %v1063, %v1061
        %v1082 = vpack.c.b16 %v1064, %v1062
        %v1083 = vpack.c.b16 %v1067, %v1065
        %v1084 = vpack.c.b16 %v1068, %v1066
        %v1165 = vunpack.c.l.b16 %v935
        %v1166 = vunpack.c.h.b16 %v935
        %v1167 = vunpack.c.l.b16 %v936
        %v1168 = vunpack.c.h.b16 %v936
        %v1169 = vunpack.c.l.b16 %v937
        %v1170 = vunpack.c.h.b16 %v937
        %v1171 = vunpack.c.l.b16 %v938
        %v1172 = vunpack.c.h.b16 %v938
        %v1173 = vunpack.c.l.b16 %v939
        %v1174 = vunpack.c.h.b16 %v939
        %v1175 = vunpack.c.l.b16 %v940
        %v1176 = vunpack.c.h.b16 %v940
        %v1177 = vunpack.c.l.b16 %v941
        %v1178 = vunpack.c.h.b16 %v941
        %v1179 = vunpack.c.l.b16 %v942
        %v1180 = vunpack.c.h.b16 %v942
        %v1181 = vunpack.c.l.b16 %v943
        %v1182 = vunpack.c.h.b16 %v943
        %v1183 = vunpack.c.l.b16 %v944
        %v1184 = vunpack.c.h.b16 %v944
        %v1185 = vunpack.c.l.b16 %v945
        %v1186 = vunpack.c.h.b16 %v945
        %v1187 = vunpack.c.l.b16 %v946
        %v1188 = vunpack.c.h.b16 %v946
        %v1189 = vunpack.c.l.b16 %v947
        %v1190 = vunpack.c.h.b16 %v947
        %v1191 = vunpack.c.l.b16 %v948
        %v1192 = vunpack.c.h.b16 %v948
        %v1193 = vunpack.c.l.b16 %v949
        %v1194 = vunpack.c.h.b16 %v949
        %v1195 = vunpack.c.l.b16 %v950
        %v1196 = vunpack.c.h.b16 %v950
        %v1197 = vunpack.c.l.b16 %v951
        %v1198 = vunpack.c.h.b16 %v951
        %v1199 = vunpack.c.l.b16 %v952
        %v1200 = vunpack.c.h.b16 %v952
        %v1201 = vunpack.c.l.b16 %v953
        %v1202 = vunpack.c.h.b16 %v953
        %v1203 = vunpack.c.l.b16 %v954
        %v1204 = vunpack.c.h.b16 %v954
        %v1205 = vunpack.c.l.b16 %v955
        %v1206 = vunpack.c.h.b16 %v955
        %v1207 = vunpack.c.l.b16 %v956
        %v1208 = vunpack.c.h.b16 %v956
        %v1209 = vunpack.c.l.b16 %v957
        %v1210 = vunpack.c.h.b16 %v957
        %v1211 = vunpack.c.l.b16 %v958
        %v1212 = vunpack.c.h.b16 %v958
        %v1213 = vunpack.c.l.b16 %v959
        %v1214 = vunpack.c.h.b16 %v959
        %v1215 = vunpack.c.l.b16 %v960
        %v1216 = vunpack.c.h.b16 %v960
        %v1217 = vunpack.c.l.b16 %v961
        %v1218 = vunpack.c.h.b16 %v961
        %v1219 = vunpack.c.l.b16 %v962
        %v1220 = vunpack.c.h.b16 %v962
        %v1221 = vunpack.c.l.b16 %v963
        %v1222 = vunpack.c.h.b16 %v963
        %v1223 = vunpack.c.l.b16 %v964
        %v1224 = vunpack.c.h.b16 %v964
        %v1225 = vunpack.c.l.b16 %v965
        %v1226 = vunpack.c.h.b16 %v965
        %v1227 = vunpack.c.l.b16 %v966
        %v1228 = vunpack.c.h.b16 %v966
        %v1229 = vunpack.c.l.b16 %v967
        %v1230 = vunpack.c.h.b16 %v967
        %v1231 = vunpack.c.l.b16 %v968
        %v1232 = vunpack.c.h.b16 %v968
        %v1233 = vunpack.c.l.b16 %v969
        %v1234 = vunpack.c.h.b16 %v969
        %v1235 = vunpack.c.l.b16 %v970
        %v1236 = vunpack.c.h.b16 %v970
        %v1237 = vunpack.c.l.b16 %v971
        %v1238 = vunpack.c.h.b16 %v971
        %v1239 = vunpack.c.l.b16 %v972
        %v1240 = vunpack.c.h.b16 %v972
        %v1241 = vunpack.c.l.b16 %v973
        %v1242 = vunpack.c.h.b16 %v973
        %v1243 = vunpack.c.l.b16 %v974
        %v1244 = vunpack.c.h.b16 %v974
        %v1245 = vunpack.c.l.b16 %v975
        %v1246 = vunpack.c.h.b16 %v975
        %v1247 = vunpack.c.l.b16 %v976
        %v1248 = vunpack.c.h.b16 %v976
        %v1249 = vunpack.c.l.b16 %v977
        %v1250 = vunpack.c.h.b16 %v977
        %v1251 = vunpack.c.l.b16 %v978
        %v1252 = vunpack.c.h.b16 %v978
        %v1253 = vunpack.c.l.b16 %v979
        %v1254 = vunpack.c.h.b16 %v979
        %v1255 = vunpack.c.l.b16 %v980
        %v1256 = vunpack.c.h.b16 %v980
        %v1257 = vunpack.c.l.b16 %v981
        %v1258 = vunpack.c.h.b16 %v981
        %v1259 = vunpack.c.l.b16 %v982
        %v1260 = vunpack.c.h.b16 %v982
        %v1261 = vunpack.c.l.b16 %v983
        %v1262 = vunpack.c.h.b16 %v983
        %v1263 = vunpack.c.l.b16 %v984
        %v1264 = vunpack.c.h.b16 %v984
        %v1265 = vunpack.c.l.b16 %v985
        %v1266 = vunpack.c.h.b16 %v985
        %v1267 = vunpack.c.l.b16 %v986
        %v1268 = vunpack.c.h.b16 %v986
        %v1269 = vunpack.c.l.b16 %v987
        %v1270 = vunpack.c.h.b16 %v987
        %v1271 = vunpack.c.l.b16 %v988
        %v1272 = vunpack.c.h.b16 %v988
        %v1273 = vunpack.c.l.b16 %v989
        %v1274 = vunpack.c.h.b16 %v989
        %v1275 = vunpack.c.l.b16 %v990
        %v1276 = vunpack.c.h.b16 %v990
        %v1277 = vunpack.c.l.b16 %v991
        %v1278 = vunpack.c.h.b16 %v991
        %v1279 = vunpack.c.l.b16 %v992
        %v1280 = vunpack.c.h.b16 %v992
        %v1281 = vunpack.c.l.b16 %v993
        %v1282 = vunpack.c.h.b16 %v993
        %v1283 = vunpack.c.l.b16 %v994
        %v1284 = vunpack.c.h.b16 %v994
        %v1285 = vunpack.c.l.b16 %v995
        %v1286 = vunpack.c.h.b16 %v995
        %v1287 = vunpack.c.l.b16 %v996
        %v1288 = vunpack.c.h.b16 %v996
        %v1289 = vunpack.c.l.b16 %v997
        %v1290 = vunpack.c.h.b16 %v997
        %v1291 = vunpack.c.l.b16 %v998
        %v1292 = vunpack.c.h.b16 %v998
        %v1293 = vpack.c.b16 %v1169, %v1165
        %v1294 = vpack.c.b16 %v1170, %v1166
        %v1295 = vpack.c.b16 %v1171, %v1167
        %v1296 = vpack.c.b16 %v1172, %v1168
        %v1297 = vpack.c.b16 %v1177, %v1173
        %v1298 = vpack.c.b16 %v1178, %v1174
        %v1299 = vpack.c.b16 %v1179, %v1175
        %v1300 = vpack.c.b16 %v1180, %v1176
        %v1301 = vpack.c.b16 %v1185, %v1181
        %v1302 = vpack.c.b16 %v1186, %v1182
        %v1303 = vpack.c.b16 %v1187, %v1183
        %v1304 = vpack.c.b16 %v1188, %v1184
        %v1305 = vpack.c.b16 %v1193, %v1189
        %v1306 = vpack.c.b16 %v1194, %v1190
        %v1307 = vpack.c.b16 %v1195, %v1191
        %v1308 = vpack.c.b16 %v1196, %v1192
        %v1309 = vpack.c.b16 %v1201, %v1197
        %v1310 = vpack.c.b16 %v1202, %v1198
        %v1311 = vpack.c.b16 %v1203, %v1199
        %v1312 = vpack.c.b16 %v1204, %v1200
        %v1313 = vpack.c.b16 %v1209, %v1205
        %v1314 = vpack.c.b16 %v1210, %v1206
        %v1315 = vpack.c.b16 %v1211, %v1207
        %v1316 = vpack.c.b16 %v1212, %v1208
        %v1317 = vpack.c.b16 %v1217, %v1213
        %v1318 = vpack.c.b16 %v1218, %v1214
        %v1319 = vpack.c.b16 %v1219, %v1215
        %v1320 = vpack.c.b16 %v1220, %v1216
        %v1321 = vpack.c.b16 %v1225, %v1221
        %v1322 = vpack.c.b16 %v1226, %v1222
        %v1323 = vpack.c.b16 %v1227, %v1223
        %v1324 = vpack.c.b16 %v1228, %v1224
        %v1325 = vpack.c.b16 %v1233, %v1229
        %v1326 = vpack.c.b16 %v1234, %v1230
        %v1327 = vpack.c.b16 %v1235, %v1231
        %v1328 = vpack.c.b16 %v1236, %v1232
        %v1329 = vpack.c.b16 %v1241, %v1237
        %v1330 = vpack.c.b16 %v1242, %v1238
        %v1331 = vpack.c.b16 %v1243, %v1239
        %v1332 = vpack.c.b16 %v1244, %v1240
        %v1333 = vpack.c.b16 %v1249, %v1245
        %v1334 = vpack.c.b16 %v1250, %v1246
        %v1335 = vpack.c.b16 %v1251, %v1247
        %v1336 = vpack.c.b16 %v1252, %v1248
        %v1337 = vpack.c.b16 %v1257, %v1253
        %v1338 = vpack.c.b16 %v1258, %v1254
        %v1339 = vpack.c.b16 %v1259, %v1255
        %v1340 = vpack.c.b16 %v1260, %v1256
        %v1341 = vpack.c.b16 %v1265, %v1261
        %v1342 = vpack.c.b16 %v1266, %v1262
        %v1343 = vpack.c.b16 %v1267, %v1263
        %v1344 = vpack.c.b16 %v1268, %v1264
        %v1345 = vpack.c.b16 %v1273, %v1269
        %v1346 = vpack.c.b16 %v1274, %v1270
        %v1347 = vpack.c.b16 %v1275, %v1271
        %v1348 = vpack.c.b16 %v1276, %v1272
        %v1349 = vpack.c.b16 %v1281, %v1277
        %v1350 = vpack.c.b16 %v1282, %v1278
        %v1351 = vpack.c.b16 %v1283, %v1279
        %v1352 = vpack.c.b16 %v1284, %v1280
        %v1353 = vpack.c.b16 %v1289, %v1285
        %v1354 = vpack.c.b16 %v1290, %v1286
        %v1355 = vpack.c.b16 %v1291, %v1287
        %v1356 = vpack.c.b16 %v1292, %v1288
        %1421 = vmatprep.subr.bf16.mxu0 %v1322
        %1422 = vmatpush1.bf16.msra.mxu0 %v1321
        %1423 = vmatprep.subr.bf16.mxu0 %v1318
        %1424 = vmatpush1.bf16.msra.mxu0 %v1317
        %1425 = vmatprep.subr.bf16.mxu0 %v1314
        %1426 = vmatpush1.bf16.msra.mxu0 %v1313
        %1427 = vmatprep.subr.bf16.mxu0 %v1310
        %1428 = vmatpush1.bf16.msra.mxu0 %v1309
        %1429 = vmatprep.subr.bf16.mxu0 %v1306
        %1430 = vmatpush1.bf16.msra.mxu0 %v1305
        %1431 = vmatprep.subr.bf16.mxu0 %v1302
        %1432 = vmatpush1.bf16.msra.mxu0 %v1301
        %1433 = vmatprep.subr.bf16.mxu0 %v1298
        %1434 = vmatpush1.bf16.msra.mxu0 %v1297
        %1435 = vmatprep.subr.bf16.mxu0 %v1294
        %1436 = vmatpush1.bf16.msra.mxu0 %v1293
        %1437 = vmatprep.subr.bf16.mxu0 %v1354
        %1438 = vmatpush2.bf16.msra.mxu0 %v1353
        %1439 = vmatprep.subr.bf16.mxu0 %v1350
        %1440 = vmatpush2.bf16.msra.mxu0 %v1349
        %1441 = vmatprep.subr.bf16.mxu0 %v1346
        %1442 = vmatpush2.bf16.msra.mxu0 %v1345
        %1443 = vmatprep.subr.bf16.mxu0 %v1342
        %1444 = vmatpush2.bf16.msra.mxu0 %v1341
        %1445 = vmatprep.subr.bf16.mxu0 %v1338
        %1446 = vmatpush2.bf16.msra.mxu0 %v1337
        %1447 = vmatprep.subr.bf16.mxu0 %v1334
        %1448 = vmatpush2.bf16.msra.mxu0 %v1333
        %1449 = vmatprep.subr.bf16.mxu0 %v1330
        %1450 = vmatpush2.bf16.msra.mxu0 %v1329
        %1451 = vmatprep.subr.bf16.mxu0 %v1326
        %1452 = vmatpush2.bf16.msra.mxu0 %v1325
        %1453 = vmatprep.mubr.bf16.mxu0 %v1070
        %1454 = vmatmul.mubr.bf16.gmra.mxu0 %v1069
        %v1455 = vpop.f32.mrf.mxu0
        %v1456 = vadd.f32 %v1004, %v1455
        %v1457 = vpop.f32.mrf.mxu0
        %v1458 = vadd.f32 %v1008, %v1457
        %v1459 = vpop.f32.mrf.mxu0
        %v1460 = vadd.f32 %v1004, %v1459
        %v1461 = vpop.f32.mrf.mxu0
        %v1462 = vadd.f32 %v1008, %v1461
        %1463 = vmatprep.mubr.bf16.mxu0 %v1072
        %1464 = vmatmul.mubr.bf16.gmra.mxu0 %v1071
        %v1465 = vpop.f32.mrf.mxu0
        %v1466 = vadd.f32 %v1004, %v1465
        %v1467 = vpop.f32.mrf.mxu0
        %v1468 = vadd.f32 %v1008, %v1467
        %v1469 = vpop.f32.mrf.mxu0
        %v1470 = vadd.f32 %v1004, %v1469
        %v1471 = vpop.f32.mrf.mxu0
        %v1472 = vadd.f32 %v1008, %v1471
        %1473 = vmatprep.mubr.bf16.mxu0 %v1074
        %1474 = vmatmul.mubr.bf16.gmra.mxu0 %v1073
        %v1475 = vpop.f32.mrf.mxu0
        %v1476 = vadd.f32 %v1004, %v1475
        %v1477 = vpop.f32.mrf.mxu0
        %v1478 = vadd.f32 %v1008, %v1477
        %v1479 = vpop.f32.mrf.mxu0
        %v1480 = vadd.f32 %v1004, %v1479
        %v1481 = vpop.f32.mrf.mxu0
        %v1482 = vadd.f32 %v1008, %v1481
        %1483 = vmatprep.mubr.bf16.mxu0 %v1076
        %1484 = vmatmul.mubr.bf16.gmra.mxu0 %v1075
        %v1485 = vpop.f32.mrf.mxu0
        %v1486 = vadd.f32 %v1004, %v1485
        %v1487 = vpop.f32.mrf.mxu0
        %v1488 = vadd.f32 %v1008, %v1487
        %v1489 = vpop.f32.mrf.mxu0
        %v1490 = vadd.f32 %v1004, %v1489
        %v1491 = vpop.f32.mrf.mxu0
        %v1492 = vadd.f32 %v1008, %v1491
        %1493 = vmatprep.mubr.bf16.mxu0 %v1078
        %1494 = vmatmul.mubr.bf16.gmra.mxu0 %v1077
        %v1495 = vpop.f32.mrf.mxu0
        %v1496 = vadd.f32 %v1004, %v1495
        %v1497 = vpop.f32.mrf.mxu0
        %v1498 = vadd.f32 %v1008, %v1497
        %v1499 = vpop.f32.mrf.mxu0
        %v1500 = vadd.f32 %v1004, %v1499
        %v1501 = vpop.f32.mrf.mxu0
        %v1502 = vadd.f32 %v1008, %v1501
        %1503 = vmatprep.mubr.bf16.mxu0 %v1080
        %1504 = vmatmul.mubr.bf16.gmra.mxu0 %v1079
        %v1505 = vpop.f32.mrf.mxu0
        %v1506 = vadd.f32 %v1004, %v1505
        %v1507 = vpop.f32.mrf.mxu0
        %v1508 = vadd.f32 %v1008, %v1507
        %v1509 = vpop.f32.mrf.mxu0
        %v1510 = vadd.f32 %v1004, %v1509
        %v1511 = vpop.f32.mrf.mxu0
        %v1512 = vadd.f32 %v1008, %v1511
        %1513 = vmatprep.mubr.bf16.mxu0 %v1082
        %1514 = vmatmul.mubr.bf16.gmra.mxu0 %v1081
        %v1515 = vpop.f32.mrf.mxu0
        %v1516 = vadd.f32 %v1004, %v1515
        %v1517 = vpop.f32.mrf.mxu0
        %v1518 = vadd.f32 %v1008, %v1517
        %v1519 = vpop.f32.mrf.mxu0
        %v1520 = vadd.f32 %v1004, %v1519
        %v1521 = vpop.f32.mrf.mxu0
        %v1522 = vadd.f32 %v1008, %v1521
        %1523 = vmatprep.mubr.bf16.mxu0 %v1084
        %1524 = vmatmul.mubr.bf16.gmra.mxu0 %v1083
        %v1525 = vpop.f32.mrf.mxu0
        %v1526 = vadd.f32 %v1004, %v1525
        %v1527 = vpop.f32.mrf.mxu0
        %v1528 = vadd.f32 %v1008, %v1527
        %v1529 = vpop.f32.mrf.mxu0
        %v1530 = vadd.f32 %v1004, %v1529
        %v1531 = vpop.f32.mrf.mxu0
        %v1532 = vadd.f32 %v1008, %v1531
        %1533 = vdwg.mxu0
        %1534 = vmatprep.subr.bf16.mxu0 %v1324
        %1535 = vmatpush1.bf16.msra.mxu0 %v1323
        %1536 = vmatprep.subr.bf16.mxu0 %v1320
        %1537 = vmatpush1.bf16.msra.mxu0 %v1319
        %1538 = vmatprep.subr.bf16.mxu0 %v1316
        %1539 = vmatpush1.bf16.msra.mxu0 %v1315
        %1540 = vmatprep.subr.bf16.mxu0 %v1312
        %1541 = vmatpush1.bf16.msra.mxu0 %v1311
        %1542 = vmatprep.subr.bf16.mxu0 %v1308
        %1543 = vmatpush1.bf16.msra.mxu0 %v1307
        %1544 = vmatprep.subr.bf16.mxu0 %v1304
        %1545 = vmatpush1.bf16.msra.mxu0 %v1303
        %1546 = vmatprep.subr.bf16.mxu0 %v1300
        %1547 = vmatpush1.bf16.msra.mxu0 %v1299
        %1548 = vmatprep.subr.bf16.mxu0 %v1296
        %1549 = vmatpush1.bf16.msra.mxu0 %v1295
        %1550 = vmatprep.subr.bf16.mxu0 %v1356
        %1551 = vmatpush2.bf16.msra.mxu0 %v1355
        %1552 = vmatprep.subr.bf16.mxu0 %v1352
        %1553 = vmatpush2.bf16.msra.mxu0 %v1351
        %1554 = vmatprep.subr.bf16.mxu0 %v1348
        %1555 = vmatpush2.bf16.msra.mxu0 %v1347
        %1556 = vmatprep.subr.bf16.mxu0 %v1344
        %1557 = vmatpush2.bf16.msra.mxu0 %v1343
        %1558 = vmatprep.subr.bf16.mxu0 %v1340
        %1559 = vmatpush2.bf16.msra.mxu0 %v1339
        %1560 = vmatprep.subr.bf16.mxu0 %v1336
        %1561 = vmatpush2.bf16.msra.mxu0 %v1335
        %1562 = vmatprep.subr.bf16.mxu0 %v1332
        %1563 = vmatpush2.bf16.msra.mxu0 %v1331
        %1564 = vmatprep.subr.bf16.mxu0 %v1328
        %1565 = vmatpush2.bf16.msra.mxu0 %v1327
        %1566 = vmatprep.mubr.bf16.mxu0 %v1070
        %1567 = vmatmul.mubr.bf16.gmra.mxu0 %v1069
        %v1568 = vpop.f32.mrf.mxu0
        %v1569 = vadd.f32 %v1012, %v1568
        %v1570 = vpop.f32.mrf.mxu0
        %v1571 = vadd.f32 %v1016, %v1570
        %v1572 = vpop.f32.mrf.mxu0
        %v1573 = vadd.f32 %v1012, %v1572
        %v1574 = vpop.f32.mrf.mxu0
        %v1575 = vadd.f32 %v1016, %v1574
        %1576 = vmatprep.mubr.bf16.mxu0 %v1072
        %1577 = vmatmul.mubr.bf16.gmra.mxu0 %v1071
        %v1578 = vpop.f32.mrf.mxu0
        %v1579 = vadd.f32 %v1012, %v1578
        %v1580 = vpop.f32.mrf.mxu0
        %v1581 = vadd.f32 %v1016, %v1580
        %v1582 = vpop.f32.mrf.mxu0
        %v1583 = vadd.f32 %v1012, %v1582
        %v1584 = vpop.f32.mrf.mxu0
        %v1585 = vadd.f32 %v1016, %v1584
        %1586 = vmatprep.mubr.bf16.mxu0 %v1074
        %1587 = vmatmul.mubr.bf16.gmra.mxu0 %v1073
        %v1588 = vpop.f32.mrf.mxu0
        %v1589 = vadd.f32 %v1012, %v1588
        %v1590 = vpop.f32.mrf.mxu0
        %v1591 = vadd.f32 %v1016, %v1590
        %v1592 = vpop.f32.mrf.mxu0
        %v1593 = vadd.f32 %v1012, %v1592
        %v1594 = vpop.f32.mrf.mxu0
        %v1595 = vadd.f32 %v1016, %v1594
        %1596 = vmatprep.mubr.bf16.mxu0 %v1076
        %1597 = vmatmul.mubr.bf16.gmra.mxu0 %v1075
        %v1598 = vpop.f32.mrf.mxu0
        %v1599 = vadd.f32 %v1012, %v1598
        %v1600 = vpop.f32.mrf.mxu0
        %v1601 = vadd.f32 %v1016, %v1600
        %v1602 = vpop.f32.mrf.mxu0
        %v1603 = vadd.f32 %v1012, %v1602
        %v1604 = vpop.f32.mrf.mxu0
        %v1605 = vadd.f32 %v1016, %v1604
        %1606 = vmatprep.mubr.bf16.mxu0 %v1078
        %1607 = vmatmul.mubr.bf16.gmra.mxu0 %v1077
        %v1608 = vpop.f32.mrf.mxu0
        %v1609 = vadd.f32 %v1012, %v1608
        %v1610 = vpop.f32.mrf.mxu0
        %v1611 = vadd.f32 %v1016, %v1610
        %v1612 = vpop.f32.mrf.mxu0
        %v1613 = vadd.f32 %v1012, %v1612
        %v1614 = vpop.f32.mrf.mxu0
        %v1615 = vadd.f32 %v1016, %v1614
        %1616 = vmatprep.mubr.bf16.mxu0 %v1080
        %1617 = vmatmul.mubr.bf16.gmra.mxu0 %v1079
        %v1618 = vpop.f32.mrf.mxu0
        %v1619 = vadd.f32 %v1012, %v1618
        %v1620 = vpop.f32.mrf.mxu0
        %v1621 = vadd.f32 %v1016, %v1620
        %v1622 = vpop.f32.mrf.mxu0
        %v1623 = vadd.f32 %v1012, %v1622
        %v1624 = vpop.f32.mrf.mxu0
        %v1625 = vadd.f32 %v1016, %v1624
        %1626 = vmatprep.mubr.bf16.mxu0 %v1082
        %1627 = vmatmul.mubr.bf16.gmra.mxu0 %v1081
        %v1628 = vpop.f32.mrf.mxu0
        %v1629 = vadd.f32 %v1012, %v1628
        %v1630 = vpop.f32.mrf.mxu0
        %v1631 = vadd.f32 %v1016, %v1630
        %v1632 = vpop.f32.mrf.mxu0
        %v1633 = vadd.f32 %v1012, %v1632
        %v1634 = vpop.f32.mrf.mxu0
        %v1635 = vadd.f32 %v1016, %v1634
        %1636 = vmatprep.mubr.bf16.mxu0 %v1084
        %1637 = vmatmul.mubr.bf16.gmra.mxu0 %v1083
        %v1638 = vpop.f32.mrf.mxu0
        %v1639 = vadd.f32 %v1012, %v1638
        %v1640 = vpop.f32.mrf.mxu0
        %v1641 = vadd.f32 %v1016, %v1640
        %v1642 = vpop.f32.mrf.mxu0
        %v1643 = vadd.f32 %v1012, %v1642
        %v1644 = vpop.f32.mrf.mxu0
        %v1645 = vadd.f32 %v1016, %v1644
        %1646 = vdwg.mxu0
        %v1647 = vmul.f32 %v1456, 0.5
        %v1648 = vmul.f32 %v1458, 0.5
        %v1649 = vmul.f32 %v1569, 0.5
        %v1650 = vmul.f32 %v1571, 0.5
        %v1651 = vmul.f32 %v1460, 0.5
        %v1652 = vmul.f32 %v1462, 0.5
        %v1653 = vmul.f32 %v1573, 0.5
        %v1654 = vmul.f32 %v1575, 0.5
        %v1655 = vmul.f32 %v1466, 0.5
        %v1656 = vmul.f32 %v1468, 0.5
        %v1657 = vmul.f32 %v1579, 0.5
        %v1658 = vmul.f32 %v1581, 0.5
        %v1659 = vmul.f32 %v1470, 0.5
        %v1660 = vmul.f32 %v1472, 0.5
        %v1661 = vmul.f32 %v1583, 0.5
        %v1662 = vmul.f32 %v1585, 0.5
        %v1663 = vmul.f32 %v1476, 0.5
        %v1664 = vmul.f32 %v1478, 0.5
        %v1665 = vmul.f32 %v1589, 0.5
        %v1666 = vmul.f32 %v1591, 0.5
        %v1667 = vmul.f32 %v1480, 0.5
        %v1668 = vmul.f32 %v1482, 0.5
        %v1669 = vmul.f32 %v1593, 0.5
        %v1670 = vmul.f32 %v1595, 0.5
        %v1671 = vmul.f32 %v1486, 0.5
        %v1672 = vmul.f32 %v1488, 0.5
        %v1673 = vmul.f32 %v1599, 0.5
        %v1674 = vmul.f32 %v1601, 0.5
        %v1675 = vmul.f32 %v1490, 0.5
        %v1676 = vmul.f32 %v1492, 0.5
        %v1677 = vmul.f32 %v1603, 0.5
        %v1678 = vmul.f32 %v1605, 0.5
        %v1679 = vmul.f32 %v1496, 0.5
        %v1680 = vmul.f32 %v1498, 0.5
        %v1681 = vmul.f32 %v1609, 0.5
        %v1682 = vmul.f32 %v1611, 0.5
        %v1683 = vmul.f32 %v1500, 0.5
        %v1684 = vmul.f32 %v1502, 0.5
        %v1685 = vmul.f32 %v1613, 0.5
        %v1686 = vmul.f32 %v1615, 0.5
        %v1687 = vmul.f32 %v1506, 0.5
        %v1688 = vmul.f32 %v1508, 0.5
        %v1689 = vmul.f32 %v1619, 0.5
        %v1690 = vmul.f32 %v1621, 0.5
        %v1691 = vmul.f32 %v1510, 0.5
        %v1692 = vmul.f32 %v1512, 0.5
        %v1693 = vmul.f32 %v1623, 0.5
        %v1694 = vmul.f32 %v1625, 0.5
        %v1695 = vmul.f32 %v1516, 0.5
        %v1696 = vmul.f32 %v1518, 0.5
        %v1697 = vmul.f32 %v1629, 0.5
        %v1698 = vmul.f32 %v1631, 0.5
        %v1699 = vmul.f32 %v1520, 0.5
        %v1700 = vmul.f32 %v1522, 0.5
        %v1701 = vmul.f32 %v1633, 0.5
        %v1702 = vmul.f32 %v1635, 0.5
        %v1703 = vmul.f32 %v1526, 0.5
        %v1704 = vmul.f32 %v1528, 0.5
        %v1705 = vmul.f32 %v1639, 0.5
        %v1706 = vmul.f32 %v1641, 0.5
        %v1707 = vmul.f32 %v1530, 0.5
        %v1708 = vmul.f32 %v1532, 0.5
        %v1709 = vmul.f32 %v1643, 0.5
        %v1710 = vmul.f32 %v1645, 0.5
        %v1711 = vmul.f32 %v1456, %v1456
        %v1712 = vmul.f32 %v1458, %v1458
        %v1713 = vmul.f32 %v1569, %v1569
        %v1714 = vmul.f32 %v1571, %v1571
        %v1715 = vmul.f32 %v1460, %v1460
        %v1716 = vmul.f32 %v1462, %v1462
        %v1717 = vmul.f32 %v1573, %v1573
        %v1718 = vmul.f32 %v1575, %v1575
        %v1719 = vmul.f32 %v1466, %v1466
        %v1720 = vmul.f32 %v1468, %v1468
        %v1721 = vmul.f32 %v1579, %v1579
        %v1722 = vmul.f32 %v1581, %v1581
        %v1723 = vmul.f32 %v1470, %v1470
        %v1724 = vmul.f32 %v1472, %v1472
        %v1725 = vmul.f32 %v1583, %v1583
        %v1726 = vmul.f32 %v1585, %v1585
        %v1727 = vmul.f32 %v1476, %v1476
        %v1728 = vmul.f32 %v1478, %v1478
        %v1729 = vmul.f32 %v1589, %v1589
        %v1730 = vmul.f32 %v1591, %v1591
        %v1731 = vmul.f32 %v1480, %v1480
        %v1732 = vmul.f32 %v1482, %v1482
        %v1733 = vmul.f32 %v1593, %v1593
        %v1734 = vmul.f32 %v1595, %v1595
        %v1735 = vmul.f32 %v1486, %v1486
        %v1736 = vmul.f32 %v1488, %v1488
        %v1737 = vmul.f32 %v1599, %v1599
        %v1738 = vmul.f32 %v1601, %v1601
        %v1739 = vmul.f32 %v1490, %v1490
        %v1740 = vmul.f32 %v1492, %v1492
        %v1741 = vmul.f32 %v1603, %v1603
        %v1742 = vmul.f32 %v1605, %v1605
        %v1743 = vmul.f32 %v1496, %v1496
        %v1744 = vmul.f32 %v1498, %v1498
        %v1745 = vmul.f32 %v1609, %v1609
        %v1746 = vmul.f32 %v1611, %v1611
        %v1747 = vmul.f32 %v1500, %v1500
        %v1748 = vmul.f32 %v1502, %v1502
        %v1749 = vmul.f32 %v1613, %v1613
        %v1750 = vmul.f32 %v1615, %v1615
        %v1751 = vmul.f32 %v1506, %v1506
        %v1752 = vmul.f32 %v1508, %v1508
        %v1753 = vmul.f32 %v1619, %v1619
        %v1754 = vmul.f32 %v1621, %v1621
        %v1755 = vmul.f32 %v1510, %v1510
        %v1756 = vmul.f32 %v1512, %v1512
        %v1757 = vmul.f32 %v1623, %v1623
        %v1758 = vmul.f32 %v1625, %v1625
        %v1759 = vmul.f32 %v1516, %v1516
        %v1760 = vmul.f32 %v1518, %v1518
        %v1761 = vmul.f32 %v1629, %v1629
        %v1762 = vmul.f32 %v1631, %v1631
        %v1763 = vmul.f32 %v1520, %v1520
        %v1764 = vmul.f32 %v1522, %v1522
        %v1765 = vmul.f32 %v1633, %v1633
        %v1766 = vmul.f32 %v1635, %v1635
        %v1767 = vmul.f32 %v1526, %v1526
        %v1768 = vmul.f32 %v1528, %v1528
        %v1769 = vmul.f32 %v1639, %v1639
        %v1770 = vmul.f32 %v1641, %v1641
        %v1771 = vmul.f32 %v1530, %v1530
        %v1772 = vmul.f32 %v1532, %v1532
        %v1773 = vmul.f32 %v1643, %v1643
        %v1774 = vmul.f32 %v1645, %v1645
        %v1775 = vmul.f32 %v1456, %v1711
        %v1776 = vmul.f32 %v1458, %v1712
        %v1777 = vmul.f32 %v1569, %v1713
        %v1778 = vmul.f32 %v1571, %v1714
        %v1779 = vmul.f32 %v1460, %v1715
        %v1780 = vmul.f32 %v1462, %v1716
        %v1781 = vmul.f32 %v1573, %v1717
        %v1782 = vmul.f32 %v1575, %v1718
        %v1783 = vmul.f32 %v1466, %v1719
        %v1784 = vmul.f32 %v1468, %v1720
        %v1785 = vmul.f32 %v1579, %v1721
        %v1786 = vmul.f32 %v1581, %v1722
        %v1787 = vmul.f32 %v1470, %v1723
        %v1788 = vmul.f32 %v1472, %v1724
        %v1789 = vmul.f32 %v1583, %v1725
        %v1790 = vmul.f32 %v1585, %v1726
        %v1791 = vmul.f32 %v1476, %v1727
        %v1792 = vmul.f32 %v1478, %v1728
        %v1793 = vmul.f32 %v1589, %v1729
        %v1794 = vmul.f32 %v1591, %v1730
        %v1795 = vmul.f32 %v1480, %v1731
        %v1796 = vmul.f32 %v1482, %v1732
        %v1797 = vmul.f32 %v1593, %v1733
        %v1798 = vmul.f32 %v1595, %v1734
        %v1799 = vmul.f32 %v1486, %v1735
        %v1800 = vmul.f32 %v1488, %v1736
        %v1801 = vmul.f32 %v1599, %v1737
        %v1802 = vmul.f32 %v1601, %v1738
        %v1803 = vmul.f32 %v1490, %v1739
        %v1804 = vmul.f32 %v1492, %v1740
        %v1805 = vmul.f32 %v1603, %v1741
        %v1806 = vmul.f32 %v1605, %v1742
        %v1807 = vmul.f32 %v1496, %v1743
        %v1808 = vmul.f32 %v1498, %v1744
        %v1809 = vmul.f32 %v1609, %v1745
        %v1810 = vmul.f32 %v1611, %v1746
        %v1811 = vmul.f32 %v1500, %v1747
        %v1812 = vmul.f32 %v1502, %v1748
        %v1813 = vmul.f32 %v1613, %v1749
        %v1814 = vmul.f32 %v1615, %v1750
        %v1815 = vmul.f32 %v1506, %v1751
        %v1816 = vmul.f32 %v1508, %v1752
        %v1817 = vmul.f32 %v1619, %v1753
        %v1818 = vmul.f32 %v1621, %v1754
        %v1819 = vmul.f32 %v1510, %v1755
        %v1820 = vmul.f32 %v1512, %v1756
        %v1821 = vmul.f32 %v1623, %v1757
        %v1822 = vmul.f32 %v1625, %v1758
        %v1823 = vmul.f32 %v1516, %v1759
        %v1824 = vmul.f32 %v1518, %v1760
        %v1825 = vmul.f32 %v1629, %v1761
        %v1826 = vmul.f32 %v1631, %v1762
        %v1827 = vmul.f32 %v1520, %v1763
        %v1828 = vmul.f32 %v1522, %v1764
        %v1829 = vmul.f32 %v1633, %v1765
        %v1830 = vmul.f32 %v1635, %v1766
        %v1831 = vmul.f32 %v1526, %v1767
        %v1832 = vmul.f32 %v1528, %v1768
        %v1833 = vmul.f32 %v1639, %v1769
        %v1834 = vmul.f32 %v1641, %v1770
        %v1835 = vmul.f32 %v1530, %v1771
        %v1836 = vmul.f32 %v1532, %v1772
        %v1837 = vmul.f32 %v1643, %v1773
        %v1838 = vmul.f32 %v1645, %v1774
        %v1839 = vmul.f32 %v1775, 0.044715
        %v1840 = vmul.f32 %v1776, 0.044715
        %v1841 = vmul.f32 %v1777, 0.044715
        %v1842 = vmul.f32 %v1778, 0.044715
        %v1843 = vmul.f32 %v1779, 0.044715
        %v1844 = vmul.f32 %v1780, 0.044715
        %v1845 = vmul.f32 %v1781, 0.044715
        %v1846 = vmul.f32 %v1782, 0.044715
        %v1847 = vmul.f32 %v1783, 0.044715
        %v1848 = vmul.f32 %v1784, 0.044715
        %v1849 = vmul.f32 %v1785, 0.044715
        %v1850 = vmul.f32 %v1786, 0.044715
        %v1851 = vmul.f32 %v1787, 0.044715
        %v1852 = vmul.f32 %v1788, 0.044715
        %v1853 = vmul.f32 %v1789, 0.044715
        %v1854 = vmul.f32 %v1790, 0.044715
        %v1855 = vmul.f32 %v1791, 0.044715
        %v1856 = vmul.f32 %v1792, 0.044715
        %v1857 = vmul.f32 %v1793, 0.044715
        %v1858 = vmul.f32 %v1794, 0.044715
        %v1859 = vmul.f32 %v1795, 0.044715
        %v1860 = vmul.f32 %v1796, 0.044715
        %v1861 = vmul.f32 %v1797, 0.044715
        %v1862 = vmul.f32 %v1798, 0.044715
        %v1863 = vmul.f32 %v1799, 0.044715
        %v1864 = vmul.f32 %v1800, 0.044715
        %v1865 = vmul.f32 %v1801, 0.044715
        %v1866 = vmul.f32 %v1802, 0.044715
        %v1867 = vmul.f32 %v1803, 0.044715
        %v1868 = vmul.f32 %v1804, 0.044715
        %v1869 = vmul.f32 %v1805, 0.044715
        %v1870 = vmul.f32 %v1806, 0.044715
        %v1871 = vmul.f32 %v1807, 0.044715
        %v1872 = vmul.f32 %v1808, 0.044715
        %v1873 = vmul.f32 %v1809, 0.044715
        %v1874 = vmul.f32 %v1810, 0.044715
        %v1875 = vmul.f32 %v1811, 0.044715
        %v1876 = vmul.f32 %v1812, 0.044715
        %v1877 = vmul.f32 %v1813, 0.044715
        %v1878 = vmul.f32 %v1814, 0.044715
        %v1879 = vmul.f32 %v1815, 0.044715
        %v1880 = vmul.f32 %v1816, 0.044715
        %v1881 = vmul.f32 %v1817, 0.044715
        %v1882 = vmul.f32 %v1818, 0.044715
        %v1883 = vmul.f32 %v1819, 0.044715
        %v1884 = vmul.f32 %v1820, 0.044715
        %v1885 = vmul.f32 %v1821, 0.044715
        %v1886 = vmul.f32 %v1822, 0.044715
        %v1887 = vmul.f32 %v1823, 0.044715
        %v1888 = vmul.f32 %v1824, 0.044715
        %v1889 = vmul.f32 %v1825, 0.044715
        %v1890 = vmul.f32 %v1826, 0.044715
        %v1891 = vmul.f32 %v1827, 0.044715
        %v1892 = vmul.f32 %v1828, 0.044715
        %v1893 = vmul.f32 %v1829, 0.044715
        %v1894 = vmul.f32 %v1830, 0.044715
        %v1895 = vmul.f32 %v1831, 0.044715
        %v1896 = vmul.f32 %v1832, 0.044715
        %v1897 = vmul.f32 %v1833, 0.044715
        %v1898 = vmul.f32 %v1834, 0.044715
        %v1899 = vmul.f32 %v1835, 0.044715
        %v1900 = vmul.f32 %v1836, 0.044715
        %v1901 = vmul.f32 %v1837, 0.044715
        %v1902 = vmul.f32 %v1838, 0.044715
        %v1903 = vadd.f32 %v1456, %v1839
        %v1904 = vadd.f32 %v1458, %v1840
        %v1905 = vadd.f32 %v1569, %v1841
        %v1906 = vadd.f32 %v1571, %v1842
        %v1907 = vadd.f32 %v1460, %v1843
        %v1908 = vadd.f32 %v1462, %v1844
        %v1909 = vadd.f32 %v1573, %v1845
        %v1910 = vadd.f32 %v1575, %v1846
        %v1911 = vadd.f32 %v1466, %v1847
        %v1912 = vadd.f32 %v1468, %v1848
        %v1913 = vadd.f32 %v1579, %v1849
        %v1914 = vadd.f32 %v1581, %v1850
        %v1915 = vadd.f32 %v1470, %v1851
        %v1916 = vadd.f32 %v1472, %v1852
        %v1917 = vadd.f32 %v1583, %v1853
        %v1918 = vadd.f32 %v1585, %v1854
        %v1919 = vadd.f32 %v1476, %v1855
        %v1920 = vadd.f32 %v1478, %v1856
        %v1921 = vadd.f32 %v1589, %v1857
        %v1922 = vadd.f32 %v1591, %v1858
        %v1923 = vadd.f32 %v1480, %v1859
        %v1924 = vadd.f32 %v1482, %v1860
        %v1925 = vadd.f32 %v1593, %v1861
        %v1926 = vadd.f32 %v1595, %v1862
        %v1927 = vadd.f32 %v1486, %v1863
        %v1928 = vadd.f32 %v1488, %v1864
        %v1929 = vadd.f32 %v1599, %v1865
        %v1930 = vadd.f32 %v1601, %v1866
        %v1931 = vadd.f32 %v1490, %v1867
        %v1932 = vadd.f32 %v1492, %v1868
        %v1933 = vadd.f32 %v1603, %v1869
        %v1934 = vadd.f32 %v1605, %v1870
        %v1935 = vadd.f32 %v1496, %v1871
        %v1936 = vadd.f32 %v1498, %v1872
        %v1937 = vadd.f32 %v1609, %v1873
        %v1938 = vadd.f32 %v1611, %v1874
        %v1939 = vadd.f32 %v1500, %v1875
        %v1940 = vadd.f32 %v1502, %v1876
        %v1941 = vadd.f32 %v1613, %v1877
        %v1942 = vadd.f32 %v1615, %v1878
        %v1943 = vadd.f32 %v1506, %v1879
        %v1944 = vadd.f32 %v1508, %v1880
        %v1945 = vadd.f32 %v1619, %v1881
        %v1946 = vadd.f32 %v1621, %v1882
        %v1947 = vadd.f32 %v1510, %v1883
        %v1948 = vadd.f32 %v1512, %v1884
        %v1949 = vadd.f32 %v1623, %v1885
        %v1950 = vadd.f32 %v1625, %v1886
        %v1951 = vadd.f32 %v1516, %v1887
        %v1952 = vadd.f32 %v1518, %v1888
        %v1953 = vadd.f32 %v1629, %v1889
        %v1954 = vadd.f32 %v1631, %v1890
        %v1955 = vadd.f32 %v1520, %v1891
        %v1956 = vadd.f32 %v1522, %v1892
        %v1957 = vadd.f32 %v1633, %v1893
        %v1958 = vadd.f32 %v1635, %v1894
        %v1959 = vadd.f32 %v1526, %v1895
        %v1960 = vadd.f32 %v1528, %v1896
        %v1961 = vadd.f32 %v1639, %v1897
        %v1962 = vadd.f32 %v1641, %v1898
        %v1963 = vadd.f32 %v1530, %v1899
        %v1964 = vadd.f32 %v1532, %v1900
        %v1965 = vadd.f32 %v1643, %v1901
        %v1966 = vadd.f32 %v1645, %v1902
        %v1967 = vmul.f32 %v1903, 0.7978845
        %v1968 = vmul.f32 %v1904, 0.7978845
        %v1969 = vmul.f32 %v1905, 0.7978845
        %v1970 = vmul.f32 %v1906, 0.7978845
        %v1971 = vmul.f32 %v1907, 0.7978845
        %v1972 = vmul.f32 %v1908, 0.7978845
        %v1973 = vmul.f32 %v1909, 0.7978845
        %v1974 = vmul.f32 %v1910, 0.7978845
        %v1975 = vmul.f32 %v1911, 0.7978845
        %v1976 = vmul.f32 %v1912, 0.7978845
        %v1977 = vmul.f32 %v1913, 0.7978845
        %v1978 = vmul.f32 %v1914, 0.7978845
        %v1979 = vmul.f32 %v1915, 0.7978845
        %v1980 = vmul.f32 %v1916, 0.7978845
        %v1981 = vmul.f32 %v1917, 0.7978845
        %v1982 = vmul.f32 %v1918, 0.7978845
        %v1983 = vmul.f32 %v1919, 0.7978845
        %v1984 = vmul.f32 %v1920, 0.7978845
        %v1985 = vmul.f32 %v1921, 0.7978845
        %v1986 = vmul.f32 %v1922, 0.7978845
        %v1987 = vmul.f32 %v1923, 0.7978845
        %v1988 = vmul.f32 %v1924, 0.7978845
        %v1989 = vmul.f32 %v1925, 0.7978845
        %v1990 = vmul.f32 %v1926, 0.7978845
        %v1991 = vmul.f32 %v1927, 0.7978845
        %v1992 = vmul.f32 %v1928, 0.7978845
        %v1993 = vmul.f32 %v1929, 0.7978845
        %v1994 = vmul.f32 %v1930, 0.7978845
        %v1995 = vmul.f32 %v1931, 0.7978845
        %v1996 = vmul.f32 %v1932, 0.7978845
        %v1997 = vmul.f32 %v1933, 0.7978845
        %v1998 = vmul.f32 %v1934, 0.7978845
        %v1999 = vmul.f32 %v1935, 0.7978845
        %v2000 = vmul.f32 %v1936, 0.7978845
        %v2001 = vmul.f32 %v1937, 0.7978845
        %v2002 = vmul.f32 %v1938, 0.7978845
        %v2003 = vmul.f32 %v1939, 0.7978845
        %v2004 = vmul.f32 %v1940, 0.7978845
        %v2005 = vmul.f32 %v1941, 0.7978845
        %v2006 = vmul.f32 %v1942, 0.7978845
        %v2007 = vmul.f32 %v1943, 0.7978845
        %v2008 = vmul.f32 %v1944, 0.7978845
        %v2009 = vmul.f32 %v1945, 0.7978845
        %v2010 = vmul.f32 %v1946, 0.7978845
        %v2011 = vmul.f32 %v1947, 0.7978845
        %v2012 = vmul.f32 %v1948, 0.7978845
        %v2013 = vmul.f32 %v1949, 0.7978845
        %v2014 = vmul.f32 %v1950, 0.7978845
        %v2015 = vmul.f32 %v1951, 0.7978845
        %v2016 = vmul.f32 %v1952, 0.7978845
        %v2017 = vmul.f32 %v1953, 0.7978845
        %v2018 = vmul.f32 %v1954, 0.7978845
        %v2019 = vmul.f32 %v1955, 0.7978845
        %v2020 = vmul.f32 %v1956, 0.7978845
        %v2021 = vmul.f32 %v1957, 0.7978845
        %v2022 = vmul.f32 %v1958, 0.7978845
        %v2023 = vmul.f32 %v1959, 0.7978845
        %v2024 = vmul.f32 %v1960, 0.7978845
        %v2025 = vmul.f32 %v1961, 0.7978845
        %v2026 = vmul.f32 %v1962, 0.7978845
        %v2027 = vmul.f32 %v1963, 0.7978845
        %v2028 = vmul.f32 %v1964, 0.7978845
        %v2029 = vmul.f32 %v1965, 0.7978845
        %v2030 = vmul.f32 %v1966, 0.7978845
        %v2031 = vtanh.pop %v1967
        %v2032 = vtanh.pop %v1968
        %v2033 = vtanh.pop %v1969
        %v2034 = vtanh.pop %v1970
        %v2035 = vtanh.pop %v1971
        %v2036 = vtanh.pop %v1972
        %v2037 = vtanh.pop %v1973
        %v2038 = vtanh.pop %v1974
        %v2039 = vtanh.pop %v1975
        %v2040 = vtanh.pop %v1976
        %v2041 = vtanh.pop %v1977
        %v2042 = vtanh.pop %v1978
        %v2043 = vtanh.pop %v1979
        %v2044 = vtanh.pop %v1980
        %v2045 = vtanh.pop %v1981
        %v2046 = vtanh.pop %v1982
        %v2047 = vtanh.pop %v1983
        %v2048 = vtanh.pop %v1984
        %v2049 = vtanh.pop %v1985
        %v2050 = vtanh.pop %v1986
        %v2051 = vtanh.pop %v1987
        %v2052 = vtanh.pop %v1988
        %v2053 = vtanh.pop %v1989
        %v2054 = vtanh.pop %v1990
        %v2055 = vtanh.pop %v1991
        %v2056 = vtanh.pop %v1992
        %v2057 = vtanh.pop %v1993
        %v2058 = vtanh.pop %v1994
        %v2059 = vtanh.pop %v1995
        %v2060 = vtanh.pop %v1996
        %v2061 = vtanh.pop %v1997
        %v2062 = vtanh.pop %v1998
        %v2063 = vtanh.pop %v1999
        %v2064 = vtanh.pop %v2000
        %v2065 = vtanh.pop %v2001
        %v2066 = vtanh.pop %v2002
        %v2067 = vtanh.pop %v2003
        %v2068 = vtanh.pop %v2004
        %v2069 = vtanh.pop %v2005
        %v2070 = vtanh.pop %v2006
        %v2071 = vtanh.pop %v2007
        %v2072 = vtanh.pop %v2008
        %v2073 = vtanh.pop %v2009
        %v2074 = vtanh.pop %v2010
        %v2075 = vtanh.pop %v2011
        %v2076 = vtanh.pop %v2012
        %v2077 = vtanh.pop %v2013
        %v2078 = vtanh.pop %v2014
        %v2079 = vtanh.pop %v2015
        %v2080 = vtanh.pop %v2016
        %v2081 = vtanh.pop %v2017
        %v2082 = vtanh.pop %v2018
        %v2083 = vtanh.pop %v2019
        %v2084 = vtanh.pop %v2020
        %v2085 = vtanh.pop %v2021
        %v2086 = vtanh.pop %v2022
        %v2087 = vtanh.pop %v2023
        %v2088 = vtanh.pop %v2024
        %v2089 = vtanh.pop %v2025
        %v2090 = vtanh.pop %v2026
        %v2091 = vtanh.pop %v2027
        %v2092 = vtanh.pop %v2028
        %v2093 = vtanh.pop %v2029
        %v2094 = vtanh.pop %v2030
        %v2095 = vadd.f32 %v2031, 1.0
        %v2096 = vadd.f32 %v2032, 1.0
        %v2097 = vadd.f32 %v2033, 1.0
        %v2098 = vadd.f32 %v2034, 1.0
        %v2099 = vadd.f32 %v2035, 1.0
        %v2100 = vadd.f32 %v2036, 1.0
        %v2101 = vadd.f32 %v2037, 1.0
        %v2102 = vadd.f32 %v2038, 1.0
        %v2103 = vadd.f32 %v2039, 1.0
        %v2104 = vadd.f32 %v2040, 1.0
        %v2105 = vadd.f32 %v2041, 1.0
        %v2106 = vadd.f32 %v2042, 1.0
        %v2107 = vadd.f32 %v2043, 1.0
        %v2108 = vadd.f32 %v2044, 1.0
        %v2109 = vadd.f32 %v2045, 1.0
        %v2110 = vadd.f32 %v2046, 1.0
        %v2111 = vadd.f32 %v2047, 1.0
        %v2112 = vadd.f32 %v2048, 1.0
        %v2113 = vadd.f32 %v2049, 1.0
        %v2114 = vadd.f32 %v2050, 1.0
        %v2115 = vadd.f32 %v2051, 1.0
        %v2116 = vadd.f32 %v2052, 1.0
        %v2117 = vadd.f32 %v2053, 1.0
        %v2118 = vadd.f32 %v2054, 1.0
        %v2119 = vadd.f32 %v2055, 1.0
        %v2120 = vadd.f32 %v2056, 1.0
        %v2121 = vadd.f32 %v2057, 1.0
        %v2122 = vadd.f32 %v2058, 1.0
        %v2123 = vadd.f32 %v2059, 1.0
        %v2124 = vadd.f32 %v2060, 1.0
        %v2125 = vadd.f32 %v2061, 1.0
        %v2126 = vadd.f32 %v2062, 1.0
        %v2127 = vadd.f32 %v2063, 1.0
        %v2128 = vadd.f32 %v2064, 1.0
        %v2129 = vadd.f32 %v2065, 1.0
        %v2130 = vadd.f32 %v2066, 1.0
        %v2131 = vadd.f32 %v2067, 1.0
        %v2132 = vadd.f32 %v2068, 1.0
        %v2133 = vadd.f32 %v2069, 1.0
        %v2134 = vadd.f32 %v2070, 1.0
        %v2135 = vadd.f32 %v2071, 1.0
        %v2136 = vadd.f32 %v2072, 1.0
        %v2137 = vadd.f32 %v2073, 1.0
        %v2138 = vadd.f32 %v2074, 1.0
        %v2139 = vadd.f32 %v2075, 1.0
        %v2140 = vadd.f32 %v2076, 1.0
        %v2141 = vadd.f32 %v2077, 1.0
        %v2142 = vadd.f32 %v2078, 1.0
        %v2143 = vadd.f32 %v2079, 1.0
        %v2144 = vadd.f32 %v2080, 1.0
        %v2145 = vadd.f32 %v2081, 1.0
        %v2146 = vadd.f32 %v2082, 1.0
        %v2147 = vadd.f32 %v2083, 1.0
        %v2148 = vadd.f32 %v2084, 1.0
        %v2149 = vadd.f32 %v2085, 1.0
        %v2150 = vadd.f32 %v2086, 1.0
        %v2151 = vadd.f32 %v2087, 1.0
        %v2152 = vadd.f32 %v2088, 1.0
        %v2153 = vadd.f32 %v2089, 1.0
        %v2154 = vadd.f32 %v2090, 1.0
        %v2155 = vadd.f32 %v2091, 1.0
        %v2156 = vadd.f32 %v2092, 1.0
        %v2157 = vadd.f32 %v2093, 1.0
        %v2158 = vadd.f32 %v2094, 1.0
        %v2159 = vmul.f32 %v1647, %v2095
        %v2160 = vmul.f32 %v1648, %v2096
        %v2161 = vmul.f32 %v1649, %v2097
        %v2162 = vmul.f32 %v1650, %v2098
        %v2163 = vmul.f32 %v1651, %v2099
        %v2164 = vmul.f32 %v1652, %v2100
        %v2165 = vmul.f32 %v1653, %v2101
        %v2166 = vmul.f32 %v1654, %v2102
        %v2167 = vmul.f32 %v1655, %v2103
        %v2168 = vmul.f32 %v1656, %v2104
        %v2169 = vmul.f32 %v1657, %v2105
        %v2170 = vmul.f32 %v1658, %v2106
        %v2171 = vmul.f32 %v1659, %v2107
        %v2172 = vmul.f32 %v1660, %v2108
        %v2173 = vmul.f32 %v1661, %v2109
        %v2174 = vmul.f32 %v1662, %v2110
        %v2175 = vmul.f32 %v1663, %v2111
        %v2176 = vmul.f32 %v1664, %v2112
        %v2177 = vmul.f32 %v1665, %v2113
        %v2178 = vmul.f32 %v1666, %v2114
        %v2179 = vmul.f32 %v1667, %v2115
        %v2180 = vmul.f32 %v1668, %v2116
        %v2181 = vmul.f32 %v1669, %v2117
        %v2182 = vmul.f32 %v1670, %v2118
        %v2183 = vmul.f32 %v1671, %v2119
        %v2184 = vmul.f32 %v1672, %v2120
        %v2185 = vmul.f32 %v1673, %v2121
        %v2186 = vmul.f32 %v1674, %v2122
        %v2187 = vmul.f32 %v1675, %v2123
        %v2188 = vmul.f32 %v1676, %v2124
        %v2189 = vmul.f32 %v1677, %v2125
        %v2190 = vmul.f32 %v1678, %v2126
        %v2191 = vmul.f32 %v1679, %v2127
        %v2192 = vmul.f32 %v1680, %v2128
        %v2193 = vmul.f32 %v1681, %v2129
        %v2194 = vmul.f32 %v1682, %v2130
        %v2195 = vmul.f32 %v1683, %v2131
        %v2196 = vmul.f32 %v1684, %v2132
        %v2197 = vmul.f32 %v1685, %v2133
        %v2198 = vmul.f32 %v1686, %v2134
        %v2199 = vmul.f32 %v1687, %v2135
        %v2200 = vmul.f32 %v1688, %v2136
        %v2201 = vmul.f32 %v1689, %v2137
        %v2202 = vmul.f32 %v1690, %v2138
        %v2203 = vmul.f32 %v1691, %v2139
        %v2204 = vmul.f32 %v1692, %v2140
        %v2205 = vmul.f32 %v1693, %v2141
        %v2206 = vmul.f32 %v1694, %v2142
        %v2207 = vmul.f32 %v1695, %v2143
        %v2208 = vmul.f32 %v1696, %v2144
        %v2209 = vmul.f32 %v1697, %v2145
        %v2210 = vmul.f32 %v1698, %v2146
        %v2211 = vmul.f32 %v1699, %v2147
        %v2212 = vmul.f32 %v1700, %v2148
        %v2213 = vmul.f32 %v1701, %v2149
        %v2214 = vmul.f32 %v1702, %v2150
        %v2215 = vmul.f32 %v1703, %v2151
        %v2216 = vmul.f32 %v1704, %v2152
        %v2217 = vmul.f32 %v1705, %v2153
        %v2218 = vmul.f32 %v1706, %v2154
        %v2219 = vmul.f32 %v1707, %v2155
        %v2220 = vmul.f32 %v1708, %v2156
        %v2221 = vmul.f32 %v1709, %v2157
        %v2222 = vmul.f32 %v1710, %v2158
        %v2223 = vpack.c.bf16 %v2163, %v2159
        %v2224 = vpack.c.bf16 %v2164, %v2160
        %v2225 = vpack.c.bf16 %v2165, %v2161
        %v2226 = vpack.c.bf16 %v2166, %v2162
        %v2227 = vpack.c.bf16 %v2171, %v2167
        %v2228 = vpack.c.bf16 %v2172, %v2168
        %v2229 = vpack.c.bf16 %v2173, %v2169
        %v2230 = vpack.c.bf16 %v2174, %v2170
        %v2231 = vpack.c.bf16 %v2179, %v2175
        %v2232 = vpack.c.bf16 %v2180, %v2176
        %v2233 = vpack.c.bf16 %v2181, %v2177
        %v2234 = vpack.c.bf16 %v2182, %v2178
        %v2235 = vpack.c.bf16 %v2187, %v2183
        %v2236 = vpack.c.bf16 %v2188, %v2184
        %v2237 = vpack.c.bf16 %v2189, %v2185
        %v2238 = vpack.c.bf16 %v2190, %v2186
        %v2239 = vpack.c.bf16 %v2195, %v2191
        %v2240 = vpack.c.bf16 %v2196, %v2192
        %v2241 = vpack.c.bf16 %v2197, %v2193
        %v2242 = vpack.c.bf16 %v2198, %v2194
        %v2243 = vpack.c.bf16 %v2203, %v2199
        %v2244 = vpack.c.bf16 %v2204, %v2200
        %v2245 = vpack.c.bf16 %v2205, %v2201
        %v2246 = vpack.c.bf16 %v2206, %v2202
        %v2247 = vpack.c.bf16 %v2211, %v2207
        %v2248 = vpack.c.bf16 %v2212, %v2208
        %v2249 = vpack.c.bf16 %v2213, %v2209
        %v2250 = vpack.c.bf16 %v2214, %v2210
        %v2251 = vpack.c.bf16 %v2219, %v2215
        %v2252 = vpack.c.bf16 %v2220, %v2216
        %v2253 = vpack.c.bf16 %v2221, %v2217
        %v2254 = vpack.c.bf16 %v2222, %v2218
        %v2287 = vunpack.c.l.b16 %v2223
        %v2288 = vunpack.c.l.b16 %v2224
        %v2289 = vunpack.c.l.b16 %v2225
        %v2290 = vunpack.c.l.b16 %v2226
        %v2291 = vunpack.c.h.b16 %v2223
        %v2292 = vunpack.c.h.b16 %v2224
        %v2293 = vunpack.c.h.b16 %v2225
        %v2294 = vunpack.c.h.b16 %v2226
        %v2295 = vunpack.c.l.b16 %v2227
        %v2296 = vunpack.c.l.b16 %v2228
        %v2297 = vunpack.c.l.b16 %v2229
        %v2298 = vunpack.c.l.b16 %v2230
        %v2299 = vunpack.c.h.b16 %v2227
        %v2300 = vunpack.c.h.b16 %v2228
        %v2301 = vunpack.c.h.b16 %v2229
        %v2302 = vunpack.c.h.b16 %v2230
        %v2303 = vunpack.c.l.b16 %v2231
        %v2304 = vunpack.c.l.b16 %v2232
        %v2305 = vunpack.c.l.b16 %v2233
        %v2306 = vunpack.c.l.b16 %v2234
        %v2307 = vunpack.c.h.b16 %v2231
        %v2308 = vunpack.c.h.b16 %v2232
        %v2309 = vunpack.c.h.b16 %v2233
        %v2310 = vunpack.c.h.b16 %v2234
        %v2311 = vunpack.c.l.b16 %v2235
        %v2312 = vunpack.c.l.b16 %v2236
        %v2313 = vunpack.c.l.b16 %v2237
        %v2314 = vunpack.c.l.b16 %v2238
        %v2315 = vunpack.c.h.b16 %v2235
        %v2316 = vunpack.c.h.b16 %v2236
        %v2317 = vunpack.c.h.b16 %v2237
        %v2318 = vunpack.c.h.b16 %v2238
        %v2319 = vunpack.c.l.b16 %v2239
        %v2320 = vunpack.c.l.b16 %v2240
        %v2321 = vunpack.c.l.b16 %v2241
        %v2322 = vunpack.c.l.b16 %v2242
        %v2323 = vunpack.c.h.b16 %v2239
        %v2324 = vunpack.c.h.b16 %v2240
        %v2325 = vunpack.c.h.b16 %v2241
        %v2326 = vunpack.c.h.b16 %v2242
        %v2327 = vunpack.c.l.b16 %v2243
        %v2328 = vunpack.c.l.b16 %v2244
        %v2329 = vunpack.c.l.b16 %v2245
        %v2330 = vunpack.c.l.b16 %v2246
        %v2331 = vunpack.c.h.b16 %v2243
        %v2332 = vunpack.c.h.b16 %v2244
        %v2333 = vunpack.c.h.b16 %v2245
        %v2334 = vunpack.c.h.b16 %v2246
        %v2335 = vunpack.c.l.b16 %v2247
        %v2336 = vunpack.c.l.b16 %v2248
        %v2337 = vunpack.c.l.b16 %v2249
        %v2338 = vunpack.c.l.b16 %v2250
        %v2339 = vunpack.c.h.b16 %v2247
        %v2340 = vunpack.c.h.b16 %v2248
        %v2341 = vunpack.c.h.b16 %v2249
        %v2342 = vunpack.c.h.b16 %v2250
        %v2343 = vunpack.c.l.b16 %v2251
        %v2344 = vunpack.c.l.b16 %v2252
        %v2345 = vunpack.c.l.b16 %v2253
        %v2346 = vunpack.c.l.b16 %v2254
        %v2347 = vunpack.c.h.b16 %v2251
        %v2348 = vunpack.c.h.b16 %v2252
        %v2349 = vunpack.c.h.b16 %v2253
        %v2350 = vunpack.c.h.b16 %v2254
        %v2351 = vpack.c.b16 %v2288, %v2287
        %v2352 = vpack.c.b16 %v2290, %v2289
        %v2353 = vpack.c.b16 %v2292, %v2291
        %v2354 = vpack.c.b16 %v2294, %v2293
        %v2355 = vpack.c.b16 %v2296, %v2295
        %v2356 = vpack.c.b16 %v2298, %v2297
        %v2357 = vpack.c.b16 %v2300, %v2299
        %v2358 = vpack.c.b16 %v2302, %v2301
        %v2359 = vpack.c.b16 %v2304, %v2303
        %v2360 = vpack.c.b16 %v2306, %v2305
        %v2361 = vpack.c.b16 %v2308, %v2307
        %v2362 = vpack.c.b16 %v2310, %v2309
        %v2363 = vpack.c.b16 %v2312, %v2311
        %v2364 = vpack.c.b16 %v2314, %v2313
        %v2365 = vpack.c.b16 %v2316, %v2315
        %v2366 = vpack.c.b16 %v2318, %v2317
        %v2367 = vpack.c.b16 %v2320, %v2319
        %v2368 = vpack.c.b16 %v2322, %v2321
        %v2369 = vpack.c.b16 %v2324, %v2323
        %v2370 = vpack.c.b16 %v2326, %v2325
        %v2371 = vpack.c.b16 %v2328, %v2327
        %v2372 = vpack.c.b16 %v2330, %v2329
        %v2373 = vpack.c.b16 %v2332, %v2331
        %v2374 = vpack.c.b16 %v2334, %v2333
        %v2375 = vpack.c.b16 %v2336, %v2335
        %v2376 = vpack.c.b16 %v2338, %v2337
        %v2377 = vpack.c.b16 %v2340, %v2339
        %v2378 = vpack.c.b16 %v2342, %v2341
        %v2379 = vpack.c.b16 %v2344, %v2343
        %v2380 = vpack.c.b16 %v2346, %v2345
        %v2381 = vpack.c.b16 %v2348, %v2347
        %v2382 = vpack.c.b16 %v2350, %v2349
        %2415 = vst [vmem:[%s410] sm:$0xff] %v2351
        %2416 = vst [vmem:[%s410 + $0x8] sm:$0xff] %v2352
        %2417 = vst [vmem:[%s410 + $0x10] sm:$0xff] %v2353
        %2418 = vst [vmem:[%s410 + $0x18] sm:$0xff] %v2354
        %2419 = vst [vmem:[%s410 + $0x20] sm:$0xff] %v2355
        %2420 = vst [vmem:[%s410 + $0x28] sm:$0xff] %v2356
        %2421 = vst [vmem:[%s410 + $0x30] sm:$0xff] %v2357
        %2422 = vst [vmem:[%s410 + $0x38] sm:$0xff] %v2358
        %2423 = vst [vmem:[%s410 + $0x40] sm:$0xff] %v2359
        %2424 = vst [vmem:[%s410 + $0x48] sm:$0xff] %v2360
        %2425 = vst [vmem:[%s410 + $0x50] sm:$0xff] %v2361
        %2426 = vst [vmem:[%s410 + $0x58] sm:$0xff] %v2362
        %2427 = vst [vmem:[%s410 + $0x60] sm:$0xff] %v2363
        %2428 = vst [vmem:[%s410 + $0x68] sm:$0xff] %v2364
        %2429 = vst [vmem:[%s410 + $0x70] sm:$0xff] %v2365
        %2430 = vst [vmem:[%s410 + $0x78] sm:$0xff] %v2366
        %2431 = vst [vmem:[%s410 + $0x80] sm:$0xff] %v2367
        %2432 = vst [vmem:[%s410 + $0x88] sm:$0xff] %v2368
        %2433 = vst [vmem:[%s410 + $0x90] sm:$0xff] %v2369
        %2434 = vst [vmem:[%s410 + $0x98] sm:$0xff] %v2370
        %2435 = vst [vmem:[%s410 + $0xa0] sm:$0xff] %v2371
        %2436 = vst [vmem:[%s410 + $0xa8] sm:$0xff] %v2372
        %2437 = vst [vmem:[%s410 + $0xb0] sm:$0xff] %v2373
        %2438 = vst [vmem:[%s410 + $0xb8] sm:$0xff] %v2374
        %2439 = vst [vmem:[%s410 + $0xc0] sm:$0xff] %v2375
        %2440 = vst [vmem:[%s410 + $0xc8] sm:$0xff] %v2376
        %2441 = vst [vmem:[%s410 + $0xd0] sm:$0xff] %v2377
        %2442 = vst [vmem:[%s410 + $0xd8] sm:$0xff] %v2378
        %2443 = vst [vmem:[%s410 + $0xe0] sm:$0xff] %v2379
        %2444 = vst [vmem:[%s410 + $0xe8] sm:$0xff] %v2380
        %2445 = vst [vmem:[%s410 + $0xf0] sm:$0xff] %v2381
        %2446 = vst [vmem:[%s410 + $0xf8] sm:$0xff] %v2382
        %s2447 = sand.u32 %s158, 1
        %s2448 = sand.u32 %s158, 1
        %s2449 = smul.addr %s2448, 256
        %s2450 = scalar_lea.vmem [#allocation4], %s2449
        // Predicated region
        $region68: #{policy_network_forward.11} parent=58 // pred_check
          %p2451 = pneg %p168
        $region69: #{policy_network_forward.11} parent=58 // pred_check_branch
          %2453 = sbr.rel (%p2451) target = $region71
        $region70: #{policy_network_forward.11} parent=58 // pred_region
          %s2454 = smul.u32 16, %s20
          %s2455 = smul.u32 4, %s21
          %s2456 = smul.addr %s2454, 8
          %s2457 = sadd.s32 %s2455, %s2456
          %s2458 = smul.addr %s2457, 4
          %s2459 = scalar_lea.vmem %s5, %s2458
          // Predicated region
          $region72: #{policy_network_forward.11} parent=70 // pred_check
            _
          $region73: #{policy_network_forward.11} parent=70 // pred_check_branch
            %2461 = sbr.rel (0) target = $region75
          $region74: #{policy_network_forward.11} parent=70 // pred_region
            // Predicated region
            $region76: #{policy_network_forward.11} parent=74 // pred_check
              _
            $region77: #{policy_network_forward.11} parent=74 // pred_check_branch
              %2463 = sbr.rel (0) target = $region79
            $region78: #{policy_network_forward.11} parent=74 // pred_region
              loop: start=0, step=1, limit=1
              $region80: #{policy_network_forward.11} parent=78 // loop_pre_header
                _
              $region81: #{policy_network_forward.11} parent=78 // loop_header
                %s2465 = sphi 0, %s2469
                %p2466 = scmp.ge.s32.totalorder %s2465, 1
                %s2470 = sphi %s2450, %s2450
                %s2471 = sphi %s2459, %s2459
              $region82: #{policy_network_forward.11} parent=78 // loop_header_branch
                %2468 = sbr.rel (%p2466) target = $region86
              $region83: #{policy_network_forward.11} parent=78 // loop_body
                %v2472 = vld [vmem:[%s2470] sm:$0xff]
                %2473 = vst [vmem:[%s2471] sm:$0xff] %v2472
                %v2474 = vld [vmem:[%s2470 + $0x8] sm:$0xff]
                %2475 = vst [vmem:[%s2471 + $0x8] sm:$0xff] %v2474
                %v2476 = vld [vmem:[%s2470 + $0x10] sm:$0xff]
                %2477 = vst [vmem:[%s2471 + $0x20] sm:$0xff] %v2476
                %v2478 = vld [vmem:[%s2470 + $0x18] sm:$0xff]
                %2479 = vst [vmem:[%s2471 + $0x28] sm:$0xff] %v2478
                %v2480 = vld [vmem:[%s2470 + $0x20] sm:$0xff]
                %2481 = vst [vmem:[%s2471 + $0x40] sm:$0xff] %v2480
                %v2482 = vld [vmem:[%s2470 + $0x28] sm:$0xff]
                %2483 = vst [vmem:[%s2471 + $0x48] sm:$0xff] %v2482
                %v2484 = vld [vmem:[%s2470 + $0x30] sm:$0xff]
                %2485 = vst [vmem:[%s2471 + $0x60] sm:$0xff] %v2484
                %v2486 = vld [vmem:[%s2470 + $0x38] sm:$0xff]
                %2487 = vst [vmem:[%s2471 + $0x68] sm:$0xff] %v2486
                %v2488 = vld [vmem:[%s2470 + $0x40] sm:$0xff]
                %2489 = vst [vmem:[%s2471 + $0x80] sm:$0xff] %v2488
                %v2490 = vld [vmem:[%s2470 + $0x48] sm:$0xff]
                %2491 = vst [vmem:[%s2471 + $0x88] sm:$0xff] %v2490
                %v2492 = vld [vmem:[%s2470 + $0x50] sm:$0xff]
                %2493 = vst [vmem:[%s2471 + $0xa0] sm:$0xff] %v2492
                %v2494 = vld [vmem:[%s2470 + $0x58] sm:$0xff]
                %2495 = vst [vmem:[%s2471 + $0xa8] sm:$0xff] %v2494
                %v2496 = vld [vmem:[%s2470 + $0x60] sm:$0xff]
                %2497 = vst [vmem:[%s2471 + $0xc0] sm:$0xff] %v2496
                %v2498 = vld [vmem:[%s2470 + $0x68] sm:$0xff]
                %2499 = vst [vmem:[%s2471 + $0xc8] sm:$0xff] %v2498
                %v2500 = vld [vmem:[%s2470 + $0x70] sm:$0xff]
                %2501 = vst [vmem:[%s2471 + $0xe0] sm:$0xff] %v2500
                %v2502 = vld [vmem:[%s2470 + $0x78] sm:$0xff]
                %2503 = vst [vmem:[%s2471 + $0xe8] sm:$0xff] %v2502
                %v2504 = vld [vmem:[%s2470 + $0x80] sm:$0xff]
                %2505 = vst [vmem:[%s2471 + $0x100] sm:$0xff] %v2504
                %v2506 = vld [vmem:[%s2470 + $0x88] sm:$0xff]
                %2507 = vst [vmem:[%s2471 + $0x108] sm:$0xff] %v2506
                %v2508 = vld [vmem:[%s2470 + $0x90] sm:$0xff]
                %2509 = vst [vmem:[%s2471 + $0x120] sm:$0xff] %v2508
                %v2510 = vld [vmem:[%s2470 + $0x98] sm:$0xff]
                %2511 = vst [vmem:[%s2471 + $0x128] sm:$0xff] %v2510
                %v2512 = vld [vmem:[%s2470 + $0xa0] sm:$0xff]
                %2513 = vst [vmem:[%s2471 + $0x140] sm:$0xff] %v2512
                %v2514 = vld [vmem:[%s2470 + $0xa8] sm:$0xff]
                %2515 = vst [vmem:[%s2471 + $0x148] sm:$0xff] %v2514
                %v2516 = vld [vmem:[%s2470 + $0xb0] sm:$0xff]
                %2517 = vst [vmem:[%s2471 + $0x160] sm:$0xff] %v2516
                %v2518 = vld [vmem:[%s2470 + $0xb8] sm:$0xff]
                %2519 = vst [vmem:[%s2471 + $0x168] sm:$0xff] %v2518
                %v2520 = vld [vmem:[%s2470 + $0xc0] sm:$0xff]
                %2521 = vst [vmem:[%s2471 + $0x180] sm:$0xff] %v2520
                %v2522 = vld [vmem:[%s2470 + $0xc8] sm:$0xff]
                %2523 = vst [vmem:[%s2471 + $0x188] sm:$0xff] %v2522
                %v2524 = vld [vmem:[%s2470 + $0xd0] sm:$0xff]
                %2525 = vst [vmem:[%s2471 + $0x1a0] sm:$0xff] %v2524
                %v2526 = vld [vmem:[%s2470 + $0xd8] sm:$0xff]
                %2527 = vst [vmem:[%s2471 + $0x1a8] sm:$0xff] %v2526
                %v2528 = vld [vmem:[%s2470 + $0xe0] sm:$0xff]
                %2529 = vst [vmem:[%s2471 + $0x1c0] sm:$0xff] %v2528
                %v2530 = vld [vmem:[%s2470 + $0xe8] sm:$0xff]
                %2531 = vst [vmem:[%s2471 + $0x1c8] sm:$0xff] %v2530
                %v2532 = vld [vmem:[%s2470 + $0xf0] sm:$0xff]
                %2533 = vst [vmem:[%s2471 + $0x1e0] sm:$0xff] %v2532
                %v2534 = vld [vmem:[%s2470 + $0xf8] sm:$0xff]
                %2535 = vst [vmem:[%s2471 + $0x1e8] sm:$0xff] %v2534
              $region84: #{policy_network_forward.11} parent=78 // loop_footer
                %s2469 = sadd.s32 1, %s2465
              $region85: #{policy_network_forward.11} parent=78 // loop_footer_branch
                %2464 = sbr.rel target = $region81
              $region86: #{policy_network_forward.11} parent=78 // loop_exit
                _
            $region79: #{policy_network_forward.11} parent=74 // pred_fallthru
              _
            // Predicated region
            $region87: #{policy_network_forward.11} parent=74 // pred_check
              _
            $region88: #{policy_network_forward.11} parent=74 // pred_check_branch
              %2537 = sbr.rel target = $region90
            $region89: #{policy_network_forward.11} parent=74 // pred_region
              _
            $region90: #{policy_network_forward.11} parent=74 // pred_fallthru
              _
          $region75: #{policy_network_forward.11} parent=70 // pred_fallthru
            _
          %2538 = vnop
        $region71: #{policy_network_forward.11} parent=58 // pred_fallthru
          _
      $region59: #{policy_network_forward.11} parent=5 // pred_fallthru
        _
      %p2539 = scmp.le.s32.totalorder 2, %s11
      // Predicated region
      $region91: #{policy_network_forward.11} parent=5 // pred_check
        %p2540 = pneg %p2539
      $region92: #{policy_network_forward.11} parent=5 // pred_check_branch
        %2542 = sbr.rel (%p2540) target = $region94
      $region93: #{policy_network_forward.11} parent=5 // pred_region
        %s2543 = ssub.s32 %s11, 2
        // Predicated region
        $region95: #{policy_network_forward.11} parent=93 // pred_check
          %p2544 = pneg %p174
        $region96: #{policy_network_forward.11} parent=93 // pred_check_branch
          %2546 = sbr.rel (%p2544) target = $region98
        $region97: #{policy_network_forward.11} parent=93 // pred_region
          %s2547 = sand.u32 %s159, 1
          %s2548 = sand.u32 %s159, 1
          %s2549 = smul.addr %s2548, 256
          %s2550 = scalar_lea.vmem [#allocation4], %s2549
        $region98: #{policy_network_forward.11} parent=93 // pred_fallthru
          _
      $region94: #{policy_network_forward.11} parent=5 // pred_fallthru
        _
    $region6: #{policy_network_forward.11} parent=1 // loop_footer
      %s15 = sadd.s32 1, %s11
    $region7: #{policy_network_forward.11} parent=1 // loop_footer_branch
      %10 = sbr.rel target = $region3
    $region8: #{policy_network_forward.11} parent=1 // loop_exit
      _

// kernel: policy_network_forward.12
$region0: #{policy_network_forward.12}
  #allocation0 [shape = 'u32[]', space=smem, size = 0x4, offset = 0x4, fixed_abs, tag = 'smem constant byte address 0x4 - core index']
  #allocation1 [shape = 'u32[144,128]{1,0:T(1,128)}', space=vmem, size = 0x12000, scoped, tag = 'internal scratch']
  #allocation2 [shape = 'f32[128,256]{1,0:T(8,128)}', space=vmem, size = 0x20000, scoped, tag = 'scratch operand']
  %s0 = inlined_call_operand.vmem [shape: bf16[128,1024], index: 0, kind: input, shape index: {}]
  %s1 = inlined_call_operand.vmem [shape: bf16[1024,256], index: 1, kind: input, shape index: {}]
  %s2 = inlined_call_operand.vmem [shape: f32[1,256], index: 2, kind: input, shape index: {}]
  %s3 = inlined_call_operand.vmem [shape: f32[128,256], index: 3, kind: input, shape index: {}]
  %s4 = inlined_call_operand.vmem [shape: f32[128,256], index: 4, kind: output, shape index: {}]
  %s5 = sld [smem:[#allocation0]]
  $region80: #{policy_network_forward.12} parent=0
    _
  %s7 = ssub.s32 1, %s5
  %s8 = scalar_select 0, %s7, %s5
  $region1: #{policy_network_forward.12} parent=0
    #allocation3 [shape = 'u8[262144]{0}', space=vmem, size = 0x40000, scoped, tag = 'input window, operand 0']
    loop: start=0, step=1, limit=4
    $region2: #{policy_network_forward.12} parent=1 // loop_pre_header
      _
    $region3: #{policy_network_forward.12} parent=1 // loop_header
      %s10 = sphi 0, %s14
      %p11 = scmp.ge.s32.totalorder %s10, 4
      %s17 = sphi 0, %s36
      %s18 = sphi 0, %s32
      %s19 = sphi 0, %s28
      %s20 = sphi 0, %s17
      %s21 = sphi 0, %s18
      %s22 = sphi 0, %s19
      %s23 = sphi 0, %s20
      %s24 = sphi 0, %s21
      %s25 = sphi 0, %s22
      %s41 = sphi 0, %s43
      %s44 = sphi 0, %s41
      %s45 = sphi 0, %s44
      %s61 = sphi 0, %s45
      %s69 = sphi 0, %s71
      %s72 = sphi 0, %s69
      %s73 = sphi 0, %s72
      %s89 = sphi 0, %s73
      %s95 = sphi 0, %s97
      %s98 = sphi 0, %s95
      %s99 = sphi 0, %s98
      %s115 = sphi 0, %s99
      %s123 = sphi 0, %s125
      %s126 = sphi 0, %s123
      %s127 = sphi 0, %s126
      %s143 = sphi 0, %s127
      %s151 = sphi 0, %s153
      %s154 = sphi 0, %s151
      %s155 = sphi 0, %s154
      %s171 = sphi 0, %s155
    $region4: #{policy_network_forward.12} parent=1 // loop_header_branch
      %13 = sbr.rel (%p11) target = $region8
    $region5: #{policy_network_forward.12} parent=1 // loop_body
      %s15 = ssub.s32 %s10, 1
      %s16 = ssub.s32 %s10, 2
      %s26 = sadd.s32 1, %s19
      %p27 = scmp.ge.s32.totalorder %s26, 2
      %s28 = scalar_select %p27, 0, %s26
      %s29 = sadd.s32 1, %s18
      %s30 = scalar_select %p27, %s29, %s18
      %p31 = scmp.ge.s32.totalorder %s30, 1
      %s32 = scalar_select %p31, 0, %s30
      %s33 = sadd.s32 1, %s17
      %s34 = scalar_select %p31, %s33, %s17
      %p35 = scmp.ge.s32.totalorder %s34, 1
      %s36 = scalar_select %p35, 0, %s34
      %s37 = ssub.s32 %s17, %s36
      %s38 = ssub.s32 %s19, %s28
      %s39 = sor.u32 %s37, %s38
      %p40 = scmp.eq.s32.totalorder %s39, 0
      %s42 = sadd.s32 %s41, 1
      %s43 = scalar_select %p40, %s41, %s42
      %p46 = pneg %p40
      %p47 = scmp.eq.s32.totalorder %s10, 1
      %p48 = por %p46, %p47
      %p49 = scmp.ne.s32.totalorder %s41, %s44
      %p50 = scmp.eq.s32.totalorder %s10, 0
      %p51 = por %p49, %p50
      %p52 = scmp.ne.s32.totalorder %s41, %s44
      %p53 = scmp.eq.s32.totalorder %s15, 1
      %p54 = por %p52, %p53
      %p55 = scmp.ne.s32.totalorder %s44, %s45
      %p56 = scmp.eq.s32.totalorder %s15, 0
      %p57 = por %p55, %p56
      %p58 = scmp.ne.s32.totalorder %s44, %s45
      %p59 = scmp.eq.s32.totalorder %s16, 1
      %p60 = por %p58, %p59
      %p62 = scmp.ne.s32.totalorder %s45, %s61
      %p63 = scmp.eq.s32.totalorder %s16, 0
      %p64 = por %p62, %p63
      %s65 = ssub.s32 %s19, %s28
      %s66 = ssub.s32 %s18, %s32
      %s67 = sor.u32 %s65, %s66
      %p68 = scmp.eq.s32.totalorder %s67, 0
      %s70 = sadd.s32 %s69, 1
      %s71 = scalar_select %p68, %s69, %s70
      %p74 = pneg %p68
      %p75 = scmp.eq.s32.totalorder %s10, 1
      %p76 = por %p74, %p75
      %p77 = scmp.ne.s32.totalorder %s69, %s72
      %p78 = scmp.eq.s32.totalorder %s10, 0
      %p79 = por %p77, %p78
      %p80 = scmp.ne.s32.totalorder %s69, %s72
      %p81 = scmp.eq.s32.totalorder %s15, 1
      %p82 = por %p80, %p81
      %p83 = scmp.ne.s32.totalorder %s72, %s73
      %p84 = scmp.eq.s32.totalorder %s15, 0
      %p85 = por %p83, %p84
      %p86 = scmp.ne.s32.totalorder %s72, %s73
      %p87 = scmp.eq.s32.totalorder %s16, 1
      %p88 = por %p86, %p87
      %p90 = scmp.ne.s32.totalorder %s73, %s89
      %p91 = scmp.eq.s32.totalorder %s16, 0
      %p92 = por %p90, %p91
      %s93 = ssub.s32 %s18, %s32
      %p94 = scmp.eq.s32.totalorder %s93, 0
      %s96 = sadd.s32 %s95, 1
      %s97 = scalar_select %p94, %s95, %s96
      %p100 = pneg %p94
      %p101 = scmp.eq.s32.totalorder %s10, 1
      %p102 = por %p100, %p101
      %p103 = scmp.ne.s32.totalorder %s95, %s98
      %p104 = scmp.eq.s32.totalorder %s10, 0
      %p105 = por %p103, %p104
      %p106 = scmp.ne.s32.totalorder %s95, %s98
      %p107 = scmp.eq.s32.totalorder %s15, 1
      %p108 = por %p106, %p107
      %p109 = scmp.ne.s32.totalorder %s98, %s99
      %p110 = scmp.eq.s32.totalorder %s15, 0
      %p111 = por %p109, %p110
      %p112 = scmp.ne.s32.totalorder %s98, %s99
      %p113 = scmp.eq.s32.totalorder %s16, 1
      %p114 = por %p112, %p113
      %p116 = scmp.ne.s32.totalorder %s99, %s115
      %p117 = scmp.eq.s32.totalorder %s16, 0
      %p118 = por %p116, %p117
      %s119 = ssub.s32 %s17, %s36
      %s120 = ssub.s32 %s18, %s32
      %s121 = sor.u32 %s119, %s120
      %p122 = scmp.eq.s32.totalorder %s121, 0
      %s124 = sadd.s32 %s123, 1
      %s125 = scalar_select %p122, %s123, %s124
      %p128 = pneg %p122
      %p129 = scmp.eq.s32.totalorder %s10, 1
      %p130 = por %p128, %p129
      %p131 = scmp.ne.s32.totalorder %s123, %s126
      %p132 = scmp.eq.s32.totalorder %s10, 0
      %p133 = por %p131, %p132
      %p134 = scmp.ne.s32.totalorder %s123, %s126
      %p135 = scmp.eq.s32.totalorder %s15, 1
      %p136 = por %p134, %p135
      %p137 = scmp.ne.s32.totalorder %s126, %s127
      %p138 = scmp.eq.s32.totalorder %s15, 0
      %p139 = por %p137, %p138
      %p140 = scmp.ne.s32.totalorder %s126, %s127
      %p141 = scmp.eq.s32.totalorder %s16, 1
      %p142 = por %p140, %p141
      %p144 = scmp.ne.s32.totalorder %s127, %s143
      %p145 = scmp.eq.s32.totalorder %s16, 0
      %p146 = por %p144, %p145
      %s147 = ssub.s32 %s17, %s36
      %s148 = ssub.s32 %s18, %s32
      %s149 = sor.u32 %s147, %s148
      %p150 = scmp.eq.s32.totalorder %s149, 0
      %s152 = sadd.s32 %s151, 1
      %s153 = scalar_select %p150, %s151, %s152
      %p156 = pneg %p150
      %p157 = scmp.eq.s32.totalorder %s10, 1
      %p158 = por %p156, %p157
      %p159 = scmp.ne.s32.totalorder %s151, %s154
      %p160 = scmp.eq.s32.totalorder %s10, 0
      %p161 = por %p159, %p160
      %p162 = scmp.ne.s32.totalorder %s151, %s154
      %p163 = scmp.eq.s32.totalorder %s15, 1
      %p164 = por %p162, %p163
      %p165 = scmp.ne.s32.totalorder %s154, %s155
      %p166 = scmp.eq.s32.totalorder %s15, 0
      %p167 = por %p165, %p166
      %p168 = scmp.ne.s32.totalorder %s154, %s155
      %p169 = scmp.eq.s32.totalorder %s16, 1
      %p170 = por %p168, %p169
      %p172 = scmp.ne.s32.totalorder %s155, %s171
      %p173 = scmp.eq.s32.totalorder %s16, 0
      %p174 = por %p172, %p173
      %p175 = scmp.le.s32.totalorder 1, %s10
      %p176 = scmp.lt.s32.totalorder %s10, 3
      %p177 = pnand %p175, %p176
      %p178 = pneg %p177
      // Predicated region
      $region9: #{policy_network_forward.12} parent=5 // pred_check
        _
      $region10: #{policy_network_forward.12} parent=5 // pred_check_branch
        %180 = sbr.rel (%p177) target = $region12
      $region11: #{policy_network_forward.12} parent=5 // pred_region
        %s181 = ssub.s32 %s10, 1
        // Predicated region
        $region13: #{policy_network_forward.12} parent=11 // pred_check
          %p182 = pneg %p111
        $region14: #{policy_network_forward.12} parent=11 // pred_check_branch
          %184 = sbr.rel (%p182) target = $region16
        $region15: #{policy_network_forward.12} parent=11 // pred_region
          %s185 = smul.u32 2, %s21
          %p186 = scmp.lt.s32.totalorder %s185, 1
          %s187 = scalar_select %p186, %s185, 1
          %s188 = scalar_lea.vmem %s2, %s187
          %s189 = smul.u32 2, %s21
        $region16: #{policy_network_forward.12} parent=11 // pred_fallthru
          _
        // Predicated region
        $region17: #{policy_network_forward.12} parent=11 // pred_check
          %p190 = pneg %p139
        $region18: #{policy_network_forward.12} parent=11 // pred_check_branch
          %192 = sbr.rel (%p190) target = $region20
        $region19: #{policy_network_forward.12} parent=11 // pred_region
          %s193 = smul.u32 16, %s20
          %s194 = smul.u32 2, %s21
          %p195 = scmp.lt.s32.totalorder %s193, 15
          %s196 = scalar_select %p195, %s193, 15
          %p197 = scmp.lt.s32.totalorder %s194, 1
          %s198 = scalar_select %p197, %s194, 1
          %s199 = smul.addr %s196, 2
          %s200 = sadd.s32 %s198, %s199
          %s201 = smul.addr %s200, 8
          %s202 = scalar_lea.vmem %s3, %s201
          %s203 = smul.u32 16, %s20
          %s204 = smul.u32 2, %s21
        $region20: #{policy_network_forward.12} parent=11 // pred_fallthru
          _
      $region12: #{policy_network_forward.12} parent=5 // pred_fallthru
        _
      %p205 = scmp.lt.s32.totalorder %s10, 2
      // Predicated region
      $region21: #{policy_network_forward.12} parent=5 // pred_check
        %p206 = pneg %p205
      $region22: #{policy_network_forward.12} parent=5 // pred_check_branch
        %208 = sbr.rel (%p206) target = $region24
      $region23: #{policy_network_forward.12} parent=5 // pred_region
        // Predicated region
        $region25: #{policy_network_forward.12} parent=23 // pred_check
          %p209 = pneg %p51
        $region26: #{policy_network_forward.12} parent=23 // pred_check_branch
          %211 = sbr.rel (%p209) target = $region28
        $region27: #{policy_network_forward.12} parent=23 // pred_region
          %s212 = sand.u32 %s41, 1
          %s213 = sand.u32 %s41, 1
          %s214 = smul.addr %s213, 256
          %s215 = scalar_lea.vmem [#allocation3], %s214
          %s216 = smul.u32 16, %s17
          %s217 = smul.u32 4, %s19
          %s218 = smul.addr %s216, 8
          %s219 = sadd.s32 %s217, %s218
          %s220 = smul.addr %s219, 4
          %s221 = scalar_lea.vmem %s0, %s220
          // Predicated region
          $region29: #{policy_network_forward.12} parent=27 // pred_check
            _
          $region30: #{policy_network_forward.12} parent=27 // pred_check_branch
            %223 = sbr.rel (0) target = $region32
          $region31: #{policy_network_forward.12} parent=27 // pred_region
            // Predicated region
            $region33: #{policy_network_forward.12} parent=31 // pred_check
              _
            $region34: #{policy_network_forward.12} parent=31 // pred_check_branch
              %225 = sbr.rel (0) target = $region36
            $region35: #{policy_network_forward.12} parent=31 // pred_region
              loop: start=0, step=1, limit=1
              $region37: #{policy_network_forward.12} parent=35 // loop_pre_header
                _
              $region38: #{policy_network_forward.12} parent=35 // loop_header
                %s227 = sphi 0, %s231
                %p228 = scmp.ge.s32.totalorder %s227, 1
                %s232 = sphi %s221, %s221
                %s233 = sphi %s215, %s215
              $region39: #{policy_network_forward.12} parent=35 // loop_header_branch
                %230 = sbr.rel (%p228) target = $region43
              $region40: #{policy_network_forward.12} parent=35 // loop_body
                %v234 = vld [vmem:[%s232] sm:$0xff]
                %235 = vst [vmem:[%s233] sm:$0xff] %v234
                %v236 = vld [vmem:[%s232 + $0x8] sm:$0xff]
                %237 = vst [vmem:[%s233 + $0x8] sm:$0xff] %v236
                %v238 = vld [vmem:[%s232 + $0x20] sm:$0xff]
                %239 = vst [vmem:[%s233 + $0x10] sm:$0xff] %v238
                %v240 = vld [vmem:[%s232 + $0x28] sm:$0xff]
                %241 = vst [vmem:[%s233 + $0x18] sm:$0xff] %v240
                %v242 = vld [vmem:[%s232 + $0x40] sm:$0xff]
                %243 = vst [vmem:[%s233 + $0x20] sm:$0xff] %v242
                %v244 = vld [vmem:[%s232 + $0x48] sm:$0xff]
                %245 = vst [vmem:[%s233 + $0x28] sm:$0xff] %v244
                %v246 = vld [vmem:[%s232 + $0x60] sm:$0xff]
                %247 = vst [vmem:[%s233 + $0x30] sm:$0xff] %v246
                %v248 = vld [vmem:[%s232 + $0x68] sm:$0xff]
                %249 = vst [vmem:[%s233 + $0x38] sm:$0xff] %v248
                %v250 = vld [vmem:[%s232 + $0x80] sm:$0xff]
                %251 = vst [vmem:[%s233 + $0x40] sm:$0xff] %v250
                %v252 = vld [vmem:[%s232 + $0x88] sm:$0xff]
                %253 = vst [vmem:[%s233 + $0x48] sm:$0xff] %v252
                %v254 = vld [vmem:[%s232 + $0xa0] sm:$0xff]
                %255 = vst [vmem:[%s233 + $0x50] sm:$0xff] %v254
                %v256 = vld [vmem:[%s232 + $0xa8] sm:$0xff]
                %257 = vst [vmem:[%s233 + $0x58] sm:$0xff] %v256
                %v258 = vld [vmem:[%s232 + $0xc0] sm:$0xff]
                %259 = vst [vmem:[%s233 + $0x60] sm:$0xff] %v258
                %v260 = vld [vmem:[%s232 + $0xc8] sm:$0xff]
                %261 = vst [vmem:[%s233 + $0x68] sm:$0xff] %v260
                %v262 = vld [vmem:[%s232 + $0xe0] sm:$0xff]
                %263 = vst [vmem:[%s233 + $0x70] sm:$0xff] %v262
                %v264 = vld [vmem:[%s232 + $0xe8] sm:$0xff]
                %265 = vst [vmem:[%s233 + $0x78] sm:$0xff] %v264
                %v266 = vld [vmem:[%s232 + $0x100] sm:$0xff]
                %267 = vst [vmem:[%s233 + $0x80] sm:$0xff] %v266
                %v268 = vld [vmem:[%s232 + $0x108] sm:$0xff]
                %269 = vst [vmem:[%s233 + $0x88] sm:$0xff] %v268
                %v270 = vld [vmem:[%s232 + $0x120] sm:$0xff]
                %271 = vst [vmem:[%s233 + $0x90] sm:$0xff] %v270
                %v272 = vld [vmem:[%s232 + $0x128] sm:$0xff]
                %273 = vst [vmem:[%s233 + $0x98] sm:$0xff] %v272
                %v274 = vld [vmem:[%s232 + $0x140] sm:$0xff]
                %275 = vst [vmem:[%s233 + $0xa0] sm:$0xff] %v274
                %v276 = vld [vmem:[%s232 + $0x148] sm:$0xff]
                %277 = vst [vmem:[%s233 + $0xa8] sm:$0xff] %v276
                %v278 = vld [vmem:[%s232 + $0x160] sm:$0xff]
                %279 = vst [vmem:[%s233 + $0xb0] sm:$0xff] %v278
                %v280 = vld [vmem:[%s232 + $0x168] sm:$0xff]
                %281 = vst [vmem:[%s233 + $0xb8] sm:$0xff] %v280
                %v282 = vld [vmem:[%s232 + $0x180] sm:$0xff]
                %283 = vst [vmem:[%s233 + $0xc0] sm:$0xff] %v282
                %v284 = vld [vmem:[%s232 + $0x188] sm:$0xff]
                %285 = vst [vmem:[%s233 + $0xc8] sm:$0xff] %v284
                %v286 = vld [vmem:[%s232 + $0x1a0] sm:$0xff]
                %287 = vst [vmem:[%s233 + $0xd0] sm:$0xff] %v286
                %v288 = vld [vmem:[%s232 + $0x1a8] sm:$0xff]
                %289 = vst [vmem:[%s233 + $0xd8] sm:$0xff] %v288
                %v290 = vld [vmem:[%s232 + $0x1c0] sm:$0xff]
                %291 = vst [vmem:[%s233 + $0xe0] sm:$0xff] %v290
                %v292 = vld [vmem:[%s232 + $0x1c8] sm:$0xff]
                %293 = vst [vmem:[%s233 + $0xe8] sm:$0xff] %v292
                %v294 = vld [vmem:[%s232 + $0x1e0] sm:$0xff]
                %295 = vst [vmem:[%s233 + $0xf0] sm:$0xff] %v294
                %v296 = vld [vmem:[%s232 + $0x1e8] sm:$0xff]
                %297 = vst [vmem:[%s233 + $0xf8] sm:$0xff] %v296
              $region41: #{policy_network_forward.12} parent=35 // loop_footer
                %s231 = sadd.s32 1, %s227
              $region42: #{policy_network_forward.12} parent=35 // loop_footer_branch
                %226 = sbr.rel target = $region38
              $region43: #{policy_network_forward.12} parent=35 // loop_exit
                _
            $region36: #{policy_network_forward.12} parent=31 // pred_fallthru
              _
            // Predicated region
            $region44: #{policy_network_forward.12} parent=31 // pred_check
              _
            $region45: #{policy_network_forward.12} parent=31 // pred_check_branch
              %299 = sbr.rel target = $region47
            $region46: #{policy_network_forward.12} parent=31 // pred_region
              _
            $region47: #{policy_network_forward.12} parent=31 // pred_fallthru
              _
          $region32: #{policy_network_forward.12} parent=27 // pred_fallthru
            _
          %300 = vnop
        $region28: #{policy_network_forward.12} parent=23 // pred_fallthru
          _
        // Predicated region
        $region48: #{policy_network_forward.12} parent=23 // pred_check
          %p301 = pneg %p79
        $region49: #{policy_network_forward.12} parent=23 // pred_check_branch
          %303 = sbr.rel (%p301) target = $region51
        $region50: #{policy_network_forward.12} parent=23 // pred_region
          %s304 = smul.u32 64, %s19
          %s305 = smul.u32 2, %s18
          %p306 = scmp.lt.s32.totalorder %s304, 127
          %s307 = scalar_select %p306, %s304, 127
          %p308 = scmp.lt.s32.totalorder %s305, 1
          %s309 = scalar_select %p308, %s305, 1
          %s310 = smul.addr %s307, 2
          %s311 = sadd.s32 %s309, %s310
          %s312 = smul.addr %s311, 4
          %s313 = scalar_lea.vmem %s1, %s312
          %s314 = smul.u32 64, %s19
          %s315 = smul.u32 2, %s18
        $region51: #{policy_network_forward.12} parent=23 // pred_fallthru
          _
      $region24: #{policy_network_forward.12} parent=5 // pred_fallthru
        _
      %p316 = scmp.le.s32.totalorder 1, %s10
      %p317 = scmp.lt.s32.totalorder %s10, 3
      %p318 = pnand %p316, %p317
      %p319 = pneg %p318
      // Predicated region
      $region52: #{policy_network_forward.12} parent=5 // pred_check
        _
      $region53: #{policy_network_forward.12} parent=5 // pred_check_branch
        %321 = sbr.rel (%p318) target = $region55
      $region54: #{policy_network_forward.12} parent=5 // pred_region
        %s322 = ssub.s32 %s10, 1
        %s323 = sand.u32 %s44, 1
        %s324 = sand.u32 %s44, 1
        %s325 = smul.addr %s324, 256
        %s326 = scalar_lea.vmem [#allocation3], %s325
        // Predicated region
        $region56: #{policy_network_forward.12} parent=54 // pred_check
          %p327 = pneg %p57
        $region57: #{policy_network_forward.12} parent=54 // pred_check_branch
          %329 = sbr.rel (%p327) target = $region59
        $region58: #{policy_network_forward.12} parent=54 // pred_region
          _
        $region59: #{policy_network_forward.12} parent=54 // pred_fallthru
          _
        %s330 = sand.u32 %s44, 1
        %s331 = sand.u32 %s44, 1
        %s332 = smul.addr %s331, 256
        %s333 = scalar_lea.vmem [#allocation3], %s332
        %p334 = pneg %p57
        %p335 = pneg %p54
        %s336 = smul.u32 64, %s22
        %s337 = smul.u32 2, %s21
        %p338 = scmp.lt.s32.totalorder %s336, 127
        %s339 = scalar_select %p338, %s336, 127
        %p340 = scmp.lt.s32.totalorder %s337, 1
        %s341 = scalar_select %p340, %s337, 1
        %s342 = smul.addr %s339, 2
        %s343 = sadd.s32 %s341, %s342
        %s344 = smul.addr %s343, 4
        %s345 = scalar_lea.vmem %s1, %s344
        %p346 = pneg %p85
        %p347 = pneg %p82
        %s348 = smul.u32 2, %s21
        %p349 = scmp.lt.s32.totalorder %s348, 1
        %s350 = scalar_select %p349, %s348, 1
        %s351 = scalar_lea.vmem %s2, %s350
        %p352 = pneg %p111
        %p353 = pneg %p108
        %s354 = smul.u32 16, %s20
        %s355 = smul.u32 2, %s21
        %p356 = scmp.lt.s32.totalorder %s354, 15
        %s357 = scalar_select %p356, %s354, 15
        %p358 = scmp.lt.s32.totalorder %s355, 1
        %s359 = scalar_select %p358, %s355, 1
        %s360 = smul.addr %s357, 2
        %s361 = sadd.s32 %s359, %s360
        %s362 = smul.addr %s361, 8
        %s363 = scalar_lea.vmem %s3, %s362
        %p364 = pneg %p139
        %p365 = pneg %p136
        %p366 = pneg %p167
        %p367 = pneg %p164
        %s368 = smul.u32 16, %s20
        %s369 = smul.u32 2, %s21
        %p370 = scmp.lt.s32.totalorder %s368, 15
        %s371 = scalar_select %p370, %s368, 15
        %p372 = scmp.lt.s32.totalorder %s369, 1
        %s373 = scalar_select %p372, %s369, 1
        %s374 = smul.addr %s371, 2
        %s375 = sadd.s32 %s373, %s374
        %s376 = smul.addr %s375, 8
        %s377 = scalar_lea.vmem %s4, %s376
        %s378 = smul.u32 16, %s20
        %s379 = smul.u32 4, %s22
        %s380 = smul.u32 64, %s22
        %s381 = smul.u32 2, %s21
        %p382 = scmp.lt.s32.totalorder %s380, 127
        %s383 = scalar_select %p382, %s380, 127
        %p384 = scmp.lt.s32.totalorder %s381, 1
        %s385 = scalar_select %p384, %s381, 1
        %s386 = smul.addr %s383, 2
        %s387 = sadd.s32 %s385, %s386
        %s388 = smul.addr %s387, 4
        %s389 = scalar_lea.vmem %s1, %s388
        %s390 = smul.u32 64, %s22
        %s391 = smul.u32 2, %s21
        %s392 = smul.u32 2, %s21
        %p393 = scmp.lt.s32.totalorder %s392, 1
        %s394 = scalar_select %p393, %s392, 1
        %s395 = scalar_lea.vmem %s2, %s394
        %s396 = smul.u32 2, %s21
        %s397 = smul.u32 16, %s20
        %s398 = smul.u32 2, %s21
        %p399 = scmp.lt.s32.totalorder %s397, 15
        %s400 = scalar_select %p399, %s397, 15
        %p401 = scmp.lt.s32.totalorder %s398, 1
        %s402 = scalar_select %p401, %s398, 1
        %s403 = smul.addr %s400, 2
        %s404 = sadd.s32 %s402, %s403
        %s405 = smul.addr %s404, 8
        %s406 = scalar_lea.vmem %s3, %s405
        %s407 = smul.u32 16, %s20
        %s408 = smul.u32 2, %s21
        %s409 = smul.u32 16, %s20
        %s410 = smul.u32 2, %s21
        %p411 = scmp.lt.s32.totalorder %s409, 15
        %s412 = scalar_select %p411, %s409, 15
        %p413 = scmp.lt.s32.totalorder %s410, 1
        %s414 = scalar_select %p413, %s410, 1
        %s415 = smul.addr %s412, 2
        %s416 = sadd.s32 %s414, %s415
        %s417 = smul.addr %s416, 8
        %s418 = scalar_lea.vmem %s4, %s417
        %s419 = smul.u32 16, %s20
        %s420 = smul.u32 2, %s21
        %p421 = scmp.eq.s32.totalorder %s22, 0
        // Predicated region
        $region60: #{policy_network_forward.12} parent=54 // pred_check
          %p422 = pneg %p421
        $region61: #{policy_network_forward.12} parent=54 // pred_check_branch
          %424 = sbr.rel (%p422) target = $region63
        $region62: #{policy_network_forward.12} parent=54 // pred_region
          %425 = vst [vmem:[#allocation2] sm:$0xff] 0.0
          %426 = vst [vmem:[#allocation2 + $0x8] sm:$0xff] 0.0
          %427 = vst [vmem:[#allocation2 + $0x10] sm:$0xff] 0.0
          %428 = vst [vmem:[#allocation2 + $0x18] sm:$0xff] 0.0
          %429 = vst [vmem:[#allocation2 + $0x20] sm:$0xff] 0.0
          %430 = vst [vmem:[#allocation2 + $0x28] sm:$0xff] 0.0
          %431 = vst [vmem:[#allocation2 + $0x30] sm:$0xff] 0.0
          %432 = vst [vmem:[#allocation2 + $0x38] sm:$0xff] 0.0
          %433 = vst [vmem:[#allocation2 + $0x40] sm:$0xff] 0.0
          %434 = vst [vmem:[#allocation2 + $0x48] sm:$0xff] 0.0
          %435 = vst [vmem:[#allocation2 + $0x50] sm:$0xff] 0.0
          %436 = vst [vmem:[#allocation2 + $0x58] sm:$0xff] 0.0
          %437 = vst [vmem:[#allocation2 + $0x60] sm:$0xff] 0.0
          %438 = vst [vmem:[#allocation2 + $0x68] sm:$0xff] 0.0
          %439 = vst [vmem:[#allocation2 + $0x70] sm:$0xff] 0.0
          %440 = vst [vmem:[#allocation2 + $0x78] sm:$0xff] 0.0
          %441 = vst [vmem:[#allocation2 + $0x80] sm:$0xff] 0.0
          %442 = vst [vmem:[#allocation2 + $0x88] sm:$0xff] 0.0
          %443 = vst [vmem:[#allocation2 + $0x90] sm:$0xff] 0.0
          %444 = vst [vmem:[#allocation2 + $0x98] sm:$0xff] 0.0
          %445 = vst [vmem:[#allocation2 + $0xa0] sm:$0xff] 0.0
          %446 = vst [vmem:[#allocation2 + $0xa8] sm:$0xff] 0.0
          %447 = vst [vmem:[#allocation2 + $0xb0] sm:$0xff] 0.0
          %448 = vst [vmem:[#allocation2 + $0xb8] sm:$0xff] 0.0
          %449 = vst [vmem:[#allocation2 + $0xc0] sm:$0xff] 0.0
          %450 = vst [vmem:[#allocation2 + $0xc8] sm:$0xff] 0.0
          %451 = vst [vmem:[#allocation2 + $0xd0] sm:$0xff] 0.0
          %452 = vst [vmem:[#allocation2 + $0xd8] sm:$0xff] 0.0
          %453 = vst [vmem:[#allocation2 + $0xe0] sm:$0xff] 0.0
          %454 = vst [vmem:[#allocation2 + $0xe8] sm:$0xff] 0.0
          %455 = vst [vmem:[#allocation2 + $0xf0] sm:$0xff] 0.0
          %456 = vst [vmem:[#allocation2 + $0xf8] sm:$0xff] 0.0
        $region63: #{policy_network_forward.12} parent=54 // pred_fallthru
          _
        %v457 = vld [vmem:[#allocation2] sm:$0xff]
        %v458 = vld [vmem:[#allocation2 + $0x8] sm:$0xff]
        %v459 = vld [vmem:[#allocation2 + $0x10] sm:$0xff]
        %v460 = vld [vmem:[#allocation2 + $0x18] sm:$0xff]
        %v461 = vld [vmem:[#allocation2 + $0x20] sm:$0xff]
        %v462 = vld [vmem:[#allocation2 + $0x28] sm:$0xff]
        %v463 = vld [vmem:[#allocation2 + $0x30] sm:$0xff]
        %v464 = vld [vmem:[#allocation2 + $0x38] sm:$0xff]
        %v465 = vld [vmem:[#allocation2 + $0x40] sm:$0xff]
        %v466 = vld [vmem:[#allocation2 + $0x48] sm:$0xff]
        %v467 = vld [vmem:[#allocation2 + $0x50] sm:$0xff]
        %v468 = vld [vmem:[#allocation2 + $0x58] sm:$0xff]
        %v469 = vld [vmem:[#allocation2 + $0x60] sm:$0xff]
        %v470 = vld [vmem:[#allocation2 + $0x68] sm:$0xff]
        %v471 = vld [vmem:[#allocation2 + $0x70] sm:$0xff]
        %v472 = vld [vmem:[#allocation2 + $0x78] sm:$0xff]
        %v473 = vld [vmem:[#allocation2 + $0x80] sm:$0xff]
        %v474 = vld [vmem:[#allocation2 + $0x88] sm:$0xff]
        %v475 = vld [vmem:[#allocation2 + $0x90] sm:$0xff]
        %v476 = vld [vmem:[#allocation2 + $0x98] sm:$0xff]
        %v477 = vld [vmem:[#allocation2 + $0xa0] sm:$0xff]
        %v478 = vld [vmem:[#allocation2 + $0xa8] sm:$0xff]
        %v479 = vld [vmem:[#allocation2 + $0xb0] sm:$0xff]
        %v480 = vld [vmem:[#allocation2 + $0xb8] sm:$0xff]
        %v481 = vld [vmem:[#allocation2 + $0xc0] sm:$0xff]
        %v482 = vld [vmem:[#allocation2 + $0xc8] sm:$0xff]
        %v483 = vld [vmem:[#allocation2 + $0xd0] sm:$0xff]
        %v484 = vld [vmem:[#allocation2 + $0xd8] sm:$0xff]
        %v485 = vld [vmem:[#allocation2 + $0xe0] sm:$0xff]
        %v486 = vld [vmem:[#allocation2 + $0xe8] sm:$0xff]
        %v487 = vld [vmem:[#allocation2 + $0xf0] sm:$0xff]
        %v488 = vld [vmem:[#allocation2 + $0xf8] sm:$0xff]
        %v489 = vld [vmem:[%s326] sm:$0xff]
        %v490 = vld [vmem:[%s326 + $0x8] sm:$0xff]
        %v491 = vld [vmem:[%s326 + $0x10] sm:$0xff]
        %v492 = vld [vmem:[%s326 + $0x18] sm:$0xff]
        %v493 = vld [vmem:[%s326 + $0x20] sm:$0xff]
        %v494 = vld [vmem:[%s326 + $0x28] sm:$0xff]
        %v495 = vld [vmem:[%s326 + $0x30] sm:$0xff]
        %v496 = vld [vmem:[%s326 + $0x38] sm:$0xff]
        %v497 = vld [vmem:[%s326 + $0x40] sm:$0xff]
        %v498 = vld [vmem:[%s326 + $0x48] sm:$0xff]
        %v499 = vld [vmem:[%s326 + $0x50] sm:$0xff]
        %v500 = vld [vmem:[%s326 + $0x58] sm:$0xff]
        %v501 = vld [vmem:[%s326 + $0x60] sm:$0xff]
        %v502 = vld [vmem:[%s326 + $0x68] sm:$0xff]
        %v503 = vld [vmem:[%s326 + $0x70] sm:$0xff]
        %v504 = vld [vmem:[%s326 + $0x78] sm:$0xff]
        %v505 = vld [vmem:[%s326 + $0x80] sm:$0xff]
        %v506 = vld [vmem:[%s326 + $0x88] sm:$0xff]
        %v507 = vld [vmem:[%s326 + $0x90] sm:$0xff]
        %v508 = vld [vmem:[%s326 + $0x98] sm:$0xff]
        %v509 = vld [vmem:[%s326 + $0xa0] sm:$0xff]
        %v510 = vld [vmem:[%s326 + $0xa8] sm:$0xff]
        %v511 = vld [vmem:[%s326 + $0xb0] sm:$0xff]
        %v512 = vld [vmem:[%s326 + $0xb8] sm:$0xff]
        %v513 = vld [vmem:[%s326 + $0xc0] sm:$0xff]
        %v514 = vld [vmem:[%s326 + $0xc8] sm:$0xff]
        %v515 = vld [vmem:[%s326 + $0xd0] sm:$0xff]
        %v516 = vld [vmem:[%s326 + $0xd8] sm:$0xff]
        %v517 = vld [vmem:[%s326 + $0xe0] sm:$0xff]
        %v518 = vld [vmem:[%s326 + $0xe8] sm:$0xff]
        %v519 = vld [vmem:[%s326 + $0xf0] sm:$0xff]
        %v520 = vld [vmem:[%s326 + $0xf8] sm:$0xff]
        %v521 = vld [vmem:[%s389] sm:$0xff]
        %v522 = vld [vmem:[%s389 + $0x8] sm:$0xff]
        %v523 = vld [vmem:[%s389 + $0x10] sm:$0xff]
        %v524 = vld [vmem:[%s389 + $0x18] sm:$0xff]
        %v525 = vld [vmem:[%s389 + $0x20] sm:$0xff]
        %v526 = vld [vmem:[%s389 + $0x28] sm:$0xff]
        %v527 = vld [vmem:[%s389 + $0x30] sm:$0xff]
        %v528 = vld [vmem:[%s389 + $0x38] sm:$0xff]
        %v529 = vld [vmem:[%s389 + $0x40] sm:$0xff]
        %v530 = vld [vmem:[%s389 + $0x48] sm:$0xff]
        %v531 = vld [vmem:[%s389 + $0x50] sm:$0xff]
        %v532 = vld [vmem:[%s389 + $0x58] sm:$0xff]
        %v533 = vld [vmem:[%s389 + $0x60] sm:$0xff]
        %v534 = vld [vmem:[%s389 + $0x68] sm:$0xff]
        %v535 = vld [vmem:[%s389 + $0x70] sm:$0xff]
        %v536 = vld [vmem:[%s389 + $0x78] sm:$0xff]
        %v537 = vld [vmem:[%s389 + $0x80] sm:$0xff]
        %v538 = vld [vmem:[%s389 + $0x88] sm:$0xff]
        %v539 = vld [vmem:[%s389 + $0x90] sm:$0xff]
        %v540 = vld [vmem:[%s389 + $0x98] sm:$0xff]
        %v541 = vld [vmem:[%s389 + $0xa0] sm:$0xff]
        %v542 = vld [vmem:[%s389 + $0xa8] sm:$0xff]
        %v543 = vld [vmem:[%s389 + $0xb0] sm:$0xff]
        %v544 = vld [vmem:[%s389 + $0xb8] sm:$0xff]
        %v545 = vld [vmem:[%s389 + $0xc0] sm:$0xff]
        %v546 = vld [vmem:[%s389 + $0xc8] sm:$0xff]
        %v547 = vld [vmem:[%s389 + $0xd0] sm:$0xff]
        %v548 = vld [vmem:[%s389 + $0xd8] sm:$0xff]
        %v549 = vld [vmem:[%s389 + $0xe0] sm:$0xff]
        %v550 = vld [vmem:[%s389 + $0xe8] sm:$0xff]
        %v551 = vld [vmem:[%s389 + $0xf0] sm:$0xff]
        %v552 = vld [vmem:[%s389 + $0xf8] sm:$0xff]
        %v553 = vld [vmem:[%s389 + $0x100] sm:$0xff]
        %v554 = vld [vmem:[%s389 + $0x108] sm:$0xff]
        %v555 = vld [vmem:[%s389 + $0x110] sm:$0xff]
        %v556 = vld [vmem:[%s389 + $0x118] sm:$0xff]
        %v557 = vld [vmem:[%s389 + $0x120] sm:$0xff]
        %v558 = vld [vmem:[%s389 + $0x128] sm:$0xff]
        %v559 = vld [vmem:[%s389 + $0x130] sm:$0xff]
        %v560 = vld [vmem:[%s389 + $0x138] sm:$0xff]
        %v561 = vld [vmem:[%s389 + $0x140] sm:$0xff]
        %v562 = vld [vmem:[%s389 + $0x148] sm:$0xff]
        %v563 = vld [vmem:[%s389 + $0x150] sm:$0xff]
        %v564 = vld [vmem:[%s389 + $0x158] sm:$0xff]
        %v565 = vld [vmem:[%s389 + $0x160] sm:$0xff]
        %v566 = vld [vmem:[%s389 + $0x168] sm:$0xff]
        %v567 = vld [vmem:[%s389 + $0x170] sm:$0xff]
        %v568 = vld [vmem:[%s389 + $0x178] sm:$0xff]
        %v569 = vld [vmem:[%s389 + $0x180] sm:$0xff]
        %v570 = vld [vmem:[%s389 + $0x188] sm:$0xff]
        %v571 = vld [vmem:[%s389 + $0x190] sm:$0xff]
        %v572 = vld [vmem:[%s389 + $0x198] sm:$0xff]
        %v573 = vld [vmem:[%s389 + $0x1a0] sm:$0xff]
        %v574 = vld [vmem:[%s389 + $0x1a8] sm:$0xff]
        %v575 = vld [vmem:[%s389 + $0x1b0] sm:$0xff]
        %v576 = vld [vmem:[%s389 + $0x1b8] sm:$0xff]
        %v577 = vld [vmem:[%s389 + $0x1c0] sm:$0xff]
        %v578 = vld [vmem:[%s389 + $0x1c8] sm:$0xff]
        %v579 = vld [vmem:[%s389 + $0x1d0] sm:$0xff]
        %v580 = vld [vmem:[%s389 + $0x1d8] sm:$0xff]
        %v581 = vld [vmem:[%s389 + $0x1e0] sm:$0xff]
        %v582 = vld [vmem:[%s389 + $0x1e8] sm:$0xff]
        %v583 = vld [vmem:[%s389 + $0x1f0] sm:$0xff]
        %v584 = vld [vmem:[%s389 + $0x1f8] sm:$0xff]
        %v617 = vunpack.c.l.b16 %v489
        %v618 = vunpack.c.h.b16 %v489
        %v619 = vunpack.c.l.b16 %v490
        %v620 = vunpack.c.h.b16 %v490
        %v621 = vunpack.c.l.b16 %v491
        %v622 = vunpack.c.h.b16 %v491
        %v623 = vunpack.c.l.b16 %v492
        %v624 = vunpack.c.h.b16 %v492
        %v625 = vunpack.c.l.b16 %v493
        %v626 = vunpack.c.h.b16 %v493
        %v627 = vunpack.c.l.b16 %v494
        %v628 = vunpack.c.h.b16 %v494
        %v629 = vunpack.c.l.b16 %v495
        %v630 = vunpack.c.h.b16 %v495
        %v631 = vunpack.c.l.b16 %v496
        %v632 = vunpack.c.h.b16 %v496
        %v633 = vunpack.c.l.b16 %v497
        %v634 = vunpack.c.h.b16 %v497
        %v635 = vunpack.c.l.b16 %v498
        %v636 = vunpack.c.h.b16 %v498
        %v637 = vunpack.c.l.b16 %v499
        %v638 = vunpack.c.h.b16 %v499
        %v639 = vunpack.c.l.b16 %v500
        %v640 = vunpack.c.h.b16 %v500
        %v641 = vunpack.c.l.b16 %v501
        %v642 = vunpack.c.h.b16 %v501
        %v643 = vunpack.c.l.b16 %v502
        %v644 = vunpack.c.h.b16 %v502
        %v645 = vunpack.c.l.b16 %v503
        %v646 = vunpack.c.h.b16 %v503
        %v647 = vunpack.c.l.b16 %v504
        %v648 = vunpack.c.h.b16 %v504
        %v649 = vunpack.c.l.b16 %v505
        %v650 = vunpack.c.h.b16 %v505
        %v651 = vunpack.c.l.b16 %v506
        %v652 = vunpack.c.h.b16 %v506
        %v653 = vunpack.c.l.b16 %v507
        %v654 = vunpack.c.h.b16 %v507
        %v655 = vunpack.c.l.b16 %v508
        %v656 = vunpack.c.h.b16 %v508
        %v657 = vunpack.c.l.b16 %v509
        %v658 = vunpack.c.h.b16 %v509
        %v659 = vunpack.c.l.b16 %v510
        %v660 = vunpack.c.h.b16 %v510
        %v661 = vunpack.c.l.b16 %v511
        %v662 = vunpack.c.h.b16 %v511
        %v663 = vunpack.c.l.b16 %v512
        %v664 = vunpack.c.h.b16 %v512
        %v665 = vunpack.c.l.b16 %v513
        %v666 = vunpack.c.h.b16 %v513
        %v667 = vunpack.c.l.b16 %v514
        %v668 = vunpack.c.h.b16 %v514
        %v669 = vunpack.c.l.b16 %v515
        %v670 = vunpack.c.h.b16 %v515
        %v671 = vunpack.c.l.b16 %v516
        %v672 = vunpack.c.h.b16 %v516
        %v673 = vunpack.c.l.b16 %v517
        %v674 = vunpack.c.h.b16 %v517
        %v675 = vunpack.c.l.b16 %v518
        %v676 = vunpack.c.h.b16 %v518
        %v677 = vunpack.c.l.b16 %v519
        %v678 = vunpack.c.h.b16 %v519
        %v679 = vunpack.c.l.b16 %v520
        %v680 = vunpack.c.h.b16 %v520
        %v681 = vpack.c.b16 %v621, %v617
        %v682 = vpack.c.b16 %v622, %v618
        %v683 = vpack.c.b16 %v623, %v619
        %v684 = vpack.c.b16 %v624, %v620
        %v685 = vpack.c.b16 %v629, %v625
        %v686 = vpack.c.b16 %v630, %v626
        %v687 = vpack.c.b16 %v631, %v627
        %v688 = vpack.c.b16 %v632, %v628
        %v689 = vpack.c.b16 %v637, %v633
        %v690 = vpack.c.b16 %v638, %v634
        %v691 = vpack.c.b16 %v639, %v635
        %v692 = vpack.c.b16 %v640, %v636
        %v693 = vpack.c.b16 %v645, %v641
        %v694 = vpack.c.b16 %v646, %v642
        %v695 = vpack.c.b16 %v647, %v643
        %v696 = vpack.c.b16 %v648, %v644
        %v697 = vpack.c.b16 %v653, %v649
        %v698 = vpack.c.b16 %v654, %v650
        %v699 = vpack.c.b16 %v655, %v651
        %v700 = vpack.c.b16 %v656, %v652
        %v701 = vpack.c.b16 %v661, %v657
        %v702 = vpack.c.b16 %v662, %v658
        %v703 = vpack.c.b16 %v663, %v659
        %v704 = vpack.c.b16 %v664, %v660
        %v705 = vpack.c.b16 %v669, %v665
        %v706 = vpack.c.b16 %v670, %v666
        %v707 = vpack.c.b16 %v671, %v667
        %v708 = vpack.c.b16 %v672, %v668
        %v709 = vpack.c.b16 %v677, %v673
        %v710 = vpack.c.b16 %v678, %v674
        %v711 = vpack.c.b16 %v679, %v675
        %v712 = vpack.c.b16 %v680, %v676
        %v809 = vunpack.c.l.b16 %v521
        %v810 = vunpack.c.h.b16 %v521
        %v811 = vunpack.c.l.b16 %v522
        %v812 = vunpack.c.h.b16 %v522
        %v813 = vunpack.c.l.b16 %v523
        %v814 = vunpack.c.h.b16 %v523
        %v815 = vunpack.c.l.b16 %v524
        %v816 = vunpack.c.h.b16 %v524
        %v817 = vunpack.c.l.b16 %v525
        %v818 = vunpack.c.h.b16 %v525
        %v819 = vunpack.c.l.b16 %v526
        %v820 = vunpack.c.h.b16 %v526
        %v821 = vunpack.c.l.b16 %v527
        %v822 = vunpack.c.h.b16 %v527
        %v823 = vunpack.c.l.b16 %v528
        %v824 = vunpack.c.h.b16 %v528
        %v825 = vunpack.c.l.b16 %v529
        %v826 = vunpack.c.h.b16 %v529
        %v827 = vunpack.c.l.b16 %v530
        %v828 = vunpack.c.h.b16 %v530
        %v829 = vunpack.c.l.b16 %v531
        %v830 = vunpack.c.h.b16 %v531
        %v831 = vunpack.c.l.b16 %v532
        %v832 = vunpack.c.h.b16 %v532
        %v833 = vunpack.c.l.b16 %v533
        %v834 = vunpack.c.h.b16 %v533
        %v835 = vunpack.c.l.b16 %v534
        %v836 = vunpack.c.h.b16 %v534
        %v837 = vunpack.c.l.b16 %v535
        %v838 = vunpack.c.h.b16 %v535
        %v839 = vunpack.c.l.b16 %v536
        %v840 = vunpack.c.h.b16 %v536
        %v841 = vunpack.c.l.b16 %v537
        %v842 = vunpack.c.h.b16 %v537
        %v843 = vunpack.c.l.b16 %v538
        %v844 = vunpack.c.h.b16 %v538
        %v845 = vunpack.c.l.b16 %v539
        %v846 = vunpack.c.h.b16 %v539
        %v847 = vunpack.c.l.b16 %v540
        %v848 = vunpack.c.h.b16 %v540
        %v849 = vunpack.c.l.b16 %v541
        %v850 = vunpack.c.h.b16 %v541
        %v851 = vunpack.c.l.b16 %v542
        %v852 = vunpack.c.h.b16 %v542
        %v853 = vunpack.c.l.b16 %v543
        %v854 = vunpack.c.h.b16 %v543
        %v855 = vunpack.c.l.b16 %v544
        %v856 = vunpack.c.h.b16 %v544
        %v857 = vunpack.c.l.b16 %v545
        %v858 = vunpack.c.h.b16 %v545
        %v859 = vunpack.c.l.b16 %v546
        %v860 = vunpack.c.h.b16 %v546
        %v861 = vunpack.c.l.b16 %v547
        %v862 = vunpack.c.h.b16 %v547
        %v863 = vunpack.c.l.b16 %v548
        %v864 = vunpack.c.h.b16 %v548
        %v865 = vunpack.c.l.b16 %v549
        %v866 = vunpack.c.h.b16 %v549
        %v867 = vunpack.c.l.b16 %v550
        %v868 = vunpack.c.h.b16 %v550
        %v869 = vunpack.c.l.b16 %v551
        %v870 = vunpack.c.h.b16 %v551
        %v871 = vunpack.c.l.b16 %v552
        %v872 = vunpack.c.h.b16 %v552
        %v873 = vunpack.c.l.b16 %v553
        %v874 = vunpack.c.h.b16 %v553
        %v875 = vunpack.c.l.b16 %v554
        %v876 = vunpack.c.h.b16 %v554
        %v877 = vunpack.c.l.b16 %v555
        %v878 = vunpack.c.h.b16 %v555
        %v879 = vunpack.c.l.b16 %v556
        %v880 = vunpack.c.h.b16 %v556
        %v881 = vunpack.c.l.b16 %v557
        %v882 = vunpack.c.h.b16 %v557
        %v883 = vunpack.c.l.b16 %v558
        %v884 = vunpack.c.h.b16 %v558
        %v885 = vunpack.c.l.b16 %v559
        %v886 = vunpack.c.h.b16 %v559
        %v887 = vunpack.c.l.b16 %v560
        %v888 = vunpack.c.h.b16 %v560
        %v889 = vunpack.c.l.b16 %v561
        %v890 = vunpack.c.h.b16 %v561
        %v891 = vunpack.c.l.b16 %v562
        %v892 = vunpack.c.h.b16 %v562
        %v893 = vunpack.c.l.b16 %v563
        %v894 = vunpack.c.h.b16 %v563
        %v895 = vunpack.c.l.b16 %v564
        %v896 = vunpack.c.h.b16 %v564
        %v897 = vunpack.c.l.b16 %v565
        %v898 = vunpack.c.h.b16 %v565
        %v899 = vunpack.c.l.b16 %v566
        %v900 = vunpack.c.h.b16 %v566
        %v901 = vunpack.c.l.b16 %v567
        %v902 = vunpack.c.h.b16 %v567
        %v903 = vunpack.c.l.b16 %v568
        %v904 = vunpack.c.h.b16 %v568
        %v905 = vunpack.c.l.b16 %v569
        %v906 = vunpack.c.h.b16 %v569
        %v907 = vunpack.c.l.b16 %v570
        %v908 = vunpack.c.h.b16 %v570
        %v909 = vunpack.c.l.b16 %v571
        %v910 = vunpack.c.h.b16 %v571
        %v911 = vunpack.c.l.b16 %v572
        %v912 = vunpack.c.h.b16 %v572
        %v913 = vunpack.c.l.b16 %v573
        %v914 = vunpack.c.h.b16 %v573
        %v915 = vunpack.c.l.b16 %v574
        %v916 = vunpack.c.h.b16 %v574
        %v917 = vunpack.c.l.b16 %v575
        %v918 = vunpack.c.h.b16 %v575
        %v919 = vunpack.c.l.b16 %v576
        %v920 = vunpack.c.h.b16 %v576
        %v921 = vunpack.c.l.b16 %v577
        %v922 = vunpack.c.h.b16 %v577
        %v923 = vunpack.c.l.b16 %v578
        %v924 = vunpack.c.h.b16 %v578
        %v925 = vunpack.c.l.b16 %v579
        %v926 = vunpack.c.h.b16 %v579
        %v927 = vunpack.c.l.b16 %v580
        %v928 = vunpack.c.h.b16 %v580
        %v929 = vunpack.c.l.b16 %v581
        %v930 = vunpack.c.h.b16 %v581
        %v931 = vunpack.c.l.b16 %v582
        %v932 = vunpack.c.h.b16 %v582
        %v933 = vunpack.c.l.b16 %v583
        %v934 = vunpack.c.h.b16 %v583
        %v935 = vunpack.c.l.b16 %v584
        %v936 = vunpack.c.h.b16 %v584
        %v937 = vpack.c.b16 %v811, %v809
        %v938 = vpack.c.b16 %v812, %v810
        %v939 = vpack.c.b16 %v815, %v813
        %v940 = vpack.c.b16 %v816, %v814
        %v941 = vpack.c.b16 %v819, %v817
        %v942 = vpack.c.b16 %v820, %v818
        %v943 = vpack.c.b16 %v823, %v821
        %v944 = vpack.c.b16 %v824, %v822
        %v945 = vpack.c.b16 %v827, %v825
        %v946 = vpack.c.b16 %v828, %v826
        %v947 = vpack.c.b16 %v831, %v829
        %v948 = vpack.c.b16 %v832, %v830
        %v949 = vpack.c.b16 %v835, %v833
        %v950 = vpack.c.b16 %v836, %v834
        %v951 = vpack.c.b16 %v839, %v837
        %v952 = vpack.c.b16 %v840, %v838
        %v953 = vpack.c.b16 %v843, %v841
        %v954 = vpack.c.b16 %v844, %v842
        %v955 = vpack.c.b16 %v847, %v845
        %v956 = vpack.c.b16 %v848, %v846
        %v957 = vpack.c.b16 %v851, %v849
        %v958 = vpack.c.b16 %v852, %v850
        %v959 = vpack.c.b16 %v855, %v853
        %v960 = vpack.c.b16 %v856, %v854
        %v961 = vpack.c.b16 %v859, %v857
        %v962 = vpack.c.b16 %v860, %v858
        %v963 = vpack.c.b16 %v863, %v861
        %v964 = vpack.c.b16 %v864, %v862
        %v965 = vpack.c.b16 %v867, %v865
        %v966 = vpack.c.b16 %v868, %v866
        %v967 = vpack.c.b16 %v871, %v869
        %v968 = vpack.c.b16 %v872, %v870
        %v969 = vpack.c.b16 %v875, %v873
        %v970 = vpack.c.b16 %v876, %v874
        %v971 = vpack.c.b16 %v879, %v877
        %v972 = vpack.c.b16 %v880, %v878
        %v973 = vpack.c.b16 %v883, %v881
        %v974 = vpack.c.b16 %v884, %v882
        %v975 = vpack.c.b16 %v887, %v885
        %v976 = vpack.c.b16 %v888, %v886
        %v977 = vpack.c.b16 %v891, %v889
        %v978 = vpack.c.b16 %v892, %v890
        %v979 = vpack.c.b16 %v895, %v893
        %v980 = vpack.c.b16 %v896, %v894
        %v981 = vpack.c.b16 %v899, %v897
        %v982 = vpack.c.b16 %v900, %v898
        %v983 = vpack.c.b16 %v903, %v901
        %v984 = vpack.c.b16 %v904, %v902
        %v985 = vpack.c.b16 %v907, %v905
        %v986 = vpack.c.b16 %v908, %v906
        %v987 = vpack.c.b16 %v911, %v909
        %v988 = vpack.c.b16 %v912, %v910
        %v989 = vpack.c.b16 %v915, %v913
        %v990 = vpack.c.b16 %v916, %v914
        %v991 = vpack.c.b16 %v919, %v917
        %v992 = vpack.c.b16 %v920, %v918
        %v993 = vpack.c.b16 %v923, %v921
        %v994 = vpack.c.b16 %v924, %v922
        %v995 = vpack.c.b16 %v927, %v925
        %v996 = vpack.c.b16 %v928, %v926
        %v997 = vpack.c.b16 %v931, %v929
        %v998 = vpack.c.b16 %v932, %v930
        %v999 = vpack.c.b16 %v935, %v933
        %v1000 = vpack.c.b16 %v936, %v934
        %1065 = vmatprep.subr.bf16.mxu0 %v952
        %1066 = vmatpush1.bf16.msra.mxu0 %v951
        %1067 = vmatprep.subr.bf16.mxu0 %v950
        %1068 = vmatpush1.bf16.msra.mxu0 %v949
        %1069 = vmatprep.subr.bf16.mxu0 %v948
        %1070 = vmatpush1.bf16.msra.mxu0 %v947
        %1071 = vmatprep.subr.bf16.mxu0 %v946
        %1072 = vmatpush1.bf16.msra.mxu0 %v945
        %1073 = vmatprep.subr.bf16.mxu0 %v944
        %1074 = vmatpush1.bf16.msra.mxu0 %v943
        %1075 = vmatprep.subr.bf16.mxu0 %v942
        %1076 = vmatpush1.bf16.msra.mxu0 %v941
        %1077 = vmatprep.subr.bf16.mxu0 %v940
        %1078 = vmatpush1.bf16.msra.mxu0 %v939
        %1079 = vmatprep.subr.bf16.mxu0 %v938
        %1080 = vmatpush1.bf16.msra.mxu0 %v937
        %1081 = vmatprep.subr.bf16.mxu0 %v968
        %1082 = vmatpush2.bf16.msra.mxu0 %v967
        %1083 = vmatprep.subr.bf16.mxu0 %v966
        %1084 = vmatpush2.bf16.msra.mxu0 %v965
        %1085 = vmatprep.subr.bf16.mxu0 %v964
        %1086 = vmatpush2.bf16.msra.mxu0 %v963
        %1087 = vmatprep.subr.bf16.mxu0 %v962
        %1088 = vmatpush2.bf16.msra.mxu0 %v961
        %1089 = vmatprep.subr.bf16.mxu0 %v960
        %1090 = vmatpush2.bf16.msra.mxu0 %v959
        %1091 = vmatprep.subr.bf16.mxu0 %v958
        %1092 = vmatpush2.bf16.msra.mxu0 %v957
        %1093 = vmatprep.subr.bf16.mxu0 %v956
        %1094 = vmatpush2.bf16.msra.mxu0 %v955
        %1095 = vmatprep.subr.bf16.mxu0 %v954
        %1096 = vmatpush2.bf16.msra.mxu0 %v953
        %1097 = vmatprep.mubr.bf16.mxu0 %v682
        %1098 = vmatmul.mubr.bf16.gmra.mxu0 %v681
        %v1099 = vpop.f32.mrf.mxu0
        %v1100 = vadd.f32 0.0, %v1099
        %v1101 = vpop.f32.mrf.mxu0
        %v1102 = vadd.f32 0.0, %v1101
        %v1103 = vpop.f32.mrf.mxu0
        %v1104 = vadd.f32 0.0, %v1103
        %v1105 = vpop.f32.mrf.mxu0
        %v1106 = vadd.f32 0.0, %v1105
        %1107 = vmatprep.mubr.bf16.mxu0 %v686
        %1108 = vmatmul.mubr.bf16.gmra.mxu0 %v685
        %v1109 = vpop.f32.mrf.mxu0
        %v1110 = vadd.f32 0.0, %v1109
        %v1111 = vpop.f32.mrf.mxu0
        %v1112 = vadd.f32 0.0, %v1111
        %v1113 = vpop.f32.mrf.mxu0
        %v1114 = vadd.f32 0.0, %v1113
        %v1115 = vpop.f32.mrf.mxu0
        %v1116 = vadd.f32 0.0, %v1115
        %1117 = vmatprep.mubr.bf16.mxu0 %v690
        %1118 = vmatmul.mubr.bf16.gmra.mxu0 %v689
        %v1119 = vpop.f32.mrf.mxu0
        %v1120 = vadd.f32 0.0, %v1119
        %v1121 = vpop.f32.mrf.mxu0
        %v1122 = vadd.f32 0.0, %v1121
        %v1123 = vpop.f32.mrf.mxu0
        %v1124 = vadd.f32 0.0, %v1123
        %v1125 = vpop.f32.mrf.mxu0
        %v1126 = vadd.f32 0.0, %v1125
        %1127 = vmatprep.mubr.bf16.mxu0 %v694
        %1128 = vmatmul.mubr.bf16.gmra.mxu0 %v693
        %v1129 = vpop.f32.mrf.mxu0
        %v1130 = vadd.f32 0.0, %v1129
        %v1131 = vpop.f32.mrf.mxu0
        %v1132 = vadd.f32 0.0, %v1131
        %v1133 = vpop.f32.mrf.mxu0
        %v1134 = vadd.f32 0.0, %v1133
        %v1135 = vpop.f32.mrf.mxu0
        %v1136 = vadd.f32 0.0, %v1135
        %1137 = vmatprep.mubr.bf16.mxu0 %v698
        %1138 = vmatmul.mubr.bf16.gmra.mxu0 %v697
        %v1139 = vpop.f32.mrf.mxu0
        %v1140 = vadd.f32 0.0, %v1139
        %v1141 = vpop.f32.mrf.mxu0
        %v1142 = vadd.f32 0.0, %v1141
        %v1143 = vpop.f32.mrf.mxu0
        %v1144 = vadd.f32 0.0, %v1143
        %v1145 = vpop.f32.mrf.mxu0
        %v1146 = vadd.f32 0.0, %v1145
        %1147 = vmatprep.mubr.bf16.mxu0 %v702
        %1148 = vmatmul.mubr.bf16.gmra.mxu0 %v701
        %v1149 = vpop.f32.mrf.mxu0
        %v1150 = vadd.f32 0.0, %v1149
        %v1151 = vpop.f32.mrf.mxu0
        %v1152 = vadd.f32 0.0, %v1151
        %v1153 = vpop.f32.mrf.mxu0
        %v1154 = vadd.f32 0.0, %v1153
        %v1155 = vpop.f32.mrf.mxu0
        %v1156 = vadd.f32 0.0, %v1155
        %1157 = vmatprep.mubr.bf16.mxu0 %v706
        %1158 = vmatmul.mubr.bf16.gmra.mxu0 %v705
        %v1159 = vpop.f32.mrf.mxu0
        %v1160 = vadd.f32 0.0, %v1159
        %v1161 = vpop.f32.mrf.mxu0
        %v1162 = vadd.f32 0.0, %v1161
        %v1163 = vpop.f32.mrf.mxu0
        %v1164 = vadd.f32 0.0, %v1163
        %v1165 = vpop.f32.mrf.mxu0
        %v1166 = vadd.f32 0.0, %v1165
        %1167 = vmatprep.mubr.bf16.mxu0 %v710
        %1168 = vmatmul.mubr.bf16.gmra.mxu0 %v709
        %v1169 = vpop.f32.mrf.mxu0
        %v1170 = vadd.f32 0.0, %v1169
        %v1171 = vpop.f32.mrf.mxu0
        %v1172 = vadd.f32 0.0, %v1171
        %v1173 = vpop.f32.mrf.mxu0
        %v1174 = vadd.f32 0.0, %v1173
        %v1175 = vpop.f32.mrf.mxu0
        %v1176 = vadd.f32 0.0, %v1175
        %1177 = vdwg.mxu0
        %1178 = vmatprep.subr.bf16.mxu0 %v984
        %1179 = vmatpush1.bf16.msra.mxu0 %v983
        %1180 = vmatprep.subr.bf16.mxu0 %v982
        %1181 = vmatpush1.bf16.msra.mxu0 %v981
        %1182 = vmatprep.subr.bf16.mxu0 %v980
        %1183 = vmatpush1.bf16.msra.mxu0 %v979
        %1184 = vmatprep.subr.bf16.mxu0 %v978
        %1185 = vmatpush1.bf16.msra.mxu0 %v977
        %1186 = vmatprep.subr.bf16.mxu0 %v976
        %1187 = vmatpush1.bf16.msra.mxu0 %v975
        %1188 = vmatprep.subr.bf16.mxu0 %v974
        %1189 = vmatpush1.bf16.msra.mxu0 %v973
        %1190 = vmatprep.subr.bf16.mxu0 %v972
        %1191 = vmatpush1.bf16.msra.mxu0 %v971
        %1192 = vmatprep.subr.bf16.mxu0 %v970
        %1193 = vmatpush1.bf16.msra.mxu0 %v969
        %1194 = vmatprep.subr.bf16.mxu0 %v1000
        %1195 = vmatpush2.bf16.msra.mxu0 %v999
        %1196 = vmatprep.subr.bf16.mxu0 %v998
        %1197 = vmatpush2.bf16.msra.mxu0 %v997
        %1198 = vmatprep.subr.bf16.mxu0 %v996
        %1199 = vmatpush2.bf16.msra.mxu0 %v995
        %1200 = vmatprep.subr.bf16.mxu0 %v994
        %1201 = vmatpush2.bf16.msra.mxu0 %v993
        %1202 = vmatprep.subr.bf16.mxu0 %v992
        %1203 = vmatpush2.bf16.msra.mxu0 %v991
        %1204 = vmatprep.subr.bf16.mxu0 %v990
        %1205 = vmatpush2.bf16.msra.mxu0 %v989
        %1206 = vmatprep.subr.bf16.mxu0 %v988
        %1207 = vmatpush2.bf16.msra.mxu0 %v987
        %1208 = vmatprep.subr.bf16.mxu0 %v986
        %1209 = vmatpush2.bf16.msra.mxu0 %v985
        %1210 = vmatprep.mubr.bf16.mxu0 %v684
        %1211 = vmatmul.mubr.bf16.gmra.mxu0 %v683
        %v1212 = vpop.f32.mrf.mxu0
        %v1213 = vadd.f32 %v1100, %v1212
        %v1214 = vpop.f32.mrf.mxu0
        %v1215 = vadd.f32 %v1102, %v1214
        %v1216 = vpop.f32.mrf.mxu0
        %v1217 = vadd.f32 %v1104, %v1216
        %v1218 = vpop.f32.mrf.mxu0
        %v1219 = vadd.f32 %v1106, %v1218
        %1220 = vmatprep.mubr.bf16.mxu0 %v688
        %1221 = vmatmul.mubr.bf16.gmra.mxu0 %v687
        %v1222 = vpop.f32.mrf.mxu0
        %v1223 = vadd.f32 %v1110, %v1222
        %v1224 = vpop.f32.mrf.mxu0
        %v1225 = vadd.f32 %v1112, %v1224
        %v1226 = vpop.f32.mrf.mxu0
        %v1227 = vadd.f32 %v1114, %v1226
        %v1228 = vpop.f32.mrf.mxu0
        %v1229 = vadd.f32 %v1116, %v1228
        %1230 = vmatprep.mubr.bf16.mxu0 %v692
        %1231 = vmatmul.mubr.bf16.gmra.mxu0 %v691
        %v1232 = vpop.f32.mrf.mxu0
        %v1233 = vadd.f32 %v1120, %v1232
        %v1234 = vpop.f32.mrf.mxu0
        %v1235 = vadd.f32 %v1122, %v1234
        %v1236 = vpop.f32.mrf.mxu0
        %v1237 = vadd.f32 %v1124, %v1236
        %v1238 = vpop.f32.mrf.mxu0
        %v1239 = vadd.f32 %v1126, %v1238
        %1240 = vmatprep.mubr.bf16.mxu0 %v696
        %1241 = vmatmul.mubr.bf16.gmra.mxu0 %v695
        %v1242 = vpop.f32.mrf.mxu0
        %v1243 = vadd.f32 %v1130, %v1242
        %v1244 = vpop.f32.mrf.mxu0
        %v1245 = vadd.f32 %v1132, %v1244
        %v1246 = vpop.f32.mrf.mxu0
        %v1247 = vadd.f32 %v1134, %v1246
        %v1248 = vpop.f32.mrf.mxu0
        %v1249 = vadd.f32 %v1136, %v1248
        %1250 = vmatprep.mubr.bf16.mxu0 %v700
        %1251 = vmatmul.mubr.bf16.gmra.mxu0 %v699
        %v1252 = vpop.f32.mrf.mxu0
        %v1253 = vadd.f32 %v1140, %v1252
        %v1254 = vpop.f32.mrf.mxu0
        %v1255 = vadd.f32 %v1142, %v1254
        %v1256 = vpop.f32.mrf.mxu0
        %v1257 = vadd.f32 %v1144, %v1256
        %v1258 = vpop.f32.mrf.mxu0
        %v1259 = vadd.f32 %v1146, %v1258
        %1260 = vmatprep.mubr.bf16.mxu0 %v704
        %1261 = vmatmul.mubr.bf16.gmra.mxu0 %v703
        %v1262 = vpop.f32.mrf.mxu0
        %v1263 = vadd.f32 %v1150, %v1262
        %v1264 = vpop.f32.mrf.mxu0
        %v1265 = vadd.f32 %v1152, %v1264
        %v1266 = vpop.f32.mrf.mxu0
        %v1267 = vadd.f32 %v1154, %v1266
        %v1268 = vpop.f32.mrf.mxu0
        %v1269 = vadd.f32 %v1156, %v1268
        %1270 = vmatprep.mubr.bf16.mxu0 %v708
        %1271 = vmatmul.mubr.bf16.gmra.mxu0 %v707
        %v1272 = vpop.f32.mrf.mxu0
        %v1273 = vadd.f32 %v1160, %v1272
        %v1274 = vpop.f32.mrf.mxu0
        %v1275 = vadd.f32 %v1162, %v1274
        %v1276 = vpop.f32.mrf.mxu0
        %v1277 = vadd.f32 %v1164, %v1276
        %v1278 = vpop.f32.mrf.mxu0
        %v1279 = vadd.f32 %v1166, %v1278
        %1280 = vmatprep.mubr.bf16.mxu0 %v712
        %1281 = vmatmul.mubr.bf16.gmra.mxu0 %v711
        %v1282 = vpop.f32.mrf.mxu0
        %v1283 = vadd.f32 %v1170, %v1282
        %v1284 = vpop.f32.mrf.mxu0
        %v1285 = vadd.f32 %v1172, %v1284
        %v1286 = vpop.f32.mrf.mxu0
        %v1287 = vadd.f32 %v1174, %v1286
        %v1288 = vpop.f32.mrf.mxu0
        %v1289 = vadd.f32 %v1176, %v1288
        %1290 = vdwg.mxu0
        %v1291 = vadd.f32 %v457, %v1213
        %v1292 = vadd.f32 %v458, %v1215
        %v1293 = vadd.f32 %v459, %v1217
        %v1294 = vadd.f32 %v460, %v1219
        %v1295 = vadd.f32 %v461, %v1223
        %v1296 = vadd.f32 %v462, %v1225
        %v1297 = vadd.f32 %v463, %v1227
        %v1298 = vadd.f32 %v464, %v1229
        %v1299 = vadd.f32 %v465, %v1233
        %v1300 = vadd.f32 %v466, %v1235
        %v1301 = vadd.f32 %v467, %v1237
        %v1302 = vadd.f32 %v468, %v1239
        %v1303 = vadd.f32 %v469, %v1243
        %v1304 = vadd.f32 %v470, %v1245
        %v1305 = vadd.f32 %v471, %v1247
        %v1306 = vadd.f32 %v472, %v1249
        %v1307 = vadd.f32 %v473, %v1253
        %v1308 = vadd.f32 %v474, %v1255
        %v1309 = vadd.f32 %v475, %v1257
        %v1310 = vadd.f32 %v476, %v1259
        %v1311 = vadd.f32 %v477, %v1263
        %v1312 = vadd.f32 %v478, %v1265
        %v1313 = vadd.f32 %v479, %v1267
        %v1314 = vadd.f32 %v480, %v1269
        %v1315 = vadd.f32 %v481, %v1273
        %v1316 = vadd.f32 %v482, %v1275
        %v1317 = vadd.f32 %v483, %v1277
        %v1318 = vadd.f32 %v484, %v1279
        %v1319 = vadd.f32 %v485, %v1283
        %v1320 = vadd.f32 %v486, %v1285
        %v1321 = vadd.f32 %v487, %v1287
        %v1322 = vadd.f32 %v488, %v1289
        %1323 = vst [vmem:[#allocation2] sm:$0xff] %v1291
        %1324 = vst [vmem:[#allocation2 + $0x8] sm:$0xff] %v1292
        %1325 = vst [vmem:[#allocation2 + $0x10] sm:$0xff] %v1293
        %1326 = vst [vmem:[#allocation2 + $0x18] sm:$0xff] %v1294
        %1327 = vst [vmem:[#allocation2 + $0x20] sm:$0xff] %v1295
        %1328 = vst [vmem:[#allocation2 + $0x28] sm:$0xff] %v1296
        %1329 = vst [vmem:[#allocation2 + $0x30] sm:$0xff] %v1297
        %1330 = vst [vmem:[#allocation2 + $0x38] sm:$0xff] %v1298
        %1331 = vst [vmem:[#allocation2 + $0x40] sm:$0xff] %v1299
        %1332 = vst [vmem:[#allocation2 + $0x48] sm:$0xff] %v1300
        %1333 = vst [vmem:[#allocation2 + $0x50] sm:$0xff] %v1301
        %1334 = vst [vmem:[#allocation2 + $0x58] sm:$0xff] %v1302
        %1335 = vst [vmem:[#allocation2 + $0x60] sm:$0xff] %v1303
        %1336 = vst [vmem:[#allocation2 + $0x68] sm:$0xff] %v1304
        %1337 = vst [vmem:[#allocation2 + $0x70] sm:$0xff] %v1305
        %1338 = vst [vmem:[#allocation2 + $0x78] sm:$0xff] %v1306
        %1339 = vst [vmem:[#allocation2 + $0x80] sm:$0xff] %v1307
        %1340 = vst [vmem:[#allocation2 + $0x88] sm:$0xff] %v1308
        %1341 = vst [vmem:[#allocation2 + $0x90] sm:$0xff] %v1309
        %1342 = vst [vmem:[#allocation2 + $0x98] sm:$0xff] %v1310
        %1343 = vst [vmem:[#allocation2 + $0xa0] sm:$0xff] %v1311
        %1344 = vst [vmem:[#allocation2 + $0xa8] sm:$0xff] %v1312
        %1345 = vst [vmem:[#allocation2 + $0xb0] sm:$0xff] %v1313
        %1346 = vst [vmem:[#allocation2 + $0xb8] sm:$0xff] %v1314
        %1347 = vst [vmem:[#allocation2 + $0xc0] sm:$0xff] %v1315
        %1348 = vst [vmem:[#allocation2 + $0xc8] sm:$0xff] %v1316
        %1349 = vst [vmem:[#allocation2 + $0xd0] sm:$0xff] %v1317
        %1350 = vst [vmem:[#allocation2 + $0xd8] sm:$0xff] %v1318
        %1351 = vst [vmem:[#allocation2 + $0xe0] sm:$0xff] %v1319
        %1352 = vst [vmem:[#allocation2 + $0xe8] sm:$0xff] %v1320
        %1353 = vst [vmem:[#allocation2 + $0xf0] sm:$0xff] %v1321
        %1354 = vst [vmem:[#allocation2 + $0xf8] sm:$0xff] %v1322
        %p1355 = scmp.eq.s32.totalorder %s22, 1
        // Predicated region
        $region64: #{policy_network_forward.12} parent=54 // pred_check
          %p1356 = pneg %p1355
        $region65: #{policy_network_forward.12} parent=54 // pred_check_branch
          %1358 = sbr.rel (%p1356) target = $region67
        $region66: #{policy_network_forward.12} parent=54 // pred_region
          %v1359 = vld [vmem:[#allocation2] sm:$0xff]
          %v1360 = vld [vmem:[#allocation2 + $0x8] sm:$0xff]
          %v1361 = vld [vmem:[#allocation2 + $0x10] sm:$0xff]
          %v1362 = vld [vmem:[#allocation2 + $0x18] sm:$0xff]
          %v1363 = vld [vmem:[#allocation2 + $0x20] sm:$0xff]
          %v1364 = vld [vmem:[#allocation2 + $0x28] sm:$0xff]
          %v1365 = vld [vmem:[#allocation2 + $0x30] sm:$0xff]
          %v1366 = vld [vmem:[#allocation2 + $0x38] sm:$0xff]
          %v1367 = vld [vmem:[#allocation2 + $0x40] sm:$0xff]
          %v1368 = vld [vmem:[#allocation2 + $0x48] sm:$0xff]
          %v1369 = vld [vmem:[#allocation2 + $0x50] sm:$0xff]
          %v1370 = vld [vmem:[#allocation2 + $0x58] sm:$0xff]
          %v1371 = vld [vmem:[#allocation2 + $0x60] sm:$0xff]
          %v1372 = vld [vmem:[#allocation2 + $0x68] sm:$0xff]
          %v1373 = vld [vmem:[#allocation2 + $0x70] sm:$0xff]
          %v1374 = vld [vmem:[#allocation2 + $0x78] sm:$0xff]
          %v1375 = vld [vmem:[#allocation2 + $0x80] sm:$0xff]
          %v1376 = vld [vmem:[#allocation2 + $0x88] sm:$0xff]
          %v1377 = vld [vmem:[#allocation2 + $0x90] sm:$0xff]
          %v1378 = vld [vmem:[#allocation2 + $0x98] sm:$0xff]
          %v1379 = vld [vmem:[#allocation2 + $0xa0] sm:$0xff]
          %v1380 = vld [vmem:[#allocation2 + $0xa8] sm:$0xff]
          %v1381 = vld [vmem:[#allocation2 + $0xb0] sm:$0xff]
          %v1382 = vld [vmem:[#allocation2 + $0xb8] sm:$0xff]
          %v1383 = vld [vmem:[#allocation2 + $0xc0] sm:$0xff]
          %v1384 = vld [vmem:[#allocation2 + $0xc8] sm:$0xff]
          %v1385 = vld [vmem:[#allocation2 + $0xd0] sm:$0xff]
          %v1386 = vld [vmem:[#allocation2 + $0xd8] sm:$0xff]
          %v1387 = vld [vmem:[#allocation2 + $0xe0] sm:$0xff]
          %v1388 = vld [vmem:[#allocation2 + $0xe8] sm:$0xff]
          %v1389 = vld [vmem:[#allocation2 + $0xf0] sm:$0xff]
          %v1390 = vld [vmem:[#allocation2 + $0xf8] sm:$0xff]
          %v1391 = vld [vmem:[%s395] sm:$0x3]
          %v1393 = vlaneseq
          %v1394 = vshrl.u32 %v1393, 7
          %v1395 = vsub.s32 0, %v1394
          %v1396 = vrot.slane %v1391, %v1395
          %v1397 = vlaneseq
          %v1398 = vshrl.u32 %v1397, 7
          %v1399 = vsub.s32 1, %v1398
          %v1400 = vrot.slane %v1391, %v1399
          %v1403 = vadd.f32 %v1359, %v1396
          %v1404 = vadd.f32 %v1360, %v1400
          %v1405 = vadd.f32 %v1361, %v1396
          %v1406 = vadd.f32 %v1362, %v1400
          %v1407 = vadd.f32 %v1363, %v1396
          %v1408 = vadd.f32 %v1364, %v1400
          %v1409 = vadd.f32 %v1365, %v1396
          %v1410 = vadd.f32 %v1366, %v1400
          %v1411 = vadd.f32 %v1367, %v1396
          %v1412 = vadd.f32 %v1368, %v1400
          %v1413 = vadd.f32 %v1369, %v1396
          %v1414 = vadd.f32 %v1370, %v1400
          %v1415 = vadd.f32 %v1371, %v1396
          %v1416 = vadd.f32 %v1372, %v1400
          %v1417 = vadd.f32 %v1373, %v1396
          %v1418 = vadd.f32 %v1374, %v1400
          %v1419 = vadd.f32 %v1375, %v1396
          %v1420 = vadd.f32 %v1376, %v1400
          %v1421 = vadd.f32 %v1377, %v1396
          %v1422 = vadd.f32 %v1378, %v1400
          %v1423 = vadd.f32 %v1379, %v1396
          %v1424 = vadd.f32 %v1380, %v1400
          %v1425 = vadd.f32 %v1381, %v1396
          %v1426 = vadd.f32 %v1382, %v1400
          %v1427 = vadd.f32 %v1383, %v1396
          %v1428 = vadd.f32 %v1384, %v1400
          %v1429 = vadd.f32 %v1385, %v1396
          %v1430 = vadd.f32 %v1386, %v1400
          %v1431 = vadd.f32 %v1387, %v1396
          %v1432 = vadd.f32 %v1388, %v1400
          %v1433 = vadd.f32 %v1389, %v1396
          %v1434 = vadd.f32 %v1390, %v1400
          %v1435 = vld [vmem:[%s406] sm:$0xff]
          %v1436 = vld [vmem:[%s406 + $0x8] sm:$0xff]
          %v1437 = vld [vmem:[%s406 + $0x10] sm:$0xff]
          %v1438 = vld [vmem:[%s406 + $0x18] sm:$0xff]
          %v1439 = vld [vmem:[%s406 + $0x20] sm:$0xff]
          %v1440 = vld [vmem:[%s406 + $0x28] sm:$0xff]
          %v1441 = vld [vmem:[%s406 + $0x30] sm:$0xff]
          %v1442 = vld [vmem:[%s406 + $0x38] sm:$0xff]
          %v1443 = vld [vmem:[%s406 + $0x40] sm:$0xff]
          %v1444 = vld [vmem:[%s406 + $0x48] sm:$0xff]
          %v1445 = vld [vmem:[%s406 + $0x50] sm:$0xff]
          %v1446 = vld [vmem:[%s406 + $0x58] sm:$0xff]
          %v1447 = vld [vmem:[%s406 + $0x60] sm:$0xff]
          %v1448 = vld [vmem:[%s406 + $0x68] sm:$0xff]
          %v1449 = vld [vmem:[%s406 + $0x70] sm:$0xff]
          %v1450 = vld [vmem:[%s406 + $0x78] sm:$0xff]
          %v1451 = vld [vmem:[%s406 + $0x80] sm:$0xff]
          %v1452 = vld [vmem:[%s406 + $0x88] sm:$0xff]
          %v1453 = vld [vmem:[%s406 + $0x90] sm:$0xff]
          %v1454 = vld [vmem:[%s406 + $0x98] sm:$0xff]
          %v1455 = vld [vmem:[%s406 + $0xa0] sm:$0xff]
          %v1456 = vld [vmem:[%s406 + $0xa8] sm:$0xff]
          %v1457 = vld [vmem:[%s406 + $0xb0] sm:$0xff]
          %v1458 = vld [vmem:[%s406 + $0xb8] sm:$0xff]
          %v1459 = vld [vmem:[%s406 + $0xc0] sm:$0xff]
          %v1460 = vld [vmem:[%s406 + $0xc8] sm:$0xff]
          %v1461 = vld [vmem:[%s406 + $0xd0] sm:$0xff]
          %v1462 = vld [vmem:[%s406 + $0xd8] sm:$0xff]
          %v1463 = vld [vmem:[%s406 + $0xe0] sm:$0xff]
          %v1464 = vld [vmem:[%s406 + $0xe8] sm:$0xff]
          %v1465 = vld [vmem:[%s406 + $0xf0] sm:$0xff]
          %v1466 = vld [vmem:[%s406 + $0xf8] sm:$0xff]
          %v1467 = vadd.f32 %v1403, %v1435
          %v1468 = vadd.f32 %v1404, %v1436
          %v1469 = vadd.f32 %v1405, %v1437
          %v1470 = vadd.f32 %v1406, %v1438
          %v1471 = vadd.f32 %v1407, %v1439
          %v1472 = vadd.f32 %v1408, %v1440
          %v1473 = vadd.f32 %v1409, %v1441
          %v1474 = vadd.f32 %v1410, %v1442
          %v1475 = vadd.f32 %v1411, %v1443
          %v1476 = vadd.f32 %v1412, %v1444
          %v1477 = vadd.f32 %v1413, %v1445
          %v1478 = vadd.f32 %v1414, %v1446
          %v1479 = vadd.f32 %v1415, %v1447
          %v1480 = vadd.f32 %v1416, %v1448
          %v1481 = vadd.f32 %v1417, %v1449
          %v1482 = vadd.f32 %v1418, %v1450
          %v1483 = vadd.f32 %v1419, %v1451
          %v1484 = vadd.f32 %v1420, %v1452
          %v1485 = vadd.f32 %v1421, %v1453
          %v1486 = vadd.f32 %v1422, %v1454
          %v1487 = vadd.f32 %v1423, %v1455
          %v1488 = vadd.f32 %v1424, %v1456
          %v1489 = vadd.f32 %v1425, %v1457
          %v1490 = vadd.f32 %v1426, %v1458
          %v1491 = vadd.f32 %v1427, %v1459
          %v1492 = vadd.f32 %v1428, %v1460
          %v1493 = vadd.f32 %v1429, %v1461
          %v1494 = vadd.f32 %v1430, %v1462
          %v1495 = vadd.f32 %v1431, %v1463
          %v1496 = vadd.f32 %v1432, %v1464
          %v1497 = vadd.f32 %v1433, %v1465
          %v1498 = vadd.f32 %v1434, %v1466
          %1499 = vst [vmem:[%s418] sm:$0xff] %v1467
          %1500 = vst [vmem:[%s418 + $0x8] sm:$0xff] %v1468
          %1501 = vst [vmem:[%s418 + $0x10] sm:$0xff] %v1469
          %1502 = vst [vmem:[%s418 + $0x18] sm:$0xff] %v1470
          %1503 = vst [vmem:[%s418 + $0x20] sm:$0xff] %v1471
          %1504 = vst [vmem:[%s418 + $0x28] sm:$0xff] %v1472
          %1505 = vst [vmem:[%s418 + $0x30] sm:$0xff] %v1473
          %1506 = vst [vmem:[%s418 + $0x38] sm:$0xff] %v1474
          %1507 = vst [vmem:[%s418 + $0x40] sm:$0xff] %v1475
          %1508 = vst [vmem:[%s418 + $0x48] sm:$0xff] %v1476
          %1509 = vst [vmem:[%s418 + $0x50] sm:$0xff] %v1477
          %1510 = vst [vmem:[%s418 + $0x58] sm:$0xff] %v1478
          %1511 = vst [vmem:[%s418 + $0x60] sm:$0xff] %v1479
          %1512 = vst [vmem:[%s418 + $0x68] sm:$0xff] %v1480
          %1513 = vst [vmem:[%s418 + $0x70] sm:$0xff] %v1481
          %1514 = vst [vmem:[%s418 + $0x78] sm:$0xff] %v1482
          %1515 = vst [vmem:[%s418 + $0x80] sm:$0xff] %v1483
          %1516 = vst [vmem:[%s418 + $0x88] sm:$0xff] %v1484
          %1517 = vst [vmem:[%s418 + $0x90] sm:$0xff] %v1485
          %1518 = vst [vmem:[%s418 + $0x98] sm:$0xff] %v1486
          %1519 = vst [vmem:[%s418 + $0xa0] sm:$0xff] %v1487
          %1520 = vst [vmem:[%s418 + $0xa8] sm:$0xff] %v1488
          %1521 = vst [vmem:[%s418 + $0xb0] sm:$0xff] %v1489
          %1522 = vst [vmem:[%s418 + $0xb8] sm:$0xff] %v1490
          %1523 = vst [vmem:[%s418 + $0xc0] sm:$0xff] %v1491
          %1524 = vst [vmem:[%s418 + $0xc8] sm:$0xff] %v1492
          %1525 = vst [vmem:[%s418 + $0xd0] sm:$0xff] %v1493
          %1526 = vst [vmem:[%s418 + $0xd8] sm:$0xff] %v1494
          %1527 = vst [vmem:[%s418 + $0xe0] sm:$0xff] %v1495
          %1528 = vst [vmem:[%s418 + $0xe8] sm:$0xff] %v1496
          %1529 = vst [vmem:[%s418 + $0xf0] sm:$0xff] %v1497
          %1530 = vst [vmem:[%s418 + $0xf8] sm:$0xff] %v1498
        $region67: #{policy_network_forward.12} parent=54 // pred_fallthru
          _
        %s1531 = smul.u32 16, %s20
        %s1532 = smul.u32 2, %s21
        %p1533 = scmp.lt.s32.totalorder %s1531, 15
        %s1534 = scalar_select %p1533, %s1531, 15
        %p1535 = scmp.lt.s32.totalorder %s1532, 1
        %s1536 = scalar_select %p1535, %s1532, 1
        %s1537 = smul.addr %s1534, 2
        %s1538 = sadd.s32 %s1536, %s1537
        %s1539 = smul.addr %s1538, 8
        %s1540 = scalar_lea.vmem %s4, %s1539
        // Predicated region
        $region68: #{policy_network_forward.12} parent=54 // pred_check
          %p1541 = pneg %p164
        $region69: #{policy_network_forward.12} parent=54 // pred_check_branch
          %1543 = sbr.rel (%p1541) target = $region71
        $region70: #{policy_network_forward.12} parent=54 // pred_region
          %s1544 = smul.u32 16, %s20
          %s1545 = smul.u32 2, %s21
        $region71: #{policy_network_forward.12} parent=54 // pred_fallthru
          _
        // Predicated region
        $region72: #{policy_network_forward.12} parent=54 // pred_check
          %p1546 = pneg %p164
        $region73: #{policy_network_forward.12} parent=54 // pred_check_branch
          %1548 = sbr.rel (%p1546) target = $region75
        $region74: #{policy_network_forward.12} parent=54 // pred_region
          %s1549 = smul.u32 16, %s20
          %s1550 = smul.u32 2, %s21
          %p1551 = scmp.lt.s32.totalorder %s1549, 15
          %s1552 = scalar_select %p1551, %s1549, 15
          %p1553 = scmp.lt.s32.totalorder %s1550, 1
          %s1554 = scalar_select %p1553, %s1550, 1
          %s1555 = smul.addr %s1552, 2
          %s1556 = sadd.s32 %s1554, %s1555
          %s1557 = smul.addr %s1556, 8
          %s1558 = scalar_lea.vmem %s4, %s1557
        $region75: #{policy_network_forward.12} parent=54 // pred_fallthru
          _
      $region55: #{policy_network_forward.12} parent=5 // pred_fallthru
        _
      %p1559 = scmp.le.s32.totalorder 2, %s10
      // Predicated region
      $region76: #{policy_network_forward.12} parent=5 // pred_check
        %p1560 = pneg %p1559
      $region77: #{policy_network_forward.12} parent=5 // pred_check_branch
        %1562 = sbr.rel (%p1560) target = $region79
      $region78: #{policy_network_forward.12} parent=5 // pred_region
        %s1563 = ssub.s32 %s10, 2
      $region79: #{policy_network_forward.12} parent=5 // pred_fallthru
        _
    $region6: #{policy_network_forward.12} parent=1 // loop_footer
      %s14 = sadd.s32 1, %s10
    $region7: #{policy_network_forward.12} parent=1 // loop_footer_branch
      %9 = sbr.rel target = $region3
    $region8: #{policy_network_forward.12} parent=1 // loop_exit
      _

// kernel: policy_network_forward.17
$region0: #{policy_network_forward.17}
  #allocation0 [shape = 'u32[]', space=smem, size = 0x4, offset = 0x4, fixed_abs, tag = 'smem constant byte address 0x4 - core index']
  #allocation1 [shape = 'u32[144,128]{1,0:T(1,128)}', space=vmem, size = 0x12000, scoped, tag = 'internal scratch']
  #allocation2 [shape = 'bf16[128,256]{1,0:T(8,128)(2,1)}', space=vmem, size = 0x10000, scoped, tag = 'scratch operand']
  %s0 = inlined_call_operand.vmem [shape: f32[128,256], index: 0, kind: input, shape index: {}]
  %s1 = inlined_call_operand.vmem [shape: f32[1,256], index: 1, kind: input, shape index: {}]
  %s2 = inlined_call_operand.vmem [shape: f32[1,256], index: 2, kind: input, shape index: {}]
  %s3 = inlined_call_operand.vmem [shape: bf16[256,512], index: 3, kind: input, shape index: {}]
  %s4 = inlined_call_operand.hbm [shape: f32[128,256], index: 4, kind: output, shape index: {0}]
  %s5 = inlined_call_operand.hbm [shape: f32[128,512], index: 5, kind: output, shape index: {1}]
  %6 = xla_tuple %s4, %s5
  %s7 = sld [smem:[#allocation0]]
  $region38: #{policy_network_forward.17} parent=0
    _
  %s9 = ssub.s32 1, %s7
  %s10 = scalar_select 0, %s9, %s7
  $region1: #{policy_network_forward.17} parent=0
    #allocation3 [shape = 'u8[131072]{0}', space=vmem, size = 0x20000, scoped, tag = 'output window, operand 0, single buffered']
    #allocation4 [shape = 's32[1]{0}', space=sflag, size = 0x4, scoped, tag = 'scoped memory for policy_network_forward.17']
    #allocation5 [shape = 'u8[262144]{0}', space=vmem, size = 0x40000, scoped, tag = 'output window, operand 1, single buffered']
    #allocation6 [shape = 's32[1]{0}', space=sflag, size = 0x4, scoped, tag = 'scoped memory for policy_network_forward.17']
    %11 = vsyncpa [#allocation4], 0
    %12 = vsyncpa [#allocation6], 0
    // Predicated region
    $region2: #{policy_network_forward.17} parent=1 // pred_check
      _
    $region3: #{policy_network_forward.17} parent=1 // pred_check_branch
      %14 = sbr.rel (0) target = $region5
    $region4: #{policy_network_forward.17} parent=1 // pred_region
      _
    $region5: #{policy_network_forward.17} parent=1 // pred_fallthru
      _
    // Predicated region
    $region6: #{policy_network_forward.17} parent=1 // pred_check
      _
    $region7: #{policy_network_forward.17} parent=1 // pred_check_branch
      %16 = sbr.rel (0) target = $region9
    $region8: #{policy_network_forward.17} parent=1 // pred_region
      _
    $region9: #{policy_network_forward.17} parent=1 // pred_fallthru
      _
    // Predicated region
    $region10: #{policy_network_forward.17} parent=1 // pred_check
      _
    $region11: #{policy_network_forward.17} parent=1 // pred_check_branch
      %18 = sbr.rel (0) target = $region13
    $region12: #{policy_network_forward.17} parent=1 // pred_region
      _
    $region13: #{policy_network_forward.17} parent=1 // pred_fallthru
      _
    // Predicated region
    $region14: #{policy_network_forward.17} parent=1 // pred_check
      _
    $region15: #{policy_network_forward.17} parent=1 // pred_check_branch
      %20 = sbr.rel (0) target = $region17
    $region16: #{policy_network_forward.17} parent=1 // pred_region
      _
    $region17: #{policy_network_forward.17} parent=1 // pred_fallthru
      _
    %p21 = scmp.eq.s32.totalorder 0, 0
    // Predicated region
    $region18: #{policy_network_forward.17} parent=1 // pred_check
      %p22 = pneg %p21
    $region19: #{policy_network_forward.17} parent=1 // pred_check_branch
      %24 = sbr.rel (%p22) target = $region21
    $region20: #{policy_network_forward.17} parent=1 // pred_region
      %v25 = vld [vmem:[%s0] sm:$0xff]
      %v26 = vld [vmem:[%s0 + $0x8] sm:$0xff]
      %v27 = vld [vmem:[%s0 + $0x10] sm:$0xff]
      %v28 = vld [vmem:[%s0 + $0x18] sm:$0xff]
      %v29 = vld [vmem:[%s0 + $0x20] sm:$0xff]
      %v30 = vld [vmem:[%s0 + $0x28] sm:$0xff]
      %v31 = vld [vmem:[%s0 + $0x30] sm:$0xff]
      %v32 = vld [vmem:[%s0 + $0x38] sm:$0xff]
      %v33 = vld [vmem:[%s0 + $0x40] sm:$0xff]
      %v34 = vld [vmem:[%s0 + $0x48] sm:$0xff]
      %v35 = vld [vmem:[%s0 + $0x50] sm:$0xff]
      %v36 = vld [vmem:[%s0 + $0x58] sm:$0xff]
      %v37 = vld [vmem:[%s0 + $0x60] sm:$0xff]
      %v38 = vld [vmem:[%s0 + $0x68] sm:$0xff]
      %v39 = vld [vmem:[%s0 + $0x70] sm:$0xff]
      %v40 = vld [vmem:[%s0 + $0x78] sm:$0xff]
      %v41 = vld [vmem:[%s0 + $0x80] sm:$0xff]
      %v42 = vld [vmem:[%s0 + $0x88] sm:$0xff]
      %v43 = vld [vmem:[%s0 + $0x90] sm:$0xff]
      %v44 = vld [vmem:[%s0 + $0x98] sm:$0xff]
      %v45 = vld [vmem:[%s0 + $0xa0] sm:$0xff]
      %v46 = vld [vmem:[%s0 + $0xa8] sm:$0xff]
      %v47 = vld [vmem:[%s0 + $0xb0] sm:$0xff]
      %v48 = vld [vmem:[%s0 + $0xb8] sm:$0xff]
      %v49 = vld [vmem:[%s0 + $0xc0] sm:$0xff]
      %v50 = vld [vmem:[%s0 + $0xc8] sm:$0xff]
      %v51 = vld [vmem:[%s0 + $0xd0] sm:$0xff]
      %v52 = vld [vmem:[%s0 + $0xd8] sm:$0xff]
      %v53 = vld [vmem:[%s0 + $0xe0] sm:$0xff]
      %v54 = vld [vmem:[%s0 + $0xe8] sm:$0xff]
      %v55 = vld [vmem:[%s0 + $0xf0] sm:$0xff]
      %v56 = vld [vmem:[%s0 + $0xf8] sm:$0xff]
      %v57 = vadd.f32 %v25, %v26
      %58 = vadd.xlane.f32.xlu0 %v57
      %v59 = vpop.xlane.xlu0 %58
      %v60 = vadd.f32 %v27, %v28
      %61 = vadd.xlane.f32.xlu0 %v60
      %v62 = vpop.xlane.xlu0 %61
      %v63 = vadd.f32 %v29, %v30
      %64 = vadd.xlane.f32.xlu0 %v63
      %v65 = vpop.xlane.xlu0 %64
      %v66 = vadd.f32 %v31, %v32
      %67 = vadd.xlane.f32.xlu0 %v66
      %v68 = vpop.xlane.xlu0 %67
      %v69 = vadd.f32 %v33, %v34
      %70 = vadd.xlane.f32.xlu0 %v69
      %v71 = vpop.xlane.xlu0 %70
      %v72 = vadd.f32 %v35, %v36
      %73 = vadd.xlane.f32.xlu0 %v72
      %v74 = vpop.xlane.xlu0 %73
      %v75 = vadd.f32 %v37, %v38
      %76 = vadd.xlane.f32.xlu0 %v75
      %v77 = vpop.xlane.xlu0 %76
      %v78 = vadd.f32 %v39, %v40
      %79 = vadd.xlane.f32.xlu0 %v78
      %v80 = vpop.xlane.xlu0 %79
      %v81 = vadd.f32 %v41, %v42
      %82 = vadd.xlane.f32.xlu0 %v81
      %v83 = vpop.xlane.xlu0 %82
      %v84 = vadd.f32 %v43, %v44
      %85 = vadd.xlane.f32.xlu0 %v84
      %v86 = vpop.xlane.xlu0 %85
      %v87 = vadd.f32 %v45, %v46
      %88 = vadd.xlane.f32.xlu0 %v87
      %v89 = vpop.xlane.xlu0 %88
      %v90 = vadd.f32 %v47, %v48
      %91 = vadd.xlane.f32.xlu0 %v90
      %v92 = vpop.xlane.xlu0 %91
      %v93 = vadd.f32 %v49, %v50
      %94 = vadd.xlane.f32.xlu0 %v93
      %v95 = vpop.xlane.xlu0 %94
      %v96 = vadd.f32 %v51, %v52
      %97 = vadd.xlane.f32.xlu0 %v96
      %v98 = vpop.xlane.xlu0 %97
      %v99 = vadd.f32 %v53, %v54
      %100 = vadd.xlane.f32.xlu0 %v99
      %v101 = vpop.xlane.xlu0 %100
      %v102 = vadd.f32 %v55, %v56
      %103 = vadd.xlane.f32.xlu0 %v102
      %v104 = vpop.xlane.xlu0 %103
      %v105 = vrcp.pop 256.0
      %v106 = vmul.f32 %v59, %v105
      %v107 = vmul.f32 %v62, %v105
      %v108 = vmul.f32 %v65, %v105
      %v109 = vmul.f32 %v68, %v105
      %v110 = vmul.f32 %v71, %v105
      %v111 = vmul.f32 %v74, %v105
      %v112 = vmul.f32 %v77, %v105
      %v113 = vmul.f32 %v80, %v105
      %v114 = vmul.f32 %v83, %v105
      %v115 = vmul.f32 %v86, %v105
      %v116 = vmul.f32 %v89, %v105
      %v117 = vmul.f32 %v92, %v105
      %v118 = vmul.f32 %v95, %v105
      %v119 = vmul.f32 %v98, %v105
      %v120 = vmul.f32 %v101, %v105
      %v121 = vmul.f32 %v104, %v105
      %v122 = vsub.f32 %v25, %v106
      %v123 = vsub.f32 %v26, %v106
      %v124 = vsub.f32 %v27, %v107
      %v125 = vsub.f32 %v28, %v107
      %v126 = vsub.f32 %v29, %v108
      %v127 = vsub.f32 %v30, %v108
      %v128 = vsub.f32 %v31, %v109
      %v129 = vsub.f32 %v32, %v109
      %v130 = vsub.f32 %v33, %v110
      %v131 = vsub.f32 %v34, %v110
      %v132 = vsub.f32 %v35, %v111
      %v133 = vsub.f32 %v36, %v111
      %v134 = vsub.f32 %v37, %v112
      %v135 = vsub.f32 %v38, %v112
      %v136 = vsub.f32 %v39, %v113
      %v137 = vsub.f32 %v40, %v113
      %v138 = vsub.f32 %v41, %v114
      %v139 = vsub.f32 %v42, %v114
      %v140 = vsub.f32 %v43, %v115
      %v141 = vsub.f32 %v44, %v115
      %v142 = vsub.f32 %v45, %v116
      %v143 = vsub.f32 %v46, %v116
      %v144 = vsub.f32 %v47, %v117
      %v145 = vsub.f32 %v48, %v117
      %v146 = vsub.f32 %v49, %v118
      %v147 = vsub.f32 %v50, %v118
      %v148 = vsub.f32 %v51, %v119
      %v149 = vsub.f32 %v52, %v119
      %v150 = vsub.f32 %v53, %v120
      %v151 = vsub.f32 %v54, %v120
      %v152 = vsub.f32 %v55, %v121
      %v153 = vsub.f32 %v56, %v121
      %v154 = vmul.f32 %v122, %v122
      %v155 = vmul.f32 %v123, %v123
      %v156 = vmul.f32 %v124, %v124
      %v157 = vmul.f32 %v125, %v125
      %v158 = vmul.f32 %v126, %v126
      %v159 = vmul.f32 %v127, %v127
      %v160 = vmul.f32 %v128, %v128
      %v161 = vmul.f32 %v129, %v129
      %v162 = vmul.f32 %v130, %v130
      %v163 = vmul.f32 %v131, %v131
      %v164 = vmul.f32 %v132, %v132
      %v165 = vmul.f32 %v133, %v133
      %v166 = vmul.f32 %v134, %v134
      %v167 = vmul.f32 %v135, %v135
      %v168 = vmul.f32 %v136, %v136
      %v169 = vmul.f32 %v137, %v137
      %v170 = vmul.f32 %v138, %v138
      %v171 = vmul.f32 %v139, %v139
      %v172 = vmul.f32 %v140, %v140
      %v173 = vmul.f32 %v141, %v141
      %v174 = vmul.f32 %v142, %v142
      %v175 = vmul.f32 %v143, %v143
      %v176 = vmul.f32 %v144, %v144
      %v177 = vmul.f32 %v145, %v145
      %v178 = vmul.f32 %v146, %v146
      %v179 = vmul.f32 %v147, %v147
      %v180 = vmul.f32 %v148, %v148
      %v181 = vmul.f32 %v149, %v149
      %v182 = vmul.f32 %v150, %v150
      %v183 = vmul.f32 %v151, %v151
      %v184 = vmul.f32 %v152, %v152
      %v185 = vmul.f32 %v153, %v153
      %v186 = vadd.f32 %v154, %v155
      %187 = vadd.xlane.f32.xlu0 %v186
      %v188 = vpop.xlane.xlu0 %187
      %v189 = vadd.f32 %v156, %v157
      %190 = vadd.xlane.f32.xlu0 %v189
      %v191 = vpop.xlane.xlu0 %190
      %v192 = vadd.f32 %v158, %v159
      %193 = vadd.xlane.f32.xlu0 %v192
      %v194 = vpop.xlane.xlu0 %193
      %v195 = vadd.f32 %v160, %v161
      %196 = vadd.xlane.f32.xlu0 %v195
      %v197 = vpop.xlane.xlu0 %196
      %v198 = vadd.f32 %v162, %v163
      %199 = vadd.xlane.f32.xlu0 %v198
      %v200 = vpop.xlane.xlu0 %199
      %v201 = vadd.f32 %v164, %v165
      %202 = vadd.xlane.f32.xlu0 %v201
      %v203 = vpop.xlane.xlu0 %202
      %v204 = vadd.f32 %v166, %v167
      %205 = vadd.xlane.f32.xlu0 %v204
      %v206 = vpop.xlane.xlu0 %205
      %v207 = vadd.f32 %v168, %v169
      %208 = vadd.xlane.f32.xlu0 %v207
      %v209 = vpop.xlane.xlu0 %208
      %v210 = vadd.f32 %v170, %v171
      %211 = vadd.xlane.f32.xlu0 %v210
      %v212 = vpop.xlane.xlu0 %211
      %v213 = vadd.f32 %v172, %v173
      %214 = vadd.xlane.f32.xlu0 %v213
      %v215 = vpop.xlane.xlu0 %214
      %v216 = vadd.f32 %v174, %v175
      %217 = vadd.xlane.f32.xlu0 %v216
      %v218 = vpop.xlane.xlu0 %217
      %v219 = vadd.f32 %v176, %v177
      %220 = vadd.xlane.f32.xlu0 %v219
      %v221 = vpop.xlane.xlu0 %220
      %v222 = vadd.f32 %v178, %v179
      %223 = vadd.xlane.f32.xlu0 %v222
      %v224 = vpop.xlane.xlu0 %223
      %v225 = vadd.f32 %v180, %v181
      %226 = vadd.xlane.f32.xlu0 %v225
      %v227 = vpop.xlane.xlu0 %226
      %v228 = vadd.f32 %v182, %v183
      %229 = vadd.xlane.f32.xlu0 %v228
      %v230 = vpop.xlane.xlu0 %229
      %v231 = vadd.f32 %v184, %v185
      %232 = vadd.xlane.f32.xlu0 %v231
      %v233 = vpop.xlane.xlu0 %232
      %v234 = vmul.f32 %v188, %v105
      %v235 = vmul.f32 %v191, %v105
      %v236 = vmul.f32 %v194, %v105
      %v237 = vmul.f32 %v197, %v105
      %v238 = vmul.f32 %v200, %v105
      %v239 = vmul.f32 %v203, %v105
      %v240 = vmul.f32 %v206, %v105
      %v241 = vmul.f32 %v209, %v105
      %v242 = vmul.f32 %v212, %v105
      %v243 = vmul.f32 %v215, %v105
      %v244 = vmul.f32 %v218, %v105
      %v245 = vmul.f32 %v221, %v105
      %v246 = vmul.f32 %v224, %v105
      %v247 = vmul.f32 %v227, %v105
      %v248 = vmul.f32 %v230, %v105
      %v249 = vmul.f32 %v233, %v105
      %v250 = vadd.f32 %v234, 1e-05
      %v251 = vadd.f32 %v235, 1e-05
      %v252 = vadd.f32 %v236, 1e-05
      %v253 = vadd.f32 %v237, 1e-05
      %v254 = vadd.f32 %v238, 1e-05
      %v255 = vadd.f32 %v239, 1e-05
      %v256 = vadd.f32 %v240, 1e-05
      %v257 = vadd.f32 %v241, 1e-05
      %v258 = vadd.f32 %v242, 1e-05
      %v259 = vadd.f32 %v243, 1e-05
      %v260 = vadd.f32 %v244, 1e-05
      %v261 = vadd.f32 %v245, 1e-05
      %v262 = vadd.f32 %v246, 1e-05
      %v263 = vadd.f32 %v247, 1e-05
      %v264 = vadd.f32 %v248, 1e-05
      %v265 = vadd.f32 %v249, 1e-05
      %v266 = vrsqrt.pop %v250
      %v267 = vrsqrt.pop %v251
      %v268 = vrsqrt.pop %v252
      %v269 = vrsqrt.pop %v253
      %v270 = vrsqrt.pop %v254
      %v271 = vrsqrt.pop %v255
      %v272 = vrsqrt.pop %v256
      %v273 = vrsqrt.pop %v257
      %v274 = vrsqrt.pop %v258
      %v275 = vrsqrt.pop %v259
      %v276 = vrsqrt.pop %v260
      %v277 = vrsqrt.pop %v261
      %v278 = vrsqrt.pop %v262
      %v279 = vrsqrt.pop %v263
      %v280 = vrsqrt.pop %v264
      %v281 = vrsqrt.pop %v265
      %v282 = vmul.f32 %v122, %v266
      %v283 = vmul.f32 %v123, %v266
      %v284 = vmul.f32 %v124, %v267
      %v285 = vmul.f32 %v125, %v267
      %v286 = vmul.f32 %v126, %v268
      %v287 = vmul.f32 %v127, %v268
      %v288 = vmul.f32 %v128, %v269
      %v289 = vmul.f32 %v129, %v269
      %v290 = vmul.f32 %v130, %v270
      %v291 = vmul.f32 %v131, %v270
      %v292 = vmul.f32 %v132, %v271
      %v293 = vmul.f32 %v133, %v271
      %v294 = vmul.f32 %v134, %v272
      %v295 = vmul.f32 %v135, %v272
      %v296 = vmul.f32 %v136, %v273
      %v297 = vmul.f32 %v137, %v273
      %v298 = vmul.f32 %v138, %v274
      %v299 = vmul.f32 %v139, %v274
      %v300 = vmul.f32 %v140, %v275
      %v301 = vmul.f32 %v141, %v275
      %v302 = vmul.f32 %v142, %v276
      %v303 = vmul.f32 %v143, %v276
      %v304 = vmul.f32 %v144, %v277
      %v305 = vmul.f32 %v145, %v277
      %v306 = vmul.f32 %v146, %v278
      %v307 = vmul.f32 %v147, %v278
      %v308 = vmul.f32 %v148, %v279
      %v309 = vmul.f32 %v149, %v279
      %v310 = vmul.f32 %v150, %v280
      %v311 = vmul.f32 %v151, %v280
      %v312 = vmul.f32 %v152, %v281
      %v313 = vmul.f32 %v153, %v281
      %v314 = vld [vmem:[%s1] sm:$0x3]
      %v316 = vlaneseq
      %v317 = vshrl.u32 %v316, 7
      %v318 = vsub.s32 0, %v317
      %v319 = vrot.slane %v314, %v318
      %v320 = vlaneseq
      %v321 = vshrl.u32 %v320, 7
      %v322 = vsub.s32 1, %v321
      %v323 = vrot.slane %v314, %v322
      %v326 = vmul.f32 %v282, %v319
      %v327 = vmul.f32 %v283, %v323
      %v328 = vmul.f32 %v284, %v319
      %v329 = vmul.f32 %v285, %v323
      %v330 = vmul.f32 %v286, %v319
      %v331 = vmul.f32 %v287, %v323
      %v332 = vmul.f32 %v288, %v319
      %v333 = vmul.f32 %v289, %v323
      %v334 = vmul.f32 %v290, %v319
      %v335 = vmul.f32 %v291, %v323
      %v336 = vmul.f32 %v292, %v319
      %v337 = vmul.f32 %v293, %v323
      %v338 = vmul.f32 %v294, %v319
      %v339 = vmul.f32 %v295, %v323
      %v340 = vmul.f32 %v296, %v319
      %v341 = vmul.f32 %v297, %v323
      %v342 = vmul.f32 %v298, %v319
      %v343 = vmul.f32 %v299, %v323
      %v344 = vmul.f32 %v300, %v319
      %v345 = vmul.f32 %v301, %v323
      %v346 = vmul.f32 %v302, %v319
      %v347 = vmul.f32 %v303, %v323
      %v348 = vmul.f32 %v304, %v319
      %v349 = vmul.f32 %v305, %v323
      %v350 = vmul.f32 %v306, %v319
      %v351 = vmul.f32 %v307, %v323
      %v352 = vmul.f32 %v308, %v319
      %v353 = vmul.f32 %v309, %v323
      %v354 = vmul.f32 %v310, %v319
      %v355 = vmul.f32 %v311, %v323
      %v356 = vmul.f32 %v312, %v319
      %v357 = vmul.f32 %v313, %v323
      %v358 = vld [vmem:[%s2] sm:$0x3]
      %v360 = vlaneseq
      %v361 = vshrl.u32 %v360, 7
      %v362 = vsub.s32 0, %v361
      %v363 = vrot.slane %v358, %v362
      %v364 = vlaneseq
      %v365 = vshrl.u32 %v364, 7
      %v366 = vsub.s32 1, %v365
      %v367 = vrot.slane %v358, %v366
      %v370 = vadd.f32 %v326, %v363
      %v371 = vadd.f32 %v327, %v367
      %v372 = vadd.f32 %v328, %v363
      %v373 = vadd.f32 %v329, %v367
      %v374 = vadd.f32 %v330, %v363
      %v375 = vadd.f32 %v331, %v367
      %v376 = vadd.f32 %v332, %v363
      %v377 = vadd.f32 %v333, %v367
      %v378 = vadd.f32 %v334, %v363
      %v379 = vadd.f32 %v335, %v367
      %v380 = vadd.f32 %v336, %v363
      %v381 = vadd.f32 %v337, %v367
      %v382 = vadd.f32 %v338, %v363
      %v383 = vadd.f32 %v339, %v367
      %v384 = vadd.f32 %v340, %v363
      %v385 = vadd.f32 %v341, %v367
      %v386 = vadd.f32 %v342, %v363
      %v387 = vadd.f32 %v343, %v367
      %v388 = vadd.f32 %v344, %v363
      %v389 = vadd.f32 %v345, %v367
      %v390 = vadd.f32 %v346, %v363
      %v391 = vadd.f32 %v347, %v367
      %v392 = vadd.f32 %v348, %v363
      %v393 = vadd.f32 %v349, %v367
      %v394 = vadd.f32 %v350, %v363
      %v395 = vadd.f32 %v351, %v367
      %v396 = vadd.f32 %v352, %v363
      %v397 = vadd.f32 %v353, %v367
      %v398 = vadd.f32 %v354, %v363
      %v399 = vadd.f32 %v355, %v367
      %v400 = vadd.f32 %v356, %v363
      %v401 = vadd.f32 %v357, %v367
      %402 = vst [vmem:[#allocation3] sm:$0xff] %v370
      %403 = vst [vmem:[#allocation3 + $0x8] sm:$0xff] %v371
      %404 = vst [vmem:[#allocation3 + $0x10] sm:$0xff] %v372
      %405 = vst [vmem:[#allocation3 + $0x18] sm:$0xff] %v373
      %406 = vst [vmem:[#allocation3 + $0x20] sm:$0xff] %v374
      %407 = vst [vmem:[#allocation3 + $0x28] sm:$0xff] %v375
      %408 = vst [vmem:[#allocation3 + $0x30] sm:$0xff] %v376
      %409 = vst [vmem:[#allocation3 + $0x38] sm:$0xff] %v377
      %410 = vst [vmem:[#allocation3 + $0x40] sm:$0xff] %v378
      %411 = vst [vmem:[#allocation3 + $0x48] sm:$0xff] %v379
      %412 = vst [vmem:[#allocation3 + $0x50] sm:$0xff] %v380
      %413 = vst [vmem:[#allocation3 + $0x58] sm:$0xff] %v381
      %414 = vst [vmem:[#allocation3 + $0x60] sm:$0xff] %v382
      %415 = vst [vmem:[#allocation3 + $0x68] sm:$0xff] %v383
      %416 = vst [vmem:[#allocation3 + $0x70] sm:$0xff] %v384
      %417 = vst [vmem:[#allocation3 + $0x78] sm:$0xff] %v385
      %418 = vst [vmem:[#allocation3 + $0x80] sm:$0xff] %v386
      %419 = vst [vmem:[#allocation3 + $0x88] sm:$0xff] %v387
      %420 = vst [vmem:[#allocation3 + $0x90] sm:$0xff] %v388
      %421 = vst [vmem:[#allocation3 + $0x98] sm:$0xff] %v389
      %422 = vst [vmem:[#allocation3 + $0xa0] sm:$0xff] %v390
      %423 = vst [vmem:[#allocation3 + $0xa8] sm:$0xff] %v391
      %424 = vst [vmem:[#allocation3 + $0xb0] sm:$0xff] %v392
      %425 = vst [vmem:[#allocation3 + $0xb8] sm:$0xff] %v393
      %426 = vst [vmem:[#allocation3 + $0xc0] sm:$0xff] %v394
      %427 = vst [vmem:[#allocation3 + $0xc8] sm:$0xff] %v395
      %428 = vst [vmem:[#allocation3 + $0xd0] sm:$0xff] %v396
      %429 = vst [vmem:[#allocation3 + $0xd8] sm:$0xff] %v397
      %430 = vst [vmem:[#allocation3 + $0xe0] sm:$0xff] %v398
      %431 = vst [vmem:[#allocation3 + $0xe8] sm:$0xff] %v399
      %432 = vst [vmem:[#allocation3 + $0xf0] sm:$0xff] %v400
      %433 = vst [vmem:[#allocation3 + $0xf8] sm:$0xff] %v401
      %v434 = vpack.c.bf16 %v372, %v370
      %v435 = vpack.c.bf16 %v373, %v371
      %v436 = vpack.c.bf16 %v376, %v374
      %v437 = vpack.c.bf16 %v377, %v375
      %v438 = vpack.c.bf16 %v380, %v378
      %v439 = vpack.c.bf16 %v381, %v379
      %v440 = vpack.c.bf16 %v384, %v382
      %v441 = vpack.c.bf16 %v385, %v383
      %v442 = vpack.c.bf16 %v388, %v386
      %v443 = vpack.c.bf16 %v389, %v387
      %v444 = vpack.c.bf16 %v392, %v390
      %v445 = vpack.c.bf16 %v393, %v391
      %v446 = vpack.c.bf16 %v396, %v394
      %v447 = vpack.c.bf16 %v397, %v395
      %v448 = vpack.c.bf16 %v400, %v398
      %v449 = vpack.c.bf16 %v401, %v399
      %v466 = vunpack.c.l.b16 %v434
      %v467 = vunpack.c.l.b16 %v435
      %v468 = vunpack.c.h.b16 %v434
      %v469 = vunpack.c.h.b16 %v435
      %v470 = vunpack.c.l.b16 %v436
      %v471 = vunpack.c.l.b16 %v437
      %v472 = vunpack.c.h.b16 %v436
      %v473 = vunpack.c.h.b16 %v437
      %v474 = vunpack.c.l.b16 %v438
      %v475 = vunpack.c.l.b16 %v439
      %v476 = vunpack.c.h.b16 %v438
      %v477 = vunpack.c.h.b16 %v439
      %v478 = vunpack.c.l.b16 %v440
      %v479 = vunpack.c.l.b16 %v441
      %v480 = vunpack.c.h.b16 %v440
      %v481 = vunpack.c.h.b16 %v441
      %v482 = vunpack.c.l.b16 %v442
      %v483 = vunpack.c.l.b16 %v443
      %v484 = vunpack.c.h.b16 %v442
      %v485 = vunpack.c.h.b16 %v443
      %v486 = vunpack.c.l.b16 %v444
      %v487 = vunpack.c.l.b16 %v445
      %v488 = vunpack.c.h.b16 %v444
      %v489 = vunpack.c.h.b16 %v445
      %v490 = vunpack.c.l.b16 %v446
      %v491 = vunpack.c.l.b16 %v447
      %v492 = vunpack.c.h.b16 %v446
      %v493 = vunpack.c.h.b16 %v447
      %v494 = vunpack.c.l.b16 %v448
      %v495 = vunpack.c.l.b16 %v449
      %v496 = vunpack.c.h.b16 %v448
      %v497 = vunpack.c.h.b16 %v449
      %v498 = vpack.c.b16 %v467, %v466
      %v499 = vpack.c.b16 %v469, %v468
      %v500 = vpack.c.b16 %v471, %v470
      %v501 = vpack.c.b16 %v473, %v472
      %v502 = vpack.c.b16 %v475, %v474
      %v503 = vpack.c.b16 %v477, %v476
      %v504 = vpack.c.b16 %v479, %v478
      %v505 = vpack.c.b16 %v481, %v480
      %v506 = vpack.c.b16 %v483, %v482
      %v507 = vpack.c.b16 %v485, %v484
      %v508 = vpack.c.b16 %v487, %v486
      %v509 = vpack.c.b16 %v489, %v488
      %v510 = vpack.c.b16 %v491, %v490
      %v511 = vpack.c.b16 %v493, %v492
      %v512 = vpack.c.b16 %v495, %v494
      %v513 = vpack.c.b16 %v497, %v496
      %530 = vst [vmem:[#allocation2] sm:$0xff] %v498
      %531 = vst [vmem:[#allocation2 + $0x8] sm:$0xff] %v499
      %532 = vst [vmem:[#allocation2 + $0x10] sm:$0xff] %v500
      %533 = vst [vmem:[#allocation2 + $0x18] sm:$0xff] %v501
      %534 = vst [vmem:[#allocation2 + $0x20] sm:$0xff] %v502
      %535 = vst [vmem:[#allocation2 + $0x28] sm:$0xff] %v503
      %536 = vst [vmem:[#allocation2 + $0x30] sm:$0xff] %v504
      %537 = vst [vmem:[#allocation2 + $0x38] sm:$0xff] %v505
      %538 = vst [vmem:[#allocation2 + $0x40] sm:$0xff] %v506
      %539 = vst [vmem:[#allocation2 + $0x48] sm:$0xff] %v507
      %540 = vst [vmem:[#allocation2 + $0x50] sm:$0xff] %v508
      %541 = vst [vmem:[#allocation2 + $0x58] sm:$0xff] %v509
      %542 = vst [vmem:[#allocation2 + $0x60] sm:$0xff] %v510
      %543 = vst [vmem:[#allocation2 + $0x68] sm:$0xff] %v511
      %544 = vst [vmem:[#allocation2 + $0x70] sm:$0xff] %v512
      %545 = vst [vmem:[#allocation2 + $0x78] sm:$0xff] %v513
    $region21: #{policy_network_forward.17} parent=1 // pred_fallthru
      _
    %v546 = vld [vmem:[#allocation2] sm:$0xff]
    %v547 = vld [vmem:[#allocation2 + $0x8] sm:$0xff]
    %v548 = vld [vmem:[#allocation2 + $0x10] sm:$0xff]
    %v549 = vld [vmem:[#allocation2 + $0x18] sm:$0xff]
    %v550 = vld [vmem:[#allocation2 + $0x20] sm:$0xff]
    %v551 = vld [vmem:[#allocation2 + $0x28] sm:$0xff]
    %v552 = vld [vmem:[#allocation2 + $0x30] sm:$0xff]
    %v553 = vld [vmem:[#allocation2 + $0x38] sm:$0xff]
    %v554 = vld [vmem:[#allocation2 + $0x40] sm:$0xff]
    %v555 = vld [vmem:[#allocation2 + $0x48] sm:$0xff]
    %v556 = vld [vmem:[#allocation2 + $0x50] sm:$0xff]
    %v557 = vld [vmem:[#allocation2 + $0x58] sm:$0xff]
    %v558 = vld [vmem:[#allocation2 + $0x60] sm:$0xff]
    %v559 = vld [vmem:[#allocation2 + $0x68] sm:$0xff]
    %v560 = vld [vmem:[#allocation2 + $0x70] sm:$0xff]
    %v561 = vld [vmem:[#allocation2 + $0x78] sm:$0xff]
    %v562 = vld [vmem:[%s3] sm:$0xff]
    %v563 = vld [vmem:[%s3 + $0x8] sm:$0xff]
    %v564 = vld [vmem:[%s3 + $0x10] sm:$0xff]
    %v565 = vld [vmem:[%s3 + $0x18] sm:$0xff]
    %v566 = vld [vmem:[%s3 + $0x20] sm:$0xff]
    %v567 = vld [vmem:[%s3 + $0x28] sm:$0xff]
    %v568 = vld [vmem:[%s3 + $0x30] sm:$0xff]
    %v569 = vld [vmem:[%s3 + $0x38] sm:$0xff]
    %v570 = vld [vmem:[%s3 + $0x40] sm:$0xff]
    %v571 = vld [vmem:[%s3 + $0x48] sm:$0xff]
    %v572 = vld [vmem:[%s3 + $0x50] sm:$0xff]
    %v573 = vld [vmem:[%s3 + $0x58] sm:$0xff]
    %v574 = vld [vmem:[%s3 + $0x60] sm:$0xff]
    %v575 = vld [vmem:[%s3 + $0x68] sm:$0xff]
    %v576 = vld [vmem:[%s3 + $0x70] sm:$0xff]
    %v577 = vld [vmem:[%s3 + $0x78] sm:$0xff]
    %v578 = vld [vmem:[%s3 + $0x80] sm:$0xff]
    %v579 = vld [vmem:[%s3 + $0x88] sm:$0xff]
    %v580 = vld [vmem:[%s3 + $0x90] sm:$0xff]
    %v581 = vld [vmem:[%s3 + $0x98] sm:$0xff]
    %v582 = vld [vmem:[%s3 + $0xa0] sm:$0xff]
    %v583 = vld [vmem:[%s3 + $0xa8] sm:$0xff]
    %v584 = vld [vmem:[%s3 + $0xb0] sm:$0xff]
    %v585 = vld [vmem:[%s3 + $0xb8] sm:$0xff]
    %v586 = vld [vmem:[%s3 + $0xc0] sm:$0xff]
    %v587 = vld [vmem:[%s3 + $0xc8] sm:$0xff]
    %v588 = vld [vmem:[%s3 + $0xd0] sm:$0xff]
    %v589 = vld [vmem:[%s3 + $0xd8] sm:$0xff]
    %v590 = vld [vmem:[%s3 + $0xe0] sm:$0xff]
    %v591 = vld [vmem:[%s3 + $0xe8] sm:$0xff]
    %v592 = vld [vmem:[%s3 + $0xf0] sm:$0xff]
    %v593 = vld [vmem:[%s3 + $0xf8] sm:$0xff]
    %v594 = vld [vmem:[%s3 + $0x100] sm:$0xff]
    %v595 = vld [vmem:[%s3 + $0x108] sm:$0xff]
    %v596 = vld [vmem:[%s3 + $0x110] sm:$0xff]
    %v597 = vld [vmem:[%s3 + $0x118] sm:$0xff]
    %v598 = vld [vmem:[%s3 + $0x120] sm:$0xff]
    %v599 = vld [vmem:[%s3 + $0x128] sm:$0xff]
    %v600 = vld [vmem:[%s3 + $0x130] sm:$0xff]
    %v601 = vld [vmem:[%s3 + $0x138] sm:$0xff]
    %v602 = vld [vmem:[%s3 + $0x140] sm:$0xff]
    %v603 = vld [vmem:[%s3 + $0x148] sm:$0xff]
    %v604 = vld [vmem:[%s3 + $0x150] sm:$0xff]
    %v605 = vld [vmem:[%s3 + $0x158] sm:$0xff]
    %v606 = vld [vmem:[%s3 + $0x160] sm:$0xff]
    %v607 = vld [vmem:[%s3 + $0x168] sm:$0xff]
    %v608 = vld [vmem:[%s3 + $0x170] sm:$0xff]
    %v609 = vld [vmem:[%s3 + $0x178] sm:$0xff]
    %v610 = vld [vmem:[%s3 + $0x180] sm:$0xff]
    %v611 = vld [vmem:[%s3 + $0x188] sm:$0xff]
    %v612 = vld [vmem:[%s3 + $0x190] sm:$0xff]
    %v613 = vld [vmem:[%s3 + $0x198] sm:$0xff]
    %v614 = vld [vmem:[%s3 + $0x1a0] sm:$0xff]
    %v615 = vld [vmem:[%s3 + $0x1a8] sm:$0xff]
    %v616 = vld [vmem:[%s3 + $0x1b0] sm:$0xff]
    %v617 = vld [vmem:[%s3 + $0x1b8] sm:$0xff]
    %v618 = vld [vmem:[%s3 + $0x1c0] sm:$0xff]
    %v619 = vld [vmem:[%s3 + $0x1c8] sm:$0xff]
    %v620 = vld [vmem:[%s3 + $0x1d0] sm:$0xff]
    %v621 = vld [vmem:[%s3 + $0x1d8] sm:$0xff]
    %v622 = vld [vmem:[%s3 + $0x1e0] sm:$0xff]
    %v623 = vld [vmem:[%s3 + $0x1e8] sm:$0xff]
    %v624 = vld [vmem:[%s3 + $0x1f0] sm:$0xff]
    %v625 = vld [vmem:[%s3 + $0x1f8] sm:$0xff]
    %v642 = vunpack.c.l.b16 %v546
    %v643 = vunpack.c.h.b16 %v546
    %v644 = vunpack.c.l.b16 %v547
    %v645 = vunpack.c.h.b16 %v547
    %v646 = vunpack.c.l.b16 %v548
    %v647 = vunpack.c.h.b16 %v548
    %v648 = vunpack.c.l.b16 %v549
    %v649 = vunpack.c.h.b16 %v549
    %v650 = vunpack.c.l.b16 %v550
    %v651 = vunpack.c.h.b16 %v550
    %v652 = vunpack.c.l.b16 %v551
    %v653 = vunpack.c.h.b16 %v551
    %v654 = vunpack.c.l.b16 %v552
    %v655 = vunpack.c.h.b16 %v552
    %v656 = vunpack.c.l.b16 %v553
    %v657 = vunpack.c.h.b16 %v553
    %v658 = vunpack.c.l.b16 %v554
    %v659 = vunpack.c.h.b16 %v554
    %v660 = vunpack.c.l.b16 %v555
    %v661 = vunpack.c.h.b16 %v555
    %v662 = vunpack.c.l.b16 %v556
    %v663 = vunpack.c.h.b16 %v556
    %v664 = vunpack.c.l.b16 %v557
    %v665 = vunpack.c.h.b16 %v557
    %v666 = vunpack.c.l.b16 %v558
    %v667 = vunpack.c.h.b16 %v558
    %v668 = vunpack.c.l.b16 %v559
    %v669 = vunpack.c.h.b16 %v559
    %v670 = vunpack.c.l.b16 %v560
    %v671 = vunpack.c.h.b16 %v560
    %v672 = vunpack.c.l.b16 %v561
    %v673 = vunpack.c.h.b16 %v561
    %v674 = vpack.c.b16 %v644, %v642
    %v675 = vpack.c.b16 %v645, %v643
    %v676 = vpack.c.b16 %v648, %v646
    %v677 = vpack.c.b16 %v649, %v647
    %v678 = vpack.c.b16 %v652, %v650
    %v679 = vpack.c.b16 %v653, %v651
    %v680 = vpack.c.b16 %v656, %v654
    %v681 = vpack.c.b16 %v657, %v655
    %v682 = vpack.c.b16 %v660, %v658
    %v683 = vpack.c.b16 %v661, %v659
    %v684 = vpack.c.b16 %v664, %v662
    %v685 = vpack.c.b16 %v665, %v663
    %v686 = vpack.c.b16 %v668, %v666
    %v687 = vpack.c.b16 %v669, %v667
    %v688 = vpack.c.b16 %v672, %v670
    %v689 = vpack.c.b16 %v673, %v671
    %v770 = vunpack.c.l.b16 %v562
    %v771 = vunpack.c.h.b16 %v562
    %v772 = vunpack.c.l.b16 %v563
    %v773 = vunpack.c.h.b16 %v563
    %v774 = vunpack.c.l.b16 %v564
    %v775 = vunpack.c.h.b16 %v564
    %v776 = vunpack.c.l.b16 %v565
    %v777 = vunpack.c.h.b16 %v565
    %v778 = vunpack.c.l.b16 %v566
    %v779 = vunpack.c.h.b16 %v566
    %v780 = vunpack.c.l.b16 %v567
    %v781 = vunpack.c.h.b16 %v567
    %v782 = vunpack.c.l.b16 %v568
    %v783 = vunpack.c.h.b16 %v568
    %v784 = vunpack.c.l.b16 %v569
    %v785 = vunpack.c.h.b16 %v569
    %v786 = vunpack.c.l.b16 %v570
    %v787 = vunpack.c.h.b16 %v570
    %v788 = vunpack.c.l.b16 %v571
    %v789 = vunpack.c.h.b16 %v571
    %v790 = vunpack.c.l.b16 %v572
    %v791 = vunpack.c.h.b16 %v572
    %v792 = vunpack.c.l.b16 %v573
    %v793 = vunpack.c.h.b16 %v573
    %v794 = vunpack.c.l.b16 %v574
    %v795 = vunpack.c.h.b16 %v574
    %v796 = vunpack.c.l.b16 %v575
    %v797 = vunpack.c.h.b16 %v575
    %v798 = vunpack.c.l.b16 %v576
    %v799 = vunpack.c.h.b16 %v576
    %v800 = vunpack.c.l.b16 %v577
    %v801 = vunpack.c.h.b16 %v577
    %v802 = vunpack.c.l.b16 %v578
    %v803 = vunpack.c.h.b16 %v578
    %v804 = vunpack.c.l.b16 %v579
    %v805 = vunpack.c.h.b16 %v579
    %v806 = vunpack.c.l.b16 %v580
    %v807 = vunpack.c.h.b16 %v580
    %v808 = vunpack.c.l.b16 %v581
    %v809 = vunpack.c.h.b16 %v581
    %v810 = vunpack.c.l.b16 %v582
    %v811 = vunpack.c.h.b16 %v582
    %v812 = vunpack.c.l.b16 %v583
    %v813 = vunpack.c.h.b16 %v583
    %v814 = vunpack.c.l.b16 %v584
    %v815 = vunpack.c.h.b16 %v584
    %v816 = vunpack.c.l.b16 %v585
    %v817 = vunpack.c.h.b16 %v585
    %v818 = vunpack.c.l.b16 %v586
    %v819 = vunpack.c.h.b16 %v586
    %v820 = vunpack.c.l.b16 %v587
    %v821 = vunpack.c.h.b16 %v587
    %v822 = vunpack.c.l.b16 %v588
    %v823 = vunpack.c.h.b16 %v588
    %v824 = vunpack.c.l.b16 %v589
    %v825 = vunpack.c.h.b16 %v589
    %v826 = vunpack.c.l.b16 %v590
    %v827 = vunpack.c.h.b16 %v590
    %v828 = vunpack.c.l.b16 %v591
    %v829 = vunpack.c.h.b16 %v591
    %v830 = vunpack.c.l.b16 %v592
    %v831 = vunpack.c.h.b16 %v592
    %v832 = vunpack.c.l.b16 %v593
    %v833 = vunpack.c.h.b16 %v593
    %v834 = vunpack.c.l.b16 %v594
    %v835 = vunpack.c.h.b16 %v594
    %v836 = vunpack.c.l.b16 %v595
    %v837 = vunpack.c.h.b16 %v595
    %v838 = vunpack.c.l.b16 %v596
    %v839 = vunpack.c.h.b16 %v596
    %v840 = vunpack.c.l.b16 %v597
    %v841 = vunpack.c.h.b16 %v597
    %v842 = vunpack.c.l.b16 %v598
    %v843 = vunpack.c.h.b16 %v598
    %v844 = vunpack.c.l.b16 %v599
    %v845 = vunpack.c.h.b16 %v599
    %v846 = vunpack.c.l.b16 %v600
    %v847 = vunpack.c.h.b16 %v600
    %v848 = vunpack.c.l.b16 %v601
    %v849 = vunpack.c.h.b16 %v601
    %v850 = vunpack.c.l.b16 %v602
    %v851 = vunpack.c.h.b16 %v602
    %v852 = vunpack.c.l.b16 %v603
    %v853 = vunpack.c.h.b16 %v603
    %v854 = vunpack.c.l.b16 %v604
    %v855 = vunpack.c.h.b16 %v604
    %v856 = vunpack.c.l.b16 %v605
    %v857 = vunpack.c.h.b16 %v605
    %v858 = vunpack.c.l.b16 %v606
    %v859 = vunpack.c.h.b16 %v606
    %v860 = vunpack.c.l.b16 %v607
    %v861 = vunpack.c.h.b16 %v607
    %v862 = vunpack.c.l.b16 %v608
    %v863 = vunpack.c.h.b16 %v608
    %v864 = vunpack.c.l.b16 %v609
    %v865 = vunpack.c.h.b16 %v609
    %v866 = vunpack.c.l.b16 %v610
    %v867 = vunpack.c.h.b16 %v610
    %v868 = vunpack.c.l.b16 %v611
    %v869 = vunpack.c.h.b16 %v611
    %v870 = vunpack.c.l.b16 %v612
    %v871 = vunpack.c.h.b16 %v612
    %v872 = vunpack.c.l.b16 %v613
    %v873 = vunpack.c.h.b16 %v613
    %v874 = vunpack.c.l.b16 %v614
    %v875 = vunpack.c.h.b16 %v614
    %v876 = vunpack.c.l.b16 %v615
    %v877 = vunpack.c.h.b16 %v615
    %v878 = vunpack.c.l.b16 %v616
    %v879 = vunpack.c.h.b16 %v616
    %v880 = vunpack.c.l.b16 %v617
    %v881 = vunpack.c.h.b16 %v617
    %v882 = vunpack.c.l.b16 %v618
    %v883 = vunpack.c.h.b16 %v618
    %v884 = vunpack.c.l.b16 %v619
    %v885 = vunpack.c.h.b16 %v619
    %v886 = vunpack.c.l.b16 %v620
    %v887 = vunpack.c.h.b16 %v620
    %v888 = vunpack.c.l.b16 %v621
    %v889 = vunpack.c.h.b16 %v621
    %v890 = vunpack.c.l.b16 %v622
    %v891 = vunpack.c.h.b16 %v622
    %v892 = vunpack.c.l.b16 %v623
    %v893 = vunpack.c.h.b16 %v623
    %v894 = vunpack.c.l.b16 %v624
    %v895 = vunpack.c.h.b16 %v624
    %v896 = vunpack.c.l.b16 %v625
    %v897 = vunpack.c.h.b16 %v625
    %v898 = vpack.c.b16 %v774, %v770
    %v899 = vpack.c.b16 %v775, %v771
    %v900 = vpack.c.b16 %v776, %v772
    %v901 = vpack.c.b16 %v777, %v773
    %v902 = vpack.c.b16 %v782, %v778
    %v903 = vpack.c.b16 %v783, %v779
    %v904 = vpack.c.b16 %v784, %v780
    %v905 = vpack.c.b16 %v785, %v781
    %v906 = vpack.c.b16 %v790, %v786
    %v907 = vpack.c.b16 %v791, %v787
    %v908 = vpack.c.b16 %v792, %v788
    %v909 = vpack.c.b16 %v793, %v789
    %v910 = vpack.c.b16 %v798, %v794
    %v911 = vpack.c.b16 %v799, %v795
    %v912 = vpack.c.b16 %v800, %v796
    %v913 = vpack.c.b16 %v801, %v797
    %v914 = vpack.c.b16 %v806, %v802
    %v915 = vpack.c.b16 %v807, %v803
    %v916 = vpack.c.b16 %v808, %v804
    %v917 = vpack.c.b16 %v809, %v805
    %v918 = vpack.c.b16 %v814, %v810
    %v919 = vpack.c.b16 %v815, %v811
    %v920 = vpack.c.b16 %v816, %v812
    %v921 = vpack.c.b16 %v817, %v813
    %v922 = vpack.c.b16 %v822, %v818
    %v923 = vpack.c.b16 %v823, %v819
    %v924 = vpack.c.b16 %v824, %v820
    %v925 = vpack.c.b16 %v825, %v821
    %v926 = vpack.c.b16 %v830, %v826
    %v927 = vpack.c.b16 %v831, %v827
    %v928 = vpack.c.b16 %v832, %v828
    %v929 = vpack.c.b16 %v833, %v829
    %v930 = vpack.c.b16 %v838, %v834
    %v931 = vpack.c.b16 %v839, %v835
    %v932 = vpack.c.b16 %v840, %v836
    %v933 = vpack.c.b16 %v841, %v837
    %v934 = vpack.c.b16 %v846, %v842
    %v935 = vpack.c.b16 %v847, %v843
    %v936 = vpack.c.b16 %v848, %v844
    %v937 = vpack.c.b16 %v849, %v845
    %v938 = vpack.c.b16 %v854, %v850
    %v939 = vpack.c.b16 %v855, %v851
    %v940 = vpack.c.b16 %v856, %v852
    %v941 = vpack.c.b16 %v857, %v853
    %v942 = vpack.c.b16 %v862, %v858
    %v943 = vpack.c.b16 %v863, %v859
    %v944 = vpack.c.b16 %v864, %v860
    %v945 = vpack.c.b16 %v865, %v861
    %v946 = vpack.c.b16 %v870, %v866
    %v947 = vpack.c.b16 %v871, %v867
    %v948 = vpack.c.b16 %v872, %v868
    %v949 = vpack.c.b16 %v873, %v869
    %v950 = vpack.c.b16 %v878, %v874
    %v951 = vpack.c.b16 %v879, %v875
    %v952 = vpack.c.b16 %v880, %v876
    %v953 = vpack.c.b16 %v881, %v877
    %v954 = vpack.c.b16 %v886, %v882
    %v955 = vpack.c.b16 %v887, %v883
    %v956 = vpack.c.b16 %v888, %v884
    %v957 = vpack.c.b16 %v889, %v885
    %v958 = vpack.c.b16 %v894, %v890
    %v959 = vpack.c.b16 %v895, %v891
    %v960 = vpack.c.b16 %v896, %v892
    %v961 = vpack.c.b16 %v897, %v893
    %1026 = vmatprep.subr.bf16.mxu0 %v927
    %1027 = vmatpush1.bf16.msra.mxu0 %v926
    %1028 = vmatprep.subr.bf16.mxu0 %v923
    %1029 = vmatpush1.bf16.msra.mxu0 %v922
    %1030 = vmatprep.subr.bf16.mxu0 %v919
    %1031 = vmatpush1.bf16.msra.mxu0 %v918
    %1032 = vmatprep.subr.bf16.mxu0 %v915
    %1033 = vmatpush1.bf16.msra.mxu0 %v914
    %1034 = vmatprep.subr.bf16.mxu0 %v911
    %1035 = vmatpush1.bf16.msra.mxu0 %v910
    %1036 = vmatprep.subr.bf16.mxu0 %v907
    %1037 = vmatpush1.bf16.msra.mxu0 %v906
    %1038 = vmatprep.subr.bf16.mxu0 %v903
    %1039 = vmatpush1.bf16.msra.mxu0 %v902
    %1040 = vmatprep.subr.bf16.mxu0 %v899
    %1041 = vmatpush1.bf16.msra.mxu0 %v898
    %1042 = vmatprep.subr.bf16.mxu0 %v959
    %1043 = vmatpush2.bf16.msra.mxu0 %v958
    %1044 = vmatprep.subr.bf16.mxu0 %v955
    %1045 = vmatpush2.bf16.msra.mxu0 %v954
    %1046 = vmatprep.subr.bf16.mxu0 %v951
    %1047 = vmatpush2.bf16.msra.mxu0 %v950
    %1048 = vmatprep.subr.bf16.mxu0 %v947
    %1049 = vmatpush2.bf16.msra.mxu0 %v946
    %1050 = vmatprep.subr.bf16.mxu0 %v943
    %1051 = vmatpush2.bf16.msra.mxu0 %v942
    %1052 = vmatprep.subr.bf16.mxu0 %v939
    %1053 = vmatpush2.bf16.msra.mxu0 %v938
    %1054 = vmatprep.subr.bf16.mxu0 %v935
    %1055 = vmatpush2.bf16.msra.mxu0 %v934
    %1056 = vmatprep.subr.bf16.mxu0 %v931
    %1057 = vmatpush2.bf16.msra.mxu0 %v930
    %1058 = vmatprep.mubr.bf16.mxu0 %v675
    %1059 = vmatmul.mubr.bf16.gmra.mxu0 %v674
    %v1060 = vpop.f32.mrf.mxu0
    %v1061 = vadd.f32 0.0, %v1060
    %v1062 = vpop.f32.mrf.mxu0
    %v1063 = vadd.f32 0.0, %v1062
    %v1064 = vpop.f32.mrf.mxu0
    %v1065 = vadd.f32 0.0, %v1064
    %v1066 = vpop.f32.mrf.mxu0
    %v1067 = vadd.f32 0.0, %v1066
    %1068 = vmatprep.mubr.bf16.mxu0 %v677
    %1069 = vmatmul.mubr.bf16.gmra.mxu0 %v676
    %v1070 = vpop.f32.mrf.mxu0
    %v1071 = vadd.f32 0.0, %v1070
    %v1072 = vpop.f32.mrf.mxu0
    %v1073 = vadd.f32 0.0, %v1072
    %v1074 = vpop.f32.mrf.mxu0
    %v1075 = vadd.f32 0.0, %v1074
    %v1076 = vpop.f32.mrf.mxu0
    %v1077 = vadd.f32 0.0, %v1076
    %1078 = vmatprep.mubr.bf16.mxu0 %v679
    %1079 = vmatmul.mubr.bf16.gmra.mxu0 %v678
    %v1080 = vpop.f32.mrf.mxu0
    %v1081 = vadd.f32 0.0, %v1080
    %v1082 = vpop.f32.mrf.mxu0
    %v1083 = vadd.f32 0.0, %v1082
    %v1084 = vpop.f32.mrf.mxu0
    %v1085 = vadd.f32 0.0, %v1084
    %v1086 = vpop.f32.mrf.mxu0
    %v1087 = vadd.f32 0.0, %v1086
    %1088 = vmatprep.mubr.bf16.mxu0 %v681
    %1089 = vmatmul.mubr.bf16.gmra.mxu0 %v680
    %v1090 = vpop.f32.mrf.mxu0
    %v1091 = vadd.f32 0.0, %v1090
    %v1092 = vpop.f32.mrf.mxu0
    %v1093 = vadd.f32 0.0, %v1092
    %v1094 = vpop.f32.mrf.mxu0
    %v1095 = vadd.f32 0.0, %v1094
    %v1096 = vpop.f32.mrf.mxu0
    %v1097 = vadd.f32 0.0, %v1096
    %1098 = vmatprep.mubr.bf16.mxu0 %v683
    %1099 = vmatmul.mubr.bf16.gmra.mxu0 %v682
    %v1100 = vpop.f32.mrf.mxu0
    %v1101 = vadd.f32 0.0, %v1100
    %v1102 = vpop.f32.mrf.mxu0
    %v1103 = vadd.f32 0.0, %v1102
    %v1104 = vpop.f32.mrf.mxu0
    %v1105 = vadd.f32 0.0, %v1104
    %v1106 = vpop.f32.mrf.mxu0
    %v1107 = vadd.f32 0.0, %v1106
    %1108 = vmatprep.mubr.bf16.mxu0 %v685
    %1109 = vmatmul.mubr.bf16.gmra.mxu0 %v684
    %v1110 = vpop.f32.mrf.mxu0
    %v1111 = vadd.f32 0.0, %v1110
    %v1112 = vpop.f32.mrf.mxu0
    %v1113 = vadd.f32 0.0, %v1112
    %v1114 = vpop.f32.mrf.mxu0
    %v1115 = vadd.f32 0.0, %v1114
    %v1116 = vpop.f32.mrf.mxu0
    %v1117 = vadd.f32 0.0, %v1116
    %1118 = vmatprep.mubr.bf16.mxu0 %v687
    %1119 = vmatmul.mubr.bf16.gmra.mxu0 %v686
    %v1120 = vpop.f32.mrf.mxu0
    %v1121 = vadd.f32 0.0, %v1120
    %v1122 = vpop.f32.mrf.mxu0
    %v1123 = vadd.f32 0.0, %v1122
    %v1124 = vpop.f32.mrf.mxu0
    %v1125 = vadd.f32 0.0, %v1124
    %v1126 = vpop.f32.mrf.mxu0
    %v1127 = vadd.f32 0.0, %v1126
    %1128 = vmatprep.mubr.bf16.mxu0 %v689
    %1129 = vmatmul.mubr.bf16.gmra.mxu0 %v688
    %v1130 = vpop.f32.mrf.mxu0
    %v1131 = vadd.f32 0.0, %v1130
    %v1132 = vpop.f32.mrf.mxu0
    %v1133 = vadd.f32 0.0, %v1132
    %v1134 = vpop.f32.mrf.mxu0
    %v1135 = vadd.f32 0.0, %v1134
    %v1136 = vpop.f32.mrf.mxu0
    %v1137 = vadd.f32 0.0, %v1136
    %1138 = vdwg.mxu0
    %1139 = vmatprep.subr.bf16.mxu0 %v929
    %1140 = vmatpush1.bf16.msra.mxu0 %v928
    %1141 = vmatprep.subr.bf16.mxu0 %v925
    %1142 = vmatpush1.bf16.msra.mxu0 %v924
    %1143 = vmatprep.subr.bf16.mxu0 %v921
    %1144 = vmatpush1.bf16.msra.mxu0 %v920
    %1145 = vmatprep.subr.bf16.mxu0 %v917
    %1146 = vmatpush1.bf16.msra.mxu0 %v916
    %1147 = vmatprep.subr.bf16.mxu0 %v913
    %1148 = vmatpush1.bf16.msra.mxu0 %v912
    %1149 = vmatprep.subr.bf16.mxu0 %v909
    %1150 = vmatpush1.bf16.msra.mxu0 %v908
    %1151 = vmatprep.subr.bf16.mxu0 %v905
    %1152 = vmatpush1.bf16.msra.mxu0 %v904
    %1153 = vmatprep.subr.bf16.mxu0 %v901
    %1154 = vmatpush1.bf16.msra.mxu0 %v900
    %1155 = vmatprep.subr.bf16.mxu0 %v961
    %1156 = vmatpush2.bf16.msra.mxu0 %v960
    %1157 = vmatprep.subr.bf16.mxu0 %v957
    %1158 = vmatpush2.bf16.msra.mxu0 %v956
    %1159 = vmatprep.subr.bf16.mxu0 %v953
    %1160 = vmatpush2.bf16.msra.mxu0 %v952
    %1161 = vmatprep.subr.bf16.mxu0 %v949
    %1162 = vmatpush2.bf16.msra.mxu0 %v948
    %1163 = vmatprep.subr.bf16.mxu0 %v945
    %1164 = vmatpush2.bf16.msra.mxu0 %v944
    %1165 = vmatprep.subr.bf16.mxu0 %v941
    %1166 = vmatpush2.bf16.msra.mxu0 %v940
    %1167 = vmatprep.subr.bf16.mxu0 %v937
    %1168 = vmatpush2.bf16.msra.mxu0 %v936
    %1169 = vmatprep.subr.bf16.mxu0 %v933
    %1170 = vmatpush2.bf16.msra.mxu0 %v932
    %1171 = vmatprep.mubr.bf16.mxu0 %v675
    %1172 = vmatmul.mubr.bf16.gmra.mxu0 %v674
    %v1173 = vpop.f32.mrf.mxu0
    %v1174 = vadd.f32 0.0, %v1173
    %v1175 = vpop.f32.mrf.mxu0
    %v1176 = vadd.f32 0.0, %v1175
    %v1177 = vpop.f32.mrf.mxu0
    %v1178 = vadd.f32 0.0, %v1177
    %v1179 = vpop.f32.mrf.mxu0
    %v1180 = vadd.f32 0.0, %v1179
    %1181 = vmatprep.mubr.bf16.mxu0 %v677
    %1182 = vmatmul.mubr.bf16.gmra.mxu0 %v676
    %v1183 = vpop.f32.mrf.mxu0
    %v1184 = vadd.f32 0.0, %v1183
    %v1185 = vpop.f32.mrf.mxu0
    %v1186 = vadd.f32 0.0, %v1185
    %v1187 = vpop.f32.mrf.mxu0
    %v1188 = vadd.f32 0.0, %v1187
    %v1189 = vpop.f32.mrf.mxu0
    %v1190 = vadd.f32 0.0, %v1189
    %1191 = vmatprep.mubr.bf16.mxu0 %v679
    %1192 = vmatmul.mubr.bf16.gmra.mxu0 %v678
    %v1193 = vpop.f32.mrf.mxu0
    %v1194 = vadd.f32 0.0, %v1193
    %v1195 = vpop.f32.mrf.mxu0
    %v1196 = vadd.f32 0.0, %v1195
    %v1197 = vpop.f32.mrf.mxu0
    %v1198 = vadd.f32 0.0, %v1197
    %v1199 = vpop.f32.mrf.mxu0
    %v1200 = vadd.f32 0.0, %v1199
    %1201 = vmatprep.mubr.bf16.mxu0 %v681
    %1202 = vmatmul.mubr.bf16.gmra.mxu0 %v680
    %v1203 = vpop.f32.mrf.mxu0
    %v1204 = vadd.f32 0.0, %v1203
    %v1205 = vpop.f32.mrf.mxu0
    %v1206 = vadd.f32 0.0, %v1205
    %v1207 = vpop.f32.mrf.mxu0
    %v1208 = vadd.f32 0.0, %v1207
    %v1209 = vpop.f32.mrf.mxu0
    %v1210 = vadd.f32 0.0, %v1209
    %1211 = vmatprep.mubr.bf16.mxu0 %v683
    %1212 = vmatmul.mubr.bf16.gmra.mxu0 %v682
    %v1213 = vpop.f32.mrf.mxu0
    %v1214 = vadd.f32 0.0, %v1213
    %v1215 = vpop.f32.mrf.mxu0
    %v1216 = vadd.f32 0.0, %v1215
    %v1217 = vpop.f32.mrf.mxu0
    %v1218 = vadd.f32 0.0, %v1217
    %v1219 = vpop.f32.mrf.mxu0
    %v1220 = vadd.f32 0.0, %v1219
    %1221 = vmatprep.mubr.bf16.mxu0 %v685
    %1222 = vmatmul.mubr.bf16.gmra.mxu0 %v684
    %v1223 = vpop.f32.mrf.mxu0
    %v1224 = vadd.f32 0.0, %v1223
    %v1225 = vpop.f32.mrf.mxu0
    %v1226 = vadd.f32 0.0, %v1225
    %v1227 = vpop.f32.mrf.mxu0
    %v1228 = vadd.f32 0.0, %v1227
    %v1229 = vpop.f32.mrf.mxu0
    %v1230 = vadd.f32 0.0, %v1229
    %1231 = vmatprep.mubr.bf16.mxu0 %v687
    %1232 = vmatmul.mubr.bf16.gmra.mxu0 %v686
    %v1233 = vpop.f32.mrf.mxu0
    %v1234 = vadd.f32 0.0, %v1233
    %v1235 = vpop.f32.mrf.mxu0
    %v1236 = vadd.f32 0.0, %v1235
    %v1237 = vpop.f32.mrf.mxu0
    %v1238 = vadd.f32 0.0, %v1237
    %v1239 = vpop.f32.mrf.mxu0
    %v1240 = vadd.f32 0.0, %v1239
    %1241 = vmatprep.mubr.bf16.mxu0 %v689
    %1242 = vmatmul.mubr.bf16.gmra.mxu0 %v688
    %v1243 = vpop.f32.mrf.mxu0
    %v1244 = vadd.f32 0.0, %v1243
    %v1245 = vpop.f32.mrf.mxu0
    %v1246 = vadd.f32 0.0, %v1245
    %v1247 = vpop.f32.mrf.mxu0
    %v1248 = vadd.f32 0.0, %v1247
    %v1249 = vpop.f32.mrf.mxu0
    %v1250 = vadd.f32 0.0, %v1249
    %1251 = vdwg.mxu0
    %1252 = vst [vmem:[#allocation5] sm:$0xff] %v1061
    %1253 = vst [vmem:[#allocation5 + $0x8] sm:$0xff] %v1063
    %1254 = vst [vmem:[#allocation5 + $0x10] sm:$0xff] %v1174
    %1255 = vst [vmem:[#allocation5 + $0x18] sm:$0xff] %v1176
    %1256 = vst [vmem:[#allocation5 + $0x20] sm:$0xff] %v1065
    %1257 = vst [vmem:[#allocation5 + $0x28] sm:$0xff] %v1067
    %1258 = vst [vmem:[#allocation5 + $0x30] sm:$0xff] %v1178
    %1259 = vst [vmem:[#allocation5 + $0x38] sm:$0xff] %v1180
    %1260 = vst [vmem:[#allocation5 + $0x40] sm:$0xff] %v1071
    %1261 = vst [vmem:[#allocation5 + $0x48] sm:$0xff] %v1073
    %1262 = vst [vmem:[#allocation5 + $0x50] sm:$0xff] %v1184
    %1263 = vst [vmem:[#allocation5 + $0x58] sm:$0xff] %v1186
    %1264 = vst [vmem:[#allocation5 + $0x60] sm:$0xff] %v1075
    %1265 = vst [vmem:[#allocation5 + $0x68] sm:$0xff] %v1077
    %1266 = vst [vmem:[#allocation5 + $0x70] sm:$0xff] %v1188
    %1267 = vst [vmem:[#allocation5 + $0x78] sm:$0xff] %v1190
    %1268 = vst [vmem:[#allocation5 + $0x80] sm:$0xff] %v1081
    %1269 = vst [vmem:[#allocation5 + $0x88] sm:$0xff] %v1083
    %1270 = vst [vmem:[#allocation5 + $0x90] sm:$0xff] %v1194
    %1271 = vst [vmem:[#allocation5 + $0x98] sm:$0xff] %v1196
    %1272 = vst [vmem:[#allocation5 + $0xa0] sm:$0xff] %v1085
    %1273 = vst [vmem:[#allocation5 + $0xa8] sm:$0xff] %v1087
    %1274 = vst [vmem:[#allocation5 + $0xb0] sm:$0xff] %v1198
    %1275 = vst [vmem:[#allocation5 + $0xb8] sm:$0xff] %v1200
    %1276 = vst [vmem:[#allocation5 + $0xc0] sm:$0xff] %v1091
    %1277 = vst [vmem:[#allocation5 + $0xc8] sm:$0xff] %v1093
    %1278 = vst [vmem:[#allocation5 + $0xd0] sm:$0xff] %v1204
    %1279 = vst [vmem:[#allocation5 + $0xd8] sm:$0xff] %v1206
    %1280 = vst [vmem:[#allocation5 + $0xe0] sm:$0xff] %v1095
    %1281 = vst [vmem:[#allocation5 + $0xe8] sm:$0xff] %v1097
    %1282 = vst [vmem:[#allocation5 + $0xf0] sm:$0xff] %v1208
    %1283 = vst [vmem:[#allocation5 + $0xf8] sm:$0xff] %v1210
    %1284 = vst [vmem:[#allocation5 + $0x100] sm:$0xff] %v1101
    %1285 = vst [vmem:[#allocation5 + $0x108] sm:$0xff] %v1103
    %1286 = vst [vmem:[#allocation5 + $0x110] sm:$0xff] %v1214
    %1287 = vst [vmem:[#allocation5 + $0x118] sm:$0xff] %v1216
    %1288 = vst [vmem:[#allocation5 + $0x120] sm:$0xff] %v1105
    %1289 = vst [vmem:[#allocation5 + $0x128] sm:$0xff] %v1107
    %1290 = vst [vmem:[#allocation5 + $0x130] sm:$0xff] %v1218
    %1291 = vst [vmem:[#allocation5 + $0x138] sm:$0xff] %v1220
    %1292 = vst [vmem:[#allocation5 + $0x140] sm:$0xff] %v1111
    %1293 = vst [vmem:[#allocation5 + $0x148] sm:$0xff] %v1113
    %1294 = vst [vmem:[#allocation5 + $0x150] sm:$0xff] %v1224
    %1295 = vst [vmem:[#allocation5 + $0x158] sm:$0xff] %v1226
    %1296 = vst [vmem:[#allocation5 + $0x160] sm:$0xff] %v1115
    %1297 = vst [vmem:[#allocation5 + $0x168] sm:$0xff] %v1117
    %1298 = vst [vmem:[#allocation5 + $0x170] sm:$0xff] %v1228
    %1299 = vst [vmem:[#allocation5 + $0x178] sm:$0xff] %v1230
    %1300 = vst [vmem:[#allocation5 + $0x180] sm:$0xff] %v1121
    %1301 = vst [vmem:[#allocation5 + $0x188] sm:$0xff] %v1123
    %1302 = vst [vmem:[#allocation5 + $0x190] sm:$0xff] %v1234
    %1303 = vst [vmem:[#allocation5 + $0x198] sm:$0xff] %v1236
    %1304 = vst [vmem:[#allocation5 + $0x1a0] sm:$0xff] %v1125
    %1305 = vst [vmem:[#allocation5 + $0x1a8] sm:$0xff] %v1127
    %1306 = vst [vmem:[#allocation5 + $0x1b0] sm:$0xff] %v1238
    %1307 = vst [vmem:[#allocation5 + $0x1b8] sm:$0xff] %v1240
    %1308 = vst [vmem:[#allocation5 + $0x1c0] sm:$0xff] %v1131
    %1309 = vst [vmem:[#allocation5 + $0x1c8] sm:$0xff] %v1133
    %1310 = vst [vmem:[#allocation5 + $0x1d0] sm:$0xff] %v1244
    %1311 = vst [vmem:[#allocation5 + $0x1d8] sm:$0xff] %v1246
    %1312 = vst [vmem:[#allocation5 + $0x1e0] sm:$0xff] %v1135
    %1313 = vst [vmem:[#allocation5 + $0x1e8] sm:$0xff] %v1137
    %1314 = vst [vmem:[#allocation5 + $0x1f0] sm:$0xff] %v1248
    %1315 = vst [vmem:[#allocation5 + $0x1f8] sm:$0xff] %v1250
    // Predicated region
    $region22: #{policy_network_forward.17} parent=1 // pred_check
      _
    $region23: #{policy_network_forward.17} parent=1 // pred_check_branch
      %1317 = sbr.rel (0) target = $region25
    $region24: #{policy_network_forward.17} parent=1 // pred_region
      %s1319 = ssub.s32 4096, 4096
      %1320 = vsyncadd [#allocation4], %s1319
      %s1321 = sshll.u32 [#allocation3], 4
      %s1322 = int_to_ptr.vmem [resolvable:$true] %s1321
      %1327 = dma.vmem_to_hbm [thread:$0]  %s1322, 4096, %s4, [#allocation4], 256, 256, 16
    $region25: #{policy_network_forward.17} parent=1 // pred_fallthru
      _
    // Predicated region
    $region26: #{policy_network_forward.17} parent=1 // pred_check
      _
    $region27: #{policy_network_forward.17} parent=1 // pred_check_branch
      %1329 = sbr.rel (0) target = $region29
    $region28: #{policy_network_forward.17} parent=1 // pred_region
      %s1331 = ssub.s32 8192, 8192
      %1332 = vsyncadd [#allocation6], %s1331
      %s1333 = sshll.u32 [#allocation5], 4
      %s1334 = int_to_ptr.vmem [resolvable:$true] %s1333
      %1339 = dma.vmem_to_hbm [thread:$0]  %s1334, 8192, %s5, [#allocation6], 512, 512, 32
    $region29: #{policy_network_forward.17} parent=1 // pred_fallthru
      _
    // Predicated region
    $region30: #{policy_network_forward.17} parent=1 // pred_check
      _
    $region31: #{policy_network_forward.17} parent=1 // pred_check_branch
      %1341 = sbr.rel (0) target = $region33
    $region32: #{policy_network_forward.17} parent=1 // pred_region
      %1342 = dma.done [#allocation4], 4096
    $region33: #{policy_network_forward.17} parent=1 // pred_fallthru
      _
    // Predicated region
    $region34: #{policy_network_forward.17} parent=1 // pred_check
      _
    $region35: #{policy_network_forward.17} parent=1 // pred_check_branch
      %1344 = sbr.rel (0) target = $region37
    $region36: #{policy_network_forward.17} parent=1 // pred_region
      %1345 = dma.done [#allocation6], 8192
    $region37: #{policy_network_forward.17} parent=1 // pred_fallthru
      _
    %1346 = vsyncpa [#allocation4], 1
    %1347 = vsyncpa [#allocation6], 1

</llo_original>
